<compile_context>
chip_gen: v7x
topology: tpu7x:2x2x1
jax: 0.10.0
libtpu: 0.0.40
codegen_flags: <defaults>
</compile_context>

<pallas_src>
import functools

import numpy as np
import jax
import jax.numpy as jnp
from jax import lax
from jax.experimental import pallas as pl
from jax.experimental.pallas import tpu as pltpu


_WEIGHT_SLAB_BUDGET = 12 * 1024 * 1024   # resident conv-weight budget (per block)
_ACT_SLAB_BUDGET = 12 * 1024 * 1024      # full-Cin activation-block budget


@functools.lru_cache(maxsize=None)
def _vmem_limit_bytes() -> int:
    """Per-chip VMEM budget: 3/4 of physical capacity, 48 MiB fallback."""
    try:
        info = pltpu.get_tpu_info()
        cap = int(getattr(info, "vmem_capacity_bytes", 0) or 0)
        if cap > 0:
            return cap * 3 // 4
    except Exception:
        pass
    return 48 * 1024 * 1024


def _pick_chunk(c: int, targets=(512, 256, 128)) -> int:
    """Largest target that divides c (keeps blocks (8,128)-legal); else full dim."""
    for t in targets:
        if c >= t and c % t == 0:
            return t
    return c


# ----------------------------------------------------------------------------
# Bilinear interpolation matrix, matching torch F.interpolate(align_corners=False).
# ----------------------------------------------------------------------------
def _bilinear_matrix(in_size: int, out_size: int) -> np.ndarray:
    scale = in_size / out_size
    W = np.zeros((out_size, in_size), dtype=np.float32)
    for o in range(out_size):
        src = (o + 0.5) * scale - 0.5
        src = max(src, 0.0)
        i0 = min(int(np.floor(src)), in_size - 1)
        i1 = i0 + 1 if i0 < in_size - 1 else i0
        lam1 = src - i0
        W[o, i0] += 1.0 - lam1
        W[o, i1] += lam1
    return W


# ----------------------------------------------------------------------------
# Fused bilinear resize (H pass + W pass in one kernel, intermediate stays in VMEM).
# ----------------------------------------------------------------------------
def _resize_fused_kernel(wh_ref, ww_ref, x_ref, o_ref, *, compute_dtype):
    _, H, W, cb = x_ref.shape
    _, out_h, out_w, _ = o_ref.shape

    wh = wh_ref[...].astype(compute_dtype)                    # (out_h, H)
    ww = ww_ref[...].astype(compute_dtype)                    # (out_w, W)
    x = x_ref[0].astype(compute_dtype)                        # (H, W, cb)

    # H pass: one lane-dense 2-D MXU matmul on the (H, W*cb) view.
    t = jnp.dot(wh, x.reshape(H, W * cb),
                preferred_element_type=jnp.float32)           # (out_h, W*cb) f32
    t = t.reshape(out_h, W, cb).astype(compute_dtype)         # (out_h, W, cb)

    # W pass: single batched matmul over the out_h rows.  Channels stay on the
    # lane axis, so the result lands directly in the output layout (no transpose,
    # lane-dense stores when cb is a multiple of 128).
    ww_b = jnp.broadcast_to(ww, (out_h, out_w, W))            # hoisted once per block
    y = jnp.einsum("row,rwc->roc", ww_b, t,
                   preferred_element_type=jnp.float32)        # (out_h, out_w, cb)
    o_ref[0] = y.astype(o_ref.dtype)


def bilinear_resize_nhwc(x, out_h, out_w, *, compute_dtype=jnp.bfloat16,
                         out_dtype=None):
    """Bilinear resize (align_corners=False) of an NHWC tensor in one pallas_call."""
    N, H, W, C = x.shape
    out_dtype = x.dtype if out_dtype is None else out_dtype
    wh = jnp.asarray(_bilinear_matrix(H, out_h))               # (out_h, H) f32
    ww = jnp.asarray(_bilinear_matrix(W, out_w))               # (out_w, W) f32

    # Channel tile: 128 keeps every block lane-dense and in-kernel temporaries small.
    # For C < 128 (small configs) the full C is used (masked stores, still correct).
    cb = 128 if C % 128 == 0 else C
    grid = (N, C // cb)

    return pl.pallas_call(
        functools.partial(_resize_fused_kernel, compute_dtype=compute_dtype),
        out_shape=jax.ShapeDtypeStruct((N, out_h, out_w, C), out_dtype),
        grid=grid,
        in_specs=[
            pl.BlockSpec((out_h, H), lambda n, c: (0, 0)),
            pl.BlockSpec((out_w, W), lambda n, c: (0, 0)),
            pl.BlockSpec((1, H, W, cb), lambda n, c: (n, 0, 0, c)),
        ],
        out_specs=pl.BlockSpec((1, out_h, out_w, cb), lambda n, c: (n, 0, 0, c)),
        compiler_params=pltpu.CompilerParams(
            dimension_semantics=("parallel", "parallel"),
            vmem_limit_bytes=_vmem_limit_bytes()),
        cost_estimate=pl.CostEstimate(
            flops=2 * N * out_h * H * W * C + 2 * N * out_h * out_w * W * C,
            transcendentals=0,
            bytes_accessed=(N * H * W * C * x.dtype.itemsize
                            + N * out_h * out_w * C * jnp.dtype(out_dtype).itemsize
                            + 4 * (out_h * H + out_w * W))),
    )(wh, ww, x)


# ----------------------------------------------------------------------------
# 3x3 / stride-2 / pad-1 conv (no bias): direct conv, no HBM im2col.
# Grid = (N, Cout tiles, Cin tiles); Cin is the reduction axis ('arbitrary', last)
# accumulated in a VMEM f32 scratch.  With the default full-Cout / full-Cin tiles
# the padded activation is read once per batch element and the weight slab is
# DMA'd once for the entire grid (constant block index => no re-fetch).
# ----------------------------------------------------------------------------
def _conv_kernel(x_ref, w_ref, o_ref, acc_ref, *, ho, wo, compute_dtype):
    k = pl.program_id(2)

    @pl.when(k == 0)
    def _():
        acc_ref[...] = jnp.zeros_like(acc_ref)

    acc = acc_ref[...]
    cin_blk = w_ref.shape[2]
    for kh in range(3):                                  # static unroll: 9 taps
        for kw in range(3):
            p = 2 * (kh % 2) + (kw % 2)                  # stride-2 phase of this tap
            win = x_ref[0, p, pl.ds(kh // 2, ho), pl.ds(kw // 2, wo), :]
            # Wo is a multiple of 8 for all supported sizes, so this flatten is a
            # layout-preserving view (no relayout copy) feeding a 2-D MXU matmul.
            a = win.reshape(ho * wo, cin_blk).astype(compute_dtype)
            b = w_ref[kh, kw].astype(compute_dtype)      # (cin_blk, cout_blk)
            acc = acc + jnp.dot(a, b, preferred_element_type=jnp.float32)
    acc_ref[...] = acc

    @pl.when(k == pl.num_programs(2) - 1)
    def _():
        o_ref[0] = acc.astype(o_ref.dtype)


def conv3x3_s2_p1_nhwc(x, w_hwio, *, compute_dtype=jnp.bfloat16, out_dtype=None):
    """x: (N, H, W, Cin) NHWC, w_hwio: (3, 3, Cin, Cout) -> (N, H//2, W//2, Cout)."""
    N, H, W, Cin = x.shape
    Cout = w_hwio.shape[-1]
    assert H % 2 == 0 and W % 2 == 0
    Ho, Wo = H // 2, W // 2
    Hp2, Wp2 = Ho + 1, Wo + 1
    out_dtype = x.dtype if out_dtype is None else out_dtype

    # Pad once, split into the 4 stride-2 phases (space-to-depth) so every 3x3 tap
    # becomes a contiguous (Ho, Wo) window: one activation copy, not a 9x im2col.
    xp = jnp.pad(x, ((0, 0), (1, 1), (1, 1), (0, 0)))
    xph = xp.reshape(N, Hp2, 2, Wp2, 2, Cin)
    xph = jnp.transpose(xph, (0, 2, 4, 1, 3, 5)).reshape(N, 4, Hp2, Wp2, Cin)

    # Hold the whole weight slab / whole Cin resident when they fit the budget, so
    # activations and weights are not re-streamed across Cout/Cin grid tiles.
    w_bytes = 9 * Cin * Cout * w_hwio.dtype.itemsize
    cob = Cout if w_bytes <= _WEIGHT_SLAB_BUDGET else _pick_chunk(Cout)
    act_bytes = 4 * Hp2 * Wp2 * Cin * x.dtype.itemsize
    cib = Cin if act_bytes <= _ACT_SLAB_BUDGET else _pick_chunk(Cin, (256, 128))

    grid = (N, Cout // cob, Cin // cib)                  # reduction axis last

    out = pl.pallas_call(
        functools.partial(_conv_kernel, ho=Ho, wo=Wo, compute_dtype=compute_dtype),
        out_shape=jax.ShapeDtypeStruct((N, Ho * Wo, Cout), out_dtype),
        grid=grid,
        in_specs=[
            pl.BlockSpec((1, 4, Hp2, Wp2, cib), lambda n, j, k: (n, 0, 0, 0, k)),
            pl.BlockSpec((3, 3, cib, cob), lambda n, j, k: (0, 0, k, j)),
        ],
        out_specs=pl.BlockSpec((1, Ho * Wo, cob), lambda n, j, k: (n, 0, j)),
        scratch_shapes=[pltpu.VMEM((Ho * Wo, cob), jnp.float32)],
        compiler_params=pltpu.CompilerParams(
            dimension_semantics=("parallel", "parallel", "arbitrary"),
            vmem_limit_bytes=_vmem_limit_bytes()),
        cost_estimate=pl.CostEstimate(
            flops=2 * N * Ho * Wo * 9 * Cin * Cout, transcendentals=0,
            bytes_accessed=(N * 4 * Hp2 * Wp2 * Cin * x.dtype.itemsize * (Cout // cob)
                            + 9 * Cin * Cout * w_hwio.dtype.itemsize
                            + N * Ho * Wo * Cout * jnp.dtype(out_dtype).itemsize)),
    )(xph, w_hwio)
    return out.reshape(N, Ho, Wo, Cout)                  # free reshape


# ----------------------------------------------------------------------------
# The module (NCHW in / NCHW out, matching the PyTorch spec).
# ----------------------------------------------------------------------------
class DeepseekVLSamVisionProjPallas:
    def __init__(self, output_channels, output_size, key, compute_dtype=jnp.bfloat16):
        self.output_size = output_size
        self.compute_dtype = compute_dtype
        k1, k2 = jax.random.split(key)
        c = output_channels
        # PyTorch-layout (OIHW) master weights in f32, no bias.
        self.w1 = 0.1 * jax.random.normal(k1, (2 * c, c, 3, 3), jnp.float32)
        self.w2 = 0.1 * jax.random.normal(k2, (4 * c, 2 * c, 3, 3), jnp.float32)
        # HWIO copies in the compute dtype (channels on lanes; bf16 halves weight HBM).
        self.w1_hwio = jnp.transpose(self.w1, (2, 3, 1, 0)).astype(compute_dtype)
        self.w2_hwio = jnp.transpose(self.w2, (2, 3, 1, 0)).astype(compute_dtype)

    def __call__(self, features):
        s = 4 * self.output_size
        cd = self.compute_dtype
        x = jnp.transpose(features, (0, 2, 3, 1))        # NCHW -> NHWC (once, smallest tensor)
        x = bilinear_resize_nhwc(x, s, s, compute_dtype=cd, out_dtype=cd)
        x = conv3x3_s2_p1_nhwc(x, self.w1_hwio, compute_dtype=cd, out_dtype=cd)
        x = conv3x3_s2_p1_nhwc(x, self.w2_hwio, compute_dtype=cd,
                               out_dtype=features.dtype)
        return jnp.transpose(x, (0, 3, 1, 2))            # NHWC -> NCHW (once)


# ----------------------------------------------------------------------------
# Pure-JAX reference for the correctness check.
# ----------------------------------------------------------------------------
def _reference(x, w1, w2, output_size):
    s = 4 * output_size
    N, C, H, W = x.shape
    Wh = jnp.asarray(_bilinear_matrix(H, s))
    Ww = jnp.asarray(_bilinear_matrix(W, s))
    y = jnp.einsum('oh,nchw,pw->ncop', Wh, x, Ww)
    dn = lax.conv_dimension_numbers(y.shape, w1.shape, ('NCHW', 'OIHW', 'NCHW'))
    y = lax.conv_general_dilated(y, w1, (2, 2), ((1, 1), (1, 1)),
                                 dimension_numbers=dn)
    y = lax.conv_general_dilated(y, w2, (2, 2), ((1, 1), (1, 1)),
                                 dimension_numbers=dn)
    return y


if __name__ == "__main__":
    key = jax.random.PRNGKey(0)
    k_in, k_params = jax.random.split(key)

    # Small config: output_channels=4, output_size=8 -> resize 16x16 -> 32x32.
    output_channels = 4
    output_size = 8
    x = jax.random.normal(k_in, (2, output_channels, 16, 16), jnp.float32)

    # bf16 compute path (default; MXU-native on v5e/v6e/v7x).
    mod_bf16 = DeepseekVLSamVisionProjPallas(output_channels, output_size, k_params)
    out_bf16 = jax.block_until_ready(jax.jit(mod_bf16.__call__)(x))
    assert out_bf16.shape == (2, 4 * output_channels, output_size, output_size), out_bf16.shape

    # f32 compute path for a tight algorithmic check.
    mod_f32 = DeepseekVLSamVisionProjPallas(output_channels, output_size, k_params,
                                            compute_dtype=jnp.float32)
    out_f32 = jax.block_until_ready(jax.jit(mod_f32.__call__)(x))

    ref = jax.block_until_ready(_reference(x, mod_f32.w1, mod_f32.w2, output_size))
    np.testing.assert_allclose(np.asarray(out_f32), np.asarray(ref),
                               rtol=1e-4, atol=1e-4)
    np.testing.assert_allclose(np.asarray(out_bf16, dtype=np.float32), np.asarray(ref),
                               rtol=3e-2, atol=3e-2)

    print("KERNEL_OK")
</pallas_src>

<mosaic_0001>
module attributes {stable_mosaic.version = 11 : i64} {
  func.func @_resize_fused_kernel(%arg0: i32, %arg1: i32, %arg2: memref<32x16xf32, #tpu.memory_space<vmem>>, %arg3: memref<32x16xf32, #tpu.memory_space<vmem>>, %arg4: memref<1x16x16x4xf32, #tpu.memory_space<vmem>>, %arg5: memref<1x32x32x4xbf16, #tpu.memory_space<vmem>>) attributes {dimension_semantics = [#tpu.dimension_semantics<parallel>, #tpu.dimension_semantics<parallel>], iteration_bounds = array<i64: 2, 1>, scalar_prefetch = 0 : i64, scratch_operands = 0 : i64, tpu.core_type = #tpu.core_type<tc>, window_params = [{pipeline_mode = #tpu.pipeline_mode<synchronous>, transform_indices = @transform_0, window_bounds = array<i64: 32, 16>}, {pipeline_mode = #tpu.pipeline_mode<synchronous>, transform_indices = @transform_1, window_bounds = array<i64: 32, 16>}, {transform_indices = @transform_2, window_bounds = array<i64: 1, 16, 16, 4>}, {transform_indices = @transform_3, window_bounds = array<i64: 1, 32, 32, 4>}]} {
    %c0 = arith.constant 0 : index
    %c0_0 = arith.constant 0 : index
    %0 = vector.load %arg2[%c0, %c0_0] : memref<32x16xf32, #tpu.memory_space<vmem>>, vector<32x16xf32>
    %1 = arith.truncf %0 : vector<32x16xf32> to vector<32x16xbf16>
    %c0_1 = arith.constant 0 : index
    %c0_2 = arith.constant 0 : index
    %2 = vector.load %arg3[%c0_1, %c0_2] : memref<32x16xf32, #tpu.memory_space<vmem>>, vector<32x16xf32>
    %3 = arith.truncf %2 : vector<32x16xf32> to vector<32x16xbf16>
    %c0_3 = arith.constant 0 : index
    %c0_4 = arith.constant 0 : index
    %c0_5 = arith.constant 0 : index
    %c0_6 = arith.constant 0 : index
    %4 = vector.load %arg4[%c0_3, %c0_4, %c0_5, %c0_6] : memref<1x16x16x4xf32, #tpu.memory_space<vmem>>, vector<1x16x16x4xf32>
    %5 = vector.shape_cast %4 : vector<1x16x16x4xf32> to vector<16x16x4xf32>
    %6 = arith.truncf %5 : vector<16x16x4xf32> to vector<16x16x4xbf16>
    %7 = vector.shape_cast %6 : vector<16x16x4xbf16> to vector<16x64xbf16>
    %cst = arith.constant dense<0.000000e+00> : vector<32x64xf32>
    %8 = tpu.matmul %1, %7, %cst {dimension_numbers = #tpu.dot_dimension_numbers<[1], [0], [0], [1], [0, 0, 1, 1], [], []>} : vector<32x16xbf16>, vector<16x64xbf16>, vector<32x64xf32> -> vector<32x64xf32>
    %9 = vector.shape_cast %8 : vector<32x64xf32> to vector<32x16x4xf32>
    %10 = arith.truncf %9 : vector<32x16x4xf32> to vector<32x16x4xbf16>
    %11 = vector.shape_cast %3 : vector<32x16xbf16> to vector<1x32x16xbf16>
    %12 = vector.broadcast %11 : vector<1x32x16xbf16> to vector<32x32x16xbf16>
    "tpu.trace_start"() <{level = 10 : i32, message = "row,rwc->roc"}> : () -> ()
    %cst_7 = arith.constant dense<0.000000e+00> : vector<32x32x4xf32>
    %13 = tpu.matmul %12, %10, %cst_7 {dimension_numbers = #tpu.dot_dimension_numbers<[2], [1], [1], [2], [0, 0, 0, 1, 1, 2], [0], [0]>} : vector<32x32x16xbf16>, vector<32x16x4xbf16>, vector<32x32x4xf32> -> vector<32x32x4xf32>
    "tpu.trace_stop"() : () -> ()
    %14 = arith.truncf %13 : vector<32x32x4xf32> to vector<32x32x4xbf16>
    %c0_8 = arith.constant 0 : index
    %c0_9 = arith.constant 0 : index
    %c0_10 = arith.constant 0 : index
    %c0_11 = arith.constant 0 : index
    %15 = vector.load %arg5[%c0_8, %c0_9, %c0_10, %c0_11] : memref<1x32x32x4xbf16, #tpu.memory_space<vmem>>, vector<1x32x32x4xbf16>
    %16 = vector.shape_cast %15 : vector<1x32x32x4xbf16> to vector<32x32x4xbf16>
    %17 = vector.shape_cast %14 : vector<32x32x4xbf16> to vector<1x32x32x4xbf16>
    tpu.vector_store %arg5[%c0_8, %c0_9, %c0_10, %c0_11], %17 {strides = array<i32>} : memref<1x32x32x4xbf16, #tpu.memory_space<vmem>>, vector<1x32x32x4xbf16>,
    return
  }
  func.func @transform_0(%arg0: i32, %arg1: i32) -> (i32, i32) {
    %c0_i32 = arith.constant 0 : i32
    %c0_i32_0 = arith.constant 0 : i32
    %c0_i32_1 = arith.constant 0 : i32
    return %c0_i32, %c0_i32_0 : i32, i32
  }
  func.func @transform_1(%arg0: i32, %arg1: i32) -> (i32, i32) {
    %c0_i32 = arith.constant 0 : i32
    %c0_i32_0 = arith.constant 0 : i32
    %c0_i32_1 = arith.constant 0 : i32
    return %c0_i32, %c0_i32_0 : i32, i32
  }
  func.func @transform_2(%arg0: i32, %arg1: i32) -> (i32, i32, i32, i32) {
    %c0_i32 = arith.constant 0 : i32
    %c0_i32_0 = arith.constant 0 : i32
    %c0_i32_1 = arith.constant 0 : i32
    return %arg0, %c0_i32, %c0_i32_0, %arg1 : i32, i32, i32, i32
  }
  func.func @transform_3(%arg0: i32, %arg1: i32) -> (i32, i32, i32, i32) {
    %c0_i32 = arith.constant 0 : i32
    %c0_i32_0 = arith.constant 0 : i32
    %c0_i32_1 = arith.constant 0 : i32
    return %arg0, %c0_i32, %c0_i32_0, %arg1 : i32, i32, i32, i32
  }
}

module attributes {stable_mosaic.version = 11 : i64} {
  func.func @_conv_kernel(%arg0: i32, %arg1: i32, %arg2: i32, %arg3: memref<1x4x17x17x4xbf16, #tpu.memory_space<vmem>>, %arg4: memref<3x3x4x8xbf16, #tpu.memory_space<vmem>>, %arg5: memref<1x256x8xbf16, #tpu.memory_space<vmem>>, %arg6: memref<256x8xf32, #tpu.memory_space<vmem>>) attributes {dimension_semantics = [#tpu.dimension_semantics<parallel>, #tpu.dimension_semantics<parallel>, #tpu.dimension_semantics<arbitrary>], iteration_bounds = array<i64: 2, 1, 1>, scalar_prefetch = 0 : i64, scratch_operands = 1 : i64, tpu.core_type = #tpu.core_type<tc>, window_params = [{transform_indices = @transform_0, window_bounds = array<i64: 1, 4, 17, 17, 4>}, {transform_indices = @transform_1, window_bounds = array<i64: 3, 3, 4, 8>}, {transform_indices = @transform_2, window_bounds = array<i64: 1, 256, 8>}]} {
    %c0_i32 = arith.constant 0 : i32
    %0 = arith.cmpi eq, %arg2, %c0_i32 : i32
    %1 = arith.extui %0 : i1 to i32
    %c0_i32_0 = arith.constant 0 : i32
    %2 = arith.cmpi ne, %1, %c0_i32_0 : i32
    scf.if %2 {
      %cst_92 = arith.constant 0.000000e+00 : f32
      %71 = vector.broadcast %cst_92 : f32 to vector<256x8xf32>
      %c0_93 = arith.constant 0 : index
      %c0_94 = arith.constant 0 : index
      %72 = vector.load %arg6[%c0_93, %c0_94] : memref<256x8xf32, #tpu.memory_space<vmem>>, vector<256x8xf32>
      tpu.vector_store %arg6[%c0_93, %c0_94], %71 {strides = array<i32>} : memref<256x8xf32, #tpu.memory_space<vmem>>, vector<256x8xf32>,
    } else {
    }
    %c0 = arith.constant 0 : index
    %c0_1 = arith.constant 0 : index
    %3 = vector.load %arg6[%c0, %c0_1] : memref<256x8xf32, #tpu.memory_space<vmem>>, vector<256x8xf32>
    %c0_2 = arith.constant 0 : index
    %c0_3 = arith.constant 0 : index
    %c0_4 = arith.constant 0 : index
    %c0_5 = arith.constant 0 : index
    %c0_6 = arith.constant 0 : index
    %4 = vector.load %arg3[%c0_2, %c0_3, %c0_4, %c0_5, %c0_6] : memref<1x4x17x17x4xbf16, #tpu.memory_space<vmem>>, vector<1x1x16x16x4xbf16>
    %5 = vector.shape_cast %4 : vector<1x1x16x16x4xbf16> to vector<16x16x4xbf16>
    %6 = vector.shape_cast %5 : vector<16x16x4xbf16> to vector<256x4xbf16>
    %c0_7 = arith.constant 0 : index
    %c0_8 = arith.constant 0 : index
    %c0_9 = arith.constant 0 : index
    %c0_10 = arith.constant 0 : index
    %7 = vector.load %arg4[%c0_7, %c0_8, %c0_9, %c0_10] : memref<3x3x4x8xbf16, #tpu.memory_space<vmem>>, vector<1x1x4x8xbf16>
    %8 = vector.shape_cast %7 : vector<1x1x4x8xbf16> to vector<4x8xbf16>
    %cst = arith.constant dense<0.000000e+00> : vector<256x8xf32>
    %9 = tpu.matmul %6, %8, %cst {dimension_numbers = #tpu.dot_dimension_numbers<[1], [0], [0], [1], [0, 0, 1, 1], [], []>} : vector<256x4xbf16>, vector<4x8xbf16>, vector<256x8xf32> -> vector<256x8xf32>
    %10 = arith.addf %3, %9 : vector<256x8xf32>
    %c0_11 = arith.constant 0 : index
    %c1 = arith.constant 1 : index
    %c0_12 = arith.constant 0 : index
    %c0_13 = arith.constant 0 : index
    %c0_14 = arith.constant 0 : index
    %11 = vector.load %arg3[%c0_11, %c1, %c0_12, %c0_13, %c0_14] : memref<1x4x17x17x4xbf16, #tpu.memory_space<vmem>>, vector<1x1x16x16x4xbf16>
    %12 = vector.shape_cast %11 : vector<1x1x16x16x4xbf16> to vector<16x16x4xbf16>
    %13 = vector.shape_cast %12 : vector<16x16x4xbf16> to vector<256x4xbf16>
    %c0_15 = arith.constant 0 : index
    %c1_16 = arith.constant 1 : index
    %c0_17 = arith.constant 0 : index
    %c0_18 = arith.constant 0 : index
    %14 = vector.load %arg4[%c0_15, %c1_16, %c0_17, %c0_18] : memref<3x3x4x8xbf16, #tpu.memory_space<vmem>>, vector<1x1x4x8xbf16>
    %15 = vector.shape_cast %14 : vector<1x1x4x8xbf16> to vector<4x8xbf16>
    %cst_19 = arith.constant dense<0.000000e+00> : vector<256x8xf32>
    %16 = tpu.matmul %13, %15, %cst_19 {dimension_numbers = #tpu.dot_dimension_numbers<[1], [0], [0], [1], [0, 0, 1, 1], [], []>} : vector<256x4xbf16>, vector<4x8xbf16>, vector<256x8xf32> -> vector<256x8xf32>
    %17 = arith.addf %10, %16 : vector<256x8xf32>
    %c0_20 = arith.constant 0 : index
    %c0_21 = arith.constant 0 : index
    %c0_22 = arith.constant 0 : index
    %c1_23 = arith.constant 1 : index
    %c0_24 = arith.constant 0 : index
    %18 = vector.load %arg3[%c0_20, %c0_21, %c0_22, %c1_23, %c0_24] : memref<1x4x17x17x4xbf16, #tpu.memory_space<vmem>>, vector<1x1x16x16x4xbf16>
    %19 = vector.shape_cast %18 : vector<1x1x16x16x4xbf16> to vector<16x16x4xbf16>
    %20 = vector.shape_cast %19 : vector<16x16x4xbf16> to vector<256x4xbf16>
    %c0_25 = arith.constant 0 : index
    %c2 = arith.constant 2 : index
    %c0_26 = arith.constant 0 : index
    %c0_27 = arith.constant 0 : index
    %21 = vector.load %arg4[%c0_25, %c2, %c0_26, %c0_27] : memref<3x3x4x8xbf16, #tpu.memory_space<vmem>>, vector<1x1x4x8xbf16>
    %22 = vector.shape_cast %21 : vector<1x1x4x8xbf16> to vector<4x8xbf16>
    %cst_28 = arith.constant dense<0.000000e+00> : vector<256x8xf32>
    %23 = tpu.matmul %20, %22, %cst_28 {dimension_numbers = #tpu.dot_dimension_numbers<[1], [0], [0], [1], [0, 0, 1, 1], [], []>} : vector<256x4xbf16>, vector<4x8xbf16>, vector<256x8xf32> -> vector<256x8xf32>
    %24 = arith.addf %17, %23 : vector<256x8xf32>
    %c0_29 = arith.constant 0 : index
    %c2_30 = arith.constant 2 : index
    %c0_31 = arith.constant 0 : index
    %c0_32 = arith.constant 0 : index
    %c0_33 = arith.constant 0 : index
    %25 = vector.load %arg3[%c0_29, %c2_30, %c0_31, %c0_32, %c0_33] : memref<1x4x17x17x4xbf16, #tpu.memory_space<vmem>>, vector<1x1x16x16x4xbf16>
    %26 = vector.shape_cast %25 : vector<1x1x16x16x4xbf16> to vector<16x16x4xbf16>
    %27 = vector.shape_cast %26 : vector<16x16x4xbf16> to vector<256x4xbf16>
    %c1_34 = arith.constant 1 : index
    %c0_35 = arith.constant 0 : index
    %c0_36 = arith.constant 0 : index
    %c0_37 = arith.constant 0 : index
    %28 = vector.load %arg4[%c1_34, %c0_35, %c0_36, %c0_37] : memref<3x3x4x8xbf16, #tpu.memory_space<vmem>>, vector<1x1x4x8xbf16>
    %29 = vector.shape_cast %28 : vector<1x1x4x8xbf16> to vector<4x8xbf16>
    %cst_38 = arith.constant dense<0.000000e+00> : vector<256x8xf32>
    %30 = tpu.matmul %27, %29, %cst_38 {dimension_numbers = #tpu.dot_dimension_numbers<[1], [0], [0], [1], [0, 0, 1, 1], [], []>} : vector<256x4xbf16>, vector<4x8xbf16>, vector<256x8xf32> -> vector<256x8xf32>
    %31 = arith.addf %24, %30 : vector<256x8xf32>
    %c0_39 = arith.constant 0 : index
    %c3 = arith.constant 3 : index
    %c0_40 = arith.constant 0 : index
    %c0_41 = arith.constant 0 : index
    %c0_42 = arith.constant 0 : index
    %32 = vector.load %arg3[%c0_39, %c3, %c0_40, %c0_41, %c0_42] : memref<1x4x17x17x4xbf16, #tpu.memory_space<vmem>>, vector<1x1x16x16x4xbf16>
    %33 = vector.shape_cast %32 : vector<1x1x16x16x4xbf16> to vector<16x16x4xbf16>
    %34 = vector.shape_cast %33 : vector<16x16x4xbf16> to vector<256x4xbf16>
    %c1_43 = arith.constant 1 : index
    %c1_44 = arith.constant 1 : index
    %c0_45 = arith.constant 0 : index
    %c0_46 = arith.constant 0 : index
    %35 = vector.load %arg4[%c1_43, %c1_44, %c0_45, %c0_46] : memref<3x3x4x8xbf16, #tpu.memory_space<vmem>>, vector<1x1x4x8xbf16>
    %36 = vector.shape_cast %35 : vector<1x1x4x8xbf16> to vector<4x8xbf16>
    %cst_47 = arith.constant dense<0.000000e+00> : vector<256x8xf32>
    %37 = tpu.matmul %34, %36, %cst_47 {dimension_numbers = #tpu.dot_dimension_numbers<[1], [0], [0], [1], [0, 0, 1, 1], [], []>} : vector<256x4xbf16>, vector<4x8xbf16>, vector<256x8xf32> -> vector<256x8xf32>
    %38 = arith.addf %31, %37 : vector<256x8xf32>
    %c0_48 = arith.constant 0 : index
    %c2_49 = arith.constant 2 : index
    %c0_50 = arith.constant 0 : index
    %c1_51 = arith.constant 1 : index
    %c0_52 = arith.constant 0 : index
    %39 = vector.load %arg3[%c0_48, %c2_49, %c0_50, %c1_51, %c0_52] : memref<1x4x17x17x4xbf16, #tpu.memory_space<vmem>>, vector<1x1x16x16x4xbf16>
    %40 = vector.shape_cast %39 : vector<1x1x16x16x4xbf16> to vector<16x16x4xbf16>
    %41 = vector.shape_cast %40 : vector<16x16x4xbf16> to vector<256x4xbf16>
    %c1_53 = arith.constant 1 : index
    %c2_54 = arith.constant 2 : index
    %c0_55 = arith.constant 0 : index
    %c0_56 = arith.constant 0 : index
    %42 = vector.load %arg4[%c1_53, %c2_54, %c0_55, %c0_56] : memref<3x3x4x8xbf16, #tpu.memory_space<vmem>>, vector<1x1x4x8xbf16>
    %43 = vector.shape_cast %42 : vector<1x1x4x8xbf16> to vector<4x8xbf16>
    %cst_57 = arith.constant dense<0.000000e+00> : vector<256x8xf32>
    %44 = tpu.matmul %41, %43, %cst_57 {dimension_numbers = #tpu.dot_dimension_numbers<[1], [0], [0], [1], [0, 0, 1, 1], [], []>} : vector<256x4xbf16>, vector<4x8xbf16>, vector<256x8xf32> -> vector<256x8xf32>
    %45 = arith.addf %38, %44 : vector<256x8xf32>
    %c0_58 = arith.constant 0 : index
    %c0_59 = arith.constant 0 : index
    %c1_60 = arith.constant 1 : index
    %c0_61 = arith.constant 0 : index
    %c0_62 = arith.constant 0 : index
    %46 = vector.load %arg3[%c0_58, %c0_59, %c1_60, %c0_61, %c0_62] : memref<1x4x17x17x4xbf16, #tpu.memory_space<vmem>>, vector<1x1x16x16x4xbf16>
    %47 = vector.shape_cast %46 : vector<1x1x16x16x4xbf16> to vector<16x16x4xbf16>
    %48 = vector.shape_cast %47 : vector<16x16x4xbf16> to vector<256x4xbf16>
    %c2_63 = arith.constant 2 : index
    %c0_64 = arith.constant 0 : index
    %c0_65 = arith.constant 0 : index
    %c0_66 = arith.constant 0 : index
    %49 = vector.load %arg4[%c2_63, %c0_64, %c0_65, %c0_66] : memref<3x3x4x8xbf16, #tpu.memory_space<vmem>>, vector<1x1x4x8xbf16>
    %50 = vector.shape_cast %49 : vector<1x1x4x8xbf16> to vector<4x8xbf16>
    %cst_67 = arith.constant dense<0.000000e+00> : vector<256x8xf32>
    %51 = tpu.matmul %48, %50, %cst_67 {dimension_numbers = #tpu.dot_dimension_numbers<[1], [0], [0], [1], [0, 0, 1, 1], [], []>} : vector<256x4xbf16>, vector<4x8xbf16>, vector<256x8xf32> -> vector<256x8xf32>
    %52 = arith.addf %45, %51 : vector<256x8xf32>
    %c0_68 = arith.constant 0 : index
    %c1_69 = arith.constant 1 : index
    %c1_70 = arith.constant 1 : index
    %c0_71 = arith.constant 0 : index
    %c0_72 = arith.constant 0 : index
    %53 = vector.load %arg3[%c0_68, %c1_69, %c1_70, %c0_71, %c0_72] : memref<1x4x17x17x4xbf16, #tpu.memory_space<vmem>>, vector<1x1x16x16x4xbf16>
    %54 = vector.shape_cast %53 : vector<1x1x16x16x4xbf16> to vector<16x16x4xbf16>
    %55 = vector.shape_cast %54 : vector<16x16x4xbf16> to vector<256x4xbf16>
    %c2_73 = arith.constant 2 : index
    %c1_74 = arith.constant 1 : index
    %c0_75 = arith.constant 0 : index
    %c0_76 = arith.constant 0 : index
    %56 = vector.load %arg4[%c2_73, %c1_74, %c0_75, %c0_76] : memref<3x3x4x8xbf16, #tpu.memory_space<vmem>>, vector<1x1x4x8xbf16>
    %57 = vector.shape_cast %56 : vector<1x1x4x8xbf16> to vector<4x8xbf16>
    %cst_77 = arith.constant dense<0.000000e+00> : vector<256x8xf32>
    %58 = tpu.matmul %55, %57, %cst_77 {dimension_numbers = #tpu.dot_dimension_numbers<[1], [0], [0], [1], [0, 0, 1, 1], [], []>} : vector<256x4xbf16>, vector<4x8xbf16>, vector<256x8xf32> -> vector<256x8xf32>
    %59 = arith.addf %52, %58 : vector<256x8xf32>
    %c0_78 = arith.constant 0 : index
    %c0_79 = arith.constant 0 : index
    %c1_80 = arith.constant 1 : index
    %c1_81 = arith.constant 1 : index
    %c0_82 = arith.constant 0 : index
    %60 = vector.load %arg3[%c0_78, %c0_79, %c1_80, %c1_81, %c0_82] : memref<1x4x17x17x4xbf16, #tpu.memory_space<vmem>>, vector<1x1x16x16x4xbf16>
    %61 = vector.shape_cast %60 : vector<1x1x16x16x4xbf16> to vector<16x16x4xbf16>
    %62 = vector.shape_cast %61 : vector<16x16x4xbf16> to vector<256x4xbf16>
    %c2_83 = arith.constant 2 : index
    %c2_84 = arith.constant 2 : index
    %c0_85 = arith.constant 0 : index
    %c0_86 = arith.constant 0 : index
    %63 = vector.load %arg4[%c2_83, %c2_84, %c0_85, %c0_86] : memref<3x3x4x8xbf16, #tpu.memory_space<vmem>>, vector<1x1x4x8xbf16>
    %64 = vector.shape_cast %63 : vector<1x1x4x8xbf16> to vector<4x8xbf16>
    %cst_87 = arith.constant dense<0.000000e+00> : vector<256x8xf32>
    %65 = tpu.matmul %62, %64, %cst_87 {dimension_numbers = #tpu.dot_dimension_numbers<[1], [0], [0], [1], [0, 0, 1, 1], [], []>} : vector<256x4xbf16>, vector<4x8xbf16>, vector<256x8xf32> -> vector<256x8xf32>
    %66 = arith.addf %59, %65 : vector<256x8xf32>
    %c0_88 = arith.constant 0 : index
    %c0_89 = arith.constant 0 : index
    %67 = vector.load %arg6[%c0_88, %c0_89] : memref<256x8xf32, #tpu.memory_space<vmem>>, vector<256x8xf32>
    tpu.vector_store %arg6[%c0_88, %c0_89], %66 {strides = array<i32>} : memref<256x8xf32, #tpu.memory_space<vmem>>, vector<256x8xf32>,
    %c0_i32_90 = arith.constant 0 : i32
    %68 = arith.cmpi eq, %arg2, %c0_i32_90 : i32
    %69 = arith.extui %68 : i1 to i32
    %c0_i32_91 = arith.constant 0 : i32
    %70 = arith.cmpi ne, %69, %c0_i32_91 : i32
    scf.if %70 {
      %71 = arith.truncf %66 : vector<256x8xf32> to vector<256x8xbf16>
      %c0_92 = arith.constant 0 : index
      %c0_93 = arith.constant 0 : index
      %c0_94 = arith.constant 0 : index
      %72 = vector.load %arg5[%c0_92, %c0_93, %c0_94] : memref<1x256x8xbf16, #tpu.memory_space<vmem>>, vector<1x256x8xbf16>
      %73 = vector.shape_cast %72 : vector<1x256x8xbf16> to vector<256x8xbf16>
      %74 = vector.shape_cast %71 : vector<256x8xbf16> to vector<1x256x8xbf16>
      tpu.vector_store %arg5[%c0_92, %c0_93, %c0_94], %74 {strides = array<i32>} : memref<1x256x8xbf16, #tpu.memory_space<vmem>>, vector<1x256x8xbf16>,
    } else {
    }
    return
  }
  func.func @transform_0(%arg0: i32, %arg1: i32, %arg2: i32) -> (i32, i32, i32, i32, i32) {
    %c0_i32 = arith.constant 0 : i32
    %c0_i32_0 = arith.constant 0 : i32
    %c0_i32_1 = arith.constant 0 : i32
    %c0_i32_2 = arith.constant 0 : i32
    return %arg0, %c0_i32, %c0_i32_0, %c0_i32_1, %arg2 : i32, i32, i32, i32, i32
  }
  func.func @transform_1(%arg0: i32, %arg1: i32, %arg2: i32) -> (i32, i32, i32, i32) {
    %c0_i32 = arith.constant 0 : i32
    %c0_i32_0 = arith.constant 0 : i32
    %c0_i32_1 = arith.constant 0 : i32
    return %c0_i32, %c0_i32_0, %arg2, %arg1 : i32, i32, i32, i32
  }
  func.func @transform_2(%arg0: i32, %arg1: i32, %arg2: i32) -> (i32, i32, i32) {
    %c0_i32 = arith.constant 0 : i32
    %c0_i32_0 = arith.constant 0 : i32
    return %arg0, %c0_i32, %arg1 : i32, i32, i32
  }
}

module attributes {stable_mosaic.version = 11 : i64} {
  func.func @_conv_kernel(%arg0: i32, %arg1: i32, %arg2: i32, %arg3: memref<1x4x9x9x8xbf16, #tpu.memory_space<vmem>>, %arg4: memref<3x3x8x16xbf16, #tpu.memory_space<vmem>>, %arg5: memref<1x64x16xf32, #tpu.memory_space<vmem>>, %arg6: memref<64x16xf32, #tpu.memory_space<vmem>>) attributes {dimension_semantics = [#tpu.dimension_semantics<parallel>, #tpu.dimension_semantics<parallel>, #tpu.dimension_semantics<arbitrary>], iteration_bounds = array<i64: 2, 1, 1>, scalar_prefetch = 0 : i64, scratch_operands = 1 : i64, tpu.core_type = #tpu.core_type<tc>, window_params = [{transform_indices = @transform_0, window_bounds = array<i64: 1, 4, 9, 9, 8>}, {transform_indices = @transform_1, window_bounds = array<i64: 3, 3, 8, 16>}, {transform_indices = @transform_2, window_bounds = array<i64: 1, 64, 16>}]} {
    %c0_i32 = arith.constant 0 : i32
    %0 = arith.cmpi eq, %arg2, %c0_i32 : i32
    %1 = arith.extui %0 : i1 to i32
    %c0_i32_0 = arith.constant 0 : i32
    %2 = arith.cmpi ne, %1, %c0_i32_0 : i32
    scf.if %2 {
      %cst_92 = arith.constant 0.000000e+00 : f32
      %71 = vector.broadcast %cst_92 : f32 to vector<64x16xf32>
      %c0_93 = arith.constant 0 : index
      %c0_94 = arith.constant 0 : index
      %72 = vector.load %arg6[%c0_93, %c0_94] : memref<64x16xf32, #tpu.memory_space<vmem>>, vector<64x16xf32>
      tpu.vector_store %arg6[%c0_93, %c0_94], %71 {strides = array<i32>} : memref<64x16xf32, #tpu.memory_space<vmem>>, vector<64x16xf32>,
    } else {
    }
    %c0 = arith.constant 0 : index
    %c0_1 = arith.constant 0 : index
    %3 = vector.load %arg6[%c0, %c0_1] : memref<64x16xf32, #tpu.memory_space<vmem>>, vector<64x16xf32>
    %c0_2 = arith.constant 0 : index
    %c0_3 = arith.constant 0 : index
    %c0_4 = arith.constant 0 : index
    %c0_5 = arith.constant 0 : index
    %c0_6 = arith.constant 0 : index
    %4 = vector.load %arg3[%c0_2, %c0_3, %c0_4, %c0_5, %c0_6] : memref<1x4x9x9x8xbf16, #tpu.memory_space<vmem>>, vector<1x1x8x8x8xbf16>
    %5 = vector.shape_cast %4 : vector<1x1x8x8x8xbf16> to vector<8x8x8xbf16>
    %6 = vector.shape_cast %5 : vector<8x8x8xbf16> to vector<64x8xbf16>
    %c0_7 = arith.constant 0 : index
    %c0_8 = arith.constant 0 : index
    %c0_9 = arith.constant 0 : index
    %c0_10 = arith.constant 0 : index
    %7 = vector.load %arg4[%c0_7, %c0_8, %c0_9, %c0_10] : memref<3x3x8x16xbf16, #tpu.memory_space<vmem>>, vector<1x1x8x16xbf16>
    %8 = vector.shape_cast %7 : vector<1x1x8x16xbf16> to vector<8x16xbf16>
    %cst = arith.constant dense<0.000000e+00> : vector<64x16xf32>
    %9 = tpu.matmul %6, %8, %cst {dimension_numbers = #tpu.dot_dimension_numbers<[1], [0], [0], [1], [0, 0, 1, 1], [], []>} : vector<64x8xbf16>, vector<8x16xbf16>, vector<64x16xf32> -> vector<64x16xf32>
    %10 = arith.addf %3, %9 : vector<64x16xf32>
    %c0_11 = arith.constant 0 : index
    %c1 = arith.constant 1 : index
    %c0_12 = arith.constant 0 : index
    %c0_13 = arith.constant 0 : index
    %c0_14 = arith.constant 0 : index
    %11 = vector.load %arg3[%c0_11, %c1, %c0_12, %c0_13, %c0_14] : memref<1x4x9x9x8xbf16, #tpu.memory_space<vmem>>, vector<1x1x8x8x8xbf16>
    %12 = vector.shape_cast %11 : vector<1x1x8x8x8xbf16> to vector<8x8x8xbf16>
    %13 = vector.shape_cast %12 : vector<8x8x8xbf16> to vector<64x8xbf16>
    %c0_15 = arith.constant 0 : index
    %c1_16 = arith.constant 1 : index
    %c0_17 = arith.constant 0 : index
    %c0_18 = arith.constant 0 : index
    %14 = vector.load %arg4[%c0_15, %c1_16, %c0_17, %c0_18] : memref<3x3x8x16xbf16, #tpu.memory_space<vmem>>, vector<1x1x8x16xbf16>
    %15 = vector.shape_cast %14 : vector<1x1x8x16xbf16> to vector<8x16xbf16>
    %cst_19 = arith.constant dense<0.000000e+00> : vector<64x16xf32>
    %16 = tpu.matmul %13, %15, %cst_19 {dimension_numbers = #tpu.dot_dimension_numbers<[1], [0], [0], [1], [0, 0, 1, 1], [], []>} : vector<64x8xbf16>, vector<8x16xbf16>, vector<64x16xf32> -> vector<64x16xf32>
    %17 = arith.addf %10, %16 : vector<64x16xf32>
    %c0_20 = arith.constant 0 : index
    %c0_21 = arith.constant 0 : index
    %c0_22 = arith.constant 0 : index
    %c1_23 = arith.constant 1 : index
    %c0_24 = arith.constant 0 : index
    %18 = vector.load %arg3[%c0_20, %c0_21, %c0_22, %c1_23, %c0_24] : memref<1x4x9x9x8xbf16, #tpu.memory_space<vmem>>, vector<1x1x8x8x8xbf16>
    %19 = vector.shape_cast %18 : vector<1x1x8x8x8xbf16> to vector<8x8x8xbf16>
    %20 = vector.shape_cast %19 : vector<8x8x8xbf16> to vector<64x8xbf16>
    %c0_25 = arith.constant 0 : index
    %c2 = arith.constant 2 : index
    %c0_26 = arith.constant 0 : index
    %c0_27 = arith.constant 0 : index
    %21 = vector.load %arg4[%c0_25, %c2, %c0_26, %c0_27] : memref<3x3x8x16xbf16, #tpu.memory_space<vmem>>, vector<1x1x8x16xbf16>
    %22 = vector.shape_cast %21 : vector<1x1x8x16xbf16> to vector<8x16xbf16>
    %cst_28 = arith.constant dense<0.000000e+00> : vector<64x16xf32>
    %23 = tpu.matmul %20, %22, %cst_28 {dimension_numbers = #tpu.dot_dimension_numbers<[1], [0], [0], [1], [0, 0, 1, 1], [], []>} : vector<64x8xbf16>, vector<8x16xbf16>, vector<64x16xf32> -> vector<64x16xf32>
    %24 = arith.addf %17, %23 : vector<64x16xf32>
    %c0_29 = arith.constant 0 : index
    %c2_30 = arith.constant 2 : index
    %c0_31 = arith.constant 0 : index
    %c0_32 = arith.constant 0 : index
    %c0_33 = arith.constant 0 : index
    %25 = vector.load %arg3[%c0_29, %c2_30, %c0_31, %c0_32, %c0_33] : memref<1x4x9x9x8xbf16, #tpu.memory_space<vmem>>, vector<1x1x8x8x8xbf16>
    %26 = vector.shape_cast %25 : vector<1x1x8x8x8xbf16> to vector<8x8x8xbf16>
    %27 = vector.shape_cast %26 : vector<8x8x8xbf16> to vector<64x8xbf16>
    %c1_34 = arith.constant 1 : index
    %c0_35 = arith.constant 0 : index
    %c0_36 = arith.constant 0 : index
    %c0_37 = arith.constant 0 : index
    %28 = vector.load %arg4[%c1_34, %c0_35, %c0_36, %c0_37] : memref<3x3x8x16xbf16, #tpu.memory_space<vmem>>, vector<1x1x8x16xbf16>
    %29 = vector.shape_cast %28 : vector<1x1x8x16xbf16> to vector<8x16xbf16>
    %cst_38 = arith.constant dense<0.000000e+00> : vector<64x16xf32>
    %30 = tpu.matmul %27, %29, %cst_38 {dimension_numbers = #tpu.dot_dimension_numbers<[1], [0], [0], [1], [0, 0, 1, 1], [], []>} : vector<64x8xbf16>, vector<8x16xbf16>, vector<64x16xf32> -> vector<64x16xf32>
    %31 = arith.addf %24, %30 : vector<64x16xf32>
    %c0_39 = arith.constant 0 : index
    %c3 = arith.constant 3 : index
    %c0_40 = arith.constant 0 : index
    %c0_41 = arith.constant 0 : index
    %c0_42 = arith.constant 0 : index
    %32 = vector.load %arg3[%c0_39, %c3, %c0_40, %c0_41, %c0_42] : memref<1x4x9x9x8xbf16, #tpu.memory_space<vmem>>, vector<1x1x8x8x8xbf16>
    %33 = vector.shape_cast %32 : vector<1x1x8x8x8xbf16> to vector<8x8x8xbf16>
    %34 = vector.shape_cast %33 : vector<8x8x8xbf16> to vector<64x8xbf16>
    %c1_43 = arith.constant 1 : index
    %c1_44 = arith.constant 1 : index
    %c0_45 = arith.constant 0 : index
    %c0_46 = arith.constant 0 : index
    %35 = vector.load %arg4[%c1_43, %c1_44, %c0_45, %c0_46] : memref<3x3x8x16xbf16, #tpu.memory_space<vmem>>, vector<1x1x8x16xbf16>
    %36 = vector.shape_cast %35 : vector<1x1x8x16xbf16> to vector<8x16xbf16>
    %cst_47 = arith.constant dense<0.000000e+00> : vector<64x16xf32>
    %37 = tpu.matmul %34, %36, %cst_47 {dimension_numbers = #tpu.dot_dimension_numbers<[1], [0], [0], [1], [0, 0, 1, 1], [], []>} : vector<64x8xbf16>, vector<8x16xbf16>, vector<64x16xf32> -> vector<64x16xf32>
    %38 = arith.addf %31, %37 : vector<64x16xf32>
    %c0_48 = arith.constant 0 : index
    %c2_49 = arith.constant 2 : index
    %c0_50 = arith.constant 0 : index
    %c1_51 = arith.constant 1 : index
    %c0_52 = arith.constant 0 : index
    %39 = vector.load %arg3[%c0_48, %c2_49, %c0_50, %c1_51, %c0_52] : memref<1x4x9x9x8xbf16, #tpu.memory_space<vmem>>, vector<1x1x8x8x8xbf16>
    %40 = vector.shape_cast %39 : vector<1x1x8x8x8xbf16> to vector<8x8x8xbf16>
    %41 = vector.shape_cast %40 : vector<8x8x8xbf16> to vector<64x8xbf16>
    %c1_53 = arith.constant 1 : index
    %c2_54 = arith.constant 2 : index
    %c0_55 = arith.constant 0 : index
    %c0_56 = arith.constant 0 : index
    %42 = vector.load %arg4[%c1_53, %c2_54, %c0_55, %c0_56] : memref<3x3x8x16xbf16, #tpu.memory_space<vmem>>, vector<1x1x8x16xbf16>
    %43 = vector.shape_cast %42 : vector<1x1x8x16xbf16> to vector<8x16xbf16>
    %cst_57 = arith.constant dense<0.000000e+00> : vector<64x16xf32>
    %44 = tpu.matmul %41, %43, %cst_57 {dimension_numbers = #tpu.dot_dimension_numbers<[1], [0], [0], [1], [0, 0, 1, 1], [], []>} : vector<64x8xbf16>, vector<8x16xbf16>, vector<64x16xf32> -> vector<64x16xf32>
    %45 = arith.addf %38, %44 : vector<64x16xf32>
    %c0_58 = arith.constant 0 : index
    %c0_59 = arith.constant 0 : index
    %c1_60 = arith.constant 1 : index
    %c0_61 = arith.constant 0 : index
    %c0_62 = arith.constant 0 : index
    %46 = vector.load %arg3[%c0_58, %c0_59, %c1_60, %c0_61, %c0_62] : memref<1x4x9x9x8xbf16, #tpu.memory_space<vmem>>, vector<1x1x8x8x8xbf16>
    %47 = vector.shape_cast %46 : vector<1x1x8x8x8xbf16> to vector<8x8x8xbf16>
    %48 = vector.shape_cast %47 : vector<8x8x8xbf16> to vector<64x8xbf16>
    %c2_63 = arith.constant 2 : index
    %c0_64 = arith.constant 0 : index
    %c0_65 = arith.constant 0 : index
    %c0_66 = arith.constant 0 : index
    %49 = vector.load %arg4[%c2_63, %c0_64, %c0_65, %c0_66] : memref<3x3x8x16xbf16, #tpu.memory_space<vmem>>, vector<1x1x8x16xbf16>
    %50 = vector.shape_cast %49 : vector<1x1x8x16xbf16> to vector<8x16xbf16>
    %cst_67 = arith.constant dense<0.000000e+00> : vector<64x16xf32>
    %51 = tpu.matmul %48, %50, %cst_67 {dimension_numbers = #tpu.dot_dimension_numbers<[1], [0], [0], [1], [0, 0, 1, 1], [], []>} : vector<64x8xbf16>, vector<8x16xbf16>, vector<64x16xf32> -> vector<64x16xf32>
    %52 = arith.addf %45, %51 : vector<64x16xf32>
    %c0_68 = arith.constant 0 : index
    %c1_69 = arith.constant 1 : index
    %c1_70 = arith.constant 1 : index
    %c0_71 = arith.constant 0 : index
    %c0_72 = arith.constant 0 : index
    %53 = vector.load %arg3[%c0_68, %c1_69, %c1_70, %c0_71, %c0_72] : memref<1x4x9x9x8xbf16, #tpu.memory_space<vmem>>, vector<1x1x8x8x8xbf16>
    %54 = vector.shape_cast %53 : vector<1x1x8x8x8xbf16> to vector<8x8x8xbf16>
    %55 = vector.shape_cast %54 : vector<8x8x8xbf16> to vector<64x8xbf16>
    %c2_73 = arith.constant 2 : index
    %c1_74 = arith.constant 1 : index
    %c0_75 = arith.constant 0 : index
    %c0_76 = arith.constant 0 : index
    %56 = vector.load %arg4[%c2_73, %c1_74, %c0_75, %c0_76] : memref<3x3x8x16xbf16, #tpu.memory_space<vmem>>, vector<1x1x8x16xbf16>
    %57 = vector.shape_cast %56 : vector<1x1x8x16xbf16> to vector<8x16xbf16>
    %cst_77 = arith.constant dense<0.000000e+00> : vector<64x16xf32>
    %58 = tpu.matmul %55, %57, %cst_77 {dimension_numbers = #tpu.dot_dimension_numbers<[1], [0], [0], [1], [0, 0, 1, 1], [], []>} : vector<64x8xbf16>, vector<8x16xbf16>, vector<64x16xf32> -> vector<64x16xf32>
    %59 = arith.addf %52, %58 : vector<64x16xf32>
    %c0_78 = arith.constant 0 : index
    %c0_79 = arith.constant 0 : index
    %c1_80 = arith.constant 1 : index
    %c1_81 = arith.constant 1 : index
    %c0_82 = arith.constant 0 : index
    %60 = vector.load %arg3[%c0_78, %c0_79, %c1_80, %c1_81, %c0_82] : memref<1x4x9x9x8xbf16, #tpu.memory_space<vmem>>, vector<1x1x8x8x8xbf16>
    %61 = vector.shape_cast %60 : vector<1x1x8x8x8xbf16> to vector<8x8x8xbf16>
    %62 = vector.shape_cast %61 : vector<8x8x8xbf16> to vector<64x8xbf16>
    %c2_83 = arith.constant 2 : index
    %c2_84 = arith.constant 2 : index
    %c0_85 = arith.constant 0 : index
    %c0_86 = arith.constant 0 : index
    %63 = vector.load %arg4[%c2_83, %c2_84, %c0_85, %c0_86] : memref<3x3x8x16xbf16, #tpu.memory_space<vmem>>, vector<1x1x8x16xbf16>
    %64 = vector.shape_cast %63 : vector<1x1x8x16xbf16> to vector<8x16xbf16>
    %cst_87 = arith.constant dense<0.000000e+00> : vector<64x16xf32>
    %65 = tpu.matmul %62, %64, %cst_87 {dimension_numbers = #tpu.dot_dimension_numbers<[1], [0], [0], [1], [0, 0, 1, 1], [], []>} : vector<64x8xbf16>, vector<8x16xbf16>, vector<64x16xf32> -> vector<64x16xf32>
    %66 = arith.addf %59, %65 : vector<64x16xf32>
    %c0_88 = arith.constant 0 : index
    %c0_89 = arith.constant 0 : index
    %67 = vector.load %arg6[%c0_88, %c0_89] : memref<64x16xf32, #tpu.memory_space<vmem>>, vector<64x16xf32>
    tpu.vector_store %arg6[%c0_88, %c0_89], %66 {strides = array<i32>} : memref<64x16xf32, #tpu.memory_space<vmem>>, vector<64x16xf32>,
    %c0_i32_90 = arith.constant 0 : i32
    %68 = arith.cmpi eq, %arg2, %c0_i32_90 : i32
    %69 = arith.extui %68 : i1 to i32
    %c0_i32_91 = arith.constant 0 : i32
    %70 = arith.cmpi ne, %69, %c0_i32_91 : i32
    scf.if %70 {
      %c0_92 = arith.constant 0 : index
      %c0_93 = arith.constant 0 : index
      %c0_94 = arith.constant 0 : index
      %71 = vector.load %arg5[%c0_92, %c0_93, %c0_94] : memref<1x64x16xf32, #tpu.memory_space<vmem>>, vector<1x64x16xf32>
      %72 = vector.shape_cast %71 : vector<1x64x16xf32> to vector<64x16xf32>
      %73 = vector.shape_cast %66 : vector<64x16xf32> to vector<1x64x16xf32>
      tpu.vector_store %arg5[%c0_92, %c0_93, %c0_94], %73 {strides = array<i32>} : memref<1x64x16xf32, #tpu.memory_space<vmem>>, vector<1x64x16xf32>,
    } else {
    }
    return
  }
  func.func @transform_0(%arg0: i32, %arg1: i32, %arg2: i32) -> (i32, i32, i32, i32, i32) {
    %c0_i32 = arith.constant 0 : i32
    %c0_i32_0 = arith.constant 0 : i32
    %c0_i32_1 = arith.constant 0 : i32
    %c0_i32_2 = arith.constant 0 : i32
    return %arg0, %c0_i32, %c0_i32_0, %c0_i32_1, %arg2 : i32, i32, i32, i32, i32
  }
  func.func @transform_1(%arg0: i32, %arg1: i32, %arg2: i32) -> (i32, i32, i32, i32) {
    %c0_i32 = arith.constant 0 : i32
    %c0_i32_0 = arith.constant 0 : i32
    %c0_i32_1 = arith.constant 0 : i32
    return %c0_i32, %c0_i32_0, %arg2, %arg1 : i32, i32, i32, i32
  }
  func.func @transform_2(%arg0: i32, %arg1: i32, %arg2: i32) -> (i32, i32, i32) {
    %c0_i32 = arith.constant 0 : i32
    %c0_i32_0 = arith.constant 0 : i32
    return %arg0, %c0_i32, %arg1 : i32, i32, i32
  }
}

</mosaic_0001>

<llo_original>
// kernel: a_call__.3
$region0: #{a_call__.3}
  #allocation0 [shape = 'u32[]', space=smem, size = 0x4, offset = 0x4, fixed_abs, tag = 'smem constant byte address 0x4 - core index']
  #allocation1 [shape = 'u32[144,128]{1,0:T(1,128)}', space=vmem, size = 0x12000, scoped, tag = 'internal scratch']
  %s0 = inlined_call_operand.vmem [shape: f32[32,16], index: 0, kind: input, shape index: {}, may-alias: {0,1}]
  %s1 = inlined_call_operand.vmem [shape: f32[32,16], index: 1, kind: input, shape index: {}, may-alias: {0,1}]
  %s2 = inlined_call_operand.vmem [shape: f32[2,16,16,4], index: 2, kind: input, shape index: {}]
  %s3 = inlined_call_operand.vmem [shape: bf16[2,32,32,4], index: 3, kind: output, shape index: {}]
  %s4 = sld [smem:[#allocation0]]
  $region45: #{a_call__.3} parent=0
    _
  %s6 = ssub.s32 1, %s4
  %s7 = scalar_select 0, %s6, %s4
  loop: start=0, step=1, limit=4
  $region2: #{a_call__.3} parent=0 // loop_pre_header
    _
  $region3: #{a_call__.3} parent=0 // loop_header
    %s9 = sphi 0, %s13
    %p10 = scmp.ge.s32.totalorder %s9, 4
    %s16 = sphi 0, %s28
    %s17 = sphi 0, %s24
    %s18 = sphi 0, %s16
    %s19 = sphi 0, %s17
    %s20 = sphi 0, %s18
    %s21 = sphi 0, %s19
    %s29 = sphi 0, %s29
    %s31 = sphi 0, %s29
    %s32 = sphi 0, %s31
    %s46 = sphi 0, %s32
    %s50 = sphi 0, %s50
    %s52 = sphi 0, %s50
    %s53 = sphi 0, %s52
    %s67 = sphi 0, %s53
    %s75 = sphi 0, %s77
    %s78 = sphi 0, %s75
    %s79 = sphi 0, %s78
    %s95 = sphi 0, %s79
    %s103 = sphi 0, %s105
    %s106 = sphi 0, %s103
    %s107 = sphi 0, %s106
    %s123 = sphi 0, %s107
  $region4: #{a_call__.3} parent=0 // loop_header_branch
    %12 = sbr.rel (%p10) target = $region8
  $region5: #{a_call__.3} parent=0 // loop_body
    %s14 = ssub.s32 %s9, 1
    %s15 = ssub.s32 %s9, 2
    %s22 = sadd.s32 1, %s17
    %p23 = scmp.ge.s32.totalorder %s22, 1
    %s24 = scalar_select %p23, 0, %s22
    %s25 = sadd.s32 1, %s16
    %s26 = scalar_select %p23, %s25, %s16
    %p27 = scmp.ge.s32.totalorder %s26, 2
    %s28 = scalar_select %p27, 0, %s26
    %s30 = sadd.s32 %s29, 1
    %p33 = scmp.eq.s32.totalorder %s9, 1
    %p34 = scmp.ne.s32.totalorder %s29, %s31
    %p35 = scmp.eq.s32.totalorder %s9, 0
    %p36 = por %p34, %p35
    %p37 = scmp.ne.s32.totalorder %s29, %s31
    %p38 = scmp.eq.s32.totalorder %s14, 1
    %p39 = por %p37, %p38
    %p40 = scmp.ne.s32.totalorder %s31, %s32
    %p41 = scmp.eq.s32.totalorder %s14, 0
    %p42 = por %p40, %p41
    %p43 = scmp.ne.s32.totalorder %s31, %s32
    %p44 = scmp.eq.s32.totalorder %s15, 1
    %p45 = por %p43, %p44
    %p47 = scmp.ne.s32.totalorder %s32, %s46
    %p48 = scmp.eq.s32.totalorder %s15, 0
    %p49 = por %p47, %p48
    %s51 = sadd.s32 %s50, 1
    %p54 = scmp.eq.s32.totalorder %s9, 1
    %p55 = scmp.ne.s32.totalorder %s50, %s52
    %p56 = scmp.eq.s32.totalorder %s9, 0
    %p57 = por %p55, %p56
    %p58 = scmp.ne.s32.totalorder %s50, %s52
    %p59 = scmp.eq.s32.totalorder %s14, 1
    %p60 = por %p58, %p59
    %p61 = scmp.ne.s32.totalorder %s52, %s53
    %p62 = scmp.eq.s32.totalorder %s14, 0
    %p63 = por %p61, %p62
    %p64 = scmp.ne.s32.totalorder %s52, %s53
    %p65 = scmp.eq.s32.totalorder %s15, 1
    %p66 = por %p64, %p65
    %p68 = scmp.ne.s32.totalorder %s53, %s67
    %p69 = scmp.eq.s32.totalorder %s15, 0
    %p70 = por %p68, %p69
    %s71 = ssub.s32 %s16, %s28
    %s72 = ssub.s32 %s17, %s24
    %s73 = sor.u32 %s71, %s72
    %p74 = scmp.eq.s32.totalorder %s73, 0
    %s76 = sadd.s32 %s75, 1
    %s77 = scalar_select %p74, %s75, %s76
    %p80 = pneg %p74
    %p81 = scmp.eq.s32.totalorder %s9, 1
    %p82 = por %p80, %p81
    %p83 = scmp.ne.s32.totalorder %s75, %s78
    %p84 = scmp.eq.s32.totalorder %s9, 0
    %p85 = por %p83, %p84
    %p86 = scmp.ne.s32.totalorder %s75, %s78
    %p87 = scmp.eq.s32.totalorder %s14, 1
    %p88 = por %p86, %p87
    %p89 = scmp.ne.s32.totalorder %s78, %s79
    %p90 = scmp.eq.s32.totalorder %s14, 0
    %p91 = por %p89, %p90
    %p92 = scmp.ne.s32.totalorder %s78, %s79
    %p93 = scmp.eq.s32.totalorder %s15, 1
    %p94 = por %p92, %p93
    %p96 = scmp.ne.s32.totalorder %s79, %s95
    %p97 = scmp.eq.s32.totalorder %s15, 0
    %p98 = por %p96, %p97
    %s99 = ssub.s32 %s16, %s28
    %s100 = ssub.s32 %s17, %s24
    %s101 = sor.u32 %s99, %s100
    %p102 = scmp.eq.s32.totalorder %s101, 0
    %s104 = sadd.s32 %s103, 1
    %s105 = scalar_select %p102, %s103, %s104
    %p108 = pneg %p102
    %p109 = scmp.eq.s32.totalorder %s9, 1
    %p110 = por %p108, %p109
    %p111 = scmp.ne.s32.totalorder %s103, %s106
    %p112 = scmp.eq.s32.totalorder %s9, 0
    %p113 = por %p111, %p112
    %p114 = scmp.ne.s32.totalorder %s103, %s106
    %p115 = scmp.eq.s32.totalorder %s14, 1
    %p116 = por %p114, %p115
    %p117 = scmp.ne.s32.totalorder %s106, %s107
    %p118 = scmp.eq.s32.totalorder %s14, 0
    %p119 = por %p117, %p118
    %p120 = scmp.ne.s32.totalorder %s106, %s107
    %p121 = scmp.eq.s32.totalorder %s15, 1
    %p122 = por %p120, %p121
    %p124 = scmp.ne.s32.totalorder %s107, %s123
    %p125 = scmp.eq.s32.totalorder %s15, 0
    %p126 = por %p124, %p125
    %p127 = scmp.le.s32.totalorder 1, %s9
    %p128 = scmp.lt.s32.totalorder %s9, 3
    %p129 = pnand %p127, %p128
    %p130 = pneg %p129
    // Predicated region
    $region9: #{a_call__.3} parent=5 // pred_check
      _
    $region10: #{a_call__.3} parent=5 // pred_check_branch
      %132 = sbr.rel (%p129) target = $region12
    $region11: #{a_call__.3} parent=5 // pred_region
      %s133 = ssub.s32 %s9, 1
      // Predicated region
      $region13: #{a_call__.3} parent=11 // pred_check
        %p134 = pneg %p42
      $region14: #{a_call__.3} parent=11 // pred_check_branch
        %136 = sbr.rel (%p134) target = $region16
      $region15: #{a_call__.3} parent=11 // pred_region
        _
      $region16: #{a_call__.3} parent=11 // pred_fallthru
        _
      // Predicated region
      $region17: #{a_call__.3} parent=11 // pred_check
        %p137 = pneg %p63
      $region18: #{a_call__.3} parent=11 // pred_check_branch
        %139 = sbr.rel (%p137) target = $region20
      $region19: #{a_call__.3} parent=11 // pred_region
        _
      $region20: #{a_call__.3} parent=11 // pred_fallthru
        _
    $region12: #{a_call__.3} parent=5 // pred_fallthru
      _
    %p140 = scmp.lt.s32.totalorder %s9, 2
    // Predicated region
    $region21: #{a_call__.3} parent=5 // pred_check
      %p141 = pneg %p140
    $region22: #{a_call__.3} parent=5 // pred_check_branch
      %143 = sbr.rel (%p141) target = $region24
    $region23: #{a_call__.3} parent=5 // pred_region
      // Predicated region
      $region25: #{a_call__.3} parent=23 // pred_check
        %p144 = pneg %p85
      $region26: #{a_call__.3} parent=23 // pred_check_branch
        %146 = sbr.rel (%p144) target = $region28
      $region27: #{a_call__.3} parent=23 // pred_region
        %p147 = scmp.lt.s32.totalorder %s16, 1
        %s148 = scalar_select %p147, %s16, 1
        %p149 = scmp.lt.s32.totalorder %s17, 0
        %s150 = scalar_select %p149, %s17, 0
        %s151 = smul.addr %s148, 32
        %s152 = sadd.s32 %s150, %s151
        %s153 = smul.addr %s152, 8
        %s154 = scalar_lea.vmem %s2, %s153
      $region28: #{a_call__.3} parent=23 // pred_fallthru
        _
    $region24: #{a_call__.3} parent=5 // pred_fallthru
      _
    %p155 = scmp.le.s32.totalorder 1, %s9
    %p156 = scmp.lt.s32.totalorder %s9, 3
    %p157 = pnand %p155, %p156
    %p158 = pneg %p157
    // Predicated region
    $region29: #{a_call__.3} parent=5 // pred_check
      _
    $region30: #{a_call__.3} parent=5 // pred_check_branch
      %160 = sbr.rel (%p157) target = $region32
    $region31: #{a_call__.3} parent=5 // pred_region
      %s161 = ssub.s32 %s9, 1
      %p162 = pneg %p42
      %p163 = pneg %p39
      %p164 = pneg %p63
      %p165 = pneg %p60
      %p166 = scmp.lt.s32.totalorder %s18, 1
      %s167 = scalar_select %p166, %s18, 1
      %p168 = scmp.lt.s32.totalorder %s19, 0
      %s169 = scalar_select %p168, %s19, 0
      %s170 = smul.addr %s167, 32
      %s171 = sadd.s32 %s169, %s170
      %s172 = smul.addr %s171, 8
      %s173 = scalar_lea.vmem %s2, %s172
      %p174 = pneg %p91
      %p175 = pneg %p88
      %p176 = pneg %p119
      %p177 = pneg %p116
      %p178 = scmp.lt.s32.totalorder %s18, 1
      %s179 = scalar_select %p178, %s18, 1
      %p180 = scmp.lt.s32.totalorder %s19, 0
      %s181 = scalar_select %p180, %s19, 0
      %s182 = smul.addr %s179, 128
      %s183 = sadd.s32 %s181, %s182
      %s184 = smul.addr %s183, 4
      %s185 = scalar_lea.vmem %s3, %s184
      %p186 = scmp.lt.s32.totalorder %s18, 1
      %s187 = scalar_select %p186, %s18, 1
      %p188 = scmp.lt.s32.totalorder %s19, 0
      %s189 = scalar_select %p188, %s19, 0
      %s190 = smul.addr %s187, 32
      %s191 = sadd.s32 %s189, %s190
      %s192 = smul.addr %s191, 8
      %s193 = scalar_lea.vmem %s2, %s192
      %p194 = scmp.lt.s32.totalorder %s18, 1
      %s195 = scalar_select %p194, %s18, 1
      %p196 = scmp.lt.s32.totalorder %s19, 0
      %s197 = scalar_select %p196, %s19, 0
      %s198 = smul.addr %s195, 128
      %s199 = sadd.s32 %s197, %s198
      %s200 = smul.addr %s199, 4
      %s201 = scalar_lea.vmem %s3, %s200
      %v203 = vld [vmem:[%s0] sm:$0xff]
      %v204 = vld [vmem:[%s0 + $0x8] sm:$0xff]
      %v205 = vld [vmem:[%s0 + $0x10] sm:$0xff]
      %v206 = vld [vmem:[%s0 + $0x18] sm:$0xff]
      %v207 = vpack.c.bf16 %v204, %v203
      %v208 = vpack.c.bf16 %v206, %v205
      %v209 = vld [vmem:[%s1] sm:$0xff]
      %v210 = vld [vmem:[%s1 + $0x8] sm:$0xff]
      %v211 = vld [vmem:[%s1 + $0x10] sm:$0xff]
      %v212 = vld [vmem:[%s1 + $0x18] sm:$0xff]
      %v213 = vpack.c.bf16 %v210, %v209
      %v214 = vpack.c.bf16 %v212, %v211
      %v215 = vld [vmem:[%s193] sm:$0xff]
      %v216 = vld [vmem:[%s193 + $0x8] sm:$0xff]
      %v217 = vld [vmem:[%s193 + $0x10] sm:$0xff]
      %v218 = vld [vmem:[%s193 + $0x18] sm:$0xff]
      %v219 = vld [vmem:[%s193 + $0x20] sm:$0xff]
      %v220 = vld [vmem:[%s193 + $0x28] sm:$0xff]
      %v221 = vld [vmem:[%s193 + $0x30] sm:$0xff]
      %v222 = vld [vmem:[%s193 + $0x38] sm:$0xff]
      %v223 = vld [vmem:[%s193 + $0x40] sm:$0xff]
      %v224 = vld [vmem:[%s193 + $0x48] sm:$0xff]
      %v225 = vld [vmem:[%s193 + $0x50] sm:$0xff]
      %v226 = vld [vmem:[%s193 + $0x58] sm:$0xff]
      %v227 = vld [vmem:[%s193 + $0x60] sm:$0xff]
      %v228 = vld [vmem:[%s193 + $0x68] sm:$0xff]
      %v229 = vld [vmem:[%s193 + $0x70] sm:$0xff]
      %v230 = vld [vmem:[%s193 + $0x78] sm:$0xff]
      %v231 = vld [vmem:[%s193 + $0x80] sm:$0xff]
      %v232 = vld [vmem:[%s193 + $0x88] sm:$0xff]
      %v233 = vld [vmem:[%s193 + $0x90] sm:$0xff]
      %v234 = vld [vmem:[%s193 + $0x98] sm:$0xff]
      %v235 = vld [vmem:[%s193 + $0xa0] sm:$0xff]
      %v236 = vld [vmem:[%s193 + $0xa8] sm:$0xff]
      %v237 = vld [vmem:[%s193 + $0xb0] sm:$0xff]
      %v238 = vld [vmem:[%s193 + $0xb8] sm:$0xff]
      %v239 = vld [vmem:[%s193 + $0xc0] sm:$0xff]
      %v240 = vld [vmem:[%s193 + $0xc8] sm:$0xff]
      %v241 = vld [vmem:[%s193 + $0xd0] sm:$0xff]
      %v242 = vld [vmem:[%s193 + $0xd8] sm:$0xff]
      %v243 = vld [vmem:[%s193 + $0xe0] sm:$0xff]
      %v244 = vld [vmem:[%s193 + $0xe8] sm:$0xff]
      %v245 = vld [vmem:[%s193 + $0xf0] sm:$0xff]
      %v246 = vld [vmem:[%s193 + $0xf8] sm:$0xff]
      %v247 = vpack.c.bf16 %v216, %v215
      %v248 = vpack.c.bf16 %v218, %v217
      %v249 = vpack.c.bf16 %v220, %v219
      %v250 = vpack.c.bf16 %v222, %v221
      %v251 = vpack.c.bf16 %v224, %v223
      %v252 = vpack.c.bf16 %v226, %v225
      %v253 = vpack.c.bf16 %v228, %v227
      %v254 = vpack.c.bf16 %v230, %v229
      %v255 = vpack.c.bf16 %v232, %v231
      %v256 = vpack.c.bf16 %v234, %v233
      %v257 = vpack.c.bf16 %v236, %v235
      %v258 = vpack.c.bf16 %v238, %v237
      %v259 = vpack.c.bf16 %v240, %v239
      %v260 = vpack.c.bf16 %v242, %v241
      %v261 = vpack.c.bf16 %v244, %v243
      %v262 = vpack.c.bf16 %v246, %v245
      %v263 = vcombine.low %v247, %v251
      %v264 = vcombine.high %v247, %v251
      %v266 = vunpack.c.l.s4 1983009808
      %v267 = vunpack.c.0.s8 %v266
      %v268 = vlaneseq
      %v269 = vshrl.u32 %v268, 7
      %v270 = vsub.s32 %v267, %v269
      %v271 = vrot.slane %v263, %v270
      %v273 = vunpack.c.l.s4 1983009808
      %v274 = vunpack.c.0.s8 %v273
      %v275 = vlaneseq
      %v276 = vshrl.u32 %v275, 7
      %v277 = vsub.s32 %v274, %v276
      %v278 = vrot.slane %v264, %v277
      %v279 = vcombine.low %v249, %v253
      %v280 = vcombine.high %v249, %v253
      %v282 = vunpack.c.l.s4 1983009808
      %v283 = vunpack.c.0.s8 %v282
      %v284 = vlaneseq
      %v285 = vshrl.u32 %v284, 7
      %v286 = vsub.s32 %v283, %v285
      %v287 = vrot.slane %v279, %v286
      %v289 = vunpack.c.l.s4 1983009808
      %v290 = vunpack.c.0.s8 %v289
      %v291 = vlaneseq
      %v292 = vshrl.u32 %v291, 7
      %v293 = vsub.s32 %v290, %v292
      %v294 = vrot.slane %v280, %v293
      %v295 = vcombine.low %v255, %v259
      %v296 = vcombine.high %v255, %v259
      %v298 = vunpack.c.l.s4 1983009808
      %v299 = vunpack.c.0.s8 %v298
      %v300 = vlaneseq
      %v301 = vshrl.u32 %v300, 7
      %v302 = vsub.s32 %v299, %v301
      %v303 = vrot.slane %v295, %v302
      %v305 = vunpack.c.l.s4 1983009808
      %v306 = vunpack.c.0.s8 %v305
      %v307 = vlaneseq
      %v308 = vshrl.u32 %v307, 7
      %v309 = vsub.s32 %v306, %v308
      %v310 = vrot.slane %v296, %v309
      %v311 = vcombine.low %v257, %v261
      %v312 = vcombine.high %v257, %v261
      %v314 = vunpack.c.l.s4 1983009808
      %v315 = vunpack.c.0.s8 %v314
      %v316 = vlaneseq
      %v317 = vshrl.u32 %v316, 7
      %v318 = vsub.s32 %v315, %v317
      %v319 = vrot.slane %v311, %v318
      %v321 = vunpack.c.l.s4 1983009808
      %v322 = vunpack.c.0.s8 %v321
      %v323 = vlaneseq
      %v324 = vshrl.u32 %v323, 7
      %v325 = vsub.s32 %v322, %v324
      %v326 = vrot.slane %v312, %v325
      %v327 = vcombine.low %v271, %v287
      %v328 = vcombine.high %v271, %v287
      %v330 = vunpack.c.l.s4 1934713408
      %v331 = vunpack.c.0.s8 %v330
      %v332 = vlaneseq
      %v333 = vshrl.u32 %v332, 7
      %v334 = vsub.s32 %v331, %v333
      %v335 = vrot.slane %v327, %v334
      %v337 = vunpack.c.l.s4 1934713408
      %v338 = vunpack.c.0.s8 %v337
      %v339 = vlaneseq
      %v340 = vshrl.u32 %v339, 7
      %v341 = vsub.s32 %v338, %v340
      %v342 = vrot.slane %v328, %v341
      %v343 = vcombine.low %v278, %v294
      %v344 = vcombine.high %v278, %v294
      %v346 = vunpack.c.l.s4 1934713408
      %v347 = vunpack.c.0.s8 %v346
      %v348 = vlaneseq
      %v349 = vshrl.u32 %v348, 7
      %v350 = vsub.s32 %v347, %v349
      %v351 = vrot.slane %v343, %v350
      %v353 = vunpack.c.l.s4 1934713408
      %v354 = vunpack.c.0.s8 %v353
      %v355 = vlaneseq
      %v356 = vshrl.u32 %v355, 7
      %v357 = vsub.s32 %v354, %v356
      %v358 = vrot.slane %v344, %v357
      %v359 = vcombine.low %v303, %v319
      %v360 = vcombine.high %v303, %v319
      %v362 = vunpack.c.l.s4 1934713408
      %v363 = vunpack.c.0.s8 %v362
      %v364 = vlaneseq
      %v365 = vshrl.u32 %v364, 7
      %v366 = vsub.s32 %v363, %v365
      %v367 = vrot.slane %v359, %v366
      %v369 = vunpack.c.l.s4 1934713408
      %v370 = vunpack.c.0.s8 %v369
      %v371 = vlaneseq
      %v372 = vshrl.u32 %v371, 7
      %v373 = vsub.s32 %v370, %v372
      %v374 = vrot.slane %v360, %v373
      %v375 = vcombine.low %v310, %v326
      %v376 = vcombine.high %v310, %v326
      %v378 = vunpack.c.l.s4 1934713408
      %v379 = vunpack.c.0.s8 %v378
      %v380 = vlaneseq
      %v381 = vshrl.u32 %v380, 7
      %v382 = vsub.s32 %v379, %v381
      %v383 = vrot.slane %v375, %v382
      %v385 = vunpack.c.l.s4 1934713408
      %v386 = vunpack.c.0.s8 %v385
      %v387 = vlaneseq
      %v388 = vshrl.u32 %v387, 7
      %v389 = vsub.s32 %v386, %v388
      %v390 = vrot.slane %v376, %v389
      %v391 = vcombine.low %v335, %v367
      %v392 = vcombine.high %v335, %v367
      %v393 = vcombine.low %v342, %v374
      %v394 = vcombine.high %v342, %v374
      %v395 = vcombine.low %v351, %v383
      %v396 = vcombine.high %v351, %v383
      %v397 = vcombine.low %v358, %v390
      %v398 = vcombine.high %v358, %v390
      %v399 = vcombine.low %v248, %v252
      %v400 = vcombine.high %v248, %v252
      %v402 = vunpack.c.l.s4 1983009808
      %v403 = vunpack.c.0.s8 %v402
      %v404 = vlaneseq
      %v405 = vshrl.u32 %v404, 7
      %v406 = vsub.s32 %v403, %v405
      %v407 = vrot.slane %v399, %v406
      %v409 = vunpack.c.l.s4 1983009808
      %v410 = vunpack.c.0.s8 %v409
      %v411 = vlaneseq
      %v412 = vshrl.u32 %v411, 7
      %v413 = vsub.s32 %v410, %v412
      %v414 = vrot.slane %v400, %v413
      %v415 = vcombine.low %v250, %v254
      %v416 = vcombine.high %v250, %v254
      %v418 = vunpack.c.l.s4 1983009808
      %v419 = vunpack.c.0.s8 %v418
      %v420 = vlaneseq
      %v421 = vshrl.u32 %v420, 7
      %v422 = vsub.s32 %v419, %v421
      %v423 = vrot.slane %v415, %v422
      %v425 = vunpack.c.l.s4 1983009808
      %v426 = vunpack.c.0.s8 %v425
      %v427 = vlaneseq
      %v428 = vshrl.u32 %v427, 7
      %v429 = vsub.s32 %v426, %v428
      %v430 = vrot.slane %v416, %v429
      %v431 = vcombine.low %v256, %v260
      %v432 = vcombine.high %v256, %v260
      %v434 = vunpack.c.l.s4 1983009808
      %v435 = vunpack.c.0.s8 %v434
      %v436 = vlaneseq
      %v437 = vshrl.u32 %v436, 7
      %v438 = vsub.s32 %v435, %v437
      %v439 = vrot.slane %v431, %v438
      %v441 = vunpack.c.l.s4 1983009808
      %v442 = vunpack.c.0.s8 %v441
      %v443 = vlaneseq
      %v444 = vshrl.u32 %v443, 7
      %v445 = vsub.s32 %v442, %v444
      %v446 = vrot.slane %v432, %v445
      %v447 = vcombine.low %v258, %v262
      %v448 = vcombine.high %v258, %v262
      %v450 = vunpack.c.l.s4 1983009808
      %v451 = vunpack.c.0.s8 %v450
      %v452 = vlaneseq
      %v453 = vshrl.u32 %v452, 7
      %v454 = vsub.s32 %v451, %v453
      %v455 = vrot.slane %v447, %v454
      %v457 = vunpack.c.l.s4 1983009808
      %v458 = vunpack.c.0.s8 %v457
      %v459 = vlaneseq
      %v460 = vshrl.u32 %v459, 7
      %v461 = vsub.s32 %v458, %v460
      %v462 = vrot.slane %v448, %v461
      %v463 = vcombine.low %v407, %v423
      %v464 = vcombine.high %v407, %v423
      %v466 = vunpack.c.l.s4 1934713408
      %v467 = vunpack.c.0.s8 %v466
      %v468 = vlaneseq
      %v469 = vshrl.u32 %v468, 7
      %v470 = vsub.s32 %v467, %v469
      %v471 = vrot.slane %v463, %v470
      %v473 = vunpack.c.l.s4 1934713408
      %v474 = vunpack.c.0.s8 %v473
      %v475 = vlaneseq
      %v476 = vshrl.u32 %v475, 7
      %v477 = vsub.s32 %v474, %v476
      %v478 = vrot.slane %v464, %v477
      %v479 = vcombine.low %v414, %v430
      %v480 = vcombine.high %v414, %v430
      %v482 = vunpack.c.l.s4 1934713408
      %v483 = vunpack.c.0.s8 %v482
      %v484 = vlaneseq
      %v485 = vshrl.u32 %v484, 7
      %v486 = vsub.s32 %v483, %v485
      %v487 = vrot.slane %v479, %v486
      %v489 = vunpack.c.l.s4 1934713408
      %v490 = vunpack.c.0.s8 %v489
      %v491 = vlaneseq
      %v492 = vshrl.u32 %v491, 7
      %v493 = vsub.s32 %v490, %v492
      %v494 = vrot.slane %v480, %v493
      %v495 = vcombine.low %v439, %v455
      %v496 = vcombine.high %v439, %v455
      %v498 = vunpack.c.l.s4 1934713408
      %v499 = vunpack.c.0.s8 %v498
      %v500 = vlaneseq
      %v501 = vshrl.u32 %v500, 7
      %v502 = vsub.s32 %v499, %v501
      %v503 = vrot.slane %v495, %v502
      %v505 = vunpack.c.l.s4 1934713408
      %v506 = vunpack.c.0.s8 %v505
      %v507 = vlaneseq
      %v508 = vshrl.u32 %v507, 7
      %v509 = vsub.s32 %v506, %v508
      %v510 = vrot.slane %v496, %v509
      %v511 = vcombine.low %v446, %v462
      %v512 = vcombine.high %v446, %v462
      %v514 = vunpack.c.l.s4 1934713408
      %v515 = vunpack.c.0.s8 %v514
      %v516 = vlaneseq
      %v517 = vshrl.u32 %v516, 7
      %v518 = vsub.s32 %v515, %v517
      %v519 = vrot.slane %v511, %v518
      %v521 = vunpack.c.l.s4 1934713408
      %v522 = vunpack.c.0.s8 %v521
      %v523 = vlaneseq
      %v524 = vshrl.u32 %v523, 7
      %v525 = vsub.s32 %v522, %v524
      %v526 = vrot.slane %v512, %v525
      %v527 = vcombine.low %v471, %v503
      %v528 = vcombine.high %v471, %v503
      %v529 = vcombine.low %v478, %v510
      %v530 = vcombine.high %v478, %v510
      %v531 = vcombine.low %v487, %v519
      %v532 = vcombine.high %v487, %v519
      %v533 = vcombine.low %v494, %v526
      %v534 = vcombine.high %v494, %v526
      %v537 = vpack.i.b16 %v527, %v391
      %v538 = vshrl.u32 %v391, 16
      %v539 = vshrl.u32 %v527, 16
      %v540 = vpack.i.b16 %v539, %v538
      %v543 = vpack.i.b16 %v528, %v392
      %v544 = vshrl.u32 %v392, 16
      %v545 = vshrl.u32 %v528, 16
      %v546 = vpack.i.b16 %v545, %v544
      %v549 = vpack.i.b16 %v529, %v393
      %v550 = vshrl.u32 %v393, 16
      %v551 = vshrl.u32 %v529, 16
      %v552 = vpack.i.b16 %v551, %v550
      %v555 = vpack.i.b16 %v530, %v394
      %v556 = vshrl.u32 %v394, 16
      %v557 = vshrl.u32 %v530, 16
      %v558 = vpack.i.b16 %v557, %v556
      %v561 = vpack.i.b16 %v531, %v395
      %v562 = vshrl.u32 %v395, 16
      %v563 = vshrl.u32 %v531, 16
      %v564 = vpack.i.b16 %v563, %v562
      %v567 = vpack.i.b16 %v532, %v396
      %v568 = vshrl.u32 %v396, 16
      %v569 = vshrl.u32 %v532, 16
      %v570 = vpack.i.b16 %v569, %v568
      %v573 = vpack.i.b16 %v533, %v397
      %v574 = vshrl.u32 %v397, 16
      %v575 = vshrl.u32 %v533, 16
      %v576 = vpack.i.b16 %v575, %v574
      %v579 = vpack.i.b16 %v534, %v398
      %v580 = vshrl.u32 %v398, 16
      %v581 = vshrl.u32 %v534, 16
      %v582 = vpack.i.b16 %v581, %v580
      %583 = vrot.lane.b32.xlu0 %v540, 4
      %v584 = vpop.permute.xlu0 %583
      %585 = vrot.lane.b32.xlu0 %v543, 8
      %v586 = vpop.permute.xlu0 %585
      %587 = vrot.lane.b32.xlu0 %v546, 12
      %v588 = vpop.permute.xlu0 %587
      %589 = vrot.lane.b32.xlu0 %v549, 16
      %v590 = vpop.permute.xlu0 %589
      %591 = vrot.lane.b32.xlu0 %v552, 20
      %v592 = vpop.permute.xlu0 %591
      %593 = vrot.lane.b32.xlu0 %v555, 24
      %v594 = vpop.permute.xlu0 %593
      %595 = vrot.lane.b32.xlu0 %v558, 28
      %v596 = vpop.permute.xlu0 %595
      %597 = vrot.lane.b32.xlu0 %v561, 32
      %v598 = vpop.permute.xlu0 %597
      %599 = vrot.lane.b32.xlu0 %v564, 36
      %v600 = vpop.permute.xlu0 %599
      %601 = vrot.lane.b32.xlu0 %v567, 40
      %v602 = vpop.permute.xlu0 %601
      %603 = vrot.lane.b32.xlu0 %v570, 44
      %v604 = vpop.permute.xlu0 %603
      %605 = vrot.lane.b32.xlu0 %v573, 48
      %v606 = vpop.permute.xlu0 %605
      %607 = vrot.lane.b32.xlu0 %v576, 52
      %v608 = vpop.permute.xlu0 %607
      %609 = vrot.lane.b32.xlu0 %v579, 56
      %v610 = vpop.permute.xlu0 %609
      %611 = vrot.lane.b32.xlu0 %v582, 60
      %v612 = vpop.permute.xlu0 %611
      %vm613 = vcmask 31744
      %v616 = vsel %vm613, %v537, %v584
      %vm617 = vcmask 64512
      %v619 = vsel %vm617, %v616, %v586
      %vm620 = vcmask 97280
      %v622 = vsel %vm620, %v619, %v588
      %vm623 = vcmask 130048
      %v625 = vsel %vm623, %v622, %v590
      %vm626 = vcmask 162816
      %v628 = vsel %vm626, %v625, %v592
      %vm629 = vcmask 195584
      %v631 = vsel %vm629, %v628, %v594
      %vm632 = vcmask 228352
      %v634 = vsel %vm632, %v631, %v596
      %vm635 = vcmask 261120
      %v637 = vsel %vm635, %v634, %v598
      %vm638 = vcmask 293888
      %v640 = vsel %vm638, %v637, %v600
      %vm641 = vcmask 326656
      %v643 = vsel %vm641, %v640, %v602
      %vm644 = vcmask 359424
      %v646 = vsel %vm644, %v643, %v604
      %vm647 = vcmask 392192
      %v649 = vsel %vm647, %v646, %v606
      %vm650 = vcmask 424960
      %v652 = vsel %vm650, %v649, %v608
      %vm653 = vcmask 457728
      %v655 = vsel %vm653, %v652, %v610
      %vm656 = vcmask 490496
      %v658 = vsel %vm656, %v655, %v612
      %v661 = vsel %vm623, %v207, 0
      %v664 = vsel %vm623, %v208, 0
      %666 = vmatprep.subr.bf16.mxu0 0
      %667 = vmatpush1.bf16.msra.mxu0 %v658
      %668 = vmatprep.subr.bf16.mxu0 0
      %669 = vmatpush1.bf16.msra.mxu0 0
      %670 = vmatprep.subr.bf16.mxu0 0
      %671 = vmatpush1.bf16.msra.mxu0 0
      %672 = vmatprep.subr.bf16.mxu0 0
      %673 = vmatpush1.bf16.msra.mxu0 0
      %674 = vmatprep.subr.bf16.mxu0 0
      %675 = vmatpush1.bf16.msra.mxu0 0
      %676 = vmatprep.subr.bf16.mxu0 0
      %677 = vmatpush1.bf16.msra.mxu0 0
      %678 = vmatprep.subr.bf16.mxu0 0
      %679 = vmatpush1.bf16.msra.mxu0 0
      %680 = vmatprep.subr.bf16.mxu0 0
      %681 = vmatpush1.bf16.msra.mxu0 0
      %682 = vmatprep.subr.bf16.mxu0 0
      %683 = vmatpush1.bf16.msra.mxu0 0
      %684 = vmatprep.subr.bf16.mxu0 0
      %685 = vmatpush1.bf16.msra.mxu0 0
      %686 = vmatprep.subr.bf16.mxu0 0
      %687 = vmatpush1.bf16.msra.mxu0 0
      %688 = vmatprep.subr.bf16.mxu0 0
      %689 = vmatpush1.bf16.msra.mxu0 0
      %690 = vmatprep.subr.bf16.mxu0 0
      %691 = vmatpush1.bf16.msra.mxu0 0
      %692 = vmatprep.subr.bf16.mxu0 0
      %693 = vmatpush1.bf16.msra.mxu0 0
      %694 = vmatprep.subr.bf16.mxu0 0
      %695 = vmatpush1.bf16.msra.mxu0 0
      %696 = vmatprep.subr.bf16.mxu0 0
      %697 = vmatpush1.bf16.msra.mxu0 0
      %698 = vmatprep.mubr.bf16.mxu0 0
      %699 = vmatmul.mubr.bf16.gmra.mrb[0].mxu0 %v661
      %v700 = vpop.f32.mrb[0].mxu0
      %v701 = vadd.f32 0.0, %v700
      %v702 = vpop.f32.mrb[0].mxu0
      %v703 = vpop.f32.mrb[0].mxu0
      %v704 = vadd.f32 0.0, %v703
      %v705 = vpop.f32.mrb[0].mxu0
      %706 = vmatprep.mubr.bf16.mxu0 0
      %707 = vmatmul.mubr.bf16.gmra.mrb[0].mxu0 %v664
      %v708 = vpop.f32.mrb[0].mxu0
      %v709 = vadd.f32 0.0, %v708
      %v710 = vpop.f32.mrb[0].mxu0
      %v711 = vpop.f32.mrb[0].mxu0
      %v712 = vadd.f32 0.0, %v711
      %v713 = vpop.f32.mrb[0].mxu0
      %714 = vdwg.mxu0
      %719 = vrot.lane.b32.xlu0 %v701, 124
      %v720 = vpop.permute.xlu0 %719
      %721 = vrot.lane.b32.xlu0 %v704, 124
      %v722 = vpop.permute.xlu0 %721
      %723 = vrot.lane.b32.xlu0 %v709, 124
      %v724 = vpop.permute.xlu0 %723
      %725 = vrot.lane.b32.xlu0 %v712, 124
      %v726 = vpop.permute.xlu0 %725
      %731 = vrot.lane.b32.xlu0 %v701, 120
      %v732 = vpop.permute.xlu0 %731
      %733 = vrot.lane.b32.xlu0 %v704, 120
      %v734 = vpop.permute.xlu0 %733
      %735 = vrot.lane.b32.xlu0 %v709, 120
      %v736 = vpop.permute.xlu0 %735
      %737 = vrot.lane.b32.xlu0 %v712, 120
      %v738 = vpop.permute.xlu0 %737
      %743 = vrot.lane.b32.xlu0 %v701, 116
      %v744 = vpop.permute.xlu0 %743
      %745 = vrot.lane.b32.xlu0 %v704, 116
      %v746 = vpop.permute.xlu0 %745
      %747 = vrot.lane.b32.xlu0 %v709, 116
      %v748 = vpop.permute.xlu0 %747
      %749 = vrot.lane.b32.xlu0 %v712, 116
      %v750 = vpop.permute.xlu0 %749
      %755 = vrot.lane.b32.xlu0 %v701, 112
      %v756 = vpop.permute.xlu0 %755
      %757 = vrot.lane.b32.xlu0 %v704, 112
      %v758 = vpop.permute.xlu0 %757
      %759 = vrot.lane.b32.xlu0 %v709, 112
      %v760 = vpop.permute.xlu0 %759
      %761 = vrot.lane.b32.xlu0 %v712, 112
      %v762 = vpop.permute.xlu0 %761
      %767 = vrot.lane.b32.xlu0 %v701, 108
      %v768 = vpop.permute.xlu0 %767
      %769 = vrot.lane.b32.xlu0 %v704, 108
      %v770 = vpop.permute.xlu0 %769
      %771 = vrot.lane.b32.xlu0 %v709, 108
      %v772 = vpop.permute.xlu0 %771
      %773 = vrot.lane.b32.xlu0 %v712, 108
      %v774 = vpop.permute.xlu0 %773
      %779 = vrot.lane.b32.xlu0 %v701, 104
      %v780 = vpop.permute.xlu0 %779
      %781 = vrot.lane.b32.xlu0 %v704, 104
      %v782 = vpop.permute.xlu0 %781
      %783 = vrot.lane.b32.xlu0 %v709, 104
      %v784 = vpop.permute.xlu0 %783
      %785 = vrot.lane.b32.xlu0 %v712, 104
      %v786 = vpop.permute.xlu0 %785
      %791 = vrot.lane.b32.xlu0 %v701, 100
      %v792 = vpop.permute.xlu0 %791
      %793 = vrot.lane.b32.xlu0 %v704, 100
      %v794 = vpop.permute.xlu0 %793
      %795 = vrot.lane.b32.xlu0 %v709, 100
      %v796 = vpop.permute.xlu0 %795
      %797 = vrot.lane.b32.xlu0 %v712, 100
      %v798 = vpop.permute.xlu0 %797
      %803 = vrot.lane.b32.xlu0 %v701, 96
      %v804 = vpop.permute.xlu0 %803
      %805 = vrot.lane.b32.xlu0 %v704, 96
      %v806 = vpop.permute.xlu0 %805
      %807 = vrot.lane.b32.xlu0 %v709, 96
      %v808 = vpop.permute.xlu0 %807
      %809 = vrot.lane.b32.xlu0 %v712, 96
      %v810 = vpop.permute.xlu0 %809
      %815 = vrot.lane.b32.xlu0 %v701, 92
      %v816 = vpop.permute.xlu0 %815
      %817 = vrot.lane.b32.xlu0 %v704, 92
      %v818 = vpop.permute.xlu0 %817
      %819 = vrot.lane.b32.xlu0 %v709, 92
      %v820 = vpop.permute.xlu0 %819
      %821 = vrot.lane.b32.xlu0 %v712, 92
      %v822 = vpop.permute.xlu0 %821
      %827 = vrot.lane.b32.xlu0 %v701, 88
      %v828 = vpop.permute.xlu0 %827
      %829 = vrot.lane.b32.xlu0 %v704, 88
      %v830 = vpop.permute.xlu0 %829
      %831 = vrot.lane.b32.xlu0 %v709, 88
      %v832 = vpop.permute.xlu0 %831
      %833 = vrot.lane.b32.xlu0 %v712, 88
      %v834 = vpop.permute.xlu0 %833
      %839 = vrot.lane.b32.xlu0 %v701, 84
      %v840 = vpop.permute.xlu0 %839
      %841 = vrot.lane.b32.xlu0 %v704, 84
      %v842 = vpop.permute.xlu0 %841
      %843 = vrot.lane.b32.xlu0 %v709, 84
      %v844 = vpop.permute.xlu0 %843
      %845 = vrot.lane.b32.xlu0 %v712, 84
      %v846 = vpop.permute.xlu0 %845
      %851 = vrot.lane.b32.xlu0 %v701, 80
      %v852 = vpop.permute.xlu0 %851
      %853 = vrot.lane.b32.xlu0 %v704, 80
      %v854 = vpop.permute.xlu0 %853
      %855 = vrot.lane.b32.xlu0 %v709, 80
      %v856 = vpop.permute.xlu0 %855
      %857 = vrot.lane.b32.xlu0 %v712, 80
      %v858 = vpop.permute.xlu0 %857
      %863 = vrot.lane.b32.xlu0 %v701, 76
      %v864 = vpop.permute.xlu0 %863
      %865 = vrot.lane.b32.xlu0 %v704, 76
      %v866 = vpop.permute.xlu0 %865
      %867 = vrot.lane.b32.xlu0 %v709, 76
      %v868 = vpop.permute.xlu0 %867
      %869 = vrot.lane.b32.xlu0 %v712, 76
      %v870 = vpop.permute.xlu0 %869
      %875 = vrot.lane.b32.xlu0 %v701, 72
      %v876 = vpop.permute.xlu0 %875
      %877 = vrot.lane.b32.xlu0 %v704, 72
      %v878 = vpop.permute.xlu0 %877
      %879 = vrot.lane.b32.xlu0 %v709, 72
      %v880 = vpop.permute.xlu0 %879
      %881 = vrot.lane.b32.xlu0 %v712, 72
      %v882 = vpop.permute.xlu0 %881
      %887 = vrot.lane.b32.xlu0 %v701, 68
      %v888 = vpop.permute.xlu0 %887
      %889 = vrot.lane.b32.xlu0 %v704, 68
      %v890 = vpop.permute.xlu0 %889
      %891 = vrot.lane.b32.xlu0 %v709, 68
      %v892 = vpop.permute.xlu0 %891
      %893 = vrot.lane.b32.xlu0 %v712, 68
      %v894 = vpop.permute.xlu0 %893
      %v899 = vcombine.low %v701, %v732
      %v900 = vcombine.high %v701, %v732
      %v902 = vunpack.c.l.s4 1983009808
      %v903 = vunpack.c.0.s8 %v902
      %v904 = vlaneseq
      %v905 = vshrl.u32 %v904, 7
      %v906 = vsub.s32 %v903, %v905
      %v907 = vrot.slane %v899, %v906
      %v909 = vunpack.c.l.s4 1983009808
      %v910 = vunpack.c.0.s8 %v909
      %v911 = vlaneseq
      %v912 = vshrl.u32 %v911, 7
      %v913 = vsub.s32 %v910, %v912
      %v914 = vrot.slane %v900, %v913
      %v915 = vcombine.low %v720, %v744
      %v916 = vcombine.high %v720, %v744
      %v918 = vunpack.c.l.s4 1983009808
      %v919 = vunpack.c.0.s8 %v918
      %v920 = vlaneseq
      %v921 = vshrl.u32 %v920, 7
      %v922 = vsub.s32 %v919, %v921
      %v923 = vrot.slane %v915, %v922
      %v925 = vunpack.c.l.s4 1983009808
      %v926 = vunpack.c.0.s8 %v925
      %v927 = vlaneseq
      %v928 = vshrl.u32 %v927, 7
      %v929 = vsub.s32 %v926, %v928
      %v930 = vrot.slane %v916, %v929
      %v931 = vcombine.low %v756, %v780
      %v932 = vcombine.high %v756, %v780
      %v934 = vunpack.c.l.s4 1983009808
      %v935 = vunpack.c.0.s8 %v934
      %v936 = vlaneseq
      %v937 = vshrl.u32 %v936, 7
      %v938 = vsub.s32 %v935, %v937
      %v939 = vrot.slane %v931, %v938
      %v941 = vunpack.c.l.s4 1983009808
      %v942 = vunpack.c.0.s8 %v941
      %v943 = vlaneseq
      %v944 = vshrl.u32 %v943, 7
      %v945 = vsub.s32 %v942, %v944
      %v946 = vrot.slane %v932, %v945
      %v947 = vcombine.low %v768, %v792
      %v948 = vcombine.high %v768, %v792
      %v950 = vunpack.c.l.s4 1983009808
      %v951 = vunpack.c.0.s8 %v950
      %v952 = vlaneseq
      %v953 = vshrl.u32 %v952, 7
      %v954 = vsub.s32 %v951, %v953
      %v955 = vrot.slane %v947, %v954
      %v957 = vunpack.c.l.s4 1983009808
      %v958 = vunpack.c.0.s8 %v957
      %v959 = vlaneseq
      %v960 = vshrl.u32 %v959, 7
      %v961 = vsub.s32 %v958, %v960
      %v962 = vrot.slane %v948, %v961
      %v963 = vcombine.low %v907, %v923
      %v964 = vcombine.high %v907, %v923
      %v966 = vunpack.c.l.s4 1934713408
      %v967 = vunpack.c.0.s8 %v966
      %v968 = vlaneseq
      %v969 = vshrl.u32 %v968, 7
      %v970 = vsub.s32 %v967, %v969
      %v971 = vrot.slane %v963, %v970
      %v973 = vunpack.c.l.s4 1934713408
      %v974 = vunpack.c.0.s8 %v973
      %v975 = vlaneseq
      %v976 = vshrl.u32 %v975, 7
      %v977 = vsub.s32 %v974, %v976
      %v978 = vrot.slane %v964, %v977
      %v979 = vcombine.low %v914, %v930
      %v980 = vcombine.high %v914, %v930
      %v982 = vunpack.c.l.s4 1934713408
      %v983 = vunpack.c.0.s8 %v982
      %v984 = vlaneseq
      %v985 = vshrl.u32 %v984, 7
      %v986 = vsub.s32 %v983, %v985
      %v987 = vrot.slane %v979, %v986
      %v989 = vunpack.c.l.s4 1934713408
      %v990 = vunpack.c.0.s8 %v989
      %v991 = vlaneseq
      %v992 = vshrl.u32 %v991, 7
      %v993 = vsub.s32 %v990, %v992
      %v994 = vrot.slane %v980, %v993
      %v995 = vcombine.low %v939, %v955
      %v996 = vcombine.high %v939, %v955
      %v998 = vunpack.c.l.s4 1934713408
      %v999 = vunpack.c.0.s8 %v998
      %v1000 = vlaneseq
      %v1001 = vshrl.u32 %v1000, 7
      %v1002 = vsub.s32 %v999, %v1001
      %v1003 = vrot.slane %v995, %v1002
      %v1005 = vunpack.c.l.s4 1934713408
      %v1006 = vunpack.c.0.s8 %v1005
      %v1007 = vlaneseq
      %v1008 = vshrl.u32 %v1007, 7
      %v1009 = vsub.s32 %v1006, %v1008
      %v1010 = vrot.slane %v996, %v1009
      %v1011 = vcombine.low %v946, %v962
      %v1012 = vcombine.high %v946, %v962
      %v1014 = vunpack.c.l.s4 1934713408
      %v1015 = vunpack.c.0.s8 %v1014
      %v1016 = vlaneseq
      %v1017 = vshrl.u32 %v1016, 7
      %v1018 = vsub.s32 %v1015, %v1017
      %v1019 = vrot.slane %v1011, %v1018
      %v1021 = vunpack.c.l.s4 1934713408
      %v1022 = vunpack.c.0.s8 %v1021
      %v1023 = vlaneseq
      %v1024 = vshrl.u32 %v1023, 7
      %v1025 = vsub.s32 %v1022, %v1024
      %v1026 = vrot.slane %v1012, %v1025
      %v1027 = vcombine.low %v971, %v1003
      %v1028 = vcombine.high %v971, %v1003
      %v1029 = vcombine.low %v978, %v1010
      %v1030 = vcombine.high %v978, %v1010
      %v1031 = vcombine.low %v987, %v1019
      %v1032 = vcombine.high %v987, %v1019
      %v1033 = vcombine.low %v994, %v1026
      %v1034 = vcombine.high %v994, %v1026
      %v1035 = vcombine.low %v804, %v828
      %v1036 = vcombine.high %v804, %v828
      %v1038 = vunpack.c.l.s4 1983009808
      %v1039 = vunpack.c.0.s8 %v1038
      %v1040 = vlaneseq
      %v1041 = vshrl.u32 %v1040, 7
      %v1042 = vsub.s32 %v1039, %v1041
      %v1043 = vrot.slane %v1035, %v1042
      %v1045 = vunpack.c.l.s4 1983009808
      %v1046 = vunpack.c.0.s8 %v1045
      %v1047 = vlaneseq
      %v1048 = vshrl.u32 %v1047, 7
      %v1049 = vsub.s32 %v1046, %v1048
      %v1050 = vrot.slane %v1036, %v1049
      %v1051 = vcombine.low %v816, %v840
      %v1052 = vcombine.high %v816, %v840
      %v1054 = vunpack.c.l.s4 1983009808
      %v1055 = vunpack.c.0.s8 %v1054
      %v1056 = vlaneseq
      %v1057 = vshrl.u32 %v1056, 7
      %v1058 = vsub.s32 %v1055, %v1057
      %v1059 = vrot.slane %v1051, %v1058
      %v1061 = vunpack.c.l.s4 1983009808
      %v1062 = vunpack.c.0.s8 %v1061
      %v1063 = vlaneseq
      %v1064 = vshrl.u32 %v1063, 7
      %v1065 = vsub.s32 %v1062, %v1064
      %v1066 = vrot.slane %v1052, %v1065
      %v1067 = vcombine.low %v852, %v876
      %v1068 = vcombine.high %v852, %v876
      %v1070 = vunpack.c.l.s4 1983009808
      %v1071 = vunpack.c.0.s8 %v1070
      %v1072 = vlaneseq
      %v1073 = vshrl.u32 %v1072, 7
      %v1074 = vsub.s32 %v1071, %v1073
      %v1075 = vrot.slane %v1067, %v1074
      %v1077 = vunpack.c.l.s4 1983009808
      %v1078 = vunpack.c.0.s8 %v1077
      %v1079 = vlaneseq
      %v1080 = vshrl.u32 %v1079, 7
      %v1081 = vsub.s32 %v1078, %v1080
      %v1082 = vrot.slane %v1068, %v1081
      %v1083 = vcombine.low %v864, %v888
      %v1084 = vcombine.high %v864, %v888
      %v1086 = vunpack.c.l.s4 1983009808
      %v1087 = vunpack.c.0.s8 %v1086
      %v1088 = vlaneseq
      %v1089 = vshrl.u32 %v1088, 7
      %v1090 = vsub.s32 %v1087, %v1089
      %v1091 = vrot.slane %v1083, %v1090
      %v1093 = vunpack.c.l.s4 1983009808
      %v1094 = vunpack.c.0.s8 %v1093
      %v1095 = vlaneseq
      %v1096 = vshrl.u32 %v1095, 7
      %v1097 = vsub.s32 %v1094, %v1096
      %v1098 = vrot.slane %v1084, %v1097
      %v1099 = vcombine.low %v1043, %v1059
      %v1100 = vcombine.high %v1043, %v1059
      %v1102 = vunpack.c.l.s4 1934713408
      %v1103 = vunpack.c.0.s8 %v1102
      %v1104 = vlaneseq
      %v1105 = vshrl.u32 %v1104, 7
      %v1106 = vsub.s32 %v1103, %v1105
      %v1107 = vrot.slane %v1099, %v1106
      %v1109 = vunpack.c.l.s4 1934713408
      %v1110 = vunpack.c.0.s8 %v1109
      %v1111 = vlaneseq
      %v1112 = vshrl.u32 %v1111, 7
      %v1113 = vsub.s32 %v1110, %v1112
      %v1114 = vrot.slane %v1100, %v1113
      %v1115 = vcombine.low %v1050, %v1066
      %v1116 = vcombine.high %v1050, %v1066
      %v1118 = vunpack.c.l.s4 1934713408
      %v1119 = vunpack.c.0.s8 %v1118
      %v1120 = vlaneseq
      %v1121 = vshrl.u32 %v1120, 7
      %v1122 = vsub.s32 %v1119, %v1121
      %v1123 = vrot.slane %v1115, %v1122
      %v1125 = vunpack.c.l.s4 1934713408
      %v1126 = vunpack.c.0.s8 %v1125
      %v1127 = vlaneseq
      %v1128 = vshrl.u32 %v1127, 7
      %v1129 = vsub.s32 %v1126, %v1128
      %v1130 = vrot.slane %v1116, %v1129
      %v1131 = vcombine.low %v1075, %v1091
      %v1132 = vcombine.high %v1075, %v1091
      %v1134 = vunpack.c.l.s4 1934713408
      %v1135 = vunpack.c.0.s8 %v1134
      %v1136 = vlaneseq
      %v1137 = vshrl.u32 %v1136, 7
      %v1138 = vsub.s32 %v1135, %v1137
      %v1139 = vrot.slane %v1131, %v1138
      %v1141 = vunpack.c.l.s4 1934713408
      %v1142 = vunpack.c.0.s8 %v1141
      %v1143 = vlaneseq
      %v1144 = vshrl.u32 %v1143, 7
      %v1145 = vsub.s32 %v1142, %v1144
      %v1146 = vrot.slane %v1132, %v1145
      %v1147 = vcombine.low %v1082, %v1098
      %v1148 = vcombine.high %v1082, %v1098
      %v1150 = vunpack.c.l.s4 1934713408
      %v1151 = vunpack.c.0.s8 %v1150
      %v1152 = vlaneseq
      %v1153 = vshrl.u32 %v1152, 7
      %v1154 = vsub.s32 %v1151, %v1153
      %v1155 = vrot.slane %v1147, %v1154
      %v1157 = vunpack.c.l.s4 1934713408
      %v1158 = vunpack.c.0.s8 %v1157
      %v1159 = vlaneseq
      %v1160 = vshrl.u32 %v1159, 7
      %v1161 = vsub.s32 %v1158, %v1160
      %v1162 = vrot.slane %v1148, %v1161
      %v1163 = vcombine.low %v1107, %v1139
      %v1164 = vcombine.high %v1107, %v1139
      %v1165 = vcombine.low %v1114, %v1146
      %v1166 = vcombine.high %v1114, %v1146
      %v1167 = vcombine.low %v1123, %v1155
      %v1168 = vcombine.high %v1123, %v1155
      %v1169 = vcombine.low %v1130, %v1162
      %v1170 = vcombine.high %v1130, %v1162
      %v1171 = vcombine.low %v704, %v734
      %v1172 = vcombine.high %v704, %v734
      %v1174 = vunpack.c.l.s4 1983009808
      %v1175 = vunpack.c.0.s8 %v1174
      %v1176 = vlaneseq
      %v1177 = vshrl.u32 %v1176, 7
      %v1178 = vsub.s32 %v1175, %v1177
      %v1179 = vrot.slane %v1171, %v1178
      %v1181 = vunpack.c.l.s4 1983009808
      %v1182 = vunpack.c.0.s8 %v1181
      %v1183 = vlaneseq
      %v1184 = vshrl.u32 %v1183, 7
      %v1185 = vsub.s32 %v1182, %v1184
      %v1186 = vrot.slane %v1172, %v1185
      %v1187 = vcombine.low %v722, %v746
      %v1188 = vcombine.high %v722, %v746
      %v1190 = vunpack.c.l.s4 1983009808
      %v1191 = vunpack.c.0.s8 %v1190
      %v1192 = vlaneseq
      %v1193 = vshrl.u32 %v1192, 7
      %v1194 = vsub.s32 %v1191, %v1193
      %v1195 = vrot.slane %v1187, %v1194
      %v1197 = vunpack.c.l.s4 1983009808
      %v1198 = vunpack.c.0.s8 %v1197
      %v1199 = vlaneseq
      %v1200 = vshrl.u32 %v1199, 7
      %v1201 = vsub.s32 %v1198, %v1200
      %v1202 = vrot.slane %v1188, %v1201
      %v1203 = vcombine.low %v758, %v782
      %v1204 = vcombine.high %v758, %v782
      %v1206 = vunpack.c.l.s4 1983009808
      %v1207 = vunpack.c.0.s8 %v1206
      %v1208 = vlaneseq
      %v1209 = vshrl.u32 %v1208, 7
      %v1210 = vsub.s32 %v1207, %v1209
      %v1211 = vrot.slane %v1203, %v1210
      %v1213 = vunpack.c.l.s4 1983009808
      %v1214 = vunpack.c.0.s8 %v1213
      %v1215 = vlaneseq
      %v1216 = vshrl.u32 %v1215, 7
      %v1217 = vsub.s32 %v1214, %v1216
      %v1218 = vrot.slane %v1204, %v1217
      %v1219 = vcombine.low %v770, %v794
      %v1220 = vcombine.high %v770, %v794
      %v1222 = vunpack.c.l.s4 1983009808
      %v1223 = vunpack.c.0.s8 %v1222
      %v1224 = vlaneseq
      %v1225 = vshrl.u32 %v1224, 7
      %v1226 = vsub.s32 %v1223, %v1225
      %v1227 = vrot.slane %v1219, %v1226
      %v1229 = vunpack.c.l.s4 1983009808
      %v1230 = vunpack.c.0.s8 %v1229
      %v1231 = vlaneseq
      %v1232 = vshrl.u32 %v1231, 7
      %v1233 = vsub.s32 %v1230, %v1232
      %v1234 = vrot.slane %v1220, %v1233
      %v1235 = vcombine.low %v1179, %v1195
      %v1236 = vcombine.high %v1179, %v1195
      %v1238 = vunpack.c.l.s4 1934713408
      %v1239 = vunpack.c.0.s8 %v1238
      %v1240 = vlaneseq
      %v1241 = vshrl.u32 %v1240, 7
      %v1242 = vsub.s32 %v1239, %v1241
      %v1243 = vrot.slane %v1235, %v1242
      %v1245 = vunpack.c.l.s4 1934713408
      %v1246 = vunpack.c.0.s8 %v1245
      %v1247 = vlaneseq
      %v1248 = vshrl.u32 %v1247, 7
      %v1249 = vsub.s32 %v1246, %v1248
      %v1250 = vrot.slane %v1236, %v1249
      %v1251 = vcombine.low %v1186, %v1202
      %v1252 = vcombine.high %v1186, %v1202
      %v1254 = vunpack.c.l.s4 1934713408
      %v1255 = vunpack.c.0.s8 %v1254
      %v1256 = vlaneseq
      %v1257 = vshrl.u32 %v1256, 7
      %v1258 = vsub.s32 %v1255, %v1257
      %v1259 = vrot.slane %v1251, %v1258
      %v1261 = vunpack.c.l.s4 1934713408
      %v1262 = vunpack.c.0.s8 %v1261
      %v1263 = vlaneseq
      %v1264 = vshrl.u32 %v1263, 7
      %v1265 = vsub.s32 %v1262, %v1264
      %v1266 = vrot.slane %v1252, %v1265
      %v1267 = vcombine.low %v1211, %v1227
      %v1268 = vcombine.high %v1211, %v1227
      %v1270 = vunpack.c.l.s4 1934713408
      %v1271 = vunpack.c.0.s8 %v1270
      %v1272 = vlaneseq
      %v1273 = vshrl.u32 %v1272, 7
      %v1274 = vsub.s32 %v1271, %v1273
      %v1275 = vrot.slane %v1267, %v1274
      %v1277 = vunpack.c.l.s4 1934713408
      %v1278 = vunpack.c.0.s8 %v1277
      %v1279 = vlaneseq
      %v1280 = vshrl.u32 %v1279, 7
      %v1281 = vsub.s32 %v1278, %v1280
      %v1282 = vrot.slane %v1268, %v1281
      %v1283 = vcombine.low %v1218, %v1234
      %v1284 = vcombine.high %v1218, %v1234
      %v1286 = vunpack.c.l.s4 1934713408
      %v1287 = vunpack.c.0.s8 %v1286
      %v1288 = vlaneseq
      %v1289 = vshrl.u32 %v1288, 7
      %v1290 = vsub.s32 %v1287, %v1289
      %v1291 = vrot.slane %v1283, %v1290
      %v1293 = vunpack.c.l.s4 1934713408
      %v1294 = vunpack.c.0.s8 %v1293
      %v1295 = vlaneseq
      %v1296 = vshrl.u32 %v1295, 7
      %v1297 = vsub.s32 %v1294, %v1296
      %v1298 = vrot.slane %v1284, %v1297
      %v1299 = vcombine.low %v1243, %v1275
      %v1300 = vcombine.high %v1243, %v1275
      %v1301 = vcombine.low %v1250, %v1282
      %v1302 = vcombine.high %v1250, %v1282
      %v1303 = vcombine.low %v1259, %v1291
      %v1304 = vcombine.high %v1259, %v1291
      %v1305 = vcombine.low %v1266, %v1298
      %v1306 = vcombine.high %v1266, %v1298
      %v1307 = vcombine.low %v806, %v830
      %v1308 = vcombine.high %v806, %v830
      %v1310 = vunpack.c.l.s4 1983009808
      %v1311 = vunpack.c.0.s8 %v1310
      %v1312 = vlaneseq
      %v1313 = vshrl.u32 %v1312, 7
      %v1314 = vsub.s32 %v1311, %v1313
      %v1315 = vrot.slane %v1307, %v1314
      %v1317 = vunpack.c.l.s4 1983009808
      %v1318 = vunpack.c.0.s8 %v1317
      %v1319 = vlaneseq
      %v1320 = vshrl.u32 %v1319, 7
      %v1321 = vsub.s32 %v1318, %v1320
      %v1322 = vrot.slane %v1308, %v1321
      %v1323 = vcombine.low %v818, %v842
      %v1324 = vcombine.high %v818, %v842
      %v1326 = vunpack.c.l.s4 1983009808
      %v1327 = vunpack.c.0.s8 %v1326
      %v1328 = vlaneseq
      %v1329 = vshrl.u32 %v1328, 7
      %v1330 = vsub.s32 %v1327, %v1329
      %v1331 = vrot.slane %v1323, %v1330
      %v1333 = vunpack.c.l.s4 1983009808
      %v1334 = vunpack.c.0.s8 %v1333
      %v1335 = vlaneseq
      %v1336 = vshrl.u32 %v1335, 7
      %v1337 = vsub.s32 %v1334, %v1336
      %v1338 = vrot.slane %v1324, %v1337
      %v1339 = vcombine.low %v854, %v878
      %v1340 = vcombine.high %v854, %v878
      %v1342 = vunpack.c.l.s4 1983009808
      %v1343 = vunpack.c.0.s8 %v1342
      %v1344 = vlaneseq
      %v1345 = vshrl.u32 %v1344, 7
      %v1346 = vsub.s32 %v1343, %v1345
      %v1347 = vrot.slane %v1339, %v1346
      %v1349 = vunpack.c.l.s4 1983009808
      %v1350 = vunpack.c.0.s8 %v1349
      %v1351 = vlaneseq
      %v1352 = vshrl.u32 %v1351, 7
      %v1353 = vsub.s32 %v1350, %v1352
      %v1354 = vrot.slane %v1340, %v1353
      %v1355 = vcombine.low %v866, %v890
      %v1356 = vcombine.high %v866, %v890
      %v1358 = vunpack.c.l.s4 1983009808
      %v1359 = vunpack.c.0.s8 %v1358
      %v1360 = vlaneseq
      %v1361 = vshrl.u32 %v1360, 7
      %v1362 = vsub.s32 %v1359, %v1361
      %v1363 = vrot.slane %v1355, %v1362
      %v1365 = vunpack.c.l.s4 1983009808
      %v1366 = vunpack.c.0.s8 %v1365
      %v1367 = vlaneseq
      %v1368 = vshrl.u32 %v1367, 7
      %v1369 = vsub.s32 %v1366, %v1368
      %v1370 = vrot.slane %v1356, %v1369
      %v1371 = vcombine.low %v1315, %v1331
      %v1372 = vcombine.high %v1315, %v1331
      %v1374 = vunpack.c.l.s4 1934713408
      %v1375 = vunpack.c.0.s8 %v1374
      %v1376 = vlaneseq
      %v1377 = vshrl.u32 %v1376, 7
      %v1378 = vsub.s32 %v1375, %v1377
      %v1379 = vrot.slane %v1371, %v1378
      %v1381 = vunpack.c.l.s4 1934713408
      %v1382 = vunpack.c.0.s8 %v1381
      %v1383 = vlaneseq
      %v1384 = vshrl.u32 %v1383, 7
      %v1385 = vsub.s32 %v1382, %v1384
      %v1386 = vrot.slane %v1372, %v1385
      %v1387 = vcombine.low %v1322, %v1338
      %v1388 = vcombine.high %v1322, %v1338
      %v1390 = vunpack.c.l.s4 1934713408
      %v1391 = vunpack.c.0.s8 %v1390
      %v1392 = vlaneseq
      %v1393 = vshrl.u32 %v1392, 7
      %v1394 = vsub.s32 %v1391, %v1393
      %v1395 = vrot.slane %v1387, %v1394
      %v1397 = vunpack.c.l.s4 1934713408
      %v1398 = vunpack.c.0.s8 %v1397
      %v1399 = vlaneseq
      %v1400 = vshrl.u32 %v1399, 7
      %v1401 = vsub.s32 %v1398, %v1400
      %v1402 = vrot.slane %v1388, %v1401
      %v1403 = vcombine.low %v1347, %v1363
      %v1404 = vcombine.high %v1347, %v1363
      %v1406 = vunpack.c.l.s4 1934713408
      %v1407 = vunpack.c.0.s8 %v1406
      %v1408 = vlaneseq
      %v1409 = vshrl.u32 %v1408, 7
      %v1410 = vsub.s32 %v1407, %v1409
      %v1411 = vrot.slane %v1403, %v1410
      %v1413 = vunpack.c.l.s4 1934713408
      %v1414 = vunpack.c.0.s8 %v1413
      %v1415 = vlaneseq
      %v1416 = vshrl.u32 %v1415, 7
      %v1417 = vsub.s32 %v1414, %v1416
      %v1418 = vrot.slane %v1404, %v1417
      %v1419 = vcombine.low %v1354, %v1370
      %v1420 = vcombine.high %v1354, %v1370
      %v1422 = vunpack.c.l.s4 1934713408
      %v1423 = vunpack.c.0.s8 %v1422
      %v1424 = vlaneseq
      %v1425 = vshrl.u32 %v1424, 7
      %v1426 = vsub.s32 %v1423, %v1425
      %v1427 = vrot.slane %v1419, %v1426
      %v1429 = vunpack.c.l.s4 1934713408
      %v1430 = vunpack.c.0.s8 %v1429
      %v1431 = vlaneseq
      %v1432 = vshrl.u32 %v1431, 7
      %v1433 = vsub.s32 %v1430, %v1432
      %v1434 = vrot.slane %v1420, %v1433
      %v1435 = vcombine.low %v1379, %v1411
      %v1436 = vcombine.high %v1379, %v1411
      %v1437 = vcombine.low %v1386, %v1418
      %v1438 = vcombine.high %v1386, %v1418
      %v1439 = vcombine.low %v1395, %v1427
      %v1440 = vcombine.high %v1395, %v1427
      %v1441 = vcombine.low %v1402, %v1434
      %v1442 = vcombine.high %v1402, %v1434
      %v1443 = vcombine.low %v709, %v736
      %v1444 = vcombine.high %v709, %v736
      %v1446 = vunpack.c.l.s4 1983009808
      %v1447 = vunpack.c.0.s8 %v1446
      %v1448 = vlaneseq
      %v1449 = vshrl.u32 %v1448, 7
      %v1450 = vsub.s32 %v1447, %v1449
      %v1451 = vrot.slane %v1443, %v1450
      %v1453 = vunpack.c.l.s4 1983009808
      %v1454 = vunpack.c.0.s8 %v1453
      %v1455 = vlaneseq
      %v1456 = vshrl.u32 %v1455, 7
      %v1457 = vsub.s32 %v1454, %v1456
      %v1458 = vrot.slane %v1444, %v1457
      %v1459 = vcombine.low %v724, %v748
      %v1460 = vcombine.high %v724, %v748
      %v1462 = vunpack.c.l.s4 1983009808
      %v1463 = vunpack.c.0.s8 %v1462
      %v1464 = vlaneseq
      %v1465 = vshrl.u32 %v1464, 7
      %v1466 = vsub.s32 %v1463, %v1465
      %v1467 = vrot.slane %v1459, %v1466
      %v1469 = vunpack.c.l.s4 1983009808
      %v1470 = vunpack.c.0.s8 %v1469
      %v1471 = vlaneseq
      %v1472 = vshrl.u32 %v1471, 7
      %v1473 = vsub.s32 %v1470, %v1472
      %v1474 = vrot.slane %v1460, %v1473
      %v1475 = vcombine.low %v760, %v784
      %v1476 = vcombine.high %v760, %v784
      %v1478 = vunpack.c.l.s4 1983009808
      %v1479 = vunpack.c.0.s8 %v1478
      %v1480 = vlaneseq
      %v1481 = vshrl.u32 %v1480, 7
      %v1482 = vsub.s32 %v1479, %v1481
      %v1483 = vrot.slane %v1475, %v1482
      %v1485 = vunpack.c.l.s4 1983009808
      %v1486 = vunpack.c.0.s8 %v1485
      %v1487 = vlaneseq
      %v1488 = vshrl.u32 %v1487, 7
      %v1489 = vsub.s32 %v1486, %v1488
      %v1490 = vrot.slane %v1476, %v1489
      %v1491 = vcombine.low %v772, %v796
      %v1492 = vcombine.high %v772, %v796
      %v1494 = vunpack.c.l.s4 1983009808
      %v1495 = vunpack.c.0.s8 %v1494
      %v1496 = vlaneseq
      %v1497 = vshrl.u32 %v1496, 7
      %v1498 = vsub.s32 %v1495, %v1497
      %v1499 = vrot.slane %v1491, %v1498
      %v1501 = vunpack.c.l.s4 1983009808
      %v1502 = vunpack.c.0.s8 %v1501
      %v1503 = vlaneseq
      %v1504 = vshrl.u32 %v1503, 7
      %v1505 = vsub.s32 %v1502, %v1504
      %v1506 = vrot.slane %v1492, %v1505
      %v1507 = vcombine.low %v1451, %v1467
      %v1508 = vcombine.high %v1451, %v1467
      %v1510 = vunpack.c.l.s4 1934713408
      %v1511 = vunpack.c.0.s8 %v1510
      %v1512 = vlaneseq
      %v1513 = vshrl.u32 %v1512, 7
      %v1514 = vsub.s32 %v1511, %v1513
      %v1515 = vrot.slane %v1507, %v1514
      %v1517 = vunpack.c.l.s4 1934713408
      %v1518 = vunpack.c.0.s8 %v1517
      %v1519 = vlaneseq
      %v1520 = vshrl.u32 %v1519, 7
      %v1521 = vsub.s32 %v1518, %v1520
      %v1522 = vrot.slane %v1508, %v1521
      %v1523 = vcombine.low %v1458, %v1474
      %v1524 = vcombine.high %v1458, %v1474
      %v1526 = vunpack.c.l.s4 1934713408
      %v1527 = vunpack.c.0.s8 %v1526
      %v1528 = vlaneseq
      %v1529 = vshrl.u32 %v1528, 7
      %v1530 = vsub.s32 %v1527, %v1529
      %v1531 = vrot.slane %v1523, %v1530
      %v1533 = vunpack.c.l.s4 1934713408
      %v1534 = vunpack.c.0.s8 %v1533
      %v1535 = vlaneseq
      %v1536 = vshrl.u32 %v1535, 7
      %v1537 = vsub.s32 %v1534, %v1536
      %v1538 = vrot.slane %v1524, %v1537
      %v1539 = vcombine.low %v1483, %v1499
      %v1540 = vcombine.high %v1483, %v1499
      %v1542 = vunpack.c.l.s4 1934713408
      %v1543 = vunpack.c.0.s8 %v1542
      %v1544 = vlaneseq
      %v1545 = vshrl.u32 %v1544, 7
      %v1546 = vsub.s32 %v1543, %v1545
      %v1547 = vrot.slane %v1539, %v1546
      %v1549 = vunpack.c.l.s4 1934713408
      %v1550 = vunpack.c.0.s8 %v1549
      %v1551 = vlaneseq
      %v1552 = vshrl.u32 %v1551, 7
      %v1553 = vsub.s32 %v1550, %v1552
      %v1554 = vrot.slane %v1540, %v1553
      %v1555 = vcombine.low %v1490, %v1506
      %v1556 = vcombine.high %v1490, %v1506
      %v1558 = vunpack.c.l.s4 1934713408
      %v1559 = vunpack.c.0.s8 %v1558
      %v1560 = vlaneseq
      %v1561 = vshrl.u32 %v1560, 7
      %v1562 = vsub.s32 %v1559, %v1561
      %v1563 = vrot.slane %v1555, %v1562
      %v1565 = vunpack.c.l.s4 1934713408
      %v1566 = vunpack.c.0.s8 %v1565
      %v1567 = vlaneseq
      %v1568 = vshrl.u32 %v1567, 7
      %v1569 = vsub.s32 %v1566, %v1568
      %v1570 = vrot.slane %v1556, %v1569
      %v1571 = vcombine.low %v1515, %v1547
      %v1572 = vcombine.high %v1515, %v1547
      %v1573 = vcombine.low %v1522, %v1554
      %v1574 = vcombine.high %v1522, %v1554
      %v1575 = vcombine.low %v1531, %v1563
      %v1576 = vcombine.high %v1531, %v1563
      %v1577 = vcombine.low %v1538, %v1570
      %v1578 = vcombine.high %v1538, %v1570
      %v1579 = vcombine.low %v808, %v832
      %v1580 = vcombine.high %v808, %v832
      %v1582 = vunpack.c.l.s4 1983009808
      %v1583 = vunpack.c.0.s8 %v1582
      %v1584 = vlaneseq
      %v1585 = vshrl.u32 %v1584, 7
      %v1586 = vsub.s32 %v1583, %v1585
      %v1587 = vrot.slane %v1579, %v1586
      %v1589 = vunpack.c.l.s4 1983009808
      %v1590 = vunpack.c.0.s8 %v1589
      %v1591 = vlaneseq
      %v1592 = vshrl.u32 %v1591, 7
      %v1593 = vsub.s32 %v1590, %v1592
      %v1594 = vrot.slane %v1580, %v1593
      %v1595 = vcombine.low %v820, %v844
      %v1596 = vcombine.high %v820, %v844
      %v1598 = vunpack.c.l.s4 1983009808
      %v1599 = vunpack.c.0.s8 %v1598
      %v1600 = vlaneseq
      %v1601 = vshrl.u32 %v1600, 7
      %v1602 = vsub.s32 %v1599, %v1601
      %v1603 = vrot.slane %v1595, %v1602
      %v1605 = vunpack.c.l.s4 1983009808
      %v1606 = vunpack.c.0.s8 %v1605
      %v1607 = vlaneseq
      %v1608 = vshrl.u32 %v1607, 7
      %v1609 = vsub.s32 %v1606, %v1608
      %v1610 = vrot.slane %v1596, %v1609
      %v1611 = vcombine.low %v856, %v880
      %v1612 = vcombine.high %v856, %v880
      %v1614 = vunpack.c.l.s4 1983009808
      %v1615 = vunpack.c.0.s8 %v1614
      %v1616 = vlaneseq
      %v1617 = vshrl.u32 %v1616, 7
      %v1618 = vsub.s32 %v1615, %v1617
      %v1619 = vrot.slane %v1611, %v1618
      %v1621 = vunpack.c.l.s4 1983009808
      %v1622 = vunpack.c.0.s8 %v1621
      %v1623 = vlaneseq
      %v1624 = vshrl.u32 %v1623, 7
      %v1625 = vsub.s32 %v1622, %v1624
      %v1626 = vrot.slane %v1612, %v1625
      %v1627 = vcombine.low %v868, %v892
      %v1628 = vcombine.high %v868, %v892
      %v1630 = vunpack.c.l.s4 1983009808
      %v1631 = vunpack.c.0.s8 %v1630
      %v1632 = vlaneseq
      %v1633 = vshrl.u32 %v1632, 7
      %v1634 = vsub.s32 %v1631, %v1633
      %v1635 = vrot.slane %v1627, %v1634
      %v1637 = vunpack.c.l.s4 1983009808
      %v1638 = vunpack.c.0.s8 %v1637
      %v1639 = vlaneseq
      %v1640 = vshrl.u32 %v1639, 7
      %v1641 = vsub.s32 %v1638, %v1640
      %v1642 = vrot.slane %v1628, %v1641
      %v1643 = vcombine.low %v1587, %v1603
      %v1644 = vcombine.high %v1587, %v1603
      %v1646 = vunpack.c.l.s4 1934713408
      %v1647 = vunpack.c.0.s8 %v1646
      %v1648 = vlaneseq
      %v1649 = vshrl.u32 %v1648, 7
      %v1650 = vsub.s32 %v1647, %v1649
      %v1651 = vrot.slane %v1643, %v1650
      %v1653 = vunpack.c.l.s4 1934713408
      %v1654 = vunpack.c.0.s8 %v1653
      %v1655 = vlaneseq
      %v1656 = vshrl.u32 %v1655, 7
      %v1657 = vsub.s32 %v1654, %v1656
      %v1658 = vrot.slane %v1644, %v1657
      %v1659 = vcombine.low %v1594, %v1610
      %v1660 = vcombine.high %v1594, %v1610
      %v1662 = vunpack.c.l.s4 1934713408
      %v1663 = vunpack.c.0.s8 %v1662
      %v1664 = vlaneseq
      %v1665 = vshrl.u32 %v1664, 7
      %v1666 = vsub.s32 %v1663, %v1665
      %v1667 = vrot.slane %v1659, %v1666
      %v1669 = vunpack.c.l.s4 1934713408
      %v1670 = vunpack.c.0.s8 %v1669
      %v1671 = vlaneseq
      %v1672 = vshrl.u32 %v1671, 7
      %v1673 = vsub.s32 %v1670, %v1672
      %v1674 = vrot.slane %v1660, %v1673
      %v1675 = vcombine.low %v1619, %v1635
      %v1676 = vcombine.high %v1619, %v1635
      %v1678 = vunpack.c.l.s4 1934713408
      %v1679 = vunpack.c.0.s8 %v1678
      %v1680 = vlaneseq
      %v1681 = vshrl.u32 %v1680, 7
      %v1682 = vsub.s32 %v1679, %v1681
      %v1683 = vrot.slane %v1675, %v1682
      %v1685 = vunpack.c.l.s4 1934713408
      %v1686 = vunpack.c.0.s8 %v1685
      %v1687 = vlaneseq
      %v1688 = vshrl.u32 %v1687, 7
      %v1689 = vsub.s32 %v1686, %v1688
      %v1690 = vrot.slane %v1676, %v1689
      %v1691 = vcombine.low %v1626, %v1642
      %v1692 = vcombine.high %v1626, %v1642
      %v1694 = vunpack.c.l.s4 1934713408
      %v1695 = vunpack.c.0.s8 %v1694
      %v1696 = vlaneseq
      %v1697 = vshrl.u32 %v1696, 7
      %v1698 = vsub.s32 %v1695, %v1697
      %v1699 = vrot.slane %v1691, %v1698
      %v1701 = vunpack.c.l.s4 1934713408
      %v1702 = vunpack.c.0.s8 %v1701
      %v1703 = vlaneseq
      %v1704 = vshrl.u32 %v1703, 7
      %v1705 = vsub.s32 %v1702, %v1704
      %v1706 = vrot.slane %v1692, %v1705
      %v1707 = vcombine.low %v1651, %v1683
      %v1708 = vcombine.high %v1651, %v1683
      %v1709 = vcombine.low %v1658, %v1690
      %v1710 = vcombine.high %v1658, %v1690
      %v1711 = vcombine.low %v1667, %v1699
      %v1712 = vcombine.high %v1667, %v1699
      %v1713 = vcombine.low %v1674, %v1706
      %v1714 = vcombine.high %v1674, %v1706
      %v1715 = vcombine.low %v712, %v738
      %v1716 = vcombine.high %v712, %v738
      %v1718 = vunpack.c.l.s4 1983009808
      %v1719 = vunpack.c.0.s8 %v1718
      %v1720 = vlaneseq
      %v1721 = vshrl.u32 %v1720, 7
      %v1722 = vsub.s32 %v1719, %v1721
      %v1723 = vrot.slane %v1715, %v1722
      %v1725 = vunpack.c.l.s4 1983009808
      %v1726 = vunpack.c.0.s8 %v1725
      %v1727 = vlaneseq
      %v1728 = vshrl.u32 %v1727, 7
      %v1729 = vsub.s32 %v1726, %v1728
      %v1730 = vrot.slane %v1716, %v1729
      %v1731 = vcombine.low %v726, %v750
      %v1732 = vcombine.high %v726, %v750
      %v1734 = vunpack.c.l.s4 1983009808
      %v1735 = vunpack.c.0.s8 %v1734
      %v1736 = vlaneseq
      %v1737 = vshrl.u32 %v1736, 7
      %v1738 = vsub.s32 %v1735, %v1737
      %v1739 = vrot.slane %v1731, %v1738
      %v1741 = vunpack.c.l.s4 1983009808
      %v1742 = vunpack.c.0.s8 %v1741
      %v1743 = vlaneseq
      %v1744 = vshrl.u32 %v1743, 7
      %v1745 = vsub.s32 %v1742, %v1744
      %v1746 = vrot.slane %v1732, %v1745
      %v1747 = vcombine.low %v762, %v786
      %v1748 = vcombine.high %v762, %v786
      %v1750 = vunpack.c.l.s4 1983009808
      %v1751 = vunpack.c.0.s8 %v1750
      %v1752 = vlaneseq
      %v1753 = vshrl.u32 %v1752, 7
      %v1754 = vsub.s32 %v1751, %v1753
      %v1755 = vrot.slane %v1747, %v1754
      %v1757 = vunpack.c.l.s4 1983009808
      %v1758 = vunpack.c.0.s8 %v1757
      %v1759 = vlaneseq
      %v1760 = vshrl.u32 %v1759, 7
      %v1761 = vsub.s32 %v1758, %v1760
      %v1762 = vrot.slane %v1748, %v1761
      %v1763 = vcombine.low %v774, %v798
      %v1764 = vcombine.high %v774, %v798
      %v1766 = vunpack.c.l.s4 1983009808
      %v1767 = vunpack.c.0.s8 %v1766
      %v1768 = vlaneseq
      %v1769 = vshrl.u32 %v1768, 7
      %v1770 = vsub.s32 %v1767, %v1769
      %v1771 = vrot.slane %v1763, %v1770
      %v1773 = vunpack.c.l.s4 1983009808
      %v1774 = vunpack.c.0.s8 %v1773
      %v1775 = vlaneseq
      %v1776 = vshrl.u32 %v1775, 7
      %v1777 = vsub.s32 %v1774, %v1776
      %v1778 = vrot.slane %v1764, %v1777
      %v1779 = vcombine.low %v1723, %v1739
      %v1780 = vcombine.high %v1723, %v1739
      %v1782 = vunpack.c.l.s4 1934713408
      %v1783 = vunpack.c.0.s8 %v1782
      %v1784 = vlaneseq
      %v1785 = vshrl.u32 %v1784, 7
      %v1786 = vsub.s32 %v1783, %v1785
      %v1787 = vrot.slane %v1779, %v1786
      %v1789 = vunpack.c.l.s4 1934713408
      %v1790 = vunpack.c.0.s8 %v1789
      %v1791 = vlaneseq
      %v1792 = vshrl.u32 %v1791, 7
      %v1793 = vsub.s32 %v1790, %v1792
      %v1794 = vrot.slane %v1780, %v1793
      %v1795 = vcombine.low %v1730, %v1746
      %v1796 = vcombine.high %v1730, %v1746
      %v1798 = vunpack.c.l.s4 1934713408
      %v1799 = vunpack.c.0.s8 %v1798
      %v1800 = vlaneseq
      %v1801 = vshrl.u32 %v1800, 7
      %v1802 = vsub.s32 %v1799, %v1801
      %v1803 = vrot.slane %v1795, %v1802
      %v1805 = vunpack.c.l.s4 1934713408
      %v1806 = vunpack.c.0.s8 %v1805
      %v1807 = vlaneseq
      %v1808 = vshrl.u32 %v1807, 7
      %v1809 = vsub.s32 %v1806, %v1808
      %v1810 = vrot.slane %v1796, %v1809
      %v1811 = vcombine.low %v1755, %v1771
      %v1812 = vcombine.high %v1755, %v1771
      %v1814 = vunpack.c.l.s4 1934713408
      %v1815 = vunpack.c.0.s8 %v1814
      %v1816 = vlaneseq
      %v1817 = vshrl.u32 %v1816, 7
      %v1818 = vsub.s32 %v1815, %v1817
      %v1819 = vrot.slane %v1811, %v1818
      %v1821 = vunpack.c.l.s4 1934713408
      %v1822 = vunpack.c.0.s8 %v1821
      %v1823 = vlaneseq
      %v1824 = vshrl.u32 %v1823, 7
      %v1825 = vsub.s32 %v1822, %v1824
      %v1826 = vrot.slane %v1812, %v1825
      %v1827 = vcombine.low %v1762, %v1778
      %v1828 = vcombine.high %v1762, %v1778
      %v1830 = vunpack.c.l.s4 1934713408
      %v1831 = vunpack.c.0.s8 %v1830
      %v1832 = vlaneseq
      %v1833 = vshrl.u32 %v1832, 7
      %v1834 = vsub.s32 %v1831, %v1833
      %v1835 = vrot.slane %v1827, %v1834
      %v1837 = vunpack.c.l.s4 1934713408
      %v1838 = vunpack.c.0.s8 %v1837
      %v1839 = vlaneseq
      %v1840 = vshrl.u32 %v1839, 7
      %v1841 = vsub.s32 %v1838, %v1840
      %v1842 = vrot.slane %v1828, %v1841
      %v1843 = vcombine.low %v1787, %v1819
      %v1844 = vcombine.high %v1787, %v1819
      %v1845 = vcombine.low %v1794, %v1826
      %v1846 = vcombine.high %v1794, %v1826
      %v1847 = vcombine.low %v1803, %v1835
      %v1848 = vcombine.high %v1803, %v1835
      %v1849 = vcombine.low %v1810, %v1842
      %v1850 = vcombine.high %v1810, %v1842
      %v1851 = vcombine.low %v810, %v834
      %v1852 = vcombine.high %v810, %v834
      %v1854 = vunpack.c.l.s4 1983009808
      %v1855 = vunpack.c.0.s8 %v1854
      %v1856 = vlaneseq
      %v1857 = vshrl.u32 %v1856, 7
      %v1858 = vsub.s32 %v1855, %v1857
      %v1859 = vrot.slane %v1851, %v1858
      %v1861 = vunpack.c.l.s4 1983009808
      %v1862 = vunpack.c.0.s8 %v1861
      %v1863 = vlaneseq
      %v1864 = vshrl.u32 %v1863, 7
      %v1865 = vsub.s32 %v1862, %v1864
      %v1866 = vrot.slane %v1852, %v1865
      %v1867 = vcombine.low %v822, %v846
      %v1868 = vcombine.high %v822, %v846
      %v1870 = vunpack.c.l.s4 1983009808
      %v1871 = vunpack.c.0.s8 %v1870
      %v1872 = vlaneseq
      %v1873 = vshrl.u32 %v1872, 7
      %v1874 = vsub.s32 %v1871, %v1873
      %v1875 = vrot.slane %v1867, %v1874
      %v1877 = vunpack.c.l.s4 1983009808
      %v1878 = vunpack.c.0.s8 %v1877
      %v1879 = vlaneseq
      %v1880 = vshrl.u32 %v1879, 7
      %v1881 = vsub.s32 %v1878, %v1880
      %v1882 = vrot.slane %v1868, %v1881
      %v1883 = vcombine.low %v858, %v882
      %v1884 = vcombine.high %v858, %v882
      %v1886 = vunpack.c.l.s4 1983009808
      %v1887 = vunpack.c.0.s8 %v1886
      %v1888 = vlaneseq
      %v1889 = vshrl.u32 %v1888, 7
      %v1890 = vsub.s32 %v1887, %v1889
      %v1891 = vrot.slane %v1883, %v1890
      %v1893 = vunpack.c.l.s4 1983009808
      %v1894 = vunpack.c.0.s8 %v1893
      %v1895 = vlaneseq
      %v1896 = vshrl.u32 %v1895, 7
      %v1897 = vsub.s32 %v1894, %v1896
      %v1898 = vrot.slane %v1884, %v1897
      %v1899 = vcombine.low %v870, %v894
      %v1900 = vcombine.high %v870, %v894
      %v1902 = vunpack.c.l.s4 1983009808
      %v1903 = vunpack.c.0.s8 %v1902
      %v1904 = vlaneseq
      %v1905 = vshrl.u32 %v1904, 7
      %v1906 = vsub.s32 %v1903, %v1905
      %v1907 = vrot.slane %v1899, %v1906
      %v1909 = vunpack.c.l.s4 1983009808
      %v1910 = vunpack.c.0.s8 %v1909
      %v1911 = vlaneseq
      %v1912 = vshrl.u32 %v1911, 7
      %v1913 = vsub.s32 %v1910, %v1912
      %v1914 = vrot.slane %v1900, %v1913
      %v1915 = vcombine.low %v1859, %v1875
      %v1916 = vcombine.high %v1859, %v1875
      %v1918 = vunpack.c.l.s4 1934713408
      %v1919 = vunpack.c.0.s8 %v1918
      %v1920 = vlaneseq
      %v1921 = vshrl.u32 %v1920, 7
      %v1922 = vsub.s32 %v1919, %v1921
      %v1923 = vrot.slane %v1915, %v1922
      %v1925 = vunpack.c.l.s4 1934713408
      %v1926 = vunpack.c.0.s8 %v1925
      %v1927 = vlaneseq
      %v1928 = vshrl.u32 %v1927, 7
      %v1929 = vsub.s32 %v1926, %v1928
      %v1930 = vrot.slane %v1916, %v1929
      %v1931 = vcombine.low %v1866, %v1882
      %v1932 = vcombine.high %v1866, %v1882
      %v1934 = vunpack.c.l.s4 1934713408
      %v1935 = vunpack.c.0.s8 %v1934
      %v1936 = vlaneseq
      %v1937 = vshrl.u32 %v1936, 7
      %v1938 = vsub.s32 %v1935, %v1937
      %v1939 = vrot.slane %v1931, %v1938
      %v1941 = vunpack.c.l.s4 1934713408
      %v1942 = vunpack.c.0.s8 %v1941
      %v1943 = vlaneseq
      %v1944 = vshrl.u32 %v1943, 7
      %v1945 = vsub.s32 %v1942, %v1944
      %v1946 = vrot.slane %v1932, %v1945
      %v1947 = vcombine.low %v1891, %v1907
      %v1948 = vcombine.high %v1891, %v1907
      %v1950 = vunpack.c.l.s4 1934713408
      %v1951 = vunpack.c.0.s8 %v1950
      %v1952 = vlaneseq
      %v1953 = vshrl.u32 %v1952, 7
      %v1954 = vsub.s32 %v1951, %v1953
      %v1955 = vrot.slane %v1947, %v1954
      %v1957 = vunpack.c.l.s4 1934713408
      %v1958 = vunpack.c.0.s8 %v1957
      %v1959 = vlaneseq
      %v1960 = vshrl.u32 %v1959, 7
      %v1961 = vsub.s32 %v1958, %v1960
      %v1962 = vrot.slane %v1948, %v1961
      %v1963 = vcombine.low %v1898, %v1914
      %v1964 = vcombine.high %v1898, %v1914
      %v1966 = vunpack.c.l.s4 1934713408
      %v1967 = vunpack.c.0.s8 %v1966
      %v1968 = vlaneseq
      %v1969 = vshrl.u32 %v1968, 7
      %v1970 = vsub.s32 %v1967, %v1969
      %v1971 = vrot.slane %v1963, %v1970
      %v1973 = vunpack.c.l.s4 1934713408
      %v1974 = vunpack.c.0.s8 %v1973
      %v1975 = vlaneseq
      %v1976 = vshrl.u32 %v1975, 7
      %v1977 = vsub.s32 %v1974, %v1976
      %v1978 = vrot.slane %v1964, %v1977
      %v1979 = vcombine.low %v1923, %v1955
      %v1980 = vcombine.high %v1923, %v1955
      %v1981 = vcombine.low %v1930, %v1962
      %v1982 = vcombine.high %v1930, %v1962
      %v1983 = vcombine.low %v1939, %v1971
      %v1984 = vcombine.high %v1939, %v1971
      %v1985 = vcombine.low %v1946, %v1978
      %v1986 = vcombine.high %v1946, %v1978
      %v1987 = vpack.c.bf16 %v1163, %v1027
      %v1988 = vpack.c.bf16 %v1164, %v1028
      %v1989 = vpack.c.bf16 %v1165, %v1029
      %v1990 = vpack.c.bf16 %v1166, %v1030
      %v1991 = vpack.c.bf16 %v1167, %v1031
      %v1992 = vpack.c.bf16 %v1168, %v1032
      %v1993 = vpack.c.bf16 %v1169, %v1033
      %v1994 = vpack.c.bf16 %v1170, %v1034
      %v1995 = vpack.c.bf16 %v1435, %v1299
      %v1996 = vpack.c.bf16 %v1436, %v1300
      %v1997 = vpack.c.bf16 %v1437, %v1301
      %v1998 = vpack.c.bf16 %v1438, %v1302
      %v1999 = vpack.c.bf16 %v1439, %v1303
      %v2000 = vpack.c.bf16 %v1440, %v1304
      %v2001 = vpack.c.bf16 %v1441, %v1305
      %v2002 = vpack.c.bf16 %v1442, %v1306
      %v2003 = vpack.c.bf16 %v1707, %v1571
      %v2004 = vpack.c.bf16 %v1708, %v1572
      %v2005 = vpack.c.bf16 %v1709, %v1573
      %v2006 = vpack.c.bf16 %v1710, %v1574
      %v2007 = vpack.c.bf16 %v1711, %v1575
      %v2008 = vpack.c.bf16 %v1712, %v1576
      %v2009 = vpack.c.bf16 %v1713, %v1577
      %v2010 = vpack.c.bf16 %v1714, %v1578
      %v2011 = vpack.c.bf16 %v1979, %v1843
      %v2012 = vpack.c.bf16 %v1980, %v1844
      %v2013 = vpack.c.bf16 %v1981, %v1845
      %v2014 = vpack.c.bf16 %v1982, %v1846
      %v2015 = vpack.c.bf16 %v1983, %v1847
      %v2016 = vpack.c.bf16 %v1984, %v1848
      %v2017 = vpack.c.bf16 %v1985, %v1849
      %v2018 = vpack.c.bf16 %v1986, %v1850
      %v2020 = vsel %vm623, %v213, 0
      %v2023 = vsel %vm623, %v214, 0
      %2025 = vmatprep.subr.bf16.mxu0 0
      %2026 = vmatpush1.bf16.msra.mxu0 %v1987
      %2027 = vmatprep.subr.bf16.mxu0 0
      %2028 = vmatpush1.bf16.msra.mxu0 0
      %2029 = vmatprep.subr.bf16.mxu0 0
      %2030 = vmatpush1.bf16.msra.mxu0 0
      %2031 = vmatprep.subr.bf16.mxu0 0
      %2032 = vmatpush1.bf16.msra.mxu0 0
      %2033 = vmatprep.subr.bf16.mxu0 0
      %2034 = vmatpush1.bf16.msra.mxu0 0
      %2035 = vmatprep.subr.bf16.mxu0 0
      %2036 = vmatpush1.bf16.msra.mxu0 0
      %2037 = vmatprep.subr.bf16.mxu0 0
      %2038 = vmatpush1.bf16.msra.mxu0 0
      %2039 = vmatprep.subr.bf16.mxu0 0
      %2040 = vmatpush1.bf16.msra.mxu0 0
      %2041 = vmatprep.subr.bf16.mxu0 0
      %2042 = vmatpush1.bf16.msra.mxu0 0
      %2043 = vmatprep.subr.bf16.mxu0 0
      %2044 = vmatpush1.bf16.msra.mxu0 0
      %2045 = vmatprep.subr.bf16.mxu0 0
      %2046 = vmatpush1.bf16.msra.mxu0 0
      %2047 = vmatprep.subr.bf16.mxu0 0
      %2048 = vmatpush1.bf16.msra.mxu0 0
      %2049 = vmatprep.subr.bf16.mxu0 0
      %2050 = vmatpush1.bf16.msra.mxu0 0
      %2051 = vmatprep.subr.bf16.mxu0 0
      %2052 = vmatpush1.bf16.msra.mxu0 0
      %2053 = vmatprep.subr.bf16.mxu0 0
      %2054 = vmatpush1.bf16.msra.mxu0 0
      %2055 = vmatprep.subr.bf16.mxu0 0
      %2056 = vmatpush1.bf16.msra.mxu0 0
      %2057 = vmatprep.mubr.bf16.mxu0 0
      %2058 = vmatmul.mubr.bf16.gmra.mrb[0].mxu0 %v2020
      %v2059 = vpop.f32.mrb[0].mxu0
      %v2060 = vadd.f32 0.0, %v2059
      %v2061 = vpop.f32.mrb[0].mxu0
      %v2062 = vpop.f32.mrb[0].mxu0
      %v2063 = vadd.f32 0.0, %v2062
      %v2064 = vpop.f32.mrb[0].mxu0
      %2065 = vmatprep.mubr.bf16.mxu0 0
      %2066 = vmatmul.mubr.bf16.gmra.mrb[0].mxu0 %v2023
      %v2067 = vpop.f32.mrb[0].mxu0
      %v2068 = vadd.f32 0.0, %v2067
      %v2069 = vpop.f32.mrb[0].mxu0
      %v2070 = vpop.f32.mrb[0].mxu0
      %v2071 = vadd.f32 0.0, %v2070
      %v2072 = vpop.f32.mrb[0].mxu0
      %2073 = vdwg.mxu0
      %2074 = vmatprep.subr.bf16.mxu0 0
      %2075 = vmatpush1.bf16.msra.mxu0 %v1988
      %2076 = vmatprep.subr.bf16.mxu0 0
      %2077 = vmatpush1.bf16.msra.mxu0 0
      %2078 = vmatprep.subr.bf16.mxu0 0
      %2079 = vmatpush1.bf16.msra.mxu0 0
      %2080 = vmatprep.subr.bf16.mxu0 0
      %2081 = vmatpush1.bf16.msra.mxu0 0
      %2082 = vmatprep.subr.bf16.mxu0 0
      %2083 = vmatpush1.bf16.msra.mxu0 0
      %2084 = vmatprep.subr.bf16.mxu0 0
      %2085 = vmatpush1.bf16.msra.mxu0 0
      %2086 = vmatprep.subr.bf16.mxu0 0
      %2087 = vmatpush1.bf16.msra.mxu0 0
      %2088 = vmatprep.subr.bf16.mxu0 0
      %2089 = vmatpush1.bf16.msra.mxu0 0
      %2090 = vmatprep.subr.bf16.mxu0 0
      %2091 = vmatpush1.bf16.msra.mxu0 0
      %2092 = vmatprep.subr.bf16.mxu0 0
      %2093 = vmatpush1.bf16.msra.mxu0 0
      %2094 = vmatprep.subr.bf16.mxu0 0
      %2095 = vmatpush1.bf16.msra.mxu0 0
      %2096 = vmatprep.subr.bf16.mxu0 0
      %2097 = vmatpush1.bf16.msra.mxu0 0
      %2098 = vmatprep.subr.bf16.mxu0 0
      %2099 = vmatpush1.bf16.msra.mxu0 0
      %2100 = vmatprep.subr.bf16.mxu0 0
      %2101 = vmatpush1.bf16.msra.mxu0 0
      %2102 = vmatprep.subr.bf16.mxu0 0
      %2103 = vmatpush1.bf16.msra.mxu0 0
      %2104 = vmatprep.subr.bf16.mxu0 0
      %2105 = vmatpush1.bf16.msra.mxu0 0
      %2106 = vmatprep.mubr.bf16.mxu0 0
      %2107 = vmatmul.mubr.bf16.gmra.mrb[0].mxu0 %v2020
      %v2108 = vpop.f32.mrb[0].mxu0
      %v2109 = vadd.f32 0.0, %v2108
      %v2110 = vpop.f32.mrb[0].mxu0
      %v2111 = vpop.f32.mrb[0].mxu0
      %v2112 = vadd.f32 0.0, %v2111
      %v2113 = vpop.f32.mrb[0].mxu0
      %2114 = vmatprep.mubr.bf16.mxu0 0
      %2115 = vmatmul.mubr.bf16.gmra.mrb[0].mxu0 %v2023
      %v2116 = vpop.f32.mrb[0].mxu0
      %v2117 = vadd.f32 0.0, %v2116
      %v2118 = vpop.f32.mrb[0].mxu0
      %v2119 = vpop.f32.mrb[0].mxu0
      %v2120 = vadd.f32 0.0, %v2119
      %v2121 = vpop.f32.mrb[0].mxu0
      %2122 = vdwg.mxu0
      %2123 = vmatprep.subr.bf16.mxu0 0
      %2124 = vmatpush1.bf16.msra.mxu0 %v1989
      %2125 = vmatprep.subr.bf16.mxu0 0
      %2126 = vmatpush1.bf16.msra.mxu0 0
      %2127 = vmatprep.subr.bf16.mxu0 0
      %2128 = vmatpush1.bf16.msra.mxu0 0
      %2129 = vmatprep.subr.bf16.mxu0 0
      %2130 = vmatpush1.bf16.msra.mxu0 0
      %2131 = vmatprep.subr.bf16.mxu0 0
      %2132 = vmatpush1.bf16.msra.mxu0 0
      %2133 = vmatprep.subr.bf16.mxu0 0
      %2134 = vmatpush1.bf16.msra.mxu0 0
      %2135 = vmatprep.subr.bf16.mxu0 0
      %2136 = vmatpush1.bf16.msra.mxu0 0
      %2137 = vmatprep.subr.bf16.mxu0 0
      %2138 = vmatpush1.bf16.msra.mxu0 0
      %2139 = vmatprep.subr.bf16.mxu0 0
      %2140 = vmatpush1.bf16.msra.mxu0 0
      %2141 = vmatprep.subr.bf16.mxu0 0
      %2142 = vmatpush1.bf16.msra.mxu0 0
      %2143 = vmatprep.subr.bf16.mxu0 0
      %2144 = vmatpush1.bf16.msra.mxu0 0
      %2145 = vmatprep.subr.bf16.mxu0 0
      %2146 = vmatpush1.bf16.msra.mxu0 0
      %2147 = vmatprep.subr.bf16.mxu0 0
      %2148 = vmatpush1.bf16.msra.mxu0 0
      %2149 = vmatprep.subr.bf16.mxu0 0
      %2150 = vmatpush1.bf16.msra.mxu0 0
      %2151 = vmatprep.subr.bf16.mxu0 0
      %2152 = vmatpush1.bf16.msra.mxu0 0
      %2153 = vmatprep.subr.bf16.mxu0 0
      %2154 = vmatpush1.bf16.msra.mxu0 0
      %2155 = vmatprep.mubr.bf16.mxu0 0
      %2156 = vmatmul.mubr.bf16.gmra.mrb[0].mxu0 %v2020
      %v2157 = vpop.f32.mrb[0].mxu0
      %v2158 = vadd.f32 0.0, %v2157
      %v2159 = vpop.f32.mrb[0].mxu0
      %v2160 = vpop.f32.mrb[0].mxu0
      %v2161 = vadd.f32 0.0, %v2160
      %v2162 = vpop.f32.mrb[0].mxu0
      %2163 = vmatprep.mubr.bf16.mxu0 0
      %2164 = vmatmul.mubr.bf16.gmra.mrb[0].mxu0 %v2023
      %v2165 = vpop.f32.mrb[0].mxu0
      %v2166 = vadd.f32 0.0, %v2165
      %v2167 = vpop.f32.mrb[0].mxu0
      %v2168 = vpop.f32.mrb[0].mxu0
      %v2169 = vadd.f32 0.0, %v2168
      %v2170 = vpop.f32.mrb[0].mxu0
      %2171 = vdwg.mxu0
      %2172 = vmatprep.subr.bf16.mxu0 0
      %2173 = vmatpush1.bf16.msra.mxu0 %v1990
      %2174 = vmatprep.subr.bf16.mxu0 0
      %2175 = vmatpush1.bf16.msra.mxu0 0
      %2176 = vmatprep.subr.bf16.mxu0 0
      %2177 = vmatpush1.bf16.msra.mxu0 0
      %2178 = vmatprep.subr.bf16.mxu0 0
      %2179 = vmatpush1.bf16.msra.mxu0 0
      %2180 = vmatprep.subr.bf16.mxu0 0
      %2181 = vmatpush1.bf16.msra.mxu0 0
      %2182 = vmatprep.subr.bf16.mxu0 0
      %2183 = vmatpush1.bf16.msra.mxu0 0
      %2184 = vmatprep.subr.bf16.mxu0 0
      %2185 = vmatpush1.bf16.msra.mxu0 0
      %2186 = vmatprep.subr.bf16.mxu0 0
      %2187 = vmatpush1.bf16.msra.mxu0 0
      %2188 = vmatprep.subr.bf16.mxu0 0
      %2189 = vmatpush1.bf16.msra.mxu0 0
      %2190 = vmatprep.subr.bf16.mxu0 0
      %2191 = vmatpush1.bf16.msra.mxu0 0
      %2192 = vmatprep.subr.bf16.mxu0 0
      %2193 = vmatpush1.bf16.msra.mxu0 0
      %2194 = vmatprep.subr.bf16.mxu0 0
      %2195 = vmatpush1.bf16.msra.mxu0 0
      %2196 = vmatprep.subr.bf16.mxu0 0
      %2197 = vmatpush1.bf16.msra.mxu0 0
      %2198 = vmatprep.subr.bf16.mxu0 0
      %2199 = vmatpush1.bf16.msra.mxu0 0
      %2200 = vmatprep.subr.bf16.mxu0 0
      %2201 = vmatpush1.bf16.msra.mxu0 0
      %2202 = vmatprep.subr.bf16.mxu0 0
      %2203 = vmatpush1.bf16.msra.mxu0 0
      %2204 = vmatprep.mubr.bf16.mxu0 0
      %2205 = vmatmul.mubr.bf16.gmra.mrb[0].mxu0 %v2020
      %v2206 = vpop.f32.mrb[0].mxu0
      %v2207 = vadd.f32 0.0, %v2206
      %v2208 = vpop.f32.mrb[0].mxu0
      %v2209 = vpop.f32.mrb[0].mxu0
      %v2210 = vadd.f32 0.0, %v2209
      %v2211 = vpop.f32.mrb[0].mxu0
      %2212 = vmatprep.mubr.bf16.mxu0 0
      %2213 = vmatmul.mubr.bf16.gmra.mrb[0].mxu0 %v2023
      %v2214 = vpop.f32.mrb[0].mxu0
      %v2215 = vadd.f32 0.0, %v2214
      %v2216 = vpop.f32.mrb[0].mxu0
      %v2217 = vpop.f32.mrb[0].mxu0
      %v2218 = vadd.f32 0.0, %v2217
      %v2219 = vpop.f32.mrb[0].mxu0
      %2220 = vdwg.mxu0
      %2221 = vmatprep.subr.bf16.mxu0 0
      %2222 = vmatpush1.bf16.msra.mxu0 %v1991
      %2223 = vmatprep.subr.bf16.mxu0 0
      %2224 = vmatpush1.bf16.msra.mxu0 0
      %2225 = vmatprep.subr.bf16.mxu0 0
      %2226 = vmatpush1.bf16.msra.mxu0 0
      %2227 = vmatprep.subr.bf16.mxu0 0
      %2228 = vmatpush1.bf16.msra.mxu0 0
      %2229 = vmatprep.subr.bf16.mxu0 0
      %2230 = vmatpush1.bf16.msra.mxu0 0
      %2231 = vmatprep.subr.bf16.mxu0 0
      %2232 = vmatpush1.bf16.msra.mxu0 0
      %2233 = vmatprep.subr.bf16.mxu0 0
      %2234 = vmatpush1.bf16.msra.mxu0 0
      %2235 = vmatprep.subr.bf16.mxu0 0
      %2236 = vmatpush1.bf16.msra.mxu0 0
      %2237 = vmatprep.subr.bf16.mxu0 0
      %2238 = vmatpush1.bf16.msra.mxu0 0
      %2239 = vmatprep.subr.bf16.mxu0 0
      %2240 = vmatpush1.bf16.msra.mxu0 0
      %2241 = vmatprep.subr.bf16.mxu0 0
      %2242 = vmatpush1.bf16.msra.mxu0 0
      %2243 = vmatprep.subr.bf16.mxu0 0
      %2244 = vmatpush1.bf16.msra.mxu0 0
      %2245 = vmatprep.subr.bf16.mxu0 0
      %2246 = vmatpush1.bf16.msra.mxu0 0
      %2247 = vmatprep.subr.bf16.mxu0 0
      %2248 = vmatpush1.bf16.msra.mxu0 0
      %2249 = vmatprep.subr.bf16.mxu0 0
      %2250 = vmatpush1.bf16.msra.mxu0 0
      %2251 = vmatprep.subr.bf16.mxu0 0
      %2252 = vmatpush1.bf16.msra.mxu0 0
      %2253 = vmatprep.mubr.bf16.mxu0 0
      %2254 = vmatmul.mubr.bf16.gmra.mrb[0].mxu0 %v2020
      %v2255 = vpop.f32.mrb[0].mxu0
      %v2256 = vadd.f32 0.0, %v2255
      %v2257 = vpop.f32.mrb[0].mxu0
      %v2258 = vpop.f32.mrb[0].mxu0
      %v2259 = vadd.f32 0.0, %v2258
      %v2260 = vpop.f32.mrb[0].mxu0
      %2261 = vmatprep.mubr.bf16.mxu0 0
      %2262 = vmatmul.mubr.bf16.gmra.mrb[0].mxu0 %v2023
      %v2263 = vpop.f32.mrb[0].mxu0
      %v2264 = vadd.f32 0.0, %v2263
      %v2265 = vpop.f32.mrb[0].mxu0
      %v2266 = vpop.f32.mrb[0].mxu0
      %v2267 = vadd.f32 0.0, %v2266
      %v2268 = vpop.f32.mrb[0].mxu0
      %2269 = vdwg.mxu0
      %2270 = vmatprep.subr.bf16.mxu0 0
      %2271 = vmatpush1.bf16.msra.mxu0 %v1992
      %2272 = vmatprep.subr.bf16.mxu0 0
      %2273 = vmatpush1.bf16.msra.mxu0 0
      %2274 = vmatprep.subr.bf16.mxu0 0
      %2275 = vmatpush1.bf16.msra.mxu0 0
      %2276 = vmatprep.subr.bf16.mxu0 0
      %2277 = vmatpush1.bf16.msra.mxu0 0
      %2278 = vmatprep.subr.bf16.mxu0 0
      %2279 = vmatpush1.bf16.msra.mxu0 0
      %2280 = vmatprep.subr.bf16.mxu0 0
      %2281 = vmatpush1.bf16.msra.mxu0 0
      %2282 = vmatprep.subr.bf16.mxu0 0
      %2283 = vmatpush1.bf16.msra.mxu0 0
      %2284 = vmatprep.subr.bf16.mxu0 0
      %2285 = vmatpush1.bf16.msra.mxu0 0
      %2286 = vmatprep.subr.bf16.mxu0 0
      %2287 = vmatpush1.bf16.msra.mxu0 0
      %2288 = vmatprep.subr.bf16.mxu0 0
      %2289 = vmatpush1.bf16.msra.mxu0 0
      %2290 = vmatprep.subr.bf16.mxu0 0
      %2291 = vmatpush1.bf16.msra.mxu0 0
      %2292 = vmatprep.subr.bf16.mxu0 0
      %2293 = vmatpush1.bf16.msra.mxu0 0
      %2294 = vmatprep.subr.bf16.mxu0 0
      %2295 = vmatpush1.bf16.msra.mxu0 0
      %2296 = vmatprep.subr.bf16.mxu0 0
      %2297 = vmatpush1.bf16.msra.mxu0 0
      %2298 = vmatprep.subr.bf16.mxu0 0
      %2299 = vmatpush1.bf16.msra.mxu0 0
      %2300 = vmatprep.subr.bf16.mxu0 0
      %2301 = vmatpush1.bf16.msra.mxu0 0
      %2302 = vmatprep.mubr.bf16.mxu0 0
      %2303 = vmatmul.mubr.bf16.gmra.mrb[0].mxu0 %v2020
      %v2304 = vpop.f32.mrb[0].mxu0
      %v2305 = vadd.f32 0.0, %v2304
      %v2306 = vpop.f32.mrb[0].mxu0
      %v2307 = vpop.f32.mrb[0].mxu0
      %v2308 = vadd.f32 0.0, %v2307
      %v2309 = vpop.f32.mrb[0].mxu0
      %2310 = vmatprep.mubr.bf16.mxu0 0
      %2311 = vmatmul.mubr.bf16.gmra.mrb[0].mxu0 %v2023
      %v2312 = vpop.f32.mrb[0].mxu0
      %v2313 = vadd.f32 0.0, %v2312
      %v2314 = vpop.f32.mrb[0].mxu0
      %v2315 = vpop.f32.mrb[0].mxu0
      %v2316 = vadd.f32 0.0, %v2315
      %v2317 = vpop.f32.mrb[0].mxu0
      %2318 = vdwg.mxu0
      %2319 = vmatprep.subr.bf16.mxu0 0
      %2320 = vmatpush1.bf16.msra.mxu0 %v1993
      %2321 = vmatprep.subr.bf16.mxu0 0
      %2322 = vmatpush1.bf16.msra.mxu0 0
      %2323 = vmatprep.subr.bf16.mxu0 0
      %2324 = vmatpush1.bf16.msra.mxu0 0
      %2325 = vmatprep.subr.bf16.mxu0 0
      %2326 = vmatpush1.bf16.msra.mxu0 0
      %2327 = vmatprep.subr.bf16.mxu0 0
      %2328 = vmatpush1.bf16.msra.mxu0 0
      %2329 = vmatprep.subr.bf16.mxu0 0
      %2330 = vmatpush1.bf16.msra.mxu0 0
      %2331 = vmatprep.subr.bf16.mxu0 0
      %2332 = vmatpush1.bf16.msra.mxu0 0
      %2333 = vmatprep.subr.bf16.mxu0 0
      %2334 = vmatpush1.bf16.msra.mxu0 0
      %2335 = vmatprep.subr.bf16.mxu0 0
      %2336 = vmatpush1.bf16.msra.mxu0 0
      %2337 = vmatprep.subr.bf16.mxu0 0
      %2338 = vmatpush1.bf16.msra.mxu0 0
      %2339 = vmatprep.subr.bf16.mxu0 0
      %2340 = vmatpush1.bf16.msra.mxu0 0
      %2341 = vmatprep.subr.bf16.mxu0 0
      %2342 = vmatpush1.bf16.msra.mxu0 0
      %2343 = vmatprep.subr.bf16.mxu0 0
      %2344 = vmatpush1.bf16.msra.mxu0 0
      %2345 = vmatprep.subr.bf16.mxu0 0
      %2346 = vmatpush1.bf16.msra.mxu0 0
      %2347 = vmatprep.subr.bf16.mxu0 0
      %2348 = vmatpush1.bf16.msra.mxu0 0
      %2349 = vmatprep.subr.bf16.mxu0 0
      %2350 = vmatpush1.bf16.msra.mxu0 0
      %2351 = vmatprep.mubr.bf16.mxu0 0
      %2352 = vmatmul.mubr.bf16.gmra.mrb[0].mxu0 %v2020
      %v2353 = vpop.f32.mrb[0].mxu0
      %v2354 = vadd.f32 0.0, %v2353
      %v2355 = vpop.f32.mrb[0].mxu0
      %v2356 = vpop.f32.mrb[0].mxu0
      %v2357 = vadd.f32 0.0, %v2356
      %v2358 = vpop.f32.mrb[0].mxu0
      %2359 = vmatprep.mubr.bf16.mxu0 0
      %2360 = vmatmul.mubr.bf16.gmra.mrb[0].mxu0 %v2023
      %v2361 = vpop.f32.mrb[0].mxu0
      %v2362 = vadd.f32 0.0, %v2361
      %v2363 = vpop.f32.mrb[0].mxu0
      %v2364 = vpop.f32.mrb[0].mxu0
      %v2365 = vadd.f32 0.0, %v2364
      %v2366 = vpop.f32.mrb[0].mxu0
      %2367 = vdwg.mxu0
      %2368 = vmatprep.subr.bf16.mxu0 0
      %2369 = vmatpush1.bf16.msra.mxu0 %v1994
      %2370 = vmatprep.subr.bf16.mxu0 0
      %2371 = vmatpush1.bf16.msra.mxu0 0
      %2372 = vmatprep.subr.bf16.mxu0 0
      %2373 = vmatpush1.bf16.msra.mxu0 0
      %2374 = vmatprep.subr.bf16.mxu0 0
      %2375 = vmatpush1.bf16.msra.mxu0 0
      %2376 = vmatprep.subr.bf16.mxu0 0
      %2377 = vmatpush1.bf16.msra.mxu0 0
      %2378 = vmatprep.subr.bf16.mxu0 0
      %2379 = vmatpush1.bf16.msra.mxu0 0
      %2380 = vmatprep.subr.bf16.mxu0 0
      %2381 = vmatpush1.bf16.msra.mxu0 0
      %2382 = vmatprep.subr.bf16.mxu0 0
      %2383 = vmatpush1.bf16.msra.mxu0 0
      %2384 = vmatprep.subr.bf16.mxu0 0
      %2385 = vmatpush1.bf16.msra.mxu0 0
      %2386 = vmatprep.subr.bf16.mxu0 0
      %2387 = vmatpush1.bf16.msra.mxu0 0
      %2388 = vmatprep.subr.bf16.mxu0 0
      %2389 = vmatpush1.bf16.msra.mxu0 0
      %2390 = vmatprep.subr.bf16.mxu0 0
      %2391 = vmatpush1.bf16.msra.mxu0 0
      %2392 = vmatprep.subr.bf16.mxu0 0
      %2393 = vmatpush1.bf16.msra.mxu0 0
      %2394 = vmatprep.subr.bf16.mxu0 0
      %2395 = vmatpush1.bf16.msra.mxu0 0
      %2396 = vmatprep.subr.bf16.mxu0 0
      %2397 = vmatpush1.bf16.msra.mxu0 0
      %2398 = vmatprep.subr.bf16.mxu0 0
      %2399 = vmatpush1.bf16.msra.mxu0 0
      %2400 = vmatprep.mubr.bf16.mxu0 0
      %2401 = vmatmul.mubr.bf16.gmra.mrb[0].mxu0 %v2020
      %v2402 = vpop.f32.mrb[0].mxu0
      %v2403 = vadd.f32 0.0, %v2402
      %v2404 = vpop.f32.mrb[0].mxu0
      %v2405 = vpop.f32.mrb[0].mxu0
      %v2406 = vadd.f32 0.0, %v2405
      %v2407 = vpop.f32.mrb[0].mxu0
      %2408 = vmatprep.mubr.bf16.mxu0 0
      %2409 = vmatmul.mubr.bf16.gmra.mrb[0].mxu0 %v2023
      %v2410 = vpop.f32.mrb[0].mxu0
      %v2411 = vadd.f32 0.0, %v2410
      %v2412 = vpop.f32.mrb[0].mxu0
      %v2413 = vpop.f32.mrb[0].mxu0
      %v2414 = vadd.f32 0.0, %v2413
      %v2415 = vpop.f32.mrb[0].mxu0
      %2416 = vdwg.mxu0
      %2417 = vmatprep.subr.bf16.mxu0 0
      %2418 = vmatpush1.bf16.msra.mxu0 %v1995
      %2419 = vmatprep.subr.bf16.mxu0 0
      %2420 = vmatpush1.bf16.msra.mxu0 0
      %2421 = vmatprep.subr.bf16.mxu0 0
      %2422 = vmatpush1.bf16.msra.mxu0 0
      %2423 = vmatprep.subr.bf16.mxu0 0
      %2424 = vmatpush1.bf16.msra.mxu0 0
      %2425 = vmatprep.subr.bf16.mxu0 0
      %2426 = vmatpush1.bf16.msra.mxu0 0
      %2427 = vmatprep.subr.bf16.mxu0 0
      %2428 = vmatpush1.bf16.msra.mxu0 0
      %2429 = vmatprep.subr.bf16.mxu0 0
      %2430 = vmatpush1.bf16.msra.mxu0 0
      %2431 = vmatprep.subr.bf16.mxu0 0
      %2432 = vmatpush1.bf16.msra.mxu0 0
      %2433 = vmatprep.subr.bf16.mxu0 0
      %2434 = vmatpush1.bf16.msra.mxu0 0
      %2435 = vmatprep.subr.bf16.mxu0 0
      %2436 = vmatpush1.bf16.msra.mxu0 0
      %2437 = vmatprep.subr.bf16.mxu0 0
      %2438 = vmatpush1.bf16.msra.mxu0 0
      %2439 = vmatprep.subr.bf16.mxu0 0
      %2440 = vmatpush1.bf16.msra.mxu0 0
      %2441 = vmatprep.subr.bf16.mxu0 0
      %2442 = vmatpush1.bf16.msra.mxu0 0
      %2443 = vmatprep.subr.bf16.mxu0 0
      %2444 = vmatpush1.bf16.msra.mxu0 0
      %2445 = vmatprep.subr.bf16.mxu0 0
      %2446 = vmatpush1.bf16.msra.mxu0 0
      %2447 = vmatprep.subr.bf16.mxu0 0
      %2448 = vmatpush1.bf16.msra.mxu0 0
      %2449 = vmatprep.mubr.bf16.mxu0 0
      %2450 = vmatmul.mubr.bf16.gmra.mrb[0].mxu0 %v2020
      %v2451 = vpop.f32.mrb[0].mxu0
      %v2452 = vadd.f32 0.0, %v2451
      %v2453 = vpop.f32.mrb[0].mxu0
      %v2454 = vpop.f32.mrb[0].mxu0
      %v2455 = vadd.f32 0.0, %v2454
      %v2456 = vpop.f32.mrb[0].mxu0
      %2457 = vmatprep.mubr.bf16.mxu0 0
      %2458 = vmatmul.mubr.bf16.gmra.mrb[0].mxu0 %v2023
      %v2459 = vpop.f32.mrb[0].mxu0
      %v2460 = vadd.f32 0.0, %v2459
      %v2461 = vpop.f32.mrb[0].mxu0
      %v2462 = vpop.f32.mrb[0].mxu0
      %v2463 = vadd.f32 0.0, %v2462
      %v2464 = vpop.f32.mrb[0].mxu0
      %2465 = vdwg.mxu0
      %2466 = vmatprep.subr.bf16.mxu0 0
      %2467 = vmatpush1.bf16.msra.mxu0 %v1996
      %2468 = vmatprep.subr.bf16.mxu0 0
      %2469 = vmatpush1.bf16.msra.mxu0 0
      %2470 = vmatprep.subr.bf16.mxu0 0
      %2471 = vmatpush1.bf16.msra.mxu0 0
      %2472 = vmatprep.subr.bf16.mxu0 0
      %2473 = vmatpush1.bf16.msra.mxu0 0
      %2474 = vmatprep.subr.bf16.mxu0 0
      %2475 = vmatpush1.bf16.msra.mxu0 0
      %2476 = vmatprep.subr.bf16.mxu0 0
      %2477 = vmatpush1.bf16.msra.mxu0 0
      %2478 = vmatprep.subr.bf16.mxu0 0
      %2479 = vmatpush1.bf16.msra.mxu0 0
      %2480 = vmatprep.subr.bf16.mxu0 0
      %2481 = vmatpush1.bf16.msra.mxu0 0
      %2482 = vmatprep.subr.bf16.mxu0 0
      %2483 = vmatpush1.bf16.msra.mxu0 0
      %2484 = vmatprep.subr.bf16.mxu0 0
      %2485 = vmatpush1.bf16.msra.mxu0 0
      %2486 = vmatprep.subr.bf16.mxu0 0
      %2487 = vmatpush1.bf16.msra.mxu0 0
      %2488 = vmatprep.subr.bf16.mxu0 0
      %2489 = vmatpush1.bf16.msra.mxu0 0
      %2490 = vmatprep.subr.bf16.mxu0 0
      %2491 = vmatpush1.bf16.msra.mxu0 0
      %2492 = vmatprep.subr.bf16.mxu0 0
      %2493 = vmatpush1.bf16.msra.mxu0 0
      %2494 = vmatprep.subr.bf16.mxu0 0
      %2495 = vmatpush1.bf16.msra.mxu0 0
      %2496 = vmatprep.subr.bf16.mxu0 0
      %2497 = vmatpush1.bf16.msra.mxu0 0
      %2498 = vmatprep.mubr.bf16.mxu0 0
      %2499 = vmatmul.mubr.bf16.gmra.mrb[0].mxu0 %v2020
      %v2500 = vpop.f32.mrb[0].mxu0
      %v2501 = vadd.f32 0.0, %v2500
      %v2502 = vpop.f32.mrb[0].mxu0
      %v2503 = vpop.f32.mrb[0].mxu0
      %v2504 = vadd.f32 0.0, %v2503
      %v2505 = vpop.f32.mrb[0].mxu0
      %2506 = vmatprep.mubr.bf16.mxu0 0
      %2507 = vmatmul.mubr.bf16.gmra.mrb[0].mxu0 %v2023
      %v2508 = vpop.f32.mrb[0].mxu0
      %v2509 = vadd.f32 0.0, %v2508
      %v2510 = vpop.f32.mrb[0].mxu0
      %v2511 = vpop.f32.mrb[0].mxu0
      %v2512 = vadd.f32 0.0, %v2511
      %v2513 = vpop.f32.mrb[0].mxu0
      %2514 = vdwg.mxu0
      %2515 = vmatprep.subr.bf16.mxu0 0
      %2516 = vmatpush1.bf16.msra.mxu0 %v1997
      %2517 = vmatprep.subr.bf16.mxu0 0
      %2518 = vmatpush1.bf16.msra.mxu0 0
      %2519 = vmatprep.subr.bf16.mxu0 0
      %2520 = vmatpush1.bf16.msra.mxu0 0
      %2521 = vmatprep.subr.bf16.mxu0 0
      %2522 = vmatpush1.bf16.msra.mxu0 0
      %2523 = vmatprep.subr.bf16.mxu0 0
      %2524 = vmatpush1.bf16.msra.mxu0 0
      %2525 = vmatprep.subr.bf16.mxu0 0
      %2526 = vmatpush1.bf16.msra.mxu0 0
      %2527 = vmatprep.subr.bf16.mxu0 0
      %2528 = vmatpush1.bf16.msra.mxu0 0
      %2529 = vmatprep.subr.bf16.mxu0 0
      %2530 = vmatpush1.bf16.msra.mxu0 0
      %2531 = vmatprep.subr.bf16.mxu0 0
      %2532 = vmatpush1.bf16.msra.mxu0 0
      %2533 = vmatprep.subr.bf16.mxu0 0
      %2534 = vmatpush1.bf16.msra.mxu0 0
      %2535 = vmatprep.subr.bf16.mxu0 0
      %2536 = vmatpush1.bf16.msra.mxu0 0
      %2537 = vmatprep.subr.bf16.mxu0 0
      %2538 = vmatpush1.bf16.msra.mxu0 0
      %2539 = vmatprep.subr.bf16.mxu0 0
      %2540 = vmatpush1.bf16.msra.mxu0 0
      %2541 = vmatprep.subr.bf16.mxu0 0
      %2542 = vmatpush1.bf16.msra.mxu0 0
      %2543 = vmatprep.subr.bf16.mxu0 0
      %2544 = vmatpush1.bf16.msra.mxu0 0
      %2545 = vmatprep.subr.bf16.mxu0 0
      %2546 = vmatpush1.bf16.msra.mxu0 0
      %2547 = vmatprep.mubr.bf16.mxu0 0
      %2548 = vmatmul.mubr.bf16.gmra.mrb[0].mxu0 %v2020
      %v2549 = vpop.f32.mrb[0].mxu0
      %v2550 = vadd.f32 0.0, %v2549
      %v2551 = vpop.f32.mrb[0].mxu0
      %v2552 = vpop.f32.mrb[0].mxu0
      %v2553 = vadd.f32 0.0, %v2552
      %v2554 = vpop.f32.mrb[0].mxu0
      %2555 = vmatprep.mubr.bf16.mxu0 0
      %2556 = vmatmul.mubr.bf16.gmra.mrb[0].mxu0 %v2023
      %v2557 = vpop.f32.mrb[0].mxu0
      %v2558 = vadd.f32 0.0, %v2557
      %v2559 = vpop.f32.mrb[0].mxu0
      %v2560 = vpop.f32.mrb[0].mxu0
      %v2561 = vadd.f32 0.0, %v2560
      %v2562 = vpop.f32.mrb[0].mxu0
      %2563 = vdwg.mxu0
      %2564 = vmatprep.subr.bf16.mxu0 0
      %2565 = vmatpush1.bf16.msra.mxu0 %v1998
      %2566 = vmatprep.subr.bf16.mxu0 0
      %2567 = vmatpush1.bf16.msra.mxu0 0
      %2568 = vmatprep.subr.bf16.mxu0 0
      %2569 = vmatpush1.bf16.msra.mxu0 0
      %2570 = vmatprep.subr.bf16.mxu0 0
      %2571 = vmatpush1.bf16.msra.mxu0 0
      %2572 = vmatprep.subr.bf16.mxu0 0
      %2573 = vmatpush1.bf16.msra.mxu0 0
      %2574 = vmatprep.subr.bf16.mxu0 0
      %2575 = vmatpush1.bf16.msra.mxu0 0
      %2576 = vmatprep.subr.bf16.mxu0 0
      %2577 = vmatpush1.bf16.msra.mxu0 0
      %2578 = vmatprep.subr.bf16.mxu0 0
      %2579 = vmatpush1.bf16.msra.mxu0 0
      %2580 = vmatprep.subr.bf16.mxu0 0
      %2581 = vmatpush1.bf16.msra.mxu0 0
      %2582 = vmatprep.subr.bf16.mxu0 0
      %2583 = vmatpush1.bf16.msra.mxu0 0
      %2584 = vmatprep.subr.bf16.mxu0 0
      %2585 = vmatpush1.bf16.msra.mxu0 0
      %2586 = vmatprep.subr.bf16.mxu0 0
      %2587 = vmatpush1.bf16.msra.mxu0 0
      %2588 = vmatprep.subr.bf16.mxu0 0
      %2589 = vmatpush1.bf16.msra.mxu0 0
      %2590 = vmatprep.subr.bf16.mxu0 0
      %2591 = vmatpush1.bf16.msra.mxu0 0
      %2592 = vmatprep.subr.bf16.mxu0 0
      %2593 = vmatpush1.bf16.msra.mxu0 0
      %2594 = vmatprep.subr.bf16.mxu0 0
      %2595 = vmatpush1.bf16.msra.mxu0 0
      %2596 = vmatprep.mubr.bf16.mxu0 0
      %2597 = vmatmul.mubr.bf16.gmra.mrb[0].mxu0 %v2020
      %v2598 = vpop.f32.mrb[0].mxu0
      %v2599 = vadd.f32 0.0, %v2598
      %v2600 = vpop.f32.mrb[0].mxu0
      %v2601 = vpop.f32.mrb[0].mxu0
      %v2602 = vadd.f32 0.0, %v2601
      %v2603 = vpop.f32.mrb[0].mxu0
      %2604 = vmatprep.mubr.bf16.mxu0 0
      %2605 = vmatmul.mubr.bf16.gmra.mrb[0].mxu0 %v2023
      %v2606 = vpop.f32.mrb[0].mxu0
      %v2607 = vadd.f32 0.0, %v2606
      %v2608 = vpop.f32.mrb[0].mxu0
      %v2609 = vpop.f32.mrb[0].mxu0
      %v2610 = vadd.f32 0.0, %v2609
      %v2611 = vpop.f32.mrb[0].mxu0
      %2612 = vdwg.mxu0
      %2613 = vmatprep.subr.bf16.mxu0 0
      %2614 = vmatpush1.bf16.msra.mxu0 %v1999
      %2615 = vmatprep.subr.bf16.mxu0 0
      %2616 = vmatpush1.bf16.msra.mxu0 0
      %2617 = vmatprep.subr.bf16.mxu0 0
      %2618 = vmatpush1.bf16.msra.mxu0 0
      %2619 = vmatprep.subr.bf16.mxu0 0
      %2620 = vmatpush1.bf16.msra.mxu0 0
      %2621 = vmatprep.subr.bf16.mxu0 0
      %2622 = vmatpush1.bf16.msra.mxu0 0
      %2623 = vmatprep.subr.bf16.mxu0 0
      %2624 = vmatpush1.bf16.msra.mxu0 0
      %2625 = vmatprep.subr.bf16.mxu0 0
      %2626 = vmatpush1.bf16.msra.mxu0 0
      %2627 = vmatprep.subr.bf16.mxu0 0
      %2628 = vmatpush1.bf16.msra.mxu0 0
      %2629 = vmatprep.subr.bf16.mxu0 0
      %2630 = vmatpush1.bf16.msra.mxu0 0
      %2631 = vmatprep.subr.bf16.mxu0 0
      %2632 = vmatpush1.bf16.msra.mxu0 0
      %2633 = vmatprep.subr.bf16.mxu0 0
      %2634 = vmatpush1.bf16.msra.mxu0 0
      %2635 = vmatprep.subr.bf16.mxu0 0
      %2636 = vmatpush1.bf16.msra.mxu0 0
      %2637 = vmatprep.subr.bf16.mxu0 0
      %2638 = vmatpush1.bf16.msra.mxu0 0
      %2639 = vmatprep.subr.bf16.mxu0 0
      %2640 = vmatpush1.bf16.msra.mxu0 0
      %2641 = vmatprep.subr.bf16.mxu0 0
      %2642 = vmatpush1.bf16.msra.mxu0 0
      %2643 = vmatprep.subr.bf16.mxu0 0
      %2644 = vmatpush1.bf16.msra.mxu0 0
      %2645 = vmatprep.mubr.bf16.mxu0 0
      %2646 = vmatmul.mubr.bf16.gmra.mrb[0].mxu0 %v2020
      %v2647 = vpop.f32.mrb[0].mxu0
      %v2648 = vadd.f32 0.0, %v2647
      %v2649 = vpop.f32.mrb[0].mxu0
      %v2650 = vpop.f32.mrb[0].mxu0
      %v2651 = vadd.f32 0.0, %v2650
      %v2652 = vpop.f32.mrb[0].mxu0
      %2653 = vmatprep.mubr.bf16.mxu0 0
      %2654 = vmatmul.mubr.bf16.gmra.mrb[0].mxu0 %v2023
      %v2655 = vpop.f32.mrb[0].mxu0
      %v2656 = vadd.f32 0.0, %v2655
      %v2657 = vpop.f32.mrb[0].mxu0
      %v2658 = vpop.f32.mrb[0].mxu0
      %v2659 = vadd.f32 0.0, %v2658
      %v2660 = vpop.f32.mrb[0].mxu0
      %2661 = vdwg.mxu0
      %2662 = vmatprep.subr.bf16.mxu0 0
      %2663 = vmatpush1.bf16.msra.mxu0 %v2000
      %2664 = vmatprep.subr.bf16.mxu0 0
      %2665 = vmatpush1.bf16.msra.mxu0 0
      %2666 = vmatprep.subr.bf16.mxu0 0
      %2667 = vmatpush1.bf16.msra.mxu0 0
      %2668 = vmatprep.subr.bf16.mxu0 0
      %2669 = vmatpush1.bf16.msra.mxu0 0
      %2670 = vmatprep.subr.bf16.mxu0 0
      %2671 = vmatpush1.bf16.msra.mxu0 0
      %2672 = vmatprep.subr.bf16.mxu0 0
      %2673 = vmatpush1.bf16.msra.mxu0 0
      %2674 = vmatprep.subr.bf16.mxu0 0
      %2675 = vmatpush1.bf16.msra.mxu0 0
      %2676 = vmatprep.subr.bf16.mxu0 0
      %2677 = vmatpush1.bf16.msra.mxu0 0
      %2678 = vmatprep.subr.bf16.mxu0 0
      %2679 = vmatpush1.bf16.msra.mxu0 0
      %2680 = vmatprep.subr.bf16.mxu0 0
      %2681 = vmatpush1.bf16.msra.mxu0 0
      %2682 = vmatprep.subr.bf16.mxu0 0
      %2683 = vmatpush1.bf16.msra.mxu0 0
      %2684 = vmatprep.subr.bf16.mxu0 0
      %2685 = vmatpush1.bf16.msra.mxu0 0
      %2686 = vmatprep.subr.bf16.mxu0 0
      %2687 = vmatpush1.bf16.msra.mxu0 0
      %2688 = vmatprep.subr.bf16.mxu0 0
      %2689 = vmatpush1.bf16.msra.mxu0 0
      %2690 = vmatprep.subr.bf16.mxu0 0
      %2691 = vmatpush1.bf16.msra.mxu0 0
      %2692 = vmatprep.subr.bf16.mxu0 0
      %2693 = vmatpush1.bf16.msra.mxu0 0
      %2694 = vmatprep.mubr.bf16.mxu0 0
      %2695 = vmatmul.mubr.bf16.gmra.mrb[0].mxu0 %v2020
      %v2696 = vpop.f32.mrb[0].mxu0
      %v2697 = vadd.f32 0.0, %v2696
      %v2698 = vpop.f32.mrb[0].mxu0
      %v2699 = vpop.f32.mrb[0].mxu0
      %v2700 = vadd.f32 0.0, %v2699
      %v2701 = vpop.f32.mrb[0].mxu0
      %2702 = vmatprep.mubr.bf16.mxu0 0
      %2703 = vmatmul.mubr.bf16.gmra.mrb[0].mxu0 %v2023
      %v2704 = vpop.f32.mrb[0].mxu0
      %v2705 = vadd.f32 0.0, %v2704
      %v2706 = vpop.f32.mrb[0].mxu0
      %v2707 = vpop.f32.mrb[0].mxu0
      %v2708 = vadd.f32 0.0, %v2707
      %v2709 = vpop.f32.mrb[0].mxu0
      %2710 = vdwg.mxu0
      %2711 = vmatprep.subr.bf16.mxu0 0
      %2712 = vmatpush1.bf16.msra.mxu0 %v2001
      %2713 = vmatprep.subr.bf16.mxu0 0
      %2714 = vmatpush1.bf16.msra.mxu0 0
      %2715 = vmatprep.subr.bf16.mxu0 0
      %2716 = vmatpush1.bf16.msra.mxu0 0
      %2717 = vmatprep.subr.bf16.mxu0 0
      %2718 = vmatpush1.bf16.msra.mxu0 0
      %2719 = vmatprep.subr.bf16.mxu0 0
      %2720 = vmatpush1.bf16.msra.mxu0 0
      %2721 = vmatprep.subr.bf16.mxu0 0
      %2722 = vmatpush1.bf16.msra.mxu0 0
      %2723 = vmatprep.subr.bf16.mxu0 0
      %2724 = vmatpush1.bf16.msra.mxu0 0
      %2725 = vmatprep.subr.bf16.mxu0 0
      %2726 = vmatpush1.bf16.msra.mxu0 0
      %2727 = vmatprep.subr.bf16.mxu0 0
      %2728 = vmatpush1.bf16.msra.mxu0 0
      %2729 = vmatprep.subr.bf16.mxu0 0
      %2730 = vmatpush1.bf16.msra.mxu0 0
      %2731 = vmatprep.subr.bf16.mxu0 0
      %2732 = vmatpush1.bf16.msra.mxu0 0
      %2733 = vmatprep.subr.bf16.mxu0 0
      %2734 = vmatpush1.bf16.msra.mxu0 0
      %2735 = vmatprep.subr.bf16.mxu0 0
      %2736 = vmatpush1.bf16.msra.mxu0 0
      %2737 = vmatprep.subr.bf16.mxu0 0
      %2738 = vmatpush1.bf16.msra.mxu0 0
      %2739 = vmatprep.subr.bf16.mxu0 0
      %2740 = vmatpush1.bf16.msra.mxu0 0
      %2741 = vmatprep.subr.bf16.mxu0 0
      %2742 = vmatpush1.bf16.msra.mxu0 0
      %2743 = vmatprep.mubr.bf16.mxu0 0
      %2744 = vmatmul.mubr.bf16.gmra.mrb[0].mxu0 %v2020
      %v2745 = vpop.f32.mrb[0].mxu0
      %v2746 = vadd.f32 0.0, %v2745
      %v2747 = vpop.f32.mrb[0].mxu0
      %v2748 = vpop.f32.mrb[0].mxu0
      %v2749 = vadd.f32 0.0, %v2748
      %v2750 = vpop.f32.mrb[0].mxu0
      %2751 = vmatprep.mubr.bf16.mxu0 0
      %2752 = vmatmul.mubr.bf16.gmra.mrb[0].mxu0 %v2023
      %v2753 = vpop.f32.mrb[0].mxu0
      %v2754 = vadd.f32 0.0, %v2753
      %v2755 = vpop.f32.mrb[0].mxu0
      %v2756 = vpop.f32.mrb[0].mxu0
      %v2757 = vadd.f32 0.0, %v2756
      %v2758 = vpop.f32.mrb[0].mxu0
      %2759 = vdwg.mxu0
      %2760 = vmatprep.subr.bf16.mxu0 0
      %2761 = vmatpush1.bf16.msra.mxu0 %v2002
      %2762 = vmatprep.subr.bf16.mxu0 0
      %2763 = vmatpush1.bf16.msra.mxu0 0
      %2764 = vmatprep.subr.bf16.mxu0 0
      %2765 = vmatpush1.bf16.msra.mxu0 0
      %2766 = vmatprep.subr.bf16.mxu0 0
      %2767 = vmatpush1.bf16.msra.mxu0 0
      %2768 = vmatprep.subr.bf16.mxu0 0
      %2769 = vmatpush1.bf16.msra.mxu0 0
      %2770 = vmatprep.subr.bf16.mxu0 0
      %2771 = vmatpush1.bf16.msra.mxu0 0
      %2772 = vmatprep.subr.bf16.mxu0 0
      %2773 = vmatpush1.bf16.msra.mxu0 0
      %2774 = vmatprep.subr.bf16.mxu0 0
      %2775 = vmatpush1.bf16.msra.mxu0 0
      %2776 = vmatprep.subr.bf16.mxu0 0
      %2777 = vmatpush1.bf16.msra.mxu0 0
      %2778 = vmatprep.subr.bf16.mxu0 0
      %2779 = vmatpush1.bf16.msra.mxu0 0
      %2780 = vmatprep.subr.bf16.mxu0 0
      %2781 = vmatpush1.bf16.msra.mxu0 0
      %2782 = vmatprep.subr.bf16.mxu0 0
      %2783 = vmatpush1.bf16.msra.mxu0 0
      %2784 = vmatprep.subr.bf16.mxu0 0
      %2785 = vmatpush1.bf16.msra.mxu0 0
      %2786 = vmatprep.subr.bf16.mxu0 0
      %2787 = vmatpush1.bf16.msra.mxu0 0
      %2788 = vmatprep.subr.bf16.mxu0 0
      %2789 = vmatpush1.bf16.msra.mxu0 0
      %2790 = vmatprep.subr.bf16.mxu0 0
      %2791 = vmatpush1.bf16.msra.mxu0 0
      %2792 = vmatprep.mubr.bf16.mxu0 0
      %2793 = vmatmul.mubr.bf16.gmra.mrb[0].mxu0 %v2020
      %v2794 = vpop.f32.mrb[0].mxu0
      %v2795 = vadd.f32 0.0, %v2794
      %v2796 = vpop.f32.mrb[0].mxu0
      %v2797 = vpop.f32.mrb[0].mxu0
      %v2798 = vadd.f32 0.0, %v2797
      %v2799 = vpop.f32.mrb[0].mxu0
      %2800 = vmatprep.mubr.bf16.mxu0 0
      %2801 = vmatmul.mubr.bf16.gmra.mrb[0].mxu0 %v2023
      %v2802 = vpop.f32.mrb[0].mxu0
      %v2803 = vadd.f32 0.0, %v2802
      %v2804 = vpop.f32.mrb[0].mxu0
      %v2805 = vpop.f32.mrb[0].mxu0
      %v2806 = vadd.f32 0.0, %v2805
      %v2807 = vpop.f32.mrb[0].mxu0
      %2808 = vdwg.mxu0
      %2809 = vmatprep.subr.bf16.mxu0 0
      %2810 = vmatpush1.bf16.msra.mxu0 %v2003
      %2811 = vmatprep.subr.bf16.mxu0 0
      %2812 = vmatpush1.bf16.msra.mxu0 0
      %2813 = vmatprep.subr.bf16.mxu0 0
      %2814 = vmatpush1.bf16.msra.mxu0 0
      %2815 = vmatprep.subr.bf16.mxu0 0
      %2816 = vmatpush1.bf16.msra.mxu0 0
      %2817 = vmatprep.subr.bf16.mxu0 0
      %2818 = vmatpush1.bf16.msra.mxu0 0
      %2819 = vmatprep.subr.bf16.mxu0 0
      %2820 = vmatpush1.bf16.msra.mxu0 0
      %2821 = vmatprep.subr.bf16.mxu0 0
      %2822 = vmatpush1.bf16.msra.mxu0 0
      %2823 = vmatprep.subr.bf16.mxu0 0
      %2824 = vmatpush1.bf16.msra.mxu0 0
      %2825 = vmatprep.subr.bf16.mxu0 0
      %2826 = vmatpush1.bf16.msra.mxu0 0
      %2827 = vmatprep.subr.bf16.mxu0 0
      %2828 = vmatpush1.bf16.msra.mxu0 0
      %2829 = vmatprep.subr.bf16.mxu0 0
      %2830 = vmatpush1.bf16.msra.mxu0 0
      %2831 = vmatprep.subr.bf16.mxu0 0
      %2832 = vmatpush1.bf16.msra.mxu0 0
      %2833 = vmatprep.subr.bf16.mxu0 0
      %2834 = vmatpush1.bf16.msra.mxu0 0
      %2835 = vmatprep.subr.bf16.mxu0 0
      %2836 = vmatpush1.bf16.msra.mxu0 0
      %2837 = vmatprep.subr.bf16.mxu0 0
      %2838 = vmatpush1.bf16.msra.mxu0 0
      %2839 = vmatprep.subr.bf16.mxu0 0
      %2840 = vmatpush1.bf16.msra.mxu0 0
      %2841 = vmatprep.mubr.bf16.mxu0 0
      %2842 = vmatmul.mubr.bf16.gmra.mrb[0].mxu0 %v2020
      %v2843 = vpop.f32.mrb[0].mxu0
      %v2844 = vadd.f32 0.0, %v2843
      %v2845 = vpop.f32.mrb[0].mxu0
      %v2846 = vpop.f32.mrb[0].mxu0
      %v2847 = vadd.f32 0.0, %v2846
      %v2848 = vpop.f32.mrb[0].mxu0
      %2849 = vmatprep.mubr.bf16.mxu0 0
      %2850 = vmatmul.mubr.bf16.gmra.mrb[0].mxu0 %v2023
      %v2851 = vpop.f32.mrb[0].mxu0
      %v2852 = vadd.f32 0.0, %v2851
      %v2853 = vpop.f32.mrb[0].mxu0
      %v2854 = vpop.f32.mrb[0].mxu0
      %v2855 = vadd.f32 0.0, %v2854
      %v2856 = vpop.f32.mrb[0].mxu0
      %2857 = vdwg.mxu0
      %2858 = vmatprep.subr.bf16.mxu0 0
      %2859 = vmatpush1.bf16.msra.mxu0 %v2004
      %2860 = vmatprep.subr.bf16.mxu0 0
      %2861 = vmatpush1.bf16.msra.mxu0 0
      %2862 = vmatprep.subr.bf16.mxu0 0
      %2863 = vmatpush1.bf16.msra.mxu0 0
      %2864 = vmatprep.subr.bf16.mxu0 0
      %2865 = vmatpush1.bf16.msra.mxu0 0
      %2866 = vmatprep.subr.bf16.mxu0 0
      %2867 = vmatpush1.bf16.msra.mxu0 0
      %2868 = vmatprep.subr.bf16.mxu0 0
      %2869 = vmatpush1.bf16.msra.mxu0 0
      %2870 = vmatprep.subr.bf16.mxu0 0
      %2871 = vmatpush1.bf16.msra.mxu0 0
      %2872 = vmatprep.subr.bf16.mxu0 0
      %2873 = vmatpush1.bf16.msra.mxu0 0
      %2874 = vmatprep.subr.bf16.mxu0 0
      %2875 = vmatpush1.bf16.msra.mxu0 0
      %2876 = vmatprep.subr.bf16.mxu0 0
      %2877 = vmatpush1.bf16.msra.mxu0 0
      %2878 = vmatprep.subr.bf16.mxu0 0
      %2879 = vmatpush1.bf16.msra.mxu0 0
      %2880 = vmatprep.subr.bf16.mxu0 0
      %2881 = vmatpush1.bf16.msra.mxu0 0
      %2882 = vmatprep.subr.bf16.mxu0 0
      %2883 = vmatpush1.bf16.msra.mxu0 0
      %2884 = vmatprep.subr.bf16.mxu0 0
      %2885 = vmatpush1.bf16.msra.mxu0 0
      %2886 = vmatprep.subr.bf16.mxu0 0
      %2887 = vmatpush1.bf16.msra.mxu0 0
      %2888 = vmatprep.subr.bf16.mxu0 0
      %2889 = vmatpush1.bf16.msra.mxu0 0
      %2890 = vmatprep.mubr.bf16.mxu0 0
      %2891 = vmatmul.mubr.bf16.gmra.mrb[0].mxu0 %v2020
      %v2892 = vpop.f32.mrb[0].mxu0
      %v2893 = vadd.f32 0.0, %v2892
      %v2894 = vpop.f32.mrb[0].mxu0
      %v2895 = vpop.f32.mrb[0].mxu0
      %v2896 = vadd.f32 0.0, %v2895
      %v2897 = vpop.f32.mrb[0].mxu0
      %2898 = vmatprep.mubr.bf16.mxu0 0
      %2899 = vmatmul.mubr.bf16.gmra.mrb[0].mxu0 %v2023
      %v2900 = vpop.f32.mrb[0].mxu0
      %v2901 = vadd.f32 0.0, %v2900
      %v2902 = vpop.f32.mrb[0].mxu0
      %v2903 = vpop.f32.mrb[0].mxu0
      %v2904 = vadd.f32 0.0, %v2903
      %v2905 = vpop.f32.mrb[0].mxu0
      %2906 = vdwg.mxu0
      %2907 = vmatprep.subr.bf16.mxu0 0
      %2908 = vmatpush1.bf16.msra.mxu0 %v2005
      %2909 = vmatprep.subr.bf16.mxu0 0
      %2910 = vmatpush1.bf16.msra.mxu0 0
      %2911 = vmatprep.subr.bf16.mxu0 0
      %2912 = vmatpush1.bf16.msra.mxu0 0
      %2913 = vmatprep.subr.bf16.mxu0 0
      %2914 = vmatpush1.bf16.msra.mxu0 0
      %2915 = vmatprep.subr.bf16.mxu0 0
      %2916 = vmatpush1.bf16.msra.mxu0 0
      %2917 = vmatprep.subr.bf16.mxu0 0
      %2918 = vmatpush1.bf16.msra.mxu0 0
      %2919 = vmatprep.subr.bf16.mxu0 0
      %2920 = vmatpush1.bf16.msra.mxu0 0
      %2921 = vmatprep.subr.bf16.mxu0 0
      %2922 = vmatpush1.bf16.msra.mxu0 0
      %2923 = vmatprep.subr.bf16.mxu0 0
      %2924 = vmatpush1.bf16.msra.mxu0 0
      %2925 = vmatprep.subr.bf16.mxu0 0
      %2926 = vmatpush1.bf16.msra.mxu0 0
      %2927 = vmatprep.subr.bf16.mxu0 0
      %2928 = vmatpush1.bf16.msra.mxu0 0
      %2929 = vmatprep.subr.bf16.mxu0 0
      %2930 = vmatpush1.bf16.msra.mxu0 0
      %2931 = vmatprep.subr.bf16.mxu0 0
      %2932 = vmatpush1.bf16.msra.mxu0 0
      %2933 = vmatprep.subr.bf16.mxu0 0
      %2934 = vmatpush1.bf16.msra.mxu0 0
      %2935 = vmatprep.subr.bf16.mxu0 0
      %2936 = vmatpush1.bf16.msra.mxu0 0
      %2937 = vmatprep.subr.bf16.mxu0 0
      %2938 = vmatpush1.bf16.msra.mxu0 0
      %2939 = vmatprep.mubr.bf16.mxu0 0
      %2940 = vmatmul.mubr.bf16.gmra.mrb[0].mxu0 %v2020
      %v2941 = vpop.f32.mrb[0].mxu0
      %v2942 = vadd.f32 0.0, %v2941
      %v2943 = vpop.f32.mrb[0].mxu0
      %v2944 = vpop.f32.mrb[0].mxu0
      %v2945 = vadd.f32 0.0, %v2944
      %v2946 = vpop.f32.mrb[0].mxu0
      %2947 = vmatprep.mubr.bf16.mxu0 0
      %2948 = vmatmul.mubr.bf16.gmra.mrb[0].mxu0 %v2023
      %v2949 = vpop.f32.mrb[0].mxu0
      %v2950 = vadd.f32 0.0, %v2949
      %v2951 = vpop.f32.mrb[0].mxu0
      %v2952 = vpop.f32.mrb[0].mxu0
      %v2953 = vadd.f32 0.0, %v2952
      %v2954 = vpop.f32.mrb[0].mxu0
      %2955 = vdwg.mxu0
      %2956 = vmatprep.subr.bf16.mxu0 0
      %2957 = vmatpush1.bf16.msra.mxu0 %v2006
      %2958 = vmatprep.subr.bf16.mxu0 0
      %2959 = vmatpush1.bf16.msra.mxu0 0
      %2960 = vmatprep.subr.bf16.mxu0 0
      %2961 = vmatpush1.bf16.msra.mxu0 0
      %2962 = vmatprep.subr.bf16.mxu0 0
      %2963 = vmatpush1.bf16.msra.mxu0 0
      %2964 = vmatprep.subr.bf16.mxu0 0
      %2965 = vmatpush1.bf16.msra.mxu0 0
      %2966 = vmatprep.subr.bf16.mxu0 0
      %2967 = vmatpush1.bf16.msra.mxu0 0
      %2968 = vmatprep.subr.bf16.mxu0 0
      %2969 = vmatpush1.bf16.msra.mxu0 0
      %2970 = vmatprep.subr.bf16.mxu0 0
      %2971 = vmatpush1.bf16.msra.mxu0 0
      %2972 = vmatprep.subr.bf16.mxu0 0
      %2973 = vmatpush1.bf16.msra.mxu0 0
      %2974 = vmatprep.subr.bf16.mxu0 0
      %2975 = vmatpush1.bf16.msra.mxu0 0
      %2976 = vmatprep.subr.bf16.mxu0 0
      %2977 = vmatpush1.bf16.msra.mxu0 0
      %2978 = vmatprep.subr.bf16.mxu0 0
      %2979 = vmatpush1.bf16.msra.mxu0 0
      %2980 = vmatprep.subr.bf16.mxu0 0
      %2981 = vmatpush1.bf16.msra.mxu0 0
      %2982 = vmatprep.subr.bf16.mxu0 0
      %2983 = vmatpush1.bf16.msra.mxu0 0
      %2984 = vmatprep.subr.bf16.mxu0 0
      %2985 = vmatpush1.bf16.msra.mxu0 0
      %2986 = vmatprep.subr.bf16.mxu0 0
      %2987 = vmatpush1.bf16.msra.mxu0 0
      %2988 = vmatprep.mubr.bf16.mxu0 0
      %2989 = vmatmul.mubr.bf16.gmra.mrb[0].mxu0 %v2020
      %v2990 = vpop.f32.mrb[0].mxu0
      %v2991 = vadd.f32 0.0, %v2990
      %v2992 = vpop.f32.mrb[0].mxu0
      %v2993 = vpop.f32.mrb[0].mxu0
      %v2994 = vadd.f32 0.0, %v2993
      %v2995 = vpop.f32.mrb[0].mxu0
      %2996 = vmatprep.mubr.bf16.mxu0 0
      %2997 = vmatmul.mubr.bf16.gmra.mrb[0].mxu0 %v2023
      %v2998 = vpop.f32.mrb[0].mxu0
      %v2999 = vadd.f32 0.0, %v2998
      %v3000 = vpop.f32.mrb[0].mxu0
      %v3001 = vpop.f32.mrb[0].mxu0
      %v3002 = vadd.f32 0.0, %v3001
      %v3003 = vpop.f32.mrb[0].mxu0
      %3004 = vdwg.mxu0
      %3005 = vmatprep.subr.bf16.mxu0 0
      %3006 = vmatpush1.bf16.msra.mxu0 %v2007
      %3007 = vmatprep.subr.bf16.mxu0 0
      %3008 = vmatpush1.bf16.msra.mxu0 0
      %3009 = vmatprep.subr.bf16.mxu0 0
      %3010 = vmatpush1.bf16.msra.mxu0 0
      %3011 = vmatprep.subr.bf16.mxu0 0
      %3012 = vmatpush1.bf16.msra.mxu0 0
      %3013 = vmatprep.subr.bf16.mxu0 0
      %3014 = vmatpush1.bf16.msra.mxu0 0
      %3015 = vmatprep.subr.bf16.mxu0 0
      %3016 = vmatpush1.bf16.msra.mxu0 0
      %3017 = vmatprep.subr.bf16.mxu0 0
      %3018 = vmatpush1.bf16.msra.mxu0 0
      %3019 = vmatprep.subr.bf16.mxu0 0
      %3020 = vmatpush1.bf16.msra.mxu0 0
      %3021 = vmatprep.subr.bf16.mxu0 0
      %3022 = vmatpush1.bf16.msra.mxu0 0
      %3023 = vmatprep.subr.bf16.mxu0 0
      %3024 = vmatpush1.bf16.msra.mxu0 0
      %3025 = vmatprep.subr.bf16.mxu0 0
      %3026 = vmatpush1.bf16.msra.mxu0 0
      %3027 = vmatprep.subr.bf16.mxu0 0
      %3028 = vmatpush1.bf16.msra.mxu0 0
      %3029 = vmatprep.subr.bf16.mxu0 0
      %3030 = vmatpush1.bf16.msra.mxu0 0
      %3031 = vmatprep.subr.bf16.mxu0 0
      %3032 = vmatpush1.bf16.msra.mxu0 0
      %3033 = vmatprep.subr.bf16.mxu0 0
      %3034 = vmatpush1.bf16.msra.mxu0 0
      %3035 = vmatprep.subr.bf16.mxu0 0
      %3036 = vmatpush1.bf16.msra.mxu0 0
      %3037 = vmatprep.mubr.bf16.mxu0 0
      %3038 = vmatmul.mubr.bf16.gmra.mrb[0].mxu0 %v2020
      %v3039 = vpop.f32.mrb[0].mxu0
      %v3040 = vadd.f32 0.0, %v3039
      %v3041 = vpop.f32.mrb[0].mxu0
      %v3042 = vpop.f32.mrb[0].mxu0
      %v3043 = vadd.f32 0.0, %v3042
      %v3044 = vpop.f32.mrb[0].mxu0
      %3045 = vmatprep.mubr.bf16.mxu0 0
      %3046 = vmatmul.mubr.bf16.gmra.mrb[0].mxu0 %v2023
      %v3047 = vpop.f32.mrb[0].mxu0
      %v3048 = vadd.f32 0.0, %v3047
      %v3049 = vpop.f32.mrb[0].mxu0
      %v3050 = vpop.f32.mrb[0].mxu0
      %v3051 = vadd.f32 0.0, %v3050
      %v3052 = vpop.f32.mrb[0].mxu0
      %3053 = vdwg.mxu0
      %3054 = vmatprep.subr.bf16.mxu0 0
      %3055 = vmatpush1.bf16.msra.mxu0 %v2008
      %3056 = vmatprep.subr.bf16.mxu0 0
      %3057 = vmatpush1.bf16.msra.mxu0 0
      %3058 = vmatprep.subr.bf16.mxu0 0
      %3059 = vmatpush1.bf16.msra.mxu0 0
      %3060 = vmatprep.subr.bf16.mxu0 0
      %3061 = vmatpush1.bf16.msra.mxu0 0
      %3062 = vmatprep.subr.bf16.mxu0 0
      %3063 = vmatpush1.bf16.msra.mxu0 0
      %3064 = vmatprep.subr.bf16.mxu0 0
      %3065 = vmatpush1.bf16.msra.mxu0 0
      %3066 = vmatprep.subr.bf16.mxu0 0
      %3067 = vmatpush1.bf16.msra.mxu0 0
      %3068 = vmatprep.subr.bf16.mxu0 0
      %3069 = vmatpush1.bf16.msra.mxu0 0
      %3070 = vmatprep.subr.bf16.mxu0 0
      %3071 = vmatpush1.bf16.msra.mxu0 0
      %3072 = vmatprep.subr.bf16.mxu0 0
      %3073 = vmatpush1.bf16.msra.mxu0 0
      %3074 = vmatprep.subr.bf16.mxu0 0
      %3075 = vmatpush1.bf16.msra.mxu0 0
      %3076 = vmatprep.subr.bf16.mxu0 0
      %3077 = vmatpush1.bf16.msra.mxu0 0
      %3078 = vmatprep.subr.bf16.mxu0 0
      %3079 = vmatpush1.bf16.msra.mxu0 0
      %3080 = vmatprep.subr.bf16.mxu0 0
      %3081 = vmatpush1.bf16.msra.mxu0 0
      %3082 = vmatprep.subr.bf16.mxu0 0
      %3083 = vmatpush1.bf16.msra.mxu0 0
      %3084 = vmatprep.subr.bf16.mxu0 0
      %3085 = vmatpush1.bf16.msra.mxu0 0
      %3086 = vmatprep.mubr.bf16.mxu0 0
      %3087 = vmatmul.mubr.bf16.gmra.mrb[0].mxu0 %v2020
      %v3088 = vpop.f32.mrb[0].mxu0
      %v3089 = vadd.f32 0.0, %v3088
      %v3090 = vpop.f32.mrb[0].mxu0
      %v3091 = vpop.f32.mrb[0].mxu0
      %v3092 = vadd.f32 0.0, %v3091
      %v3093 = vpop.f32.mrb[0].mxu0
      %3094 = vmatprep.mubr.bf16.mxu0 0
      %3095 = vmatmul.mubr.bf16.gmra.mrb[0].mxu0 %v2023
      %v3096 = vpop.f32.mrb[0].mxu0
      %v3097 = vadd.f32 0.0, %v3096
      %v3098 = vpop.f32.mrb[0].mxu0
      %v3099 = vpop.f32.mrb[0].mxu0
      %v3100 = vadd.f32 0.0, %v3099
      %v3101 = vpop.f32.mrb[0].mxu0
      %3102 = vdwg.mxu0
      %3103 = vmatprep.subr.bf16.mxu0 0
      %3104 = vmatpush1.bf16.msra.mxu0 %v2009
      %3105 = vmatprep.subr.bf16.mxu0 0
      %3106 = vmatpush1.bf16.msra.mxu0 0
      %3107 = vmatprep.subr.bf16.mxu0 0
      %3108 = vmatpush1.bf16.msra.mxu0 0
      %3109 = vmatprep.subr.bf16.mxu0 0
      %3110 = vmatpush1.bf16.msra.mxu0 0
      %3111 = vmatprep.subr.bf16.mxu0 0
      %3112 = vmatpush1.bf16.msra.mxu0 0
      %3113 = vmatprep.subr.bf16.mxu0 0
      %3114 = vmatpush1.bf16.msra.mxu0 0
      %3115 = vmatprep.subr.bf16.mxu0 0
      %3116 = vmatpush1.bf16.msra.mxu0 0
      %3117 = vmatprep.subr.bf16.mxu0 0
      %3118 = vmatpush1.bf16.msra.mxu0 0
      %3119 = vmatprep.subr.bf16.mxu0 0
      %3120 = vmatpush1.bf16.msra.mxu0 0
      %3121 = vmatprep.subr.bf16.mxu0 0
      %3122 = vmatpush1.bf16.msra.mxu0 0
      %3123 = vmatprep.subr.bf16.mxu0 0
      %3124 = vmatpush1.bf16.msra.mxu0 0
      %3125 = vmatprep.subr.bf16.mxu0 0
      %3126 = vmatpush1.bf16.msra.mxu0 0
      %3127 = vmatprep.subr.bf16.mxu0 0
      %3128 = vmatpush1.bf16.msra.mxu0 0
      %3129 = vmatprep.subr.bf16.mxu0 0
      %3130 = vmatpush1.bf16.msra.mxu0 0
      %3131 = vmatprep.subr.bf16.mxu0 0
      %3132 = vmatpush1.bf16.msra.mxu0 0
      %3133 = vmatprep.subr.bf16.mxu0 0
      %3134 = vmatpush1.bf16.msra.mxu0 0
      %3135 = vmatprep.mubr.bf16.mxu0 0
      %3136 = vmatmul.mubr.bf16.gmra.mrb[0].mxu0 %v2020
      %v3137 = vpop.f32.mrb[0].mxu0
      %v3138 = vadd.f32 0.0, %v3137
      %v3139 = vpop.f32.mrb[0].mxu0
      %v3140 = vpop.f32.mrb[0].mxu0
      %v3141 = vadd.f32 0.0, %v3140
      %v3142 = vpop.f32.mrb[0].mxu0
      %3143 = vmatprep.mubr.bf16.mxu0 0
      %3144 = vmatmul.mubr.bf16.gmra.mrb[0].mxu0 %v2023
      %v3145 = vpop.f32.mrb[0].mxu0
      %v3146 = vadd.f32 0.0, %v3145
      %v3147 = vpop.f32.mrb[0].mxu0
      %v3148 = vpop.f32.mrb[0].mxu0
      %v3149 = vadd.f32 0.0, %v3148
      %v3150 = vpop.f32.mrb[0].mxu0
      %3151 = vdwg.mxu0
      %3152 = vmatprep.subr.bf16.mxu0 0
      %3153 = vmatpush1.bf16.msra.mxu0 %v2010
      %3154 = vmatprep.subr.bf16.mxu0 0
      %3155 = vmatpush1.bf16.msra.mxu0 0
      %3156 = vmatprep.subr.bf16.mxu0 0
      %3157 = vmatpush1.bf16.msra.mxu0 0
      %3158 = vmatprep.subr.bf16.mxu0 0
      %3159 = vmatpush1.bf16.msra.mxu0 0
      %3160 = vmatprep.subr.bf16.mxu0 0
      %3161 = vmatpush1.bf16.msra.mxu0 0
      %3162 = vmatprep.subr.bf16.mxu0 0
      %3163 = vmatpush1.bf16.msra.mxu0 0
      %3164 = vmatprep.subr.bf16.mxu0 0
      %3165 = vmatpush1.bf16.msra.mxu0 0
      %3166 = vmatprep.subr.bf16.mxu0 0
      %3167 = vmatpush1.bf16.msra.mxu0 0
      %3168 = vmatprep.subr.bf16.mxu0 0
      %3169 = vmatpush1.bf16.msra.mxu0 0
      %3170 = vmatprep.subr.bf16.mxu0 0
      %3171 = vmatpush1.bf16.msra.mxu0 0
      %3172 = vmatprep.subr.bf16.mxu0 0
      %3173 = vmatpush1.bf16.msra.mxu0 0
      %3174 = vmatprep.subr.bf16.mxu0 0
      %3175 = vmatpush1.bf16.msra.mxu0 0
      %3176 = vmatprep.subr.bf16.mxu0 0
      %3177 = vmatpush1.bf16.msra.mxu0 0
      %3178 = vmatprep.subr.bf16.mxu0 0
      %3179 = vmatpush1.bf16.msra.mxu0 0
      %3180 = vmatprep.subr.bf16.mxu0 0
      %3181 = vmatpush1.bf16.msra.mxu0 0
      %3182 = vmatprep.subr.bf16.mxu0 0
      %3183 = vmatpush1.bf16.msra.mxu0 0
      %3184 = vmatprep.mubr.bf16.mxu0 0
      %3185 = vmatmul.mubr.bf16.gmra.mrb[0].mxu0 %v2020
      %v3186 = vpop.f32.mrb[0].mxu0
      %v3187 = vadd.f32 0.0, %v3186
      %v3188 = vpop.f32.mrb[0].mxu0
      %v3189 = vpop.f32.mrb[0].mxu0
      %v3190 = vadd.f32 0.0, %v3189
      %v3191 = vpop.f32.mrb[0].mxu0
      %3192 = vmatprep.mubr.bf16.mxu0 0
      %3193 = vmatmul.mubr.bf16.gmra.mrb[0].mxu0 %v2023
      %v3194 = vpop.f32.mrb[0].mxu0
      %v3195 = vadd.f32 0.0, %v3194
      %v3196 = vpop.f32.mrb[0].mxu0
      %v3197 = vpop.f32.mrb[0].mxu0
      %v3198 = vadd.f32 0.0, %v3197
      %v3199 = vpop.f32.mrb[0].mxu0
      %3200 = vdwg.mxu0
      %3201 = vmatprep.subr.bf16.mxu0 0
      %3202 = vmatpush1.bf16.msra.mxu0 %v2011
      %3203 = vmatprep.subr.bf16.mxu0 0
      %3204 = vmatpush1.bf16.msra.mxu0 0
      %3205 = vmatprep.subr.bf16.mxu0 0
      %3206 = vmatpush1.bf16.msra.mxu0 0
      %3207 = vmatprep.subr.bf16.mxu0 0
      %3208 = vmatpush1.bf16.msra.mxu0 0
      %3209 = vmatprep.subr.bf16.mxu0 0
      %3210 = vmatpush1.bf16.msra.mxu0 0
      %3211 = vmatprep.subr.bf16.mxu0 0
      %3212 = vmatpush1.bf16.msra.mxu0 0
      %3213 = vmatprep.subr.bf16.mxu0 0
      %3214 = vmatpush1.bf16.msra.mxu0 0
      %3215 = vmatprep.subr.bf16.mxu0 0
      %3216 = vmatpush1.bf16.msra.mxu0 0
      %3217 = vmatprep.subr.bf16.mxu0 0
      %3218 = vmatpush1.bf16.msra.mxu0 0
      %3219 = vmatprep.subr.bf16.mxu0 0
      %3220 = vmatpush1.bf16.msra.mxu0 0
      %3221 = vmatprep.subr.bf16.mxu0 0
      %3222 = vmatpush1.bf16.msra.mxu0 0
      %3223 = vmatprep.subr.bf16.mxu0 0
      %3224 = vmatpush1.bf16.msra.mxu0 0
      %3225 = vmatprep.subr.bf16.mxu0 0
      %3226 = vmatpush1.bf16.msra.mxu0 0
      %3227 = vmatprep.subr.bf16.mxu0 0
      %3228 = vmatpush1.bf16.msra.mxu0 0
      %3229 = vmatprep.subr.bf16.mxu0 0
      %3230 = vmatpush1.bf16.msra.mxu0 0
      %3231 = vmatprep.subr.bf16.mxu0 0
      %3232 = vmatpush1.bf16.msra.mxu0 0
      %3233 = vmatprep.mubr.bf16.mxu0 0
      %3234 = vmatmul.mubr.bf16.gmra.mrb[0].mxu0 %v2020
      %v3235 = vpop.f32.mrb[0].mxu0
      %v3236 = vadd.f32 0.0, %v3235
      %v3237 = vpop.f32.mrb[0].mxu0
      %v3238 = vpop.f32.mrb[0].mxu0
      %v3239 = vadd.f32 0.0, %v3238
      %v3240 = vpop.f32.mrb[0].mxu0
      %3241 = vmatprep.mubr.bf16.mxu0 0
      %3242 = vmatmul.mubr.bf16.gmra.mrb[0].mxu0 %v2023
      %v3243 = vpop.f32.mrb[0].mxu0
      %v3244 = vadd.f32 0.0, %v3243
      %v3245 = vpop.f32.mrb[0].mxu0
      %v3246 = vpop.f32.mrb[0].mxu0
      %v3247 = vadd.f32 0.0, %v3246
      %v3248 = vpop.f32.mrb[0].mxu0
      %3249 = vdwg.mxu0
      %3250 = vmatprep.subr.bf16.mxu0 0
      %3251 = vmatpush1.bf16.msra.mxu0 %v2012
      %3252 = vmatprep.subr.bf16.mxu0 0
      %3253 = vmatpush1.bf16.msra.mxu0 0
      %3254 = vmatprep.subr.bf16.mxu0 0
      %3255 = vmatpush1.bf16.msra.mxu0 0
      %3256 = vmatprep.subr.bf16.mxu0 0
      %3257 = vmatpush1.bf16.msra.mxu0 0
      %3258 = vmatprep.subr.bf16.mxu0 0
      %3259 = vmatpush1.bf16.msra.mxu0 0
      %3260 = vmatprep.subr.bf16.mxu0 0
      %3261 = vmatpush1.bf16.msra.mxu0 0
      %3262 = vmatprep.subr.bf16.mxu0 0
      %3263 = vmatpush1.bf16.msra.mxu0 0
      %3264 = vmatprep.subr.bf16.mxu0 0
      %3265 = vmatpush1.bf16.msra.mxu0 0
      %3266 = vmatprep.subr.bf16.mxu0 0
      %3267 = vmatpush1.bf16.msra.mxu0 0
      %3268 = vmatprep.subr.bf16.mxu0 0
      %3269 = vmatpush1.bf16.msra.mxu0 0
      %3270 = vmatprep.subr.bf16.mxu0 0
      %3271 = vmatpush1.bf16.msra.mxu0 0
      %3272 = vmatprep.subr.bf16.mxu0 0
      %3273 = vmatpush1.bf16.msra.mxu0 0
      %3274 = vmatprep.subr.bf16.mxu0 0
      %3275 = vmatpush1.bf16.msra.mxu0 0
      %3276 = vmatprep.subr.bf16.mxu0 0
      %3277 = vmatpush1.bf16.msra.mxu0 0
      %3278 = vmatprep.subr.bf16.mxu0 0
      %3279 = vmatpush1.bf16.msra.mxu0 0
      %3280 = vmatprep.subr.bf16.mxu0 0
      %3281 = vmatpush1.bf16.msra.mxu0 0
      %3282 = vmatprep.mubr.bf16.mxu0 0
      %3283 = vmatmul.mubr.bf16.gmra.mrb[0].mxu0 %v2020
      %v3284 = vpop.f32.mrb[0].mxu0
      %v3285 = vadd.f32 0.0, %v3284
      %v3286 = vpop.f32.mrb[0].mxu0
      %v3287 = vpop.f32.mrb[0].mxu0
      %v3288 = vadd.f32 0.0, %v3287
      %v3289 = vpop.f32.mrb[0].mxu0
      %3290 = vmatprep.mubr.bf16.mxu0 0
      %3291 = vmatmul.mubr.bf16.gmra.mrb[0].mxu0 %v2023
      %v3292 = vpop.f32.mrb[0].mxu0
      %v3293 = vadd.f32 0.0, %v3292
      %v3294 = vpop.f32.mrb[0].mxu0
      %v3295 = vpop.f32.mrb[0].mxu0
      %v3296 = vadd.f32 0.0, %v3295
      %v3297 = vpop.f32.mrb[0].mxu0
      %3298 = vdwg.mxu0
      %3299 = vmatprep.subr.bf16.mxu0 0
      %3300 = vmatpush1.bf16.msra.mxu0 %v2013
      %3301 = vmatprep.subr.bf16.mxu0 0
      %3302 = vmatpush1.bf16.msra.mxu0 0
      %3303 = vmatprep.subr.bf16.mxu0 0
      %3304 = vmatpush1.bf16.msra.mxu0 0
      %3305 = vmatprep.subr.bf16.mxu0 0
      %3306 = vmatpush1.bf16.msra.mxu0 0
      %3307 = vmatprep.subr.bf16.mxu0 0
      %3308 = vmatpush1.bf16.msra.mxu0 0
      %3309 = vmatprep.subr.bf16.mxu0 0
      %3310 = vmatpush1.bf16.msra.mxu0 0
      %3311 = vmatprep.subr.bf16.mxu0 0
      %3312 = vmatpush1.bf16.msra.mxu0 0
      %3313 = vmatprep.subr.bf16.mxu0 0
      %3314 = vmatpush1.bf16.msra.mxu0 0
      %3315 = vmatprep.subr.bf16.mxu0 0
      %3316 = vmatpush1.bf16.msra.mxu0 0
      %3317 = vmatprep.subr.bf16.mxu0 0
      %3318 = vmatpush1.bf16.msra.mxu0 0
      %3319 = vmatprep.subr.bf16.mxu0 0
      %3320 = vmatpush1.bf16.msra.mxu0 0
      %3321 = vmatprep.subr.bf16.mxu0 0
      %3322 = vmatpush1.bf16.msra.mxu0 0
      %3323 = vmatprep.subr.bf16.mxu0 0
      %3324 = vmatpush1.bf16.msra.mxu0 0
      %3325 = vmatprep.subr.bf16.mxu0 0
      %3326 = vmatpush1.bf16.msra.mxu0 0
      %3327 = vmatprep.subr.bf16.mxu0 0
      %3328 = vmatpush1.bf16.msra.mxu0 0
      %3329 = vmatprep.subr.bf16.mxu0 0
      %3330 = vmatpush1.bf16.msra.mxu0 0
      %3331 = vmatprep.mubr.bf16.mxu0 0
      %3332 = vmatmul.mubr.bf16.gmra.mrb[0].mxu0 %v2020
      %v3333 = vpop.f32.mrb[0].mxu0
      %v3334 = vadd.f32 0.0, %v3333
      %v3335 = vpop.f32.mrb[0].mxu0
      %v3336 = vpop.f32.mrb[0].mxu0
      %v3337 = vadd.f32 0.0, %v3336
      %v3338 = vpop.f32.mrb[0].mxu0
      %3339 = vmatprep.mubr.bf16.mxu0 0
      %3340 = vmatmul.mubr.bf16.gmra.mrb[0].mxu0 %v2023
      %v3341 = vpop.f32.mrb[0].mxu0
      %v3342 = vadd.f32 0.0, %v3341
      %v3343 = vpop.f32.mrb[0].mxu0
      %v3344 = vpop.f32.mrb[0].mxu0
      %v3345 = vadd.f32 0.0, %v3344
      %v3346 = vpop.f32.mrb[0].mxu0
      %3347 = vdwg.mxu0
      %3348 = vmatprep.subr.bf16.mxu0 0
      %3349 = vmatpush1.bf16.msra.mxu0 %v2014
      %3350 = vmatprep.subr.bf16.mxu0 0
      %3351 = vmatpush1.bf16.msra.mxu0 0
      %3352 = vmatprep.subr.bf16.mxu0 0
      %3353 = vmatpush1.bf16.msra.mxu0 0
      %3354 = vmatprep.subr.bf16.mxu0 0
      %3355 = vmatpush1.bf16.msra.mxu0 0
      %3356 = vmatprep.subr.bf16.mxu0 0
      %3357 = vmatpush1.bf16.msra.mxu0 0
      %3358 = vmatprep.subr.bf16.mxu0 0
      %3359 = vmatpush1.bf16.msra.mxu0 0
      %3360 = vmatprep.subr.bf16.mxu0 0
      %3361 = vmatpush1.bf16.msra.mxu0 0
      %3362 = vmatprep.subr.bf16.mxu0 0
      %3363 = vmatpush1.bf16.msra.mxu0 0
      %3364 = vmatprep.subr.bf16.mxu0 0
      %3365 = vmatpush1.bf16.msra.mxu0 0
      %3366 = vmatprep.subr.bf16.mxu0 0
      %3367 = vmatpush1.bf16.msra.mxu0 0
      %3368 = vmatprep.subr.bf16.mxu0 0
      %3369 = vmatpush1.bf16.msra.mxu0 0
      %3370 = vmatprep.subr.bf16.mxu0 0
      %3371 = vmatpush1.bf16.msra.mxu0 0
      %3372 = vmatprep.subr.bf16.mxu0 0
      %3373 = vmatpush1.bf16.msra.mxu0 0
      %3374 = vmatprep.subr.bf16.mxu0 0
      %3375 = vmatpush1.bf16.msra.mxu0 0
      %3376 = vmatprep.subr.bf16.mxu0 0
      %3377 = vmatpush1.bf16.msra.mxu0 0
      %3378 = vmatprep.subr.bf16.mxu0 0
      %3379 = vmatpush1.bf16.msra.mxu0 0
      %3380 = vmatprep.mubr.bf16.mxu0 0
      %3381 = vmatmul.mubr.bf16.gmra.mrb[0].mxu0 %v2020
      %v3382 = vpop.f32.mrb[0].mxu0
      %v3383 = vadd.f32 0.0, %v3382
      %v3384 = vpop.f32.mrb[0].mxu0
      %v3385 = vpop.f32.mrb[0].mxu0
      %v3386 = vadd.f32 0.0, %v3385
      %v3387 = vpop.f32.mrb[0].mxu0
      %3388 = vmatprep.mubr.bf16.mxu0 0
      %3389 = vmatmul.mubr.bf16.gmra.mrb[0].mxu0 %v2023
      %v3390 = vpop.f32.mrb[0].mxu0
      %v3391 = vadd.f32 0.0, %v3390
      %v3392 = vpop.f32.mrb[0].mxu0
      %v3393 = vpop.f32.mrb[0].mxu0
      %v3394 = vadd.f32 0.0, %v3393
      %v3395 = vpop.f32.mrb[0].mxu0
      %3396 = vdwg.mxu0
      %3397 = vmatprep.subr.bf16.mxu0 0
      %3398 = vmatpush1.bf16.msra.mxu0 %v2015
      %3399 = vmatprep.subr.bf16.mxu0 0
      %3400 = vmatpush1.bf16.msra.mxu0 0
      %3401 = vmatprep.subr.bf16.mxu0 0
      %3402 = vmatpush1.bf16.msra.mxu0 0
      %3403 = vmatprep.subr.bf16.mxu0 0
      %3404 = vmatpush1.bf16.msra.mxu0 0
      %3405 = vmatprep.subr.bf16.mxu0 0
      %3406 = vmatpush1.bf16.msra.mxu0 0
      %3407 = vmatprep.subr.bf16.mxu0 0
      %3408 = vmatpush1.bf16.msra.mxu0 0
      %3409 = vmatprep.subr.bf16.mxu0 0
      %3410 = vmatpush1.bf16.msra.mxu0 0
      %3411 = vmatprep.subr.bf16.mxu0 0
      %3412 = vmatpush1.bf16.msra.mxu0 0
      %3413 = vmatprep.subr.bf16.mxu0 0
      %3414 = vmatpush1.bf16.msra.mxu0 0
      %3415 = vmatprep.subr.bf16.mxu0 0
      %3416 = vmatpush1.bf16.msra.mxu0 0
      %3417 = vmatprep.subr.bf16.mxu0 0
      %3418 = vmatpush1.bf16.msra.mxu0 0
      %3419 = vmatprep.subr.bf16.mxu0 0
      %3420 = vmatpush1.bf16.msra.mxu0 0
      %3421 = vmatprep.subr.bf16.mxu0 0
      %3422 = vmatpush1.bf16.msra.mxu0 0
      %3423 = vmatprep.subr.bf16.mxu0 0
      %3424 = vmatpush1.bf16.msra.mxu0 0
      %3425 = vmatprep.subr.bf16.mxu0 0
      %3426 = vmatpush1.bf16.msra.mxu0 0
      %3427 = vmatprep.subr.bf16.mxu0 0
      %3428 = vmatpush1.bf16.msra.mxu0 0
      %3429 = vmatprep.mubr.bf16.mxu0 0
      %3430 = vmatmul.mubr.bf16.gmra.mrb[0].mxu0 %v2020
      %v3431 = vpop.f32.mrb[0].mxu0
      %v3432 = vadd.f32 0.0, %v3431
      %v3433 = vpop.f32.mrb[0].mxu0
      %v3434 = vpop.f32.mrb[0].mxu0
      %v3435 = vadd.f32 0.0, %v3434
      %v3436 = vpop.f32.mrb[0].mxu0
      %3437 = vmatprep.mubr.bf16.mxu0 0
      %3438 = vmatmul.mubr.bf16.gmra.mrb[0].mxu0 %v2023
      %v3439 = vpop.f32.mrb[0].mxu0
      %v3440 = vadd.f32 0.0, %v3439
      %v3441 = vpop.f32.mrb[0].mxu0
      %v3442 = vpop.f32.mrb[0].mxu0
      %v3443 = vadd.f32 0.0, %v3442
      %v3444 = vpop.f32.mrb[0].mxu0
      %3445 = vdwg.mxu0
      %3446 = vmatprep.subr.bf16.mxu0 0
      %3447 = vmatpush1.bf16.msra.mxu0 %v2016
      %3448 = vmatprep.subr.bf16.mxu0 0
      %3449 = vmatpush1.bf16.msra.mxu0 0
      %3450 = vmatprep.subr.bf16.mxu0 0
      %3451 = vmatpush1.bf16.msra.mxu0 0
      %3452 = vmatprep.subr.bf16.mxu0 0
      %3453 = vmatpush1.bf16.msra.mxu0 0
      %3454 = vmatprep.subr.bf16.mxu0 0
      %3455 = vmatpush1.bf16.msra.mxu0 0
      %3456 = vmatprep.subr.bf16.mxu0 0
      %3457 = vmatpush1.bf16.msra.mxu0 0
      %3458 = vmatprep.subr.bf16.mxu0 0
      %3459 = vmatpush1.bf16.msra.mxu0 0
      %3460 = vmatprep.subr.bf16.mxu0 0
      %3461 = vmatpush1.bf16.msra.mxu0 0
      %3462 = vmatprep.subr.bf16.mxu0 0
      %3463 = vmatpush1.bf16.msra.mxu0 0
      %3464 = vmatprep.subr.bf16.mxu0 0
      %3465 = vmatpush1.bf16.msra.mxu0 0
      %3466 = vmatprep.subr.bf16.mxu0 0
      %3467 = vmatpush1.bf16.msra.mxu0 0
      %3468 = vmatprep.subr.bf16.mxu0 0
      %3469 = vmatpush1.bf16.msra.mxu0 0
      %3470 = vmatprep.subr.bf16.mxu0 0
      %3471 = vmatpush1.bf16.msra.mxu0 0
      %3472 = vmatprep.subr.bf16.mxu0 0
      %3473 = vmatpush1.bf16.msra.mxu0 0
      %3474 = vmatprep.subr.bf16.mxu0 0
      %3475 = vmatpush1.bf16.msra.mxu0 0
      %3476 = vmatprep.subr.bf16.mxu0 0
      %3477 = vmatpush1.bf16.msra.mxu0 0
      %3478 = vmatprep.mubr.bf16.mxu0 0
      %3479 = vmatmul.mubr.bf16.gmra.mrb[0].mxu0 %v2020
      %v3480 = vpop.f32.mrb[0].mxu0
      %v3481 = vadd.f32 0.0, %v3480
      %v3482 = vpop.f32.mrb[0].mxu0
      %v3483 = vpop.f32.mrb[0].mxu0
      %v3484 = vadd.f32 0.0, %v3483
      %v3485 = vpop.f32.mrb[0].mxu0
      %3486 = vmatprep.mubr.bf16.mxu0 0
      %3487 = vmatmul.mubr.bf16.gmra.mrb[0].mxu0 %v2023
      %v3488 = vpop.f32.mrb[0].mxu0
      %v3489 = vadd.f32 0.0, %v3488
      %v3490 = vpop.f32.mrb[0].mxu0
      %v3491 = vpop.f32.mrb[0].mxu0
      %v3492 = vadd.f32 0.0, %v3491
      %v3493 = vpop.f32.mrb[0].mxu0
      %3494 = vdwg.mxu0
      %3495 = vmatprep.subr.bf16.mxu0 0
      %3496 = vmatpush1.bf16.msra.mxu0 %v2017
      %3497 = vmatprep.subr.bf16.mxu0 0
      %3498 = vmatpush1.bf16.msra.mxu0 0
      %3499 = vmatprep.subr.bf16.mxu0 0
      %3500 = vmatpush1.bf16.msra.mxu0 0
      %3501 = vmatprep.subr.bf16.mxu0 0
      %3502 = vmatpush1.bf16.msra.mxu0 0
      %3503 = vmatprep.subr.bf16.mxu0 0
      %3504 = vmatpush1.bf16.msra.mxu0 0
      %3505 = vmatprep.subr.bf16.mxu0 0
      %3506 = vmatpush1.bf16.msra.mxu0 0
      %3507 = vmatprep.subr.bf16.mxu0 0
      %3508 = vmatpush1.bf16.msra.mxu0 0
      %3509 = vmatprep.subr.bf16.mxu0 0
      %3510 = vmatpush1.bf16.msra.mxu0 0
      %3511 = vmatprep.subr.bf16.mxu0 0
      %3512 = vmatpush1.bf16.msra.mxu0 0
      %3513 = vmatprep.subr.bf16.mxu0 0
      %3514 = vmatpush1.bf16.msra.mxu0 0
      %3515 = vmatprep.subr.bf16.mxu0 0
      %3516 = vmatpush1.bf16.msra.mxu0 0
      %3517 = vmatprep.subr.bf16.mxu0 0
      %3518 = vmatpush1.bf16.msra.mxu0 0
      %3519 = vmatprep.subr.bf16.mxu0 0
      %3520 = vmatpush1.bf16.msra.mxu0 0
      %3521 = vmatprep.subr.bf16.mxu0 0
      %3522 = vmatpush1.bf16.msra.mxu0 0
      %3523 = vmatprep.subr.bf16.mxu0 0
      %3524 = vmatpush1.bf16.msra.mxu0 0
      %3525 = vmatprep.subr.bf16.mxu0 0
      %3526 = vmatpush1.bf16.msra.mxu0 0
      %3527 = vmatprep.mubr.bf16.mxu0 0
      %3528 = vmatmul.mubr.bf16.gmra.mrb[0].mxu0 %v2020
      %v3529 = vpop.f32.mrb[0].mxu0
      %v3530 = vadd.f32 0.0, %v3529
      %v3531 = vpop.f32.mrb[0].mxu0
      %v3532 = vpop.f32.mrb[0].mxu0
      %v3533 = vadd.f32 0.0, %v3532
      %v3534 = vpop.f32.mrb[0].mxu0
      %3535 = vmatprep.mubr.bf16.mxu0 0
      %3536 = vmatmul.mubr.bf16.gmra.mrb[0].mxu0 %v2023
      %v3537 = vpop.f32.mrb[0].mxu0
      %v3538 = vadd.f32 0.0, %v3537
      %v3539 = vpop.f32.mrb[0].mxu0
      %v3540 = vpop.f32.mrb[0].mxu0
      %v3541 = vadd.f32 0.0, %v3540
      %v3542 = vpop.f32.mrb[0].mxu0
      %3543 = vdwg.mxu0
      %3544 = vmatprep.subr.bf16.mxu0 0
      %3545 = vmatpush1.bf16.msra.mxu0 %v2018
      %3546 = vmatprep.subr.bf16.mxu0 0
      %3547 = vmatpush1.bf16.msra.mxu0 0
      %3548 = vmatprep.subr.bf16.mxu0 0
      %3549 = vmatpush1.bf16.msra.mxu0 0
      %3550 = vmatprep.subr.bf16.mxu0 0
      %3551 = vmatpush1.bf16.msra.mxu0 0
      %3552 = vmatprep.subr.bf16.mxu0 0
      %3553 = vmatpush1.bf16.msra.mxu0 0
      %3554 = vmatprep.subr.bf16.mxu0 0
      %3555 = vmatpush1.bf16.msra.mxu0 0
      %3556 = vmatprep.subr.bf16.mxu0 0
      %3557 = vmatpush1.bf16.msra.mxu0 0
      %3558 = vmatprep.subr.bf16.mxu0 0
      %3559 = vmatpush1.bf16.msra.mxu0 0
      %3560 = vmatprep.subr.bf16.mxu0 0
      %3561 = vmatpush1.bf16.msra.mxu0 0
      %3562 = vmatprep.subr.bf16.mxu0 0
      %3563 = vmatpush1.bf16.msra.mxu0 0
      %3564 = vmatprep.subr.bf16.mxu0 0
      %3565 = vmatpush1.bf16.msra.mxu0 0
      %3566 = vmatprep.subr.bf16.mxu0 0
      %3567 = vmatpush1.bf16.msra.mxu0 0
      %3568 = vmatprep.subr.bf16.mxu0 0
      %3569 = vmatpush1.bf16.msra.mxu0 0
      %3570 = vmatprep.subr.bf16.mxu0 0
      %3571 = vmatpush1.bf16.msra.mxu0 0
      %3572 = vmatprep.subr.bf16.mxu0 0
      %3573 = vmatpush1.bf16.msra.mxu0 0
      %3574 = vmatprep.subr.bf16.mxu0 0
      %3575 = vmatpush1.bf16.msra.mxu0 0
      %3576 = vmatprep.mubr.bf16.mxu0 0
      %3577 = vmatmul.mubr.bf16.gmra.mrb[0].mxu0 %v2020
      %v3578 = vpop.f32.mrb[0].mxu0
      %v3579 = vadd.f32 0.0, %v3578
      %v3580 = vpop.f32.mrb[0].mxu0
      %v3581 = vpop.f32.mrb[0].mxu0
      %v3582 = vadd.f32 0.0, %v3581
      %v3583 = vpop.f32.mrb[0].mxu0
      %3584 = vmatprep.mubr.bf16.mxu0 0
      %3585 = vmatmul.mubr.bf16.gmra.mrb[0].mxu0 %v2023
      %v3586 = vpop.f32.mrb[0].mxu0
      %v3587 = vadd.f32 0.0, %v3586
      %v3588 = vpop.f32.mrb[0].mxu0
      %v3589 = vpop.f32.mrb[0].mxu0
      %v3590 = vadd.f32 0.0, %v3589
      %v3591 = vpop.f32.mrb[0].mxu0
      %3592 = vdwg.mxu0
      %v3593 = vpack.c.bf16 %v2063, %v2060
      %v3594 = vpack.c.bf16 %v2071, %v2068
      %v3595 = vpack.c.bf16 %v2112, %v2109
      %v3596 = vpack.c.bf16 %v2120, %v2117
      %v3597 = vpack.c.bf16 %v2161, %v2158
      %v3598 = vpack.c.bf16 %v2169, %v2166
      %v3599 = vpack.c.bf16 %v2210, %v2207
      %v3600 = vpack.c.bf16 %v2218, %v2215
      %v3601 = vpack.c.bf16 %v2259, %v2256
      %v3602 = vpack.c.bf16 %v2267, %v2264
      %v3603 = vpack.c.bf16 %v2308, %v2305
      %v3604 = vpack.c.bf16 %v2316, %v2313
      %v3605 = vpack.c.bf16 %v2357, %v2354
      %v3606 = vpack.c.bf16 %v2365, %v2362
      %v3607 = vpack.c.bf16 %v2406, %v2403
      %v3608 = vpack.c.bf16 %v2414, %v2411
      %v3609 = vpack.c.bf16 %v2455, %v2452
      %v3610 = vpack.c.bf16 %v2463, %v2460
      %v3611 = vpack.c.bf16 %v2504, %v2501
      %v3612 = vpack.c.bf16 %v2512, %v2509
      %v3613 = vpack.c.bf16 %v2553, %v2550
      %v3614 = vpack.c.bf16 %v2561, %v2558
      %v3615 = vpack.c.bf16 %v2602, %v2599
      %v3616 = vpack.c.bf16 %v2610, %v2607
      %v3617 = vpack.c.bf16 %v2651, %v2648
      %v3618 = vpack.c.bf16 %v2659, %v2656
      %v3619 = vpack.c.bf16 %v2700, %v2697
      %v3620 = vpack.c.bf16 %v2708, %v2705
      %v3621 = vpack.c.bf16 %v2749, %v2746
      %v3622 = vpack.c.bf16 %v2757, %v2754
      %v3623 = vpack.c.bf16 %v2798, %v2795
      %v3624 = vpack.c.bf16 %v2806, %v2803
      %v3625 = vpack.c.bf16 %v2847, %v2844
      %v3626 = vpack.c.bf16 %v2855, %v2852
      %v3627 = vpack.c.bf16 %v2896, %v2893
      %v3628 = vpack.c.bf16 %v2904, %v2901
      %v3629 = vpack.c.bf16 %v2945, %v2942
      %v3630 = vpack.c.bf16 %v2953, %v2950
      %v3631 = vpack.c.bf16 %v2994, %v2991
      %v3632 = vpack.c.bf16 %v3002, %v2999
      %v3633 = vpack.c.bf16 %v3043, %v3040
      %v3634 = vpack.c.bf16 %v3051, %v3048
      %v3635 = vpack.c.bf16 %v3092, %v3089
      %v3636 = vpack.c.bf16 %v3100, %v3097
      %v3637 = vpack.c.bf16 %v3141, %v3138
      %v3638 = vpack.c.bf16 %v3149, %v3146
      %v3639 = vpack.c.bf16 %v3190, %v3187
      %v3640 = vpack.c.bf16 %v3198, %v3195
      %v3641 = vpack.c.bf16 %v3239, %v3236
      %v3642 = vpack.c.bf16 %v3247, %v3244
      %v3643 = vpack.c.bf16 %v3288, %v3285
      %v3644 = vpack.c.bf16 %v3296, %v3293
      %v3645 = vpack.c.bf16 %v3337, %v3334
      %v3646 = vpack.c.bf16 %v3345, %v3342
      %v3647 = vpack.c.bf16 %v3386, %v3383
      %v3648 = vpack.c.bf16 %v3394, %v3391
      %v3649 = vpack.c.bf16 %v3435, %v3432
      %v3650 = vpack.c.bf16 %v3443, %v3440
      %v3651 = vpack.c.bf16 %v3484, %v3481
      %v3652 = vpack.c.bf16 %v3492, %v3489
      %v3653 = vpack.c.bf16 %v3533, %v3530
      %v3654 = vpack.c.bf16 %v3541, %v3538
      %v3655 = vpack.c.bf16 %v3582, %v3579
      %v3656 = vpack.c.bf16 %v3590, %v3587
      %v3721 = vunpack.c.l.b16 %v3593
      %v3722 = vunpack.c.h.b16 %v3593
      %v3723 = vunpack.c.l.b16 %v3594
      %v3724 = vunpack.c.h.b16 %v3594
      %v3725 = vunpack.c.l.b16 %v3595
      %v3726 = vunpack.c.h.b16 %v3595
      %v3727 = vunpack.c.l.b16 %v3596
      %v3728 = vunpack.c.h.b16 %v3596
      %v3729 = vunpack.c.l.b16 %v3597
      %v3730 = vunpack.c.h.b16 %v3597
      %v3731 = vunpack.c.l.b16 %v3598
      %v3732 = vunpack.c.h.b16 %v3598
      %v3733 = vunpack.c.l.b16 %v3599
      %v3734 = vunpack.c.h.b16 %v3599
      %v3735 = vunpack.c.l.b16 %v3600
      %v3736 = vunpack.c.h.b16 %v3600
      %v3737 = vunpack.c.l.b16 %v3601
      %v3738 = vunpack.c.h.b16 %v3601
      %v3739 = vunpack.c.l.b16 %v3602
      %v3740 = vunpack.c.h.b16 %v3602
      %v3741 = vunpack.c.l.b16 %v3603
      %v3742 = vunpack.c.h.b16 %v3603
      %v3743 = vunpack.c.l.b16 %v3604
      %v3744 = vunpack.c.h.b16 %v3604
      %v3745 = vunpack.c.l.b16 %v3605
      %v3746 = vunpack.c.h.b16 %v3605
      %v3747 = vunpack.c.l.b16 %v3606
      %v3748 = vunpack.c.h.b16 %v3606
      %v3749 = vunpack.c.l.b16 %v3607
      %v3750 = vunpack.c.h.b16 %v3607
      %v3751 = vunpack.c.l.b16 %v3608
      %v3752 = vunpack.c.h.b16 %v3608
      %v3753 = vunpack.c.l.b16 %v3609
      %v3754 = vunpack.c.h.b16 %v3609
      %v3755 = vunpack.c.l.b16 %v3610
      %v3756 = vunpack.c.h.b16 %v3610
      %v3757 = vunpack.c.l.b16 %v3611
      %v3758 = vunpack.c.h.b16 %v3611
      %v3759 = vunpack.c.l.b16 %v3612
      %v3760 = vunpack.c.h.b16 %v3612
      %v3761 = vunpack.c.l.b16 %v3613
      %v3762 = vunpack.c.h.b16 %v3613
      %v3763 = vunpack.c.l.b16 %v3614
      %v3764 = vunpack.c.h.b16 %v3614
      %v3765 = vunpack.c.l.b16 %v3615
      %v3766 = vunpack.c.h.b16 %v3615
      %v3767 = vunpack.c.l.b16 %v3616
      %v3768 = vunpack.c.h.b16 %v3616
      %v3769 = vunpack.c.l.b16 %v3617
      %v3770 = vunpack.c.h.b16 %v3617
      %v3771 = vunpack.c.l.b16 %v3618
      %v3772 = vunpack.c.h.b16 %v3618
      %v3773 = vunpack.c.l.b16 %v3619
      %v3774 = vunpack.c.h.b16 %v3619
      %v3775 = vunpack.c.l.b16 %v3620
      %v3776 = vunpack.c.h.b16 %v3620
      %v3777 = vunpack.c.l.b16 %v3621
      %v3778 = vunpack.c.h.b16 %v3621
      %v3779 = vunpack.c.l.b16 %v3622
      %v3780 = vunpack.c.h.b16 %v3622
      %v3781 = vunpack.c.l.b16 %v3623
      %v3782 = vunpack.c.h.b16 %v3623
      %v3783 = vunpack.c.l.b16 %v3624
      %v3784 = vunpack.c.h.b16 %v3624
      %v3785 = vunpack.c.l.b16 %v3625
      %v3786 = vunpack.c.h.b16 %v3625
      %v3787 = vunpack.c.l.b16 %v3626
      %v3788 = vunpack.c.h.b16 %v3626
      %v3789 = vunpack.c.l.b16 %v3627
      %v3790 = vunpack.c.h.b16 %v3627
      %v3791 = vunpack.c.l.b16 %v3628
      %v3792 = vunpack.c.h.b16 %v3628
      %v3793 = vunpack.c.l.b16 %v3629
      %v3794 = vunpack.c.h.b16 %v3629
      %v3795 = vunpack.c.l.b16 %v3630
      %v3796 = vunpack.c.h.b16 %v3630
      %v3797 = vunpack.c.l.b16 %v3631
      %v3798 = vunpack.c.h.b16 %v3631
      %v3799 = vunpack.c.l.b16 %v3632
      %v3800 = vunpack.c.h.b16 %v3632
      %v3801 = vunpack.c.l.b16 %v3633
      %v3802 = vunpack.c.h.b16 %v3633
      %v3803 = vunpack.c.l.b16 %v3634
      %v3804 = vunpack.c.h.b16 %v3634
      %v3805 = vunpack.c.l.b16 %v3635
      %v3806 = vunpack.c.h.b16 %v3635
      %v3807 = vunpack.c.l.b16 %v3636
      %v3808 = vunpack.c.h.b16 %v3636
      %v3809 = vunpack.c.l.b16 %v3637
      %v3810 = vunpack.c.h.b16 %v3637
      %v3811 = vunpack.c.l.b16 %v3638
      %v3812 = vunpack.c.h.b16 %v3638
      %v3813 = vunpack.c.l.b16 %v3639
      %v3814 = vunpack.c.h.b16 %v3639
      %v3815 = vunpack.c.l.b16 %v3640
      %v3816 = vunpack.c.h.b16 %v3640
      %v3817 = vunpack.c.l.b16 %v3641
      %v3818 = vunpack.c.h.b16 %v3641
      %v3819 = vunpack.c.l.b16 %v3642
      %v3820 = vunpack.c.h.b16 %v3642
      %v3821 = vunpack.c.l.b16 %v3643
      %v3822 = vunpack.c.h.b16 %v3643
      %v3823 = vunpack.c.l.b16 %v3644
      %v3824 = vunpack.c.h.b16 %v3644
      %v3825 = vunpack.c.l.b16 %v3645
      %v3826 = vunpack.c.h.b16 %v3645
      %v3827 = vunpack.c.l.b16 %v3646
      %v3828 = vunpack.c.h.b16 %v3646
      %v3829 = vunpack.c.l.b16 %v3647
      %v3830 = vunpack.c.h.b16 %v3647
      %v3831 = vunpack.c.l.b16 %v3648
      %v3832 = vunpack.c.h.b16 %v3648
      %v3833 = vunpack.c.l.b16 %v3649
      %v3834 = vunpack.c.h.b16 %v3649
      %v3835 = vunpack.c.l.b16 %v3650
      %v3836 = vunpack.c.h.b16 %v3650
      %v3837 = vunpack.c.l.b16 %v3651
      %v3838 = vunpack.c.h.b16 %v3651
      %v3839 = vunpack.c.l.b16 %v3652
      %v3840 = vunpack.c.h.b16 %v3652
      %v3841 = vunpack.c.l.b16 %v3653
      %v3842 = vunpack.c.h.b16 %v3653
      %v3843 = vunpack.c.l.b16 %v3654
      %v3844 = vunpack.c.h.b16 %v3654
      %v3845 = vunpack.c.l.b16 %v3655
      %v3846 = vunpack.c.h.b16 %v3655
      %v3847 = vunpack.c.l.b16 %v3656
      %v3848 = vunpack.c.h.b16 %v3656
      %v3849 = vpack.c.b16 %v3721, %v3721
      %v3850 = vpack.c.b16 %v3722, %v3722
      %v3851 = vpack.c.b16 %v3723, %v3723
      %v3852 = vpack.c.b16 %v3724, %v3724
      %v3853 = vpack.c.b16 %v3725, %v3725
      %v3854 = vpack.c.b16 %v3726, %v3726
      %v3855 = vpack.c.b16 %v3727, %v3727
      %v3856 = vpack.c.b16 %v3728, %v3728
      %v3857 = vpack.c.b16 %v3729, %v3729
      %v3858 = vpack.c.b16 %v3730, %v3730
      %v3859 = vpack.c.b16 %v3731, %v3731
      %v3860 = vpack.c.b16 %v3732, %v3732
      %v3861 = vpack.c.b16 %v3733, %v3733
      %v3862 = vpack.c.b16 %v3734, %v3734
      %v3863 = vpack.c.b16 %v3735, %v3735
      %v3864 = vpack.c.b16 %v3736, %v3736
      %v3865 = vpack.c.b16 %v3737, %v3737
      %v3866 = vpack.c.b16 %v3738, %v3738
      %v3867 = vpack.c.b16 %v3739, %v3739
      %v3868 = vpack.c.b16 %v3740, %v3740
      %v3869 = vpack.c.b16 %v3741, %v3741
      %v3870 = vpack.c.b16 %v3742, %v3742
      %v3871 = vpack.c.b16 %v3743, %v3743
      %v3872 = vpack.c.b16 %v3744, %v3744
      %v3873 = vpack.c.b16 %v3745, %v3745
      %v3874 = vpack.c.b16 %v3746, %v3746
      %v3875 = vpack.c.b16 %v3747, %v3747
      %v3876 = vpack.c.b16 %v3748, %v3748
      %v3877 = vpack.c.b16 %v3749, %v3749
      %v3878 = vpack.c.b16 %v3750, %v3750
      %v3879 = vpack.c.b16 %v3751, %v3751
      %v3880 = vpack.c.b16 %v3752, %v3752
      %v3881 = vpack.c.b16 %v3753, %v3753
      %v3882 = vpack.c.b16 %v3754, %v3754
      %v3883 = vpack.c.b16 %v3755, %v3755
      %v3884 = vpack.c.b16 %v3756, %v3756
      %v3885 = vpack.c.b16 %v3757, %v3757
      %v3886 = vpack.c.b16 %v3758, %v3758
      %v3887 = vpack.c.b16 %v3759, %v3759
      %v3888 = vpack.c.b16 %v3760, %v3760
      %v3889 = vpack.c.b16 %v3761, %v3761
      %v3890 = vpack.c.b16 %v3762, %v3762
      %v3891 = vpack.c.b16 %v3763, %v3763
      %v3892 = vpack.c.b16 %v3764, %v3764
      %v3893 = vpack.c.b16 %v3765, %v3765
      %v3894 = vpack.c.b16 %v3766, %v3766
      %v3895 = vpack.c.b16 %v3767, %v3767
      %v3896 = vpack.c.b16 %v3768, %v3768
      %v3897 = vpack.c.b16 %v3769, %v3769
      %v3898 = vpack.c.b16 %v3770, %v3770
      %v3899 = vpack.c.b16 %v3771, %v3771
      %v3900 = vpack.c.b16 %v3772, %v3772
      %v3901 = vpack.c.b16 %v3773, %v3773
      %v3902 = vpack.c.b16 %v3774, %v3774
      %v3903 = vpack.c.b16 %v3775, %v3775
      %v3904 = vpack.c.b16 %v3776, %v3776
      %v3905 = vpack.c.b16 %v3777, %v3777
      %v3906 = vpack.c.b16 %v3778, %v3778
      %v3907 = vpack.c.b16 %v3779, %v3779
      %v3908 = vpack.c.b16 %v3780, %v3780
      %v3909 = vpack.c.b16 %v3781, %v3781
      %v3910 = vpack.c.b16 %v3782, %v3782
      %v3911 = vpack.c.b16 %v3783, %v3783
      %v3912 = vpack.c.b16 %v3784, %v3784
      %v3913 = vpack.c.b16 %v3785, %v3785
      %v3914 = vpack.c.b16 %v3786, %v3786
      %v3915 = vpack.c.b16 %v3787, %v3787
      %v3916 = vpack.c.b16 %v3788, %v3788
      %v3917 = vpack.c.b16 %v3789, %v3789
      %v3918 = vpack.c.b16 %v3790, %v3790
      %v3919 = vpack.c.b16 %v3791, %v3791
      %v3920 = vpack.c.b16 %v3792, %v3792
      %v3921 = vpack.c.b16 %v3793, %v3793
      %v3922 = vpack.c.b16 %v3794, %v3794
      %v3923 = vpack.c.b16 %v3795, %v3795
      %v3924 = vpack.c.b16 %v3796, %v3796
      %v3925 = vpack.c.b16 %v3797, %v3797
      %v3926 = vpack.c.b16 %v3798, %v3798
      %v3927 = vpack.c.b16 %v3799, %v3799
      %v3928 = vpack.c.b16 %v3800, %v3800
      %v3929 = vpack.c.b16 %v3801, %v3801
      %v3930 = vpack.c.b16 %v3802, %v3802
      %v3931 = vpack.c.b16 %v3803, %v3803
      %v3932 = vpack.c.b16 %v3804, %v3804
      %v3933 = vpack.c.b16 %v3805, %v3805
      %v3934 = vpack.c.b16 %v3806, %v3806
      %v3935 = vpack.c.b16 %v3807, %v3807
      %v3936 = vpack.c.b16 %v3808, %v3808
      %v3937 = vpack.c.b16 %v3809, %v3809
      %v3938 = vpack.c.b16 %v3810, %v3810
      %v3939 = vpack.c.b16 %v3811, %v3811
      %v3940 = vpack.c.b16 %v3812, %v3812
      %v3941 = vpack.c.b16 %v3813, %v3813
      %v3942 = vpack.c.b16 %v3814, %v3814
      %v3943 = vpack.c.b16 %v3815, %v3815
      %v3944 = vpack.c.b16 %v3816, %v3816
      %v3945 = vpack.c.b16 %v3817, %v3817
      %v3946 = vpack.c.b16 %v3818, %v3818
      %v3947 = vpack.c.b16 %v3819, %v3819
      %v3948 = vpack.c.b16 %v3820, %v3820
      %v3949 = vpack.c.b16 %v3821, %v3821
      %v3950 = vpack.c.b16 %v3822, %v3822
      %v3951 = vpack.c.b16 %v3823, %v3823
      %v3952 = vpack.c.b16 %v3824, %v3824
      %v3953 = vpack.c.b16 %v3825, %v3825
      %v3954 = vpack.c.b16 %v3826, %v3826
      %v3955 = vpack.c.b16 %v3827, %v3827
      %v3956 = vpack.c.b16 %v3828, %v3828
      %v3957 = vpack.c.b16 %v3829, %v3829
      %v3958 = vpack.c.b16 %v3830, %v3830
      %v3959 = vpack.c.b16 %v3831, %v3831
      %v3960 = vpack.c.b16 %v3832, %v3832
      %v3961 = vpack.c.b16 %v3833, %v3833
      %v3962 = vpack.c.b16 %v3834, %v3834
      %v3963 = vpack.c.b16 %v3835, %v3835
      %v3964 = vpack.c.b16 %v3836, %v3836
      %v3965 = vpack.c.b16 %v3837, %v3837
      %v3966 = vpack.c.b16 %v3838, %v3838
      %v3967 = vpack.c.b16 %v3839, %v3839
      %v3968 = vpack.c.b16 %v3840, %v3840
      %v3969 = vpack.c.b16 %v3841, %v3841
      %v3970 = vpack.c.b16 %v3842, %v3842
      %v3971 = vpack.c.b16 %v3843, %v3843
      %v3972 = vpack.c.b16 %v3844, %v3844
      %v3973 = vpack.c.b16 %v3845, %v3845
      %v3974 = vpack.c.b16 %v3846, %v3846
      %v3975 = vpack.c.b16 %v3847, %v3847
      %v3976 = vpack.c.b16 %v3848, %v3848
      %vm4105 = vcmask 27648
      %4106 = vst.msk [vmem:[%s201] sm:$0xf] %vm4105, %v3849
      %4107 = vst.msk [vmem:[%s201 + $0x4] sm:$0xf] %vm4105, %v3850
      %4108 = vst.msk [vmem:[%s201 + $0x8] sm:$0xf] %vm4105, %v3851
      %4109 = vst.msk [vmem:[%s201 + $0xc] sm:$0xf] %vm4105, %v3852
      %4110 = vst.msk [vmem:[%s201 + $0x10] sm:$0xf] %vm4105, %v3853
      %4111 = vst.msk [vmem:[%s201 + $0x14] sm:$0xf] %vm4105, %v3854
      %4112 = vst.msk [vmem:[%s201 + $0x18] sm:$0xf] %vm4105, %v3855
      %4113 = vst.msk [vmem:[%s201 + $0x1c] sm:$0xf] %vm4105, %v3856
      %4114 = vst.msk [vmem:[%s201 + $0x20] sm:$0xf] %vm4105, %v3857
      %4115 = vst.msk [vmem:[%s201 + $0x24] sm:$0xf] %vm4105, %v3858
      %4116 = vst.msk [vmem:[%s201 + $0x28] sm:$0xf] %vm4105, %v3859
      %4117 = vst.msk [vmem:[%s201 + $0x2c] sm:$0xf] %vm4105, %v3860
      %4118 = vst.msk [vmem:[%s201 + $0x30] sm:$0xf] %vm4105, %v3861
      %4119 = vst.msk [vmem:[%s201 + $0x34] sm:$0xf] %vm4105, %v3862
      %4120 = vst.msk [vmem:[%s201 + $0x38] sm:$0xf] %vm4105, %v3863
      %4121 = vst.msk [vmem:[%s201 + $0x3c] sm:$0xf] %vm4105, %v3864
      %4122 = vst.msk [vmem:[%s201 + $0x40] sm:$0xf] %vm4105, %v3865
      %4123 = vst.msk [vmem:[%s201 + $0x44] sm:$0xf] %vm4105, %v3866
      %4124 = vst.msk [vmem:[%s201 + $0x48] sm:$0xf] %vm4105, %v3867
      %4125 = vst.msk [vmem:[%s201 + $0x4c] sm:$0xf] %vm4105, %v3868
      %4126 = vst.msk [vmem:[%s201 + $0x50] sm:$0xf] %vm4105, %v3869
      %4127 = vst.msk [vmem:[%s201 + $0x54] sm:$0xf] %vm4105, %v3870
      %4128 = vst.msk [vmem:[%s201 + $0x58] sm:$0xf] %vm4105, %v3871
      %4129 = vst.msk [vmem:[%s201 + $0x5c] sm:$0xf] %vm4105, %v3872
      %4130 = vst.msk [vmem:[%s201 + $0x60] sm:$0xf] %vm4105, %v3873
      %4131 = vst.msk [vmem:[%s201 + $0x64] sm:$0xf] %vm4105, %v3874
      %4132 = vst.msk [vmem:[%s201 + $0x68] sm:$0xf] %vm4105, %v3875
      %4133 = vst.msk [vmem:[%s201 + $0x6c] sm:$0xf] %vm4105, %v3876
      %4134 = vst.msk [vmem:[%s201 + $0x70] sm:$0xf] %vm4105, %v3877
      %4135 = vst.msk [vmem:[%s201 + $0x74] sm:$0xf] %vm4105, %v3878
      %4136 = vst.msk [vmem:[%s201 + $0x78] sm:$0xf] %vm4105, %v3879
      %4137 = vst.msk [vmem:[%s201 + $0x7c] sm:$0xf] %vm4105, %v3880
      %4138 = vst.msk [vmem:[%s201 + $0x80] sm:$0xf] %vm4105, %v3881
      %4139 = vst.msk [vmem:[%s201 + $0x84] sm:$0xf] %vm4105, %v3882
      %4140 = vst.msk [vmem:[%s201 + $0x88] sm:$0xf] %vm4105, %v3883
      %4141 = vst.msk [vmem:[%s201 + $0x8c] sm:$0xf] %vm4105, %v3884
      %4142 = vst.msk [vmem:[%s201 + $0x90] sm:$0xf] %vm4105, %v3885
      %4143 = vst.msk [vmem:[%s201 + $0x94] sm:$0xf] %vm4105, %v3886
      %4144 = vst.msk [vmem:[%s201 + $0x98] sm:$0xf] %vm4105, %v3887
      %4145 = vst.msk [vmem:[%s201 + $0x9c] sm:$0xf] %vm4105, %v3888
      %4146 = vst.msk [vmem:[%s201 + $0xa0] sm:$0xf] %vm4105, %v3889
      %4147 = vst.msk [vmem:[%s201 + $0xa4] sm:$0xf] %vm4105, %v3890
      %4148 = vst.msk [vmem:[%s201 + $0xa8] sm:$0xf] %vm4105, %v3891
      %4149 = vst.msk [vmem:[%s201 + $0xac] sm:$0xf] %vm4105, %v3892
      %4150 = vst.msk [vmem:[%s201 + $0xb0] sm:$0xf] %vm4105, %v3893
      %4151 = vst.msk [vmem:[%s201 + $0xb4] sm:$0xf] %vm4105, %v3894
      %4152 = vst.msk [vmem:[%s201 + $0xb8] sm:$0xf] %vm4105, %v3895
      %4153 = vst.msk [vmem:[%s201 + $0xbc] sm:$0xf] %vm4105, %v3896
      %4154 = vst.msk [vmem:[%s201 + $0xc0] sm:$0xf] %vm4105, %v3897
      %4155 = vst.msk [vmem:[%s201 + $0xc4] sm:$0xf] %vm4105, %v3898
      %4156 = vst.msk [vmem:[%s201 + $0xc8] sm:$0xf] %vm4105, %v3899
      %4157 = vst.msk [vmem:[%s201 + $0xcc] sm:$0xf] %vm4105, %v3900
      %4158 = vst.msk [vmem:[%s201 + $0xd0] sm:$0xf] %vm4105, %v3901
      %4159 = vst.msk [vmem:[%s201 + $0xd4] sm:$0xf] %vm4105, %v3902
      %4160 = vst.msk [vmem:[%s201 + $0xd8] sm:$0xf] %vm4105, %v3903
      %4161 = vst.msk [vmem:[%s201 + $0xdc] sm:$0xf] %vm4105, %v3904
      %4162 = vst.msk [vmem:[%s201 + $0xe0] sm:$0xf] %vm4105, %v3905
      %4163 = vst.msk [vmem:[%s201 + $0xe4] sm:$0xf] %vm4105, %v3906
      %4164 = vst.msk [vmem:[%s201 + $0xe8] sm:$0xf] %vm4105, %v3907
      %4165 = vst.msk [vmem:[%s201 + $0xec] sm:$0xf] %vm4105, %v3908
      %4166 = vst.msk [vmem:[%s201 + $0xf0] sm:$0xf] %vm4105, %v3909
      %4167 = vst.msk [vmem:[%s201 + $0xf4] sm:$0xf] %vm4105, %v3910
      %4168 = vst.msk [vmem:[%s201 + $0xf8] sm:$0xf] %vm4105, %v3911
      %4169 = vst.msk [vmem:[%s201 + $0xfc] sm:$0xf] %vm4105, %v3912
      %4170 = vst.msk [vmem:[%s201 + $0x100] sm:$0xf] %vm4105, %v3913
      %4171 = vst.msk [vmem:[%s201 + $0x104] sm:$0xf] %vm4105, %v3914
      %4172 = vst.msk [vmem:[%s201 + $0x108] sm:$0xf] %vm4105, %v3915
      %4173 = vst.msk [vmem:[%s201 + $0x10c] sm:$0xf] %vm4105, %v3916
      %4174 = vst.msk [vmem:[%s201 + $0x110] sm:$0xf] %vm4105, %v3917
      %4175 = vst.msk [vmem:[%s201 + $0x114] sm:$0xf] %vm4105, %v3918
      %4176 = vst.msk [vmem:[%s201 + $0x118] sm:$0xf] %vm4105, %v3919
      %4177 = vst.msk [vmem:[%s201 + $0x11c] sm:$0xf] %vm4105, %v3920
      %4178 = vst.msk [vmem:[%s201 + $0x120] sm:$0xf] %vm4105, %v3921
      %4179 = vst.msk [vmem:[%s201 + $0x124] sm:$0xf] %vm4105, %v3922
      %4180 = vst.msk [vmem:[%s201 + $0x128] sm:$0xf] %vm4105, %v3923
      %4181 = vst.msk [vmem:[%s201 + $0x12c] sm:$0xf] %vm4105, %v3924
      %4182 = vst.msk [vmem:[%s201 + $0x130] sm:$0xf] %vm4105, %v3925
      %4183 = vst.msk [vmem:[%s201 + $0x134] sm:$0xf] %vm4105, %v3926
      %4184 = vst.msk [vmem:[%s201 + $0x138] sm:$0xf] %vm4105, %v3927
      %4185 = vst.msk [vmem:[%s201 + $0x13c] sm:$0xf] %vm4105, %v3928
      %4186 = vst.msk [vmem:[%s201 + $0x140] sm:$0xf] %vm4105, %v3929
      %4187 = vst.msk [vmem:[%s201 + $0x144] sm:$0xf] %vm4105, %v3930
      %4188 = vst.msk [vmem:[%s201 + $0x148] sm:$0xf] %vm4105, %v3931
      %4189 = vst.msk [vmem:[%s201 + $0x14c] sm:$0xf] %vm4105, %v3932
      %4190 = vst.msk [vmem:[%s201 + $0x150] sm:$0xf] %vm4105, %v3933
      %4191 = vst.msk [vmem:[%s201 + $0x154] sm:$0xf] %vm4105, %v3934
      %4192 = vst.msk [vmem:[%s201 + $0x158] sm:$0xf] %vm4105, %v3935
      %4193 = vst.msk [vmem:[%s201 + $0x15c] sm:$0xf] %vm4105, %v3936
      %4194 = vst.msk [vmem:[%s201 + $0x160] sm:$0xf] %vm4105, %v3937
      %4195 = vst.msk [vmem:[%s201 + $0x164] sm:$0xf] %vm4105, %v3938
      %4196 = vst.msk [vmem:[%s201 + $0x168] sm:$0xf] %vm4105, %v3939
      %4197 = vst.msk [vmem:[%s201 + $0x16c] sm:$0xf] %vm4105, %v3940
      %4198 = vst.msk [vmem:[%s201 + $0x170] sm:$0xf] %vm4105, %v3941
      %4199 = vst.msk [vmem:[%s201 + $0x174] sm:$0xf] %vm4105, %v3942
      %4200 = vst.msk [vmem:[%s201 + $0x178] sm:$0xf] %vm4105, %v3943
      %4201 = vst.msk [vmem:[%s201 + $0x17c] sm:$0xf] %vm4105, %v3944
      %4202 = vst.msk [vmem:[%s201 + $0x180] sm:$0xf] %vm4105, %v3945
      %4203 = vst.msk [vmem:[%s201 + $0x184] sm:$0xf] %vm4105, %v3946
      %4204 = vst.msk [vmem:[%s201 + $0x188] sm:$0xf] %vm4105, %v3947
      %4205 = vst.msk [vmem:[%s201 + $0x18c] sm:$0xf] %vm4105, %v3948
      %4206 = vst.msk [vmem:[%s201 + $0x190] sm:$0xf] %vm4105, %v3949
      %4207 = vst.msk [vmem:[%s201 + $0x194] sm:$0xf] %vm4105, %v3950
      %4208 = vst.msk [vmem:[%s201 + $0x198] sm:$0xf] %vm4105, %v3951
      %4209 = vst.msk [vmem:[%s201 + $0x19c] sm:$0xf] %vm4105, %v3952
      %4210 = vst.msk [vmem:[%s201 + $0x1a0] sm:$0xf] %vm4105, %v3953
      %4211 = vst.msk [vmem:[%s201 + $0x1a4] sm:$0xf] %vm4105, %v3954
      %4212 = vst.msk [vmem:[%s201 + $0x1a8] sm:$0xf] %vm4105, %v3955
      %4213 = vst.msk [vmem:[%s201 + $0x1ac] sm:$0xf] %vm4105, %v3956
      %4214 = vst.msk [vmem:[%s201 + $0x1b0] sm:$0xf] %vm4105, %v3957
      %4215 = vst.msk [vmem:[%s201 + $0x1b4] sm:$0xf] %vm4105, %v3958
      %4216 = vst.msk [vmem:[%s201 + $0x1b8] sm:$0xf] %vm4105, %v3959
      %4217 = vst.msk [vmem:[%s201 + $0x1bc] sm:$0xf] %vm4105, %v3960
      %4218 = vst.msk [vmem:[%s201 + $0x1c0] sm:$0xf] %vm4105, %v3961
      %4219 = vst.msk [vmem:[%s201 + $0x1c4] sm:$0xf] %vm4105, %v3962
      %4220 = vst.msk [vmem:[%s201 + $0x1c8] sm:$0xf] %vm4105, %v3963
      %4221 = vst.msk [vmem:[%s201 + $0x1cc] sm:$0xf] %vm4105, %v3964
      %4222 = vst.msk [vmem:[%s201 + $0x1d0] sm:$0xf] %vm4105, %v3965
      %4223 = vst.msk [vmem:[%s201 + $0x1d4] sm:$0xf] %vm4105, %v3966
      %4224 = vst.msk [vmem:[%s201 + $0x1d8] sm:$0xf] %vm4105, %v3967
      %4225 = vst.msk [vmem:[%s201 + $0x1dc] sm:$0xf] %vm4105, %v3968
      %4226 = vst.msk [vmem:[%s201 + $0x1e0] sm:$0xf] %vm4105, %v3969
      %4227 = vst.msk [vmem:[%s201 + $0x1e4] sm:$0xf] %vm4105, %v3970
      %4228 = vst.msk [vmem:[%s201 + $0x1e8] sm:$0xf] %vm4105, %v3971
      %4229 = vst.msk [vmem:[%s201 + $0x1ec] sm:$0xf] %vm4105, %v3972
      %4230 = vst.msk [vmem:[%s201 + $0x1f0] sm:$0xf] %vm4105, %v3973
      %4231 = vst.msk [vmem:[%s201 + $0x1f4] sm:$0xf] %vm4105, %v3974
      %4232 = vst.msk [vmem:[%s201 + $0x1f8] sm:$0xf] %vm4105, %v3975
      %4233 = vst.msk [vmem:[%s201 + $0x1fc] sm:$0xf] %vm4105, %v3976
      %p4234 = scmp.lt.s32.totalorder %s18, 1
      %s4235 = scalar_select %p4234, %s18, 1
      %p4236 = scmp.lt.s32.totalorder %s19, 0
      %s4237 = scalar_select %p4236, %s19, 0
      %s4238 = smul.addr %s4235, 128
      %s4239 = sadd.s32 %s4237, %s4238
      %s4240 = smul.addr %s4239, 4
      %s4241 = scalar_lea.vmem %s3, %s4240
      // Predicated region
      $region33: #{a_call__.3} parent=31 // pred_check
        %p4242 = pneg %p116
      $region34: #{a_call__.3} parent=31 // pred_check_branch
        %4244 = sbr.rel (%p4242) target = $region36
      $region35: #{a_call__.3} parent=31 // pred_region
        _
      $region36: #{a_call__.3} parent=31 // pred_fallthru
        _
    $region32: #{a_call__.3} parent=5 // pred_fallthru
      _
    %p4245 = scmp.le.s32.totalorder 2, %s9
    // Predicated region
    $region37: #{a_call__.3} parent=5 // pred_check
      %p4246 = pneg %p4245
    $region38: #{a_call__.3} parent=5 // pred_check_branch
      %4248 = sbr.rel (%p4246) target = $region40
    $region39: #{a_call__.3} parent=5 // pred_region
      %s4249 = ssub.s32 %s9, 2
      // Predicated region
      $region41: #{a_call__.3} parent=39 // pred_check
        %p4250 = pneg %p122
      $region42: #{a_call__.3} parent=39 // pred_check_branch
        %4252 = sbr.rel (%p4250) target = $region44
      $region43: #{a_call__.3} parent=39 // pred_region
        %p4253 = scmp.lt.s32.totalorder %s20, 1
        %s4254 = scalar_select %p4253, %s20, 1
        %p4255 = scmp.lt.s32.totalorder %s21, 0
        %s4256 = scalar_select %p4255, %s21, 0
        %s4257 = smul.addr %s4254, 128
        %s4258 = sadd.s32 %s4256, %s4257
        %s4259 = smul.addr %s4258, 4
        %s4260 = scalar_lea.vmem %s3, %s4259
      $region44: #{a_call__.3} parent=39 // pred_fallthru
        _
    $region40: #{a_call__.3} parent=5 // pred_fallthru
      _
  $region6: #{a_call__.3} parent=0 // loop_footer
    %s13 = sadd.s32 1, %s9
  $region7: #{a_call__.3} parent=0 // loop_footer_branch
    %8 = sbr.rel target = $region3
  $region8: #{a_call__.3} parent=0 // loop_exit
    _

// kernel: a_call__.4
$region0: #{a_call__.4}
  #allocation0 [shape = 'u32[]', space=smem, size = 0x4, offset = 0x4, fixed_abs, tag = 'smem constant byte address 0x4 - core index']
  #allocation1 [shape = 'u32[144,128]{1,0:T(1,128)}', space=vmem, size = 0x12000, scoped, tag = 'internal scratch']
  #allocation2 [shape = 'f32[256,8]{1,0:T(8,128)}', space=vmem, size = 0x20000, scoped, tag = 'scratch operand']
  %s0 = inlined_call_operand.vmem [shape: bf16[2,4,17,17,4], index: 0, kind: input, shape index: {}]
  %s1 = inlined_call_operand.vmem [shape: bf16[3,3,4,8], index: 1, kind: input, shape index: {}]
  %s2 = inlined_call_operand.vmem [shape: bf16[2,256,8], index: 2, kind: output, shape index: {}]
  %s3 = sld [smem:[#allocation0]]
  $region49: #{a_call__.4} parent=0
    _
  %s5 = ssub.s32 1, %s3
  %s6 = scalar_select 0, %s5, %s3
  loop: start=0, step=1, limit=4
  $region2: #{a_call__.4} parent=0 // loop_pre_header
    _
  $region3: #{a_call__.4} parent=0 // loop_header
    %s8 = sphi 0, %s12
    %p9 = scmp.ge.s32.totalorder %s8, 4
    %s15 = sphi 0, %s34
    %s16 = sphi 0, %s30
    %s17 = sphi 0, %s26
    %s18 = sphi 0, %s15
    %s19 = sphi 0, %s16
    %s20 = sphi 0, %s17
    %s21 = sphi 0, %s18
    %s22 = sphi 0, %s19
    %s23 = sphi 0, %s20
    %s39 = sphi 0, %s41
    %s42 = sphi 0, %s39
    %s43 = sphi 0, %s42
    %s59 = sphi 0, %s43
    %s67 = sphi 0, %s69
    %s70 = sphi 0, %s67
    %s71 = sphi 0, %s70
    %s87 = sphi 0, %s71
    %s95 = sphi 0, %s97
    %s98 = sphi 0, %s95
    %s99 = sphi 0, %s98
    %s115 = sphi 0, %s99
  $region4: #{a_call__.4} parent=0 // loop_header_branch
    %11 = sbr.rel (%p9) target = $region8
  $region5: #{a_call__.4} parent=0 // loop_body
    %s13 = ssub.s32 %s8, 1
    %s14 = ssub.s32 %s8, 2
    %s24 = sadd.s32 1, %s17
    %p25 = scmp.ge.s32.totalorder %s24, 1
    %s26 = scalar_select %p25, 0, %s24
    %s27 = sadd.s32 1, %s16
    %s28 = scalar_select %p25, %s27, %s16
    %p29 = scmp.ge.s32.totalorder %s28, 1
    %s30 = scalar_select %p29, 0, %s28
    %s31 = sadd.s32 1, %s15
    %s32 = scalar_select %p29, %s31, %s15
    %p33 = scmp.ge.s32.totalorder %s32, 2
    %s34 = scalar_select %p33, 0, %s32
    %s35 = ssub.s32 %s15, %s34
    %s36 = ssub.s32 %s17, %s26
    %s37 = sor.u32 %s35, %s36
    %p38 = scmp.eq.s32.totalorder %s37, 0
    %s40 = sadd.s32 %s39, 1
    %s41 = scalar_select %p38, %s39, %s40
    %p44 = pneg %p38
    %p45 = scmp.eq.s32.totalorder %s8, 1
    %p46 = por %p44, %p45
    %p47 = scmp.ne.s32.totalorder %s39, %s42
    %p48 = scmp.eq.s32.totalorder %s8, 0
    %p49 = por %p47, %p48
    %p50 = scmp.ne.s32.totalorder %s39, %s42
    %p51 = scmp.eq.s32.totalorder %s13, 1
    %p52 = por %p50, %p51
    %p53 = scmp.ne.s32.totalorder %s42, %s43
    %p54 = scmp.eq.s32.totalorder %s13, 0
    %p55 = por %p53, %p54
    %p56 = scmp.ne.s32.totalorder %s42, %s43
    %p57 = scmp.eq.s32.totalorder %s14, 1
    %p58 = por %p56, %p57
    %p60 = scmp.ne.s32.totalorder %s43, %s59
    %p61 = scmp.eq.s32.totalorder %s14, 0
    %p62 = por %p60, %p61
    %s63 = ssub.s32 %s17, %s26
    %s64 = ssub.s32 %s16, %s30
    %s65 = sor.u32 %s63, %s64
    %p66 = scmp.eq.s32.totalorder %s65, 0
    %s68 = sadd.s32 %s67, 1
    %s69 = scalar_select %p66, %s67, %s68
    %p72 = pneg %p66
    %p73 = scmp.eq.s32.totalorder %s8, 1
    %p74 = por %p72, %p73
    %p75 = scmp.ne.s32.totalorder %s67, %s70
    %p76 = scmp.eq.s32.totalorder %s8, 0
    %p77 = por %p75, %p76
    %p78 = scmp.ne.s32.totalorder %s67, %s70
    %p79 = scmp.eq.s32.totalorder %s13, 1
    %p80 = por %p78, %p79
    %p81 = scmp.ne.s32.totalorder %s70, %s71
    %p82 = scmp.eq.s32.totalorder %s13, 0
    %p83 = por %p81, %p82
    %p84 = scmp.ne.s32.totalorder %s70, %s71
    %p85 = scmp.eq.s32.totalorder %s14, 1
    %p86 = por %p84, %p85
    %p88 = scmp.ne.s32.totalorder %s71, %s87
    %p89 = scmp.eq.s32.totalorder %s14, 0
    %p90 = por %p88, %p89
    %s91 = ssub.s32 %s15, %s34
    %s92 = ssub.s32 %s16, %s30
    %s93 = sor.u32 %s91, %s92
    %p94 = scmp.eq.s32.totalorder %s93, 0
    %s96 = sadd.s32 %s95, 1
    %s97 = scalar_select %p94, %s95, %s96
    %p100 = pneg %p94
    %p101 = scmp.eq.s32.totalorder %s8, 1
    %p102 = por %p100, %p101
    %p103 = scmp.ne.s32.totalorder %s95, %s98
    %p104 = scmp.eq.s32.totalorder %s8, 0
    %p105 = por %p103, %p104
    %p106 = scmp.ne.s32.totalorder %s95, %s98
    %p107 = scmp.eq.s32.totalorder %s13, 1
    %p108 = por %p106, %p107
    %p109 = scmp.ne.s32.totalorder %s98, %s99
    %p110 = scmp.eq.s32.totalorder %s13, 0
    %p111 = por %p109, %p110
    %p112 = scmp.ne.s32.totalorder %s98, %s99
    %p113 = scmp.eq.s32.totalorder %s14, 1
    %p114 = por %p112, %p113
    %p116 = scmp.ne.s32.totalorder %s99, %s115
    %p117 = scmp.eq.s32.totalorder %s14, 0
    %p118 = por %p116, %p117
    %p119 = scmp.le.s32.totalorder 1, %s8
    %p120 = scmp.lt.s32.totalorder %s8, 3
    %p121 = pnand %p119, %p120
    %p122 = pneg %p121
    // Predicated region
    $region9: #{a_call__.4} parent=5 // pred_check
      _
    $region10: #{a_call__.4} parent=5 // pred_check_branch
      %124 = sbr.rel (%p121) target = $region12
    $region11: #{a_call__.4} parent=5 // pred_region
      %s125 = ssub.s32 %s8, 1
      // Predicated region
      $region13: #{a_call__.4} parent=11 // pred_check
        %p126 = pneg %p83
      $region14: #{a_call__.4} parent=11 // pred_check_branch
        %128 = sbr.rel (%p126) target = $region16
      $region15: #{a_call__.4} parent=11 // pred_region
        %p129 = scmp.lt.s32.totalorder %s20, 0
        %s130 = scalar_select %p129, %s20, 0
        %p131 = scmp.lt.s32.totalorder %s19, 0
        %s132 = scalar_select %p131, %s19, 0
        %s133 = sadd.s32 %s132, %s130
        %s134 = smul.addr %s133, 2
        %s135 = scalar_lea.vmem %s1, %s134
      $region16: #{a_call__.4} parent=11 // pred_fallthru
        _
    $region12: #{a_call__.4} parent=5 // pred_fallthru
      _
    %p136 = scmp.lt.s32.totalorder %s8, 2
    // Predicated region
    $region17: #{a_call__.4} parent=5 // pred_check
      %p137 = pneg %p136
    $region18: #{a_call__.4} parent=5 // pred_check_branch
      %139 = sbr.rel (%p137) target = $region20
    $region19: #{a_call__.4} parent=5 // pred_region
      // Predicated region
      $region21: #{a_call__.4} parent=19 // pred_check
        %p140 = pneg %p49
      $region22: #{a_call__.4} parent=19 // pred_check_branch
        %142 = sbr.rel (%p140) target = $region24
      $region23: #{a_call__.4} parent=19 // pred_region
        %p143 = scmp.lt.s32.totalorder %s15, 1
        %s144 = scalar_select %p143, %s15, 1
        %p145 = scmp.lt.s32.totalorder %s17, 0
        %s146 = scalar_select %p145, %s17, 0
        %s147 = smul.addr %s144, 204
        %s148 = sadd.s32 %s146, %s147
        %s149 = smul.addr %s148, 4
        %s150 = scalar_lea.vmem %s0, %s149
      $region24: #{a_call__.4} parent=19 // pred_fallthru
        _
    $region20: #{a_call__.4} parent=5 // pred_fallthru
      _
    %p151 = scmp.le.s32.totalorder 1, %s8
    %p152 = scmp.lt.s32.totalorder %s8, 3
    %p153 = pnand %p151, %p152
    %p154 = pneg %p153
    // Predicated region
    $region25: #{a_call__.4} parent=5 // pred_check
      _
    $region26: #{a_call__.4} parent=5 // pred_check_branch
      %156 = sbr.rel (%p153) target = $region28
    $region27: #{a_call__.4} parent=5 // pred_region
      %s157 = ssub.s32 %s8, 1
      %p158 = scmp.lt.s32.totalorder %s18, 1
      %s159 = scalar_select %p158, %s18, 1
      %p160 = scmp.lt.s32.totalorder %s20, 0
      %s161 = scalar_select %p160, %s20, 0
      %s162 = smul.addr %s159, 204
      %s163 = sadd.s32 %s161, %s162
      %s164 = smul.addr %s163, 4
      %s165 = scalar_lea.vmem %s0, %s164
      %p166 = pneg %p55
      %p167 = pneg %p52
      %p168 = scmp.lt.s32.totalorder %s20, 0
      %s169 = scalar_select %p168, %s20, 0
      %p170 = scmp.lt.s32.totalorder %s19, 0
      %s171 = scalar_select %p170, %s19, 0
      %s172 = sadd.s32 %s171, %s169
      %s173 = smul.addr %s172, 2
      %s174 = scalar_lea.vmem %s1, %s173
      %p175 = pneg %p83
      %p176 = pneg %p80
      %p177 = pneg %p111
      %p178 = pneg %p108
      %p179 = scmp.lt.s32.totalorder %s18, 1
      %s180 = scalar_select %p179, %s18, 1
      %p181 = scmp.lt.s32.totalorder %s19, 0
      %s182 = scalar_select %p181, %s19, 0
      %s183 = smul.addr %s180, 32
      %s184 = sadd.s32 %s182, %s183
      %s185 = smul.addr %s184, 4
      %s186 = scalar_lea.vmem %s2, %s185
      %p187 = scmp.lt.s32.totalorder %s18, 1
      %s188 = scalar_select %p187, %s18, 1
      %p189 = scmp.lt.s32.totalorder %s20, 0
      %s190 = scalar_select %p189, %s20, 0
      %s191 = smul.addr %s188, 204
      %s192 = sadd.s32 %s190, %s191
      %s193 = smul.addr %s192, 4
      %s194 = scalar_lea.vmem %s0, %s193
      %p195 = scmp.lt.s32.totalorder %s20, 0
      %s196 = scalar_select %p195, %s20, 0
      %p197 = scmp.lt.s32.totalorder %s19, 0
      %s198 = scalar_select %p197, %s19, 0
      %s199 = sadd.s32 %s198, %s196
      %s200 = smul.addr %s199, 2
      %s201 = scalar_lea.vmem %s1, %s200
      %p202 = scmp.lt.s32.totalorder %s18, 1
      %s203 = scalar_select %p202, %s18, 1
      %p204 = scmp.lt.s32.totalorder %s19, 0
      %s205 = scalar_select %p204, %s19, 0
      %s206 = smul.addr %s203, 32
      %s207 = sadd.s32 %s205, %s206
      %s208 = smul.addr %s207, 4
      %s209 = scalar_lea.vmem %s2, %s208
      %p211 = scmp.eq.s32.totalorder %s20, 0
      // Predicated region
      $region29: #{a_call__.4} parent=27 // pred_check
        %p212 = pneg %p211
      $region30: #{a_call__.4} parent=27 // pred_check_branch
        %214 = sbr.rel (%p212) target = $region32
      $region31: #{a_call__.4} parent=27 // pred_region
        %vm215 = vcmask 64512
        %216 = vst.msk [vmem:[#allocation2] sm:$0xff] %vm215, 0.0
        %217 = vst.msk [vmem:[#allocation2 + $0x8] sm:$0xff] %vm215, 0.0
        %218 = vst.msk [vmem:[#allocation2 + $0x10] sm:$0xff] %vm215, 0.0
        %219 = vst.msk [vmem:[#allocation2 + $0x18] sm:$0xff] %vm215, 0.0
        %220 = vst.msk [vmem:[#allocation2 + $0x20] sm:$0xff] %vm215, 0.0
        %221 = vst.msk [vmem:[#allocation2 + $0x28] sm:$0xff] %vm215, 0.0
        %222 = vst.msk [vmem:[#allocation2 + $0x30] sm:$0xff] %vm215, 0.0
        %223 = vst.msk [vmem:[#allocation2 + $0x38] sm:$0xff] %vm215, 0.0
        %224 = vst.msk [vmem:[#allocation2 + $0x40] sm:$0xff] %vm215, 0.0
        %225 = vst.msk [vmem:[#allocation2 + $0x48] sm:$0xff] %vm215, 0.0
        %226 = vst.msk [vmem:[#allocation2 + $0x50] sm:$0xff] %vm215, 0.0
        %227 = vst.msk [vmem:[#allocation2 + $0x58] sm:$0xff] %vm215, 0.0
        %228 = vst.msk [vmem:[#allocation2 + $0x60] sm:$0xff] %vm215, 0.0
        %229 = vst.msk [vmem:[#allocation2 + $0x68] sm:$0xff] %vm215, 0.0
        %230 = vst.msk [vmem:[#allocation2 + $0x70] sm:$0xff] %vm215, 0.0
        %231 = vst.msk [vmem:[#allocation2 + $0x78] sm:$0xff] %vm215, 0.0
        %232 = vst.msk [vmem:[#allocation2 + $0x80] sm:$0xff] %vm215, 0.0
        %233 = vst.msk [vmem:[#allocation2 + $0x88] sm:$0xff] %vm215, 0.0
        %234 = vst.msk [vmem:[#allocation2 + $0x90] sm:$0xff] %vm215, 0.0
        %235 = vst.msk [vmem:[#allocation2 + $0x98] sm:$0xff] %vm215, 0.0
        %236 = vst.msk [vmem:[#allocation2 + $0xa0] sm:$0xff] %vm215, 0.0
        %237 = vst.msk [vmem:[#allocation2 + $0xa8] sm:$0xff] %vm215, 0.0
        %238 = vst.msk [vmem:[#allocation2 + $0xb0] sm:$0xff] %vm215, 0.0
        %239 = vst.msk [vmem:[#allocation2 + $0xb8] sm:$0xff] %vm215, 0.0
        %240 = vst.msk [vmem:[#allocation2 + $0xc0] sm:$0xff] %vm215, 0.0
        %241 = vst.msk [vmem:[#allocation2 + $0xc8] sm:$0xff] %vm215, 0.0
        %242 = vst.msk [vmem:[#allocation2 + $0xd0] sm:$0xff] %vm215, 0.0
        %243 = vst.msk [vmem:[#allocation2 + $0xd8] sm:$0xff] %vm215, 0.0
        %244 = vst.msk [vmem:[#allocation2 + $0xe0] sm:$0xff] %vm215, 0.0
        %245 = vst.msk [vmem:[#allocation2 + $0xe8] sm:$0xff] %vm215, 0.0
        %246 = vst.msk [vmem:[#allocation2 + $0xf0] sm:$0xff] %vm215, 0.0
        %247 = vst.msk [vmem:[#allocation2 + $0xf8] sm:$0xff] %vm215, 0.0
      $region32: #{a_call__.4} parent=27 // pred_fallthru
        _
      %v248 = vld [vmem:[#allocation2] sm:$0xff]
      %v249 = vld [vmem:[#allocation2 + $0x8] sm:$0xff]
      %v250 = vld [vmem:[#allocation2 + $0x10] sm:$0xff]
      %v251 = vld [vmem:[#allocation2 + $0x18] sm:$0xff]
      %v252 = vld [vmem:[#allocation2 + $0x20] sm:$0xff]
      %v253 = vld [vmem:[#allocation2 + $0x28] sm:$0xff]
      %v254 = vld [vmem:[#allocation2 + $0x30] sm:$0xff]
      %v255 = vld [vmem:[#allocation2 + $0x38] sm:$0xff]
      %v256 = vld [vmem:[#allocation2 + $0x40] sm:$0xff]
      %v257 = vld [vmem:[#allocation2 + $0x48] sm:$0xff]
      %v258 = vld [vmem:[#allocation2 + $0x50] sm:$0xff]
      %v259 = vld [vmem:[#allocation2 + $0x58] sm:$0xff]
      %v260 = vld [vmem:[#allocation2 + $0x60] sm:$0xff]
      %v261 = vld [vmem:[#allocation2 + $0x68] sm:$0xff]
      %v262 = vld [vmem:[#allocation2 + $0x70] sm:$0xff]
      %v263 = vld [vmem:[#allocation2 + $0x78] sm:$0xff]
      %v264 = vld [vmem:[#allocation2 + $0x80] sm:$0xff]
      %v265 = vld [vmem:[#allocation2 + $0x88] sm:$0xff]
      %v266 = vld [vmem:[#allocation2 + $0x90] sm:$0xff]
      %v267 = vld [vmem:[#allocation2 + $0x98] sm:$0xff]
      %v268 = vld [vmem:[#allocation2 + $0xa0] sm:$0xff]
      %v269 = vld [vmem:[#allocation2 + $0xa8] sm:$0xff]
      %v270 = vld [vmem:[#allocation2 + $0xb0] sm:$0xff]
      %v271 = vld [vmem:[#allocation2 + $0xb8] sm:$0xff]
      %v272 = vld [vmem:[#allocation2 + $0xc0] sm:$0xff]
      %v273 = vld [vmem:[#allocation2 + $0xc8] sm:$0xff]
      %v274 = vld [vmem:[#allocation2 + $0xd0] sm:$0xff]
      %v275 = vld [vmem:[#allocation2 + $0xd8] sm:$0xff]
      %v276 = vld [vmem:[#allocation2 + $0xe0] sm:$0xff]
      %v277 = vld [vmem:[#allocation2 + $0xe8] sm:$0xff]
      %v278 = vld [vmem:[#allocation2 + $0xf0] sm:$0xff]
      %v279 = vld [vmem:[#allocation2 + $0xf8] sm:$0xff]
      %v280 = vld [vmem:[%s194] sm:$0xf]
      %v281 = vld [vmem:[%s194 + $0x4] sm:$0xf]
      %v282 = vld [vmem:[%s194 + $0xc] sm:$0xf]
      %v283 = vld [vmem:[%s194 + $0x10] sm:$0xf]
      %v284 = vld [vmem:[%s194 + $0x18] sm:$0xf]
      %v285 = vld [vmem:[%s194 + $0x1c] sm:$0xf]
      %v286 = vld [vmem:[%s194 + $0x24] sm:$0xf]
      %v287 = vld [vmem:[%s194 + $0x28] sm:$0xf]
      %v288 = vld [vmem:[%s194 + $0x30] sm:$0xf]
      %v289 = vld [vmem:[%s194 + $0x34] sm:$0xf]
      %v290 = vld [vmem:[%s194 + $0x3c] sm:$0xf]
      %v291 = vld [vmem:[%s194 + $0x40] sm:$0xf]
      %v292 = vld [vmem:[%s194 + $0x48] sm:$0xf]
      %v293 = vld [vmem:[%s194 + $0x4c] sm:$0xf]
      %v294 = vld [vmem:[%s194 + $0x54] sm:$0xf]
      %v295 = vld [vmem:[%s194 + $0x58] sm:$0xf]
      %v296 = vld [vmem:[%s194 + $0x60] sm:$0xf]
      %v297 = vld [vmem:[%s194 + $0x64] sm:$0xf]
      %v298 = vld [vmem:[%s194 + $0x6c] sm:$0xf]
      %v299 = vld [vmem:[%s194 + $0x70] sm:$0xf]
      %v300 = vld [vmem:[%s194 + $0x78] sm:$0xf]
      %v301 = vld [vmem:[%s194 + $0x7c] sm:$0xf]
      %v302 = vld [vmem:[%s194 + $0x84] sm:$0xf]
      %v303 = vld [vmem:[%s194 + $0x88] sm:$0xf]
      %v304 = vld [vmem:[%s194 + $0x90] sm:$0xf]
      %v305 = vld [vmem:[%s194 + $0x94] sm:$0xf]
      %v306 = vld [vmem:[%s194 + $0x9c] sm:$0xf]
      %v307 = vld [vmem:[%s194 + $0xa0] sm:$0xf]
      %v308 = vld [vmem:[%s194 + $0xa8] sm:$0xf]
      %v309 = vld [vmem:[%s194 + $0xac] sm:$0xf]
      %v310 = vld [vmem:[%s194 + $0xb4] sm:$0xf]
      %v311 = vld [vmem:[%s194 + $0xb8] sm:$0xf]
      %v312 = vld [vmem:[%s201] sm:$0x3]
      %v345 = vunpack.c.l.b16 %v280
      %v346 = vunpack.c.l.b16 %v281
      %v347 = vunpack.c.l.b16 %v282
      %v348 = vunpack.c.l.b16 %v283
      %v349 = vunpack.c.l.b16 %v284
      %v350 = vunpack.c.l.b16 %v285
      %v351 = vunpack.c.l.b16 %v286
      %v352 = vunpack.c.l.b16 %v287
      %v353 = vunpack.c.l.b16 %v288
      %v354 = vunpack.c.l.b16 %v289
      %v355 = vunpack.c.l.b16 %v290
      %v356 = vunpack.c.l.b16 %v291
      %v357 = vunpack.c.l.b16 %v292
      %v358 = vunpack.c.l.b16 %v293
      %v359 = vunpack.c.l.b16 %v294
      %v360 = vunpack.c.l.b16 %v295
      %v361 = vunpack.c.l.b16 %v296
      %v362 = vunpack.c.l.b16 %v297
      %v363 = vunpack.c.l.b16 %v298
      %v364 = vunpack.c.l.b16 %v299
      %v365 = vunpack.c.l.b16 %v300
      %v366 = vunpack.c.l.b16 %v301
      %v367 = vunpack.c.l.b16 %v302
      %v368 = vunpack.c.l.b16 %v303
      %v369 = vunpack.c.l.b16 %v304
      %v370 = vunpack.c.l.b16 %v305
      %v371 = vunpack.c.l.b16 %v306
      %v372 = vunpack.c.l.b16 %v307
      %v373 = vunpack.c.l.b16 %v308
      %v374 = vunpack.c.l.b16 %v309
      %v375 = vunpack.c.l.b16 %v310
      %v376 = vunpack.c.l.b16 %v311
      %v377 = vpack.c.b16 %v346, %v345
      %v378 = vpack.c.b16 %v348, %v347
      %v379 = vpack.c.b16 %v350, %v349
      %v380 = vpack.c.b16 %v352, %v351
      %v381 = vpack.c.b16 %v354, %v353
      %v382 = vpack.c.b16 %v356, %v355
      %v383 = vpack.c.b16 %v358, %v357
      %v384 = vpack.c.b16 %v360, %v359
      %v385 = vpack.c.b16 %v362, %v361
      %v386 = vpack.c.b16 %v364, %v363
      %v387 = vpack.c.b16 %v366, %v365
      %v388 = vpack.c.b16 %v368, %v367
      %v389 = vpack.c.b16 %v370, %v369
      %v390 = vpack.c.b16 %v372, %v371
      %v391 = vpack.c.b16 %v374, %v373
      %v392 = vpack.c.b16 %v376, %v375
      %vm393 = vcmask 31744
      %v395 = vsel %vm393, %v377, 0
      %v398 = vsel %vm393, %v378, 0
      %v401 = vsel %vm393, %v379, 0
      %v404 = vsel %vm393, %v380, 0
      %v407 = vsel %vm393, %v381, 0
      %v410 = vsel %vm393, %v382, 0
      %v413 = vsel %vm393, %v383, 0
      %v416 = vsel %vm393, %v384, 0
      %v419 = vsel %vm393, %v385, 0
      %v422 = vsel %vm393, %v386, 0
      %v425 = vsel %vm393, %v387, 0
      %v428 = vsel %vm393, %v388, 0
      %v431 = vsel %vm393, %v389, 0
      %v434 = vsel %vm393, %v390, 0
      %v437 = vsel %vm393, %v391, 0
      %v440 = vsel %vm393, %v392, 0
      %vm442 = vcmask 1041408
      %v444 = vsel %vm442, %v312, 0
      %446 = vmatprep.subr.bf16.mxu0 0
      %447 = vmatpush1.bf16.msra.mxu0 %v444
      %448 = vmatprep.subr.bf16.mxu0 0
      %449 = vmatpush1.bf16.msra.mxu0 0
      %450 = vmatprep.subr.bf16.mxu0 0
      %451 = vmatpush1.bf16.msra.mxu0 0
      %452 = vmatprep.subr.bf16.mxu0 0
      %453 = vmatpush1.bf16.msra.mxu0 0
      %454 = vmatprep.subr.bf16.mxu0 0
      %455 = vmatpush1.bf16.msra.mxu0 0
      %456 = vmatprep.subr.bf16.mxu0 0
      %457 = vmatpush1.bf16.msra.mxu0 0
      %458 = vmatprep.subr.bf16.mxu0 0
      %459 = vmatpush1.bf16.msra.mxu0 0
      %460 = vmatprep.subr.bf16.mxu0 0
      %461 = vmatpush1.bf16.msra.mxu0 0
      %462 = vmatprep.subr.bf16.mxu0 0
      %463 = vmatpush1.bf16.msra.mxu0 0
      %464 = vmatprep.subr.bf16.mxu0 0
      %465 = vmatpush1.bf16.msra.mxu0 0
      %466 = vmatprep.subr.bf16.mxu0 0
      %467 = vmatpush1.bf16.msra.mxu0 0
      %468 = vmatprep.subr.bf16.mxu0 0
      %469 = vmatpush1.bf16.msra.mxu0 0
      %470 = vmatprep.subr.bf16.mxu0 0
      %471 = vmatpush1.bf16.msra.mxu0 0
      %472 = vmatprep.subr.bf16.mxu0 0
      %473 = vmatpush1.bf16.msra.mxu0 0
      %474 = vmatprep.subr.bf16.mxu0 0
      %475 = vmatpush1.bf16.msra.mxu0 0
      %476 = vmatprep.subr.bf16.mxu0 0
      %477 = vmatpush1.bf16.msra.mxu0 0
      %478 = vmatprep.mubr.bf16.mxu0 0
      %479 = vmatmul.mubr.bf16.gmra.mrb[0].mxu0 %v395
      %v480 = vpop.f32.mrb[0].mxu0
      %v481 = vadd.f32 0.0, %v480
      %v482 = vpop.f32.mrb[0].mxu0
      %v483 = vpop.f32.mrb[0].mxu0
      %v484 = vadd.f32 0.0, %v483
      %v485 = vpop.f32.mrb[0].mxu0
      %486 = vmatprep.mubr.bf16.mxu0 0
      %487 = vmatmul.mubr.bf16.gmra.mrb[0].mxu0 %v398
      %v488 = vpop.f32.mrb[0].mxu0
      %v489 = vadd.f32 0.0, %v488
      %v490 = vpop.f32.mrb[0].mxu0
      %v491 = vpop.f32.mrb[0].mxu0
      %v492 = vadd.f32 0.0, %v491
      %v493 = vpop.f32.mrb[0].mxu0
      %494 = vmatprep.mubr.bf16.mxu0 0
      %495 = vmatmul.mubr.bf16.gmra.mrb[0].mxu0 %v401
      %v496 = vpop.f32.mrb[0].mxu0
      %v497 = vadd.f32 0.0, %v496
      %v498 = vpop.f32.mrb[0].mxu0
      %v499 = vpop.f32.mrb[0].mxu0
      %v500 = vadd.f32 0.0, %v499
      %v501 = vpop.f32.mrb[0].mxu0
      %502 = vmatprep.mubr.bf16.mxu0 0
      %503 = vmatmul.mubr.bf16.gmra.mrb[0].mxu0 %v404
      %v504 = vpop.f32.mrb[0].mxu0
      %v505 = vadd.f32 0.0, %v504
      %v506 = vpop.f32.mrb[0].mxu0
      %v507 = vpop.f32.mrb[0].mxu0
      %v508 = vadd.f32 0.0, %v507
      %v509 = vpop.f32.mrb[0].mxu0
      %510 = vmatprep.mubr.bf16.mxu0 0
      %511 = vmatmul.mubr.bf16.gmra.mrb[0].mxu0 %v407
      %v512 = vpop.f32.mrb[0].mxu0
      %v513 = vadd.f32 0.0, %v512
      %v514 = vpop.f32.mrb[0].mxu0
      %v515 = vpop.f32.mrb[0].mxu0
      %v516 = vadd.f32 0.0, %v515
      %v517 = vpop.f32.mrb[0].mxu0
      %518 = vmatprep.mubr.bf16.mxu0 0
      %519 = vmatmul.mubr.bf16.gmra.mrb[0].mxu0 %v410
      %v520 = vpop.f32.mrb[0].mxu0
      %v521 = vadd.f32 0.0, %v520
      %v522 = vpop.f32.mrb[0].mxu0
      %v523 = vpop.f32.mrb[0].mxu0
      %v524 = vadd.f32 0.0, %v523
      %v525 = vpop.f32.mrb[0].mxu0
      %526 = vmatprep.mubr.bf16.mxu0 0
      %527 = vmatmul.mubr.bf16.gmra.mrb[0].mxu0 %v413
      %v528 = vpop.f32.mrb[0].mxu0
      %v529 = vadd.f32 0.0, %v528
      %v530 = vpop.f32.mrb[0].mxu0
      %v531 = vpop.f32.mrb[0].mxu0
      %v532 = vadd.f32 0.0, %v531
      %v533 = vpop.f32.mrb[0].mxu0
      %534 = vmatprep.mubr.bf16.mxu0 0
      %535 = vmatmul.mubr.bf16.gmra.mrb[0].mxu0 %v416
      %v536 = vpop.f32.mrb[0].mxu0
      %v537 = vadd.f32 0.0, %v536
      %v538 = vpop.f32.mrb[0].mxu0
      %v539 = vpop.f32.mrb[0].mxu0
      %v540 = vadd.f32 0.0, %v539
      %v541 = vpop.f32.mrb[0].mxu0
      %542 = vmatprep.mubr.bf16.mxu0 0
      %543 = vmatmul.mubr.bf16.gmra.mrb[0].mxu0 %v419
      %v544 = vpop.f32.mrb[0].mxu0
      %v545 = vadd.f32 0.0, %v544
      %v546 = vpop.f32.mrb[0].mxu0
      %v547 = vpop.f32.mrb[0].mxu0
      %v548 = vadd.f32 0.0, %v547
      %v549 = vpop.f32.mrb[0].mxu0
      %550 = vmatprep.mubr.bf16.mxu0 0
      %551 = vmatmul.mubr.bf16.gmra.mrb[0].mxu0 %v422
      %v552 = vpop.f32.mrb[0].mxu0
      %v553 = vadd.f32 0.0, %v552
      %v554 = vpop.f32.mrb[0].mxu0
      %v555 = vpop.f32.mrb[0].mxu0
      %v556 = vadd.f32 0.0, %v555
      %v557 = vpop.f32.mrb[0].mxu0
      %558 = vmatprep.mubr.bf16.mxu0 0
      %559 = vmatmul.mubr.bf16.gmra.mrb[0].mxu0 %v425
      %v560 = vpop.f32.mrb[0].mxu0
      %v561 = vadd.f32 0.0, %v560
      %v562 = vpop.f32.mrb[0].mxu0
      %v563 = vpop.f32.mrb[0].mxu0
      %v564 = vadd.f32 0.0, %v563
      %v565 = vpop.f32.mrb[0].mxu0
      %566 = vmatprep.mubr.bf16.mxu0 0
      %567 = vmatmul.mubr.bf16.gmra.mrb[0].mxu0 %v428
      %v568 = vpop.f32.mrb[0].mxu0
      %v569 = vadd.f32 0.0, %v568
      %v570 = vpop.f32.mrb[0].mxu0
      %v571 = vpop.f32.mrb[0].mxu0
      %v572 = vadd.f32 0.0, %v571
      %v573 = vpop.f32.mrb[0].mxu0
      %574 = vmatprep.mubr.bf16.mxu0 0
      %575 = vmatmul.mubr.bf16.gmra.mrb[0].mxu0 %v431
      %v576 = vpop.f32.mrb[0].mxu0
      %v577 = vadd.f32 0.0, %v576
      %v578 = vpop.f32.mrb[0].mxu0
      %v579 = vpop.f32.mrb[0].mxu0
      %v580 = vadd.f32 0.0, %v579
      %v581 = vpop.f32.mrb[0].mxu0
      %582 = vmatprep.mubr.bf16.mxu0 0
      %583 = vmatmul.mubr.bf16.gmra.mrb[0].mxu0 %v434
      %v584 = vpop.f32.mrb[0].mxu0
      %v585 = vadd.f32 0.0, %v584
      %v586 = vpop.f32.mrb[0].mxu0
      %v587 = vpop.f32.mrb[0].mxu0
      %v588 = vadd.f32 0.0, %v587
      %v589 = vpop.f32.mrb[0].mxu0
      %590 = vmatprep.mubr.bf16.mxu0 0
      %591 = vmatmul.mubr.bf16.gmra.mrb[0].mxu0 %v437
      %v592 = vpop.f32.mrb[0].mxu0
      %v593 = vadd.f32 0.0, %v592
      %v594 = vpop.f32.mrb[0].mxu0
      %v595 = vpop.f32.mrb[0].mxu0
      %v596 = vadd.f32 0.0, %v595
      %v597 = vpop.f32.mrb[0].mxu0
      %598 = vmatprep.mubr.bf16.mxu0 0
      %599 = vmatmul.mubr.bf16.gmra.mrb[0].mxu0 %v440
      %v600 = vpop.f32.mrb[0].mxu0
      %v601 = vadd.f32 0.0, %v600
      %v602 = vpop.f32.mrb[0].mxu0
      %v603 = vpop.f32.mrb[0].mxu0
      %v604 = vadd.f32 0.0, %v603
      %v605 = vpop.f32.mrb[0].mxu0
      %606 = vdwg.mxu0
      %v607 = vadd.f32 %v248, %v481
      %v608 = vadd.f32 %v249, %v484
      %v609 = vadd.f32 %v250, %v489
      %v610 = vadd.f32 %v251, %v492
      %v611 = vadd.f32 %v252, %v497
      %v612 = vadd.f32 %v253, %v500
      %v613 = vadd.f32 %v254, %v505
      %v614 = vadd.f32 %v255, %v508
      %v615 = vadd.f32 %v256, %v513
      %v616 = vadd.f32 %v257, %v516
      %v617 = vadd.f32 %v258, %v521
      %v618 = vadd.f32 %v259, %v524
      %v619 = vadd.f32 %v260, %v529
      %v620 = vadd.f32 %v261, %v532
      %v621 = vadd.f32 %v262, %v537
      %v622 = vadd.f32 %v263, %v540
      %v623 = vadd.f32 %v264, %v545
      %v624 = vadd.f32 %v265, %v548
      %v625 = vadd.f32 %v266, %v553
      %v626 = vadd.f32 %v267, %v556
      %v627 = vadd.f32 %v268, %v561
      %v628 = vadd.f32 %v269, %v564
      %v629 = vadd.f32 %v270, %v569
      %v630 = vadd.f32 %v271, %v572
      %v631 = vadd.f32 %v272, %v577
      %v632 = vadd.f32 %v273, %v580
      %v633 = vadd.f32 %v274, %v585
      %v634 = vadd.f32 %v275, %v588
      %v635 = vadd.f32 %v276, %v593
      %v636 = vadd.f32 %v277, %v596
      %v637 = vadd.f32 %v278, %v601
      %v638 = vadd.f32 %v279, %v604
      %s639 = scalar_lea.vmem %s194, 204
      %v640 = vld [vmem:[%s639] sm:$0xf]
      %v641 = vld [vmem:[%s639 + $0x4] sm:$0xf]
      %v642 = vld [vmem:[%s639 + $0xc] sm:$0xf]
      %v643 = vld [vmem:[%s639 + $0x10] sm:$0xf]
      %v644 = vld [vmem:[%s639 + $0x18] sm:$0xf]
      %v645 = vld [vmem:[%s639 + $0x1c] sm:$0xf]
      %v646 = vld [vmem:[%s639 + $0x24] sm:$0xf]
      %v647 = vld [vmem:[%s639 + $0x28] sm:$0xf]
      %v648 = vld [vmem:[%s639 + $0x30] sm:$0xf]
      %v649 = vld [vmem:[%s639 + $0x34] sm:$0xf]
      %v650 = vld [vmem:[%s639 + $0x3c] sm:$0xf]
      %v651 = vld [vmem:[%s639 + $0x40] sm:$0xf]
      %v652 = vld [vmem:[%s639 + $0x48] sm:$0xf]
      %v653 = vld [vmem:[%s639 + $0x4c] sm:$0xf]
      %v654 = vld [vmem:[%s639 + $0x54] sm:$0xf]
      %v655 = vld [vmem:[%s639 + $0x58] sm:$0xf]
      %v656 = vld [vmem:[%s639 + $0x60] sm:$0xf]
      %v657 = vld [vmem:[%s639 + $0x64] sm:$0xf]
      %v658 = vld [vmem:[%s639 + $0x6c] sm:$0xf]
      %v659 = vld [vmem:[%s639 + $0x70] sm:$0xf]
      %v660 = vld [vmem:[%s639 + $0x78] sm:$0xf]
      %v661 = vld [vmem:[%s639 + $0x7c] sm:$0xf]
      %v662 = vld [vmem:[%s639 + $0x84] sm:$0xf]
      %v663 = vld [vmem:[%s639 + $0x88] sm:$0xf]
      %v664 = vld [vmem:[%s639 + $0x90] sm:$0xf]
      %v665 = vld [vmem:[%s639 + $0x94] sm:$0xf]
      %v666 = vld [vmem:[%s639 + $0x9c] sm:$0xf]
      %v667 = vld [vmem:[%s639 + $0xa0] sm:$0xf]
      %v668 = vld [vmem:[%s639 + $0xa8] sm:$0xf]
      %v669 = vld [vmem:[%s639 + $0xac] sm:$0xf]
      %v670 = vld [vmem:[%s639 + $0xb4] sm:$0xf]
      %v671 = vld [vmem:[%s639 + $0xb8] sm:$0xf]
      %s672 = scalar_lea.vmem %s201, 2
      %v673 = vld [vmem:[%s672] sm:$0x3]
      %v706 = vunpack.c.l.b16 %v640
      %v707 = vunpack.c.l.b16 %v641
      %v708 = vunpack.c.l.b16 %v642
      %v709 = vunpack.c.l.b16 %v643
      %v710 = vunpack.c.l.b16 %v644
      %v711 = vunpack.c.l.b16 %v645
      %v712 = vunpack.c.l.b16 %v646
      %v713 = vunpack.c.l.b16 %v647
      %v714 = vunpack.c.l.b16 %v648
      %v715 = vunpack.c.l.b16 %v649
      %v716 = vunpack.c.l.b16 %v650
      %v717 = vunpack.c.l.b16 %v651
      %v718 = vunpack.c.l.b16 %v652
      %v719 = vunpack.c.l.b16 %v653
      %v720 = vunpack.c.l.b16 %v654
      %v721 = vunpack.c.l.b16 %v655
      %v722 = vunpack.c.l.b16 %v656
      %v723 = vunpack.c.l.b16 %v657
      %v724 = vunpack.c.l.b16 %v658
      %v725 = vunpack.c.l.b16 %v659
      %v726 = vunpack.c.l.b16 %v660
      %v727 = vunpack.c.l.b16 %v661
      %v728 = vunpack.c.l.b16 %v662
      %v729 = vunpack.c.l.b16 %v663
      %v730 = vunpack.c.l.b16 %v664
      %v731 = vunpack.c.l.b16 %v665
      %v732 = vunpack.c.l.b16 %v666
      %v733 = vunpack.c.l.b16 %v667
      %v734 = vunpack.c.l.b16 %v668
      %v735 = vunpack.c.l.b16 %v669
      %v736 = vunpack.c.l.b16 %v670
      %v737 = vunpack.c.l.b16 %v671
      %v738 = vpack.c.b16 %v707, %v706
      %v739 = vpack.c.b16 %v709, %v708
      %v740 = vpack.c.b16 %v711, %v710
      %v741 = vpack.c.b16 %v713, %v712
      %v742 = vpack.c.b16 %v715, %v714
      %v743 = vpack.c.b16 %v717, %v716
      %v744 = vpack.c.b16 %v719, %v718
      %v745 = vpack.c.b16 %v721, %v720
      %v746 = vpack.c.b16 %v723, %v722
      %v747 = vpack.c.b16 %v725, %v724
      %v748 = vpack.c.b16 %v727, %v726
      %v749 = vpack.c.b16 %v729, %v728
      %v750 = vpack.c.b16 %v731, %v730
      %v751 = vpack.c.b16 %v733, %v732
      %v752 = vpack.c.b16 %v735, %v734
      %v753 = vpack.c.b16 %v737, %v736
      %v755 = vsel %vm393, %v738, 0
      %v758 = vsel %vm393, %v739, 0
      %v761 = vsel %vm393, %v740, 0
      %v764 = vsel %vm393, %v741, 0
      %v767 = vsel %vm393, %v742, 0
      %v770 = vsel %vm393, %v743, 0
      %v773 = vsel %vm393, %v744, 0
      %v776 = vsel %vm393, %v745, 0
      %v779 = vsel %vm393, %v746, 0
      %v782 = vsel %vm393, %v747, 0
      %v785 = vsel %vm393, %v748, 0
      %v788 = vsel %vm393, %v749, 0
      %v791 = vsel %vm393, %v750, 0
      %v794 = vsel %vm393, %v751, 0
      %v797 = vsel %vm393, %v752, 0
      %v800 = vsel %vm393, %v753, 0
      %v803 = vsel %vm442, %v673, 0
      %805 = vmatprep.subr.bf16.mxu0 0
      %806 = vmatpush1.bf16.msra.mxu0 %v803
      %807 = vmatprep.subr.bf16.mxu0 0
      %808 = vmatpush1.bf16.msra.mxu0 0
      %809 = vmatprep.subr.bf16.mxu0 0
      %810 = vmatpush1.bf16.msra.mxu0 0
      %811 = vmatprep.subr.bf16.mxu0 0
      %812 = vmatpush1.bf16.msra.mxu0 0
      %813 = vmatprep.subr.bf16.mxu0 0
      %814 = vmatpush1.bf16.msra.mxu0 0
      %815 = vmatprep.subr.bf16.mxu0 0
      %816 = vmatpush1.bf16.msra.mxu0 0
      %817 = vmatprep.subr.bf16.mxu0 0
      %818 = vmatpush1.bf16.msra.mxu0 0
      %819 = vmatprep.subr.bf16.mxu0 0
      %820 = vmatpush1.bf16.msra.mxu0 0
      %821 = vmatprep.subr.bf16.mxu0 0
      %822 = vmatpush1.bf16.msra.mxu0 0
      %823 = vmatprep.subr.bf16.mxu0 0
      %824 = vmatpush1.bf16.msra.mxu0 0
      %825 = vmatprep.subr.bf16.mxu0 0
      %826 = vmatpush1.bf16.msra.mxu0 0
      %827 = vmatprep.subr.bf16.mxu0 0
      %828 = vmatpush1.bf16.msra.mxu0 0
      %829 = vmatprep.subr.bf16.mxu0 0
      %830 = vmatpush1.bf16.msra.mxu0 0
      %831 = vmatprep.subr.bf16.mxu0 0
      %832 = vmatpush1.bf16.msra.mxu0 0
      %833 = vmatprep.subr.bf16.mxu0 0
      %834 = vmatpush1.bf16.msra.mxu0 0
      %835 = vmatprep.subr.bf16.mxu0 0
      %836 = vmatpush1.bf16.msra.mxu0 0
      %837 = vmatprep.mubr.bf16.mxu0 0
      %838 = vmatmul.mubr.bf16.gmra.mrb[0].mxu0 %v755
      %v839 = vpop.f32.mrb[0].mxu0
      %v840 = vadd.f32 0.0, %v839
      %v841 = vpop.f32.mrb[0].mxu0
      %v842 = vpop.f32.mrb[0].mxu0
      %v843 = vadd.f32 0.0, %v842
      %v844 = vpop.f32.mrb[0].mxu0
      %845 = vmatprep.mubr.bf16.mxu0 0
      %846 = vmatmul.mubr.bf16.gmra.mrb[0].mxu0 %v758
      %v847 = vpop.f32.mrb[0].mxu0
      %v848 = vadd.f32 0.0, %v847
      %v849 = vpop.f32.mrb[0].mxu0
      %v850 = vpop.f32.mrb[0].mxu0
      %v851 = vadd.f32 0.0, %v850
      %v852 = vpop.f32.mrb[0].mxu0
      %853 = vmatprep.mubr.bf16.mxu0 0
      %854 = vmatmul.mubr.bf16.gmra.mrb[0].mxu0 %v761
      %v855 = vpop.f32.mrb[0].mxu0
      %v856 = vadd.f32 0.0, %v855
      %v857 = vpop.f32.mrb[0].mxu0
      %v858 = vpop.f32.mrb[0].mxu0
      %v859 = vadd.f32 0.0, %v858
      %v860 = vpop.f32.mrb[0].mxu0
      %861 = vmatprep.mubr.bf16.mxu0 0
      %862 = vmatmul.mubr.bf16.gmra.mrb[0].mxu0 %v764
      %v863 = vpop.f32.mrb[0].mxu0
      %v864 = vadd.f32 0.0, %v863
      %v865 = vpop.f32.mrb[0].mxu0
      %v866 = vpop.f32.mrb[0].mxu0
      %v867 = vadd.f32 0.0, %v866
      %v868 = vpop.f32.mrb[0].mxu0
      %869 = vmatprep.mubr.bf16.mxu0 0
      %870 = vmatmul.mubr.bf16.gmra.mrb[0].mxu0 %v767
      %v871 = vpop.f32.mrb[0].mxu0
      %v872 = vadd.f32 0.0, %v871
      %v873 = vpop.f32.mrb[0].mxu0
      %v874 = vpop.f32.mrb[0].mxu0
      %v875 = vadd.f32 0.0, %v874
      %v876 = vpop.f32.mrb[0].mxu0
      %877 = vmatprep.mubr.bf16.mxu0 0
      %878 = vmatmul.mubr.bf16.gmra.mrb[0].mxu0 %v770
      %v879 = vpop.f32.mrb[0].mxu0
      %v880 = vadd.f32 0.0, %v879
      %v881 = vpop.f32.mrb[0].mxu0
      %v882 = vpop.f32.mrb[0].mxu0
      %v883 = vadd.f32 0.0, %v882
      %v884 = vpop.f32.mrb[0].mxu0
      %885 = vmatprep.mubr.bf16.mxu0 0
      %886 = vmatmul.mubr.bf16.gmra.mrb[0].mxu0 %v773
      %v887 = vpop.f32.mrb[0].mxu0
      %v888 = vadd.f32 0.0, %v887
      %v889 = vpop.f32.mrb[0].mxu0
      %v890 = vpop.f32.mrb[0].mxu0
      %v891 = vadd.f32 0.0, %v890
      %v892 = vpop.f32.mrb[0].mxu0
      %893 = vmatprep.mubr.bf16.mxu0 0
      %894 = vmatmul.mubr.bf16.gmra.mrb[0].mxu0 %v776
      %v895 = vpop.f32.mrb[0].mxu0
      %v896 = vadd.f32 0.0, %v895
      %v897 = vpop.f32.mrb[0].mxu0
      %v898 = vpop.f32.mrb[0].mxu0
      %v899 = vadd.f32 0.0, %v898
      %v900 = vpop.f32.mrb[0].mxu0
      %901 = vmatprep.mubr.bf16.mxu0 0
      %902 = vmatmul.mubr.bf16.gmra.mrb[0].mxu0 %v779
      %v903 = vpop.f32.mrb[0].mxu0
      %v904 = vadd.f32 0.0, %v903
      %v905 = vpop.f32.mrb[0].mxu0
      %v906 = vpop.f32.mrb[0].mxu0
      %v907 = vadd.f32 0.0, %v906
      %v908 = vpop.f32.mrb[0].mxu0
      %909 = vmatprep.mubr.bf16.mxu0 0
      %910 = vmatmul.mubr.bf16.gmra.mrb[0].mxu0 %v782
      %v911 = vpop.f32.mrb[0].mxu0
      %v912 = vadd.f32 0.0, %v911
      %v913 = vpop.f32.mrb[0].mxu0
      %v914 = vpop.f32.mrb[0].mxu0
      %v915 = vadd.f32 0.0, %v914
      %v916 = vpop.f32.mrb[0].mxu0
      %917 = vmatprep.mubr.bf16.mxu0 0
      %918 = vmatmul.mubr.bf16.gmra.mrb[0].mxu0 %v785
      %v919 = vpop.f32.mrb[0].mxu0
      %v920 = vadd.f32 0.0, %v919
      %v921 = vpop.f32.mrb[0].mxu0
      %v922 = vpop.f32.mrb[0].mxu0
      %v923 = vadd.f32 0.0, %v922
      %v924 = vpop.f32.mrb[0].mxu0
      %925 = vmatprep.mubr.bf16.mxu0 0
      %926 = vmatmul.mubr.bf16.gmra.mrb[0].mxu0 %v788
      %v927 = vpop.f32.mrb[0].mxu0
      %v928 = vadd.f32 0.0, %v927
      %v929 = vpop.f32.mrb[0].mxu0
      %v930 = vpop.f32.mrb[0].mxu0
      %v931 = vadd.f32 0.0, %v930
      %v932 = vpop.f32.mrb[0].mxu0
      %933 = vmatprep.mubr.bf16.mxu0 0
      %934 = vmatmul.mubr.bf16.gmra.mrb[0].mxu0 %v791
      %v935 = vpop.f32.mrb[0].mxu0
      %v936 = vadd.f32 0.0, %v935
      %v937 = vpop.f32.mrb[0].mxu0
      %v938 = vpop.f32.mrb[0].mxu0
      %v939 = vadd.f32 0.0, %v938
      %v940 = vpop.f32.mrb[0].mxu0
      %941 = vmatprep.mubr.bf16.mxu0 0
      %942 = vmatmul.mubr.bf16.gmra.mrb[0].mxu0 %v794
      %v943 = vpop.f32.mrb[0].mxu0
      %v944 = vadd.f32 0.0, %v943
      %v945 = vpop.f32.mrb[0].mxu0
      %v946 = vpop.f32.mrb[0].mxu0
      %v947 = vadd.f32 0.0, %v946
      %v948 = vpop.f32.mrb[0].mxu0
      %949 = vmatprep.mubr.bf16.mxu0 0
      %950 = vmatmul.mubr.bf16.gmra.mrb[0].mxu0 %v797
      %v951 = vpop.f32.mrb[0].mxu0
      %v952 = vadd.f32 0.0, %v951
      %v953 = vpop.f32.mrb[0].mxu0
      %v954 = vpop.f32.mrb[0].mxu0
      %v955 = vadd.f32 0.0, %v954
      %v956 = vpop.f32.mrb[0].mxu0
      %957 = vmatprep.mubr.bf16.mxu0 0
      %958 = vmatmul.mubr.bf16.gmra.mrb[0].mxu0 %v800
      %v959 = vpop.f32.mrb[0].mxu0
      %v960 = vadd.f32 0.0, %v959
      %v961 = vpop.f32.mrb[0].mxu0
      %v962 = vpop.f32.mrb[0].mxu0
      %v963 = vadd.f32 0.0, %v962
      %v964 = vpop.f32.mrb[0].mxu0
      %965 = vdwg.mxu0
      %v966 = vadd.f32 %v607, %v840
      %v967 = vadd.f32 %v608, %v843
      %v968 = vadd.f32 %v609, %v848
      %v969 = vadd.f32 %v610, %v851
      %v970 = vadd.f32 %v611, %v856
      %v971 = vadd.f32 %v612, %v859
      %v972 = vadd.f32 %v613, %v864
      %v973 = vadd.f32 %v614, %v867
      %v974 = vadd.f32 %v615, %v872
      %v975 = vadd.f32 %v616, %v875
      %v976 = vadd.f32 %v617, %v880
      %v977 = vadd.f32 %v618, %v883
      %v978 = vadd.f32 %v619, %v888
      %v979 = vadd.f32 %v620, %v891
      %v980 = vadd.f32 %v621, %v896
      %v981 = vadd.f32 %v622, %v899
      %v982 = vadd.f32 %v623, %v904
      %v983 = vadd.f32 %v624, %v907
      %v984 = vadd.f32 %v625, %v912
      %v985 = vadd.f32 %v626, %v915
      %v986 = vadd.f32 %v627, %v920
      %v987 = vadd.f32 %v628, %v923
      %v988 = vadd.f32 %v629, %v928
      %v989 = vadd.f32 %v630, %v931
      %v990 = vadd.f32 %v631, %v936
      %v991 = vadd.f32 %v632, %v939
      %v992 = vadd.f32 %v633, %v944
      %v993 = vadd.f32 %v634, %v947
      %v994 = vadd.f32 %v635, %v952
      %v995 = vadd.f32 %v636, %v955
      %v996 = vadd.f32 %v637, %v960
      %v997 = vadd.f32 %v638, %v963
      %v998 = vld [vmem:[%s194] sm:$0xf]
      %v999 = vld [vmem:[%s194 + $0x4] sm:$0xf]
      %v1000 = vld [vmem:[%s194 + $0x8] sm:$0x1]
      %v1001 = vld [vmem:[%s194 + $0xc] sm:$0xf]
      %v1002 = vld [vmem:[%s194 + $0x10] sm:$0xf]
      %v1003 = vld [vmem:[%s194 + $0x14] sm:$0x1]
      %v1004 = vld [vmem:[%s194 + $0x18] sm:$0xf]
      %v1005 = vld [vmem:[%s194 + $0x1c] sm:$0xf]
      %v1006 = vld [vmem:[%s194 + $0x20] sm:$0x1]
      %v1007 = vld [vmem:[%s194 + $0x24] sm:$0xf]
      %v1008 = vld [vmem:[%s194 + $0x28] sm:$0xf]
      %v1009 = vld [vmem:[%s194 + $0x2c] sm:$0x1]
      %v1010 = vld [vmem:[%s194 + $0x30] sm:$0xf]
      %v1011 = vld [vmem:[%s194 + $0x34] sm:$0xf]
      %v1012 = vld [vmem:[%s194 + $0x38] sm:$0x1]
      %v1013 = vld [vmem:[%s194 + $0x3c] sm:$0xf]
      %v1014 = vld [vmem:[%s194 + $0x40] sm:$0xf]
      %v1015 = vld [vmem:[%s194 + $0x44] sm:$0x1]
      %v1016 = vld [vmem:[%s194 + $0x48] sm:$0xf]
      %v1017 = vld [vmem:[%s194 + $0x4c] sm:$0xf]
      %v1018 = vld [vmem:[%s194 + $0x50] sm:$0x1]
      %v1019 = vld [vmem:[%s194 + $0x54] sm:$0xf]
      %v1020 = vld [vmem:[%s194 + $0x58] sm:$0xf]
      %v1021 = vld [vmem:[%s194 + $0x5c] sm:$0x1]
      %v1022 = vld [vmem:[%s194 + $0x60] sm:$0xf]
      %v1023 = vld [vmem:[%s194 + $0x64] sm:$0xf]
      %v1024 = vld [vmem:[%s194 + $0x68] sm:$0x1]
      %v1025 = vld [vmem:[%s194 + $0x6c] sm:$0xf]
      %v1026 = vld [vmem:[%s194 + $0x70] sm:$0xf]
      %v1027 = vld [vmem:[%s194 + $0x74] sm:$0x1]
      %v1028 = vld [vmem:[%s194 + $0x78] sm:$0xf]
      %v1029 = vld [vmem:[%s194 + $0x7c] sm:$0xf]
      %v1030 = vld [vmem:[%s194 + $0x80] sm:$0x1]
      %v1031 = vld [vmem:[%s194 + $0x84] sm:$0xf]
      %v1032 = vld [vmem:[%s194 + $0x88] sm:$0xf]
      %v1033 = vld [vmem:[%s194 + $0x8c] sm:$0x1]
      %v1034 = vld [vmem:[%s194 + $0x90] sm:$0xf]
      %v1035 = vld [vmem:[%s194 + $0x94] sm:$0xf]
      %v1036 = vld [vmem:[%s194 + $0x98] sm:$0x1]
      %v1037 = vld [vmem:[%s194 + $0x9c] sm:$0xf]
      %v1038 = vld [vmem:[%s194 + $0xa0] sm:$0xf]
      %v1039 = vld [vmem:[%s194 + $0xa4] sm:$0x1]
      %v1040 = vld [vmem:[%s194 + $0xa8] sm:$0xf]
      %v1041 = vld [vmem:[%s194 + $0xac] sm:$0xf]
      %v1042 = vld [vmem:[%s194 + $0xb0] sm:$0x1]
      %v1043 = vld [vmem:[%s194 + $0xb4] sm:$0xf]
      %v1044 = vld [vmem:[%s194 + $0xb8] sm:$0xf]
      %v1045 = vld [vmem:[%s194 + $0xbc] sm:$0x1]
      %vm1046 = vsmask.f32 3328
      %vm1047 = vsmask.f32 7440
      %vm1048 = vmor %vm1046, %vm1047
      %v1050 = vshrl.u32 %v998, 16
      %v1052 = vrot.slane %v1050, 4
      %v1053 = vshll.u32 %v998, 16
      %v1055 = vrot.slane %v1053, 5
      %v1056 = vor.u32 %v1052, %v1055
      %v1057 = vrot.slane %v1056, 4
      %v1059 = vshll.u32 %v999, 16
      %v1061 = vrot.slane %v1059, 5
      %v1062 = vsel %vm1048, %v1057, %v1061
      %v1063 = vshrl.u32 %v999, 16
      %v1065 = vrot.slane %v1063, 4
      %v1066 = vor.u32 %v1065, %v1061
      %v1067 = vrot.slane %v1066, 4
      %v1069 = vshll.u32 %v1000, 16
      %v1071 = vrot.slane %v1069, 5
      %v1072 = vsel %vm1048, %v1067, %v1071
      %v1074 = vshrl.u32 %v1001, 16
      %v1076 = vrot.slane %v1074, 4
      %v1077 = vshll.u32 %v1001, 16
      %v1079 = vrot.slane %v1077, 5
      %v1080 = vor.u32 %v1076, %v1079
      %v1081 = vrot.slane %v1080, 4
      %v1083 = vshll.u32 %v1002, 16
      %v1085 = vrot.slane %v1083, 5
      %v1086 = vsel %vm1048, %v1081, %v1085
      %v1087 = vshrl.u32 %v1002, 16
      %v1089 = vrot.slane %v1087, 4
      %v1090 = vor.u32 %v1089, %v1085
      %v1091 = vrot.slane %v1090, 4
      %v1093 = vshll.u32 %v1003, 16
      %v1095 = vrot.slane %v1093, 5
      %v1096 = vsel %vm1048, %v1091, %v1095
      %v1098 = vshrl.u32 %v1004, 16
      %v1100 = vrot.slane %v1098, 4
      %v1101 = vshll.u32 %v1004, 16
      %v1103 = vrot.slane %v1101, 5
      %v1104 = vor.u32 %v1100, %v1103
      %v1105 = vrot.slane %v1104, 4
      %v1107 = vshll.u32 %v1005, 16
      %v1109 = vrot.slane %v1107, 5
      %v1110 = vsel %vm1048, %v1105, %v1109
      %v1111 = vshrl.u32 %v1005, 16
      %v1113 = vrot.slane %v1111, 4
      %v1114 = vor.u32 %v1113, %v1109
      %v1115 = vrot.slane %v1114, 4
      %v1117 = vshll.u32 %v1006, 16
      %v1119 = vrot.slane %v1117, 5
      %v1120 = vsel %vm1048, %v1115, %v1119
      %v1122 = vshrl.u32 %v1007, 16
      %v1124 = vrot.slane %v1122, 4
      %v1125 = vshll.u32 %v1007, 16
      %v1127 = vrot.slane %v1125, 5
      %v1128 = vor.u32 %v1124, %v1127
      %v1129 = vrot.slane %v1128, 4
      %v1131 = vshll.u32 %v1008, 16
      %v1133 = vrot.slane %v1131, 5
      %v1134 = vsel %vm1048, %v1129, %v1133
      %v1135 = vshrl.u32 %v1008, 16
      %v1137 = vrot.slane %v1135, 4
      %v1138 = vor.u32 %v1137, %v1133
      %v1139 = vrot.slane %v1138, 4
      %v1141 = vshll.u32 %v1009, 16
      %v1143 = vrot.slane %v1141, 5
      %v1144 = vsel %vm1048, %v1139, %v1143
      %v1146 = vshrl.u32 %v1010, 16
      %v1148 = vrot.slane %v1146, 4
      %v1149 = vshll.u32 %v1010, 16
      %v1151 = vrot.slane %v1149, 5
      %v1152 = vor.u32 %v1148, %v1151
      %v1153 = vrot.slane %v1152, 4
      %v1155 = vshll.u32 %v1011, 16
      %v1157 = vrot.slane %v1155, 5
      %v1158 = vsel %vm1048, %v1153, %v1157
      %v1159 = vshrl.u32 %v1011, 16
      %v1161 = vrot.slane %v1159, 4
      %v1162 = vor.u32 %v1161, %v1157
      %v1163 = vrot.slane %v1162, 4
      %v1165 = vshll.u32 %v1012, 16
      %v1167 = vrot.slane %v1165, 5
      %v1168 = vsel %vm1048, %v1163, %v1167
      %v1170 = vshrl.u32 %v1013, 16
      %v1172 = vrot.slane %v1170, 4
      %v1173 = vshll.u32 %v1013, 16
      %v1175 = vrot.slane %v1173, 5
      %v1176 = vor.u32 %v1172, %v1175
      %v1177 = vrot.slane %v1176, 4
      %v1179 = vshll.u32 %v1014, 16
      %v1181 = vrot.slane %v1179, 5
      %v1182 = vsel %vm1048, %v1177, %v1181
      %v1183 = vshrl.u32 %v1014, 16
      %v1185 = vrot.slane %v1183, 4
      %v1186 = vor.u32 %v1185, %v1181
      %v1187 = vrot.slane %v1186, 4
      %v1189 = vshll.u32 %v1015, 16
      %v1191 = vrot.slane %v1189, 5
      %v1192 = vsel %vm1048, %v1187, %v1191
      %v1194 = vshrl.u32 %v1016, 16
      %v1196 = vrot.slane %v1194, 4
      %v1197 = vshll.u32 %v1016, 16
      %v1199 = vrot.slane %v1197, 5
      %v1200 = vor.u32 %v1196, %v1199
      %v1201 = vrot.slane %v1200, 4
      %v1203 = vshll.u32 %v1017, 16
      %v1205 = vrot.slane %v1203, 5
      %v1206 = vsel %vm1048, %v1201, %v1205
      %v1207 = vshrl.u32 %v1017, 16
      %v1209 = vrot.slane %v1207, 4
      %v1210 = vor.u32 %v1209, %v1205
      %v1211 = vrot.slane %v1210, 4
      %v1213 = vshll.u32 %v1018, 16
      %v1215 = vrot.slane %v1213, 5
      %v1216 = vsel %vm1048, %v1211, %v1215
      %v1218 = vshrl.u32 %v1019, 16
      %v1220 = vrot.slane %v1218, 4
      %v1221 = vshll.u32 %v1019, 16
      %v1223 = vrot.slane %v1221, 5
      %v1224 = vor.u32 %v1220, %v1223
      %v1225 = vrot.slane %v1224, 4
      %v1227 = vshll.u32 %v1020, 16
      %v1229 = vrot.slane %v1227, 5
      %v1230 = vsel %vm1048, %v1225, %v1229
      %v1231 = vshrl.u32 %v1020, 16
      %v1233 = vrot.slane %v1231, 4
      %v1234 = vor.u32 %v1233, %v1229
      %v1235 = vrot.slane %v1234, 4
      %v1237 = vshll.u32 %v1021, 16
      %v1239 = vrot.slane %v1237, 5
      %v1240 = vsel %vm1048, %v1235, %v1239
      %v1242 = vshrl.u32 %v1022, 16
      %v1244 = vrot.slane %v1242, 4
      %v1245 = vshll.u32 %v1022, 16
      %v1247 = vrot.slane %v1245, 5
      %v1248 = vor.u32 %v1244, %v1247
      %v1249 = vrot.slane %v1248, 4
      %v1251 = vshll.u32 %v1023, 16
      %v1253 = vrot.slane %v1251, 5
      %v1254 = vsel %vm1048, %v1249, %v1253
      %v1255 = vshrl.u32 %v1023, 16
      %v1257 = vrot.slane %v1255, 4
      %v1258 = vor.u32 %v1257, %v1253
      %v1259 = vrot.slane %v1258, 4
      %v1261 = vshll.u32 %v1024, 16
      %v1263 = vrot.slane %v1261, 5
      %v1264 = vsel %vm1048, %v1259, %v1263
      %v1266 = vshrl.u32 %v1025, 16
      %v1268 = vrot.slane %v1266, 4
      %v1269 = vshll.u32 %v1025, 16
      %v1271 = vrot.slane %v1269, 5
      %v1272 = vor.u32 %v1268, %v1271
      %v1273 = vrot.slane %v1272, 4
      %v1275 = vshll.u32 %v1026, 16
      %v1277 = vrot.slane %v1275, 5
      %v1278 = vsel %vm1048, %v1273, %v1277
      %v1279 = vshrl.u32 %v1026, 16
      %v1281 = vrot.slane %v1279, 4
      %v1282 = vor.u32 %v1281, %v1277
      %v1283 = vrot.slane %v1282, 4
      %v1285 = vshll.u32 %v1027, 16
      %v1287 = vrot.slane %v1285, 5
      %v1288 = vsel %vm1048, %v1283, %v1287
      %v1290 = vshrl.u32 %v1028, 16
      %v1292 = vrot.slane %v1290, 4
      %v1293 = vshll.u32 %v1028, 16
      %v1295 = vrot.slane %v1293, 5
      %v1296 = vor.u32 %v1292, %v1295
      %v1297 = vrot.slane %v1296, 4
      %v1299 = vshll.u32 %v1029, 16
      %v1301 = vrot.slane %v1299, 5
      %v1302 = vsel %vm1048, %v1297, %v1301
      %v1303 = vshrl.u32 %v1029, 16
      %v1305 = vrot.slane %v1303, 4
      %v1306 = vor.u32 %v1305, %v1301
      %v1307 = vrot.slane %v1306, 4
      %v1309 = vshll.u32 %v1030, 16
      %v1311 = vrot.slane %v1309, 5
      %v1312 = vsel %vm1048, %v1307, %v1311
      %v1314 = vshrl.u32 %v1031, 16
      %v1316 = vrot.slane %v1314, 4
      %v1317 = vshll.u32 %v1031, 16
      %v1319 = vrot.slane %v1317, 5
      %v1320 = vor.u32 %v1316, %v1319
      %v1321 = vrot.slane %v1320, 4
      %v1323 = vshll.u32 %v1032, 16
      %v1325 = vrot.slane %v1323, 5
      %v1326 = vsel %vm1048, %v1321, %v1325
      %v1327 = vshrl.u32 %v1032, 16
      %v1329 = vrot.slane %v1327, 4
      %v1330 = vor.u32 %v1329, %v1325
      %v1331 = vrot.slane %v1330, 4
      %v1333 = vshll.u32 %v1033, 16
      %v1335 = vrot.slane %v1333, 5
      %v1336 = vsel %vm1048, %v1331, %v1335
      %v1338 = vshrl.u32 %v1034, 16
      %v1340 = vrot.slane %v1338, 4
      %v1341 = vshll.u32 %v1034, 16
      %v1343 = vrot.slane %v1341, 5
      %v1344 = vor.u32 %v1340, %v1343
      %v1345 = vrot.slane %v1344, 4
      %v1347 = vshll.u32 %v1035, 16
      %v1349 = vrot.slane %v1347, 5
      %v1350 = vsel %vm1048, %v1345, %v1349
      %v1351 = vshrl.u32 %v1035, 16
      %v1353 = vrot.slane %v1351, 4
      %v1354 = vor.u32 %v1353, %v1349
      %v1355 = vrot.slane %v1354, 4
      %v1357 = vshll.u32 %v1036, 16
      %v1359 = vrot.slane %v1357, 5
      %v1360 = vsel %vm1048, %v1355, %v1359
      %v1362 = vshrl.u32 %v1037, 16
      %v1364 = vrot.slane %v1362, 4
      %v1365 = vshll.u32 %v1037, 16
      %v1367 = vrot.slane %v1365, 5
      %v1368 = vor.u32 %v1364, %v1367
      %v1369 = vrot.slane %v1368, 4
      %v1371 = vshll.u32 %v1038, 16
      %v1373 = vrot.slane %v1371, 5
      %v1374 = vsel %vm1048, %v1369, %v1373
      %v1375 = vshrl.u32 %v1038, 16
      %v1377 = vrot.slane %v1375, 4
      %v1378 = vor.u32 %v1377, %v1373
      %v1379 = vrot.slane %v1378, 4
      %v1381 = vshll.u32 %v1039, 16
      %v1383 = vrot.slane %v1381, 5
      %v1384 = vsel %vm1048, %v1379, %v1383
      %v1386 = vshrl.u32 %v1040, 16
      %v1388 = vrot.slane %v1386, 4
      %v1389 = vshll.u32 %v1040, 16
      %v1391 = vrot.slane %v1389, 5
      %v1392 = vor.u32 %v1388, %v1391
      %v1393 = vrot.slane %v1392, 4
      %v1395 = vshll.u32 %v1041, 16
      %v1397 = vrot.slane %v1395, 5
      %v1398 = vsel %vm1048, %v1393, %v1397
      %v1399 = vshrl.u32 %v1041, 16
      %v1401 = vrot.slane %v1399, 4
      %v1402 = vor.u32 %v1401, %v1397
      %v1403 = vrot.slane %v1402, 4
      %v1405 = vshll.u32 %v1042, 16
      %v1407 = vrot.slane %v1405, 5
      %v1408 = vsel %vm1048, %v1403, %v1407
      %v1410 = vshrl.u32 %v1043, 16
      %v1412 = vrot.slane %v1410, 4
      %v1413 = vshll.u32 %v1043, 16
      %v1415 = vrot.slane %v1413, 5
      %v1416 = vor.u32 %v1412, %v1415
      %v1417 = vrot.slane %v1416, 4
      %v1419 = vshll.u32 %v1044, 16
      %v1421 = vrot.slane %v1419, 5
      %v1422 = vsel %vm1048, %v1417, %v1421
      %v1423 = vshrl.u32 %v1044, 16
      %v1425 = vrot.slane %v1423, 4
      %v1426 = vor.u32 %v1425, %v1421
      %v1427 = vrot.slane %v1426, 4
      %v1429 = vshll.u32 %v1045, 16
      %v1431 = vrot.slane %v1429, 5
      %v1432 = vsel %vm1048, %v1427, %v1431
      %s1433 = scalar_lea.vmem %s201, 4
      %v1434 = vld [vmem:[%s1433] sm:$0x3]
      %v1435 = vunpack.c.l.b16 %v1062
      %v1436 = vunpack.c.l.b16 %v1072
      %v1437 = vunpack.c.l.b16 %v1086
      %v1438 = vunpack.c.l.b16 %v1096
      %v1439 = vunpack.c.l.b16 %v1110
      %v1440 = vunpack.c.l.b16 %v1120
      %v1441 = vunpack.c.l.b16 %v1134
      %v1442 = vunpack.c.l.b16 %v1144
      %v1443 = vunpack.c.l.b16 %v1158
      %v1444 = vunpack.c.l.b16 %v1168
      %v1445 = vunpack.c.l.b16 %v1182
      %v1446 = vunpack.c.l.b16 %v1192
      %v1447 = vunpack.c.l.b16 %v1206
      %v1448 = vunpack.c.l.b16 %v1216
      %v1449 = vunpack.c.l.b16 %v1230
      %v1450 = vunpack.c.l.b16 %v1240
      %v1451 = vunpack.c.l.b16 %v1254
      %v1452 = vunpack.c.l.b16 %v1264
      %v1453 = vunpack.c.l.b16 %v1278
      %v1454 = vunpack.c.l.b16 %v1288
      %v1455 = vunpack.c.l.b16 %v1302
      %v1456 = vunpack.c.l.b16 %v1312
      %v1457 = vunpack.c.l.b16 %v1326
      %v1458 = vunpack.c.l.b16 %v1336
      %v1459 = vunpack.c.l.b16 %v1350
      %v1460 = vunpack.c.l.b16 %v1360
      %v1461 = vunpack.c.l.b16 %v1374
      %v1462 = vunpack.c.l.b16 %v1384
      %v1463 = vunpack.c.l.b16 %v1398
      %v1464 = vunpack.c.l.b16 %v1408
      %v1465 = vunpack.c.l.b16 %v1422
      %v1466 = vunpack.c.l.b16 %v1432
      %v1467 = vpack.c.b16 %v1436, %v1435
      %v1468 = vpack.c.b16 %v1438, %v1437
      %v1469 = vpack.c.b16 %v1440, %v1439
      %v1470 = vpack.c.b16 %v1442, %v1441
      %v1471 = vpack.c.b16 %v1444, %v1443
      %v1472 = vpack.c.b16 %v1446, %v1445
      %v1473 = vpack.c.b16 %v1448, %v1447
      %v1474 = vpack.c.b16 %v1450, %v1449
      %v1475 = vpack.c.b16 %v1452, %v1451
      %v1476 = vpack.c.b16 %v1454, %v1453
      %v1477 = vpack.c.b16 %v1456, %v1455
      %v1478 = vpack.c.b16 %v1458, %v1457
      %v1479 = vpack.c.b16 %v1460, %v1459
      %v1480 = vpack.c.b16 %v1462, %v1461
      %v1481 = vpack.c.b16 %v1464, %v1463
      %v1482 = vpack.c.b16 %v1466, %v1465
      %v1484 = vsel %vm393, %v1467, 0
      %v1487 = vsel %vm393, %v1468, 0
      %v1490 = vsel %vm393, %v1469, 0
      %v1493 = vsel %vm393, %v1470, 0
      %v1496 = vsel %vm393, %v1471, 0
      %v1499 = vsel %vm393, %v1472, 0
      %v1502 = vsel %vm393, %v1473, 0
      %v1505 = vsel %vm393, %v1474, 0
      %v1508 = vsel %vm393, %v1475, 0
      %v1511 = vsel %vm393, %v1476, 0
      %v1514 = vsel %vm393, %v1477, 0
      %v1517 = vsel %vm393, %v1478, 0
      %v1520 = vsel %vm393, %v1479, 0
      %v1523 = vsel %vm393, %v1480, 0
      %v1526 = vsel %vm393, %v1481, 0
      %v1529 = vsel %vm393, %v1482, 0
      %v1532 = vsel %vm442, %v1434, 0
      %1534 = vmatprep.subr.bf16.mxu0 0
      %1535 = vmatpush1.bf16.msra.mxu0 %v1532
      %1536 = vmatprep.subr.bf16.mxu0 0
      %1537 = vmatpush1.bf16.msra.mxu0 0
      %1538 = vmatprep.subr.bf16.mxu0 0
      %1539 = vmatpush1.bf16.msra.mxu0 0
      %1540 = vmatprep.subr.bf16.mxu0 0
      %1541 = vmatpush1.bf16.msra.mxu0 0
      %1542 = vmatprep.subr.bf16.mxu0 0
      %1543 = vmatpush1.bf16.msra.mxu0 0
      %1544 = vmatprep.subr.bf16.mxu0 0
      %1545 = vmatpush1.bf16.msra.mxu0 0
      %1546 = vmatprep.subr.bf16.mxu0 0
      %1547 = vmatpush1.bf16.msra.mxu0 0
      %1548 = vmatprep.subr.bf16.mxu0 0
      %1549 = vmatpush1.bf16.msra.mxu0 0
      %1550 = vmatprep.subr.bf16.mxu0 0
      %1551 = vmatpush1.bf16.msra.mxu0 0
      %1552 = vmatprep.subr.bf16.mxu0 0
      %1553 = vmatpush1.bf16.msra.mxu0 0
      %1554 = vmatprep.subr.bf16.mxu0 0
      %1555 = vmatpush1.bf16.msra.mxu0 0
      %1556 = vmatprep.subr.bf16.mxu0 0
      %1557 = vmatpush1.bf16.msra.mxu0 0
      %1558 = vmatprep.subr.bf16.mxu0 0
      %1559 = vmatpush1.bf16.msra.mxu0 0
      %1560 = vmatprep.subr.bf16.mxu0 0
      %1561 = vmatpush1.bf16.msra.mxu0 0
      %1562 = vmatprep.subr.bf16.mxu0 0
      %1563 = vmatpush1.bf16.msra.mxu0 0
      %1564 = vmatprep.subr.bf16.mxu0 0
      %1565 = vmatpush1.bf16.msra.mxu0 0
      %1566 = vmatprep.mubr.bf16.mxu0 0
      %1567 = vmatmul.mubr.bf16.gmra.mrb[0].mxu0 %v1484
      %v1568 = vpop.f32.mrb[0].mxu0
      %v1569 = vadd.f32 0.0, %v1568
      %v1570 = vpop.f32.mrb[0].mxu0
      %v1571 = vpop.f32.mrb[0].mxu0
      %v1572 = vadd.f32 0.0, %v1571
      %v1573 = vpop.f32.mrb[0].mxu0
      %1574 = vmatprep.mubr.bf16.mxu0 0
      %1575 = vmatmul.mubr.bf16.gmra.mrb[0].mxu0 %v1487
      %v1576 = vpop.f32.mrb[0].mxu0
      %v1577 = vadd.f32 0.0, %v1576
      %v1578 = vpop.f32.mrb[0].mxu0
      %v1579 = vpop.f32.mrb[0].mxu0
      %v1580 = vadd.f32 0.0, %v1579
      %v1581 = vpop.f32.mrb[0].mxu0
      %1582 = vmatprep.mubr.bf16.mxu0 0
      %1583 = vmatmul.mubr.bf16.gmra.mrb[0].mxu0 %v1490
      %v1584 = vpop.f32.mrb[0].mxu0
      %v1585 = vadd.f32 0.0, %v1584
      %v1586 = vpop.f32.mrb[0].mxu0
      %v1587 = vpop.f32.mrb[0].mxu0
      %v1588 = vadd.f32 0.0, %v1587
      %v1589 = vpop.f32.mrb[0].mxu0
      %1590 = vmatprep.mubr.bf16.mxu0 0
      %1591 = vmatmul.mubr.bf16.gmra.mrb[0].mxu0 %v1493
      %v1592 = vpop.f32.mrb[0].mxu0
      %v1593 = vadd.f32 0.0, %v1592
      %v1594 = vpop.f32.mrb[0].mxu0
      %v1595 = vpop.f32.mrb[0].mxu0
      %v1596 = vadd.f32 0.0, %v1595
      %v1597 = vpop.f32.mrb[0].mxu0
      %1598 = vmatprep.mubr.bf16.mxu0 0
      %1599 = vmatmul.mubr.bf16.gmra.mrb[0].mxu0 %v1496
      %v1600 = vpop.f32.mrb[0].mxu0
      %v1601 = vadd.f32 0.0, %v1600
      %v1602 = vpop.f32.mrb[0].mxu0
      %v1603 = vpop.f32.mrb[0].mxu0
      %v1604 = vadd.f32 0.0, %v1603
      %v1605 = vpop.f32.mrb[0].mxu0
      %1606 = vmatprep.mubr.bf16.mxu0 0
      %1607 = vmatmul.mubr.bf16.gmra.mrb[0].mxu0 %v1499
      %v1608 = vpop.f32.mrb[0].mxu0
      %v1609 = vadd.f32 0.0, %v1608
      %v1610 = vpop.f32.mrb[0].mxu0
      %v1611 = vpop.f32.mrb[0].mxu0
      %v1612 = vadd.f32 0.0, %v1611
      %v1613 = vpop.f32.mrb[0].mxu0
      %1614 = vmatprep.mubr.bf16.mxu0 0
      %1615 = vmatmul.mubr.bf16.gmra.mrb[0].mxu0 %v1502
      %v1616 = vpop.f32.mrb[0].mxu0
      %v1617 = vadd.f32 0.0, %v1616
      %v1618 = vpop.f32.mrb[0].mxu0
      %v1619 = vpop.f32.mrb[0].mxu0
      %v1620 = vadd.f32 0.0, %v1619
      %v1621 = vpop.f32.mrb[0].mxu0
      %1622 = vmatprep.mubr.bf16.mxu0 0
      %1623 = vmatmul.mubr.bf16.gmra.mrb[0].mxu0 %v1505
      %v1624 = vpop.f32.mrb[0].mxu0
      %v1625 = vadd.f32 0.0, %v1624
      %v1626 = vpop.f32.mrb[0].mxu0
      %v1627 = vpop.f32.mrb[0].mxu0
      %v1628 = vadd.f32 0.0, %v1627
      %v1629 = vpop.f32.mrb[0].mxu0
      %1630 = vmatprep.mubr.bf16.mxu0 0
      %1631 = vmatmul.mubr.bf16.gmra.mrb[0].mxu0 %v1508
      %v1632 = vpop.f32.mrb[0].mxu0
      %v1633 = vadd.f32 0.0, %v1632
      %v1634 = vpop.f32.mrb[0].mxu0
      %v1635 = vpop.f32.mrb[0].mxu0
      %v1636 = vadd.f32 0.0, %v1635
      %v1637 = vpop.f32.mrb[0].mxu0
      %1638 = vmatprep.mubr.bf16.mxu0 0
      %1639 = vmatmul.mubr.bf16.gmra.mrb[0].mxu0 %v1511
      %v1640 = vpop.f32.mrb[0].mxu0
      %v1641 = vadd.f32 0.0, %v1640
      %v1642 = vpop.f32.mrb[0].mxu0
      %v1643 = vpop.f32.mrb[0].mxu0
      %v1644 = vadd.f32 0.0, %v1643
      %v1645 = vpop.f32.mrb[0].mxu0
      %1646 = vmatprep.mubr.bf16.mxu0 0
      %1647 = vmatmul.mubr.bf16.gmra.mrb[0].mxu0 %v1514
      %v1648 = vpop.f32.mrb[0].mxu0
      %v1649 = vadd.f32 0.0, %v1648
      %v1650 = vpop.f32.mrb[0].mxu0
      %v1651 = vpop.f32.mrb[0].mxu0
      %v1652 = vadd.f32 0.0, %v1651
      %v1653 = vpop.f32.mrb[0].mxu0
      %1654 = vmatprep.mubr.bf16.mxu0 0
      %1655 = vmatmul.mubr.bf16.gmra.mrb[0].mxu0 %v1517
      %v1656 = vpop.f32.mrb[0].mxu0
      %v1657 = vadd.f32 0.0, %v1656
      %v1658 = vpop.f32.mrb[0].mxu0
      %v1659 = vpop.f32.mrb[0].mxu0
      %v1660 = vadd.f32 0.0, %v1659
      %v1661 = vpop.f32.mrb[0].mxu0
      %1662 = vmatprep.mubr.bf16.mxu0 0
      %1663 = vmatmul.mubr.bf16.gmra.mrb[0].mxu0 %v1520
      %v1664 = vpop.f32.mrb[0].mxu0
      %v1665 = vadd.f32 0.0, %v1664
      %v1666 = vpop.f32.mrb[0].mxu0
      %v1667 = vpop.f32.mrb[0].mxu0
      %v1668 = vadd.f32 0.0, %v1667
      %v1669 = vpop.f32.mrb[0].mxu0
      %1670 = vmatprep.mubr.bf16.mxu0 0
      %1671 = vmatmul.mubr.bf16.gmra.mrb[0].mxu0 %v1523
      %v1672 = vpop.f32.mrb[0].mxu0
      %v1673 = vadd.f32 0.0, %v1672
      %v1674 = vpop.f32.mrb[0].mxu0
      %v1675 = vpop.f32.mrb[0].mxu0
      %v1676 = vadd.f32 0.0, %v1675
      %v1677 = vpop.f32.mrb[0].mxu0
      %1678 = vmatprep.mubr.bf16.mxu0 0
      %1679 = vmatmul.mubr.bf16.gmra.mrb[0].mxu0 %v1526
      %v1680 = vpop.f32.mrb[0].mxu0
      %v1681 = vadd.f32 0.0, %v1680
      %v1682 = vpop.f32.mrb[0].mxu0
      %v1683 = vpop.f32.mrb[0].mxu0
      %v1684 = vadd.f32 0.0, %v1683
      %v1685 = vpop.f32.mrb[0].mxu0
      %1686 = vmatprep.mubr.bf16.mxu0 0
      %1687 = vmatmul.mubr.bf16.gmra.mrb[0].mxu0 %v1529
      %v1688 = vpop.f32.mrb[0].mxu0
      %v1689 = vadd.f32 0.0, %v1688
      %v1690 = vpop.f32.mrb[0].mxu0
      %v1691 = vpop.f32.mrb[0].mxu0
      %v1692 = vadd.f32 0.0, %v1691
      %v1693 = vpop.f32.mrb[0].mxu0
      %1694 = vdwg.mxu0
      %v1695 = vadd.f32 %v966, %v1569
      %v1696 = vadd.f32 %v967, %v1572
      %v1697 = vadd.f32 %v968, %v1577
      %v1698 = vadd.f32 %v969, %v1580
      %v1699 = vadd.f32 %v970, %v1585
      %v1700 = vadd.f32 %v971, %v1588
      %v1701 = vadd.f32 %v972, %v1593
      %v1702 = vadd.f32 %v973, %v1596
      %v1703 = vadd.f32 %v974, %v1601
      %v1704 = vadd.f32 %v975, %v1604
      %v1705 = vadd.f32 %v976, %v1609
      %v1706 = vadd.f32 %v977, %v1612
      %v1707 = vadd.f32 %v978, %v1617
      %v1708 = vadd.f32 %v979, %v1620
      %v1709 = vadd.f32 %v980, %v1625
      %v1710 = vadd.f32 %v981, %v1628
      %v1711 = vadd.f32 %v982, %v1633
      %v1712 = vadd.f32 %v983, %v1636
      %v1713 = vadd.f32 %v984, %v1641
      %v1714 = vadd.f32 %v985, %v1644
      %v1715 = vadd.f32 %v986, %v1649
      %v1716 = vadd.f32 %v987, %v1652
      %v1717 = vadd.f32 %v988, %v1657
      %v1718 = vadd.f32 %v989, %v1660
      %v1719 = vadd.f32 %v990, %v1665
      %v1720 = vadd.f32 %v991, %v1668
      %v1721 = vadd.f32 %v992, %v1673
      %v1722 = vadd.f32 %v993, %v1676
      %v1723 = vadd.f32 %v994, %v1681
      %v1724 = vadd.f32 %v995, %v1684
      %v1725 = vadd.f32 %v996, %v1689
      %v1726 = vadd.f32 %v997, %v1692
      %s1727 = scalar_lea.vmem %s194, 408
      %v1728 = vld [vmem:[%s1727] sm:$0xf]
      %v1729 = vld [vmem:[%s1727 + $0x4] sm:$0xf]
      %v1730 = vld [vmem:[%s1727 + $0xc] sm:$0xf]
      %v1731 = vld [vmem:[%s1727 + $0x10] sm:$0xf]
      %v1732 = vld [vmem:[%s1727 + $0x18] sm:$0xf]
      %v1733 = vld [vmem:[%s1727 + $0x1c] sm:$0xf]
      %v1734 = vld [vmem:[%s1727 + $0x24] sm:$0xf]
      %v1735 = vld [vmem:[%s1727 + $0x28] sm:$0xf]
      %v1736 = vld [vmem:[%s1727 + $0x30] sm:$0xf]
      %v1737 = vld [vmem:[%s1727 + $0x34] sm:$0xf]
      %v1738 = vld [vmem:[%s1727 + $0x3c] sm:$0xf]
      %v1739 = vld [vmem:[%s1727 + $0x40] sm:$0xf]
      %v1740 = vld [vmem:[%s1727 + $0x48] sm:$0xf]
      %v1741 = vld [vmem:[%s1727 + $0x4c] sm:$0xf]
      %v1742 = vld [vmem:[%s1727 + $0x54] sm:$0xf]
      %v1743 = vld [vmem:[%s1727 + $0x58] sm:$0xf]
      %v1744 = vld [vmem:[%s1727 + $0x60] sm:$0xf]
      %v1745 = vld [vmem:[%s1727 + $0x64] sm:$0xf]
      %v1746 = vld [vmem:[%s1727 + $0x6c] sm:$0xf]
      %v1747 = vld [vmem:[%s1727 + $0x70] sm:$0xf]
      %v1748 = vld [vmem:[%s1727 + $0x78] sm:$0xf]
      %v1749 = vld [vmem:[%s1727 + $0x7c] sm:$0xf]
      %v1750 = vld [vmem:[%s1727 + $0x84] sm:$0xf]
      %v1751 = vld [vmem:[%s1727 + $0x88] sm:$0xf]
      %v1752 = vld [vmem:[%s1727 + $0x90] sm:$0xf]
      %v1753 = vld [vmem:[%s1727 + $0x94] sm:$0xf]
      %v1754 = vld [vmem:[%s1727 + $0x9c] sm:$0xf]
      %v1755 = vld [vmem:[%s1727 + $0xa0] sm:$0xf]
      %v1756 = vld [vmem:[%s1727 + $0xa8] sm:$0xf]
      %v1757 = vld [vmem:[%s1727 + $0xac] sm:$0xf]
      %v1758 = vld [vmem:[%s1727 + $0xb4] sm:$0xf]
      %v1759 = vld [vmem:[%s1727 + $0xb8] sm:$0xf]
      %s1760 = scalar_lea.vmem %s201, 6
      %v1761 = vld [vmem:[%s1760] sm:$0x3]
      %v1794 = vunpack.c.l.b16 %v1728
      %v1795 = vunpack.c.l.b16 %v1729
      %v1796 = vunpack.c.l.b16 %v1730
      %v1797 = vunpack.c.l.b16 %v1731
      %v1798 = vunpack.c.l.b16 %v1732
      %v1799 = vunpack.c.l.b16 %v1733
      %v1800 = vunpack.c.l.b16 %v1734
      %v1801 = vunpack.c.l.b16 %v1735
      %v1802 = vunpack.c.l.b16 %v1736
      %v1803 = vunpack.c.l.b16 %v1737
      %v1804 = vunpack.c.l.b16 %v1738
      %v1805 = vunpack.c.l.b16 %v1739
      %v1806 = vunpack.c.l.b16 %v1740
      %v1807 = vunpack.c.l.b16 %v1741
      %v1808 = vunpack.c.l.b16 %v1742
      %v1809 = vunpack.c.l.b16 %v1743
      %v1810 = vunpack.c.l.b16 %v1744
      %v1811 = vunpack.c.l.b16 %v1745
      %v1812 = vunpack.c.l.b16 %v1746
      %v1813 = vunpack.c.l.b16 %v1747
      %v1814 = vunpack.c.l.b16 %v1748
      %v1815 = vunpack.c.l.b16 %v1749
      %v1816 = vunpack.c.l.b16 %v1750
      %v1817 = vunpack.c.l.b16 %v1751
      %v1818 = vunpack.c.l.b16 %v1752
      %v1819 = vunpack.c.l.b16 %v1753
      %v1820 = vunpack.c.l.b16 %v1754
      %v1821 = vunpack.c.l.b16 %v1755
      %v1822 = vunpack.c.l.b16 %v1756
      %v1823 = vunpack.c.l.b16 %v1757
      %v1824 = vunpack.c.l.b16 %v1758
      %v1825 = vunpack.c.l.b16 %v1759
      %v1826 = vpack.c.b16 %v1795, %v1794
      %v1827 = vpack.c.b16 %v1797, %v1796
      %v1828 = vpack.c.b16 %v1799, %v1798
      %v1829 = vpack.c.b16 %v1801, %v1800
      %v1830 = vpack.c.b16 %v1803, %v1802
      %v1831 = vpack.c.b16 %v1805, %v1804
      %v1832 = vpack.c.b16 %v1807, %v1806
      %v1833 = vpack.c.b16 %v1809, %v1808
      %v1834 = vpack.c.b16 %v1811, %v1810
      %v1835 = vpack.c.b16 %v1813, %v1812
      %v1836 = vpack.c.b16 %v1815, %v1814
      %v1837 = vpack.c.b16 %v1817, %v1816
      %v1838 = vpack.c.b16 %v1819, %v1818
      %v1839 = vpack.c.b16 %v1821, %v1820
      %v1840 = vpack.c.b16 %v1823, %v1822
      %v1841 = vpack.c.b16 %v1825, %v1824
      %v1843 = vsel %vm393, %v1826, 0
      %v1846 = vsel %vm393, %v1827, 0
      %v1849 = vsel %vm393, %v1828, 0
      %v1852 = vsel %vm393, %v1829, 0
      %v1855 = vsel %vm393, %v1830, 0
      %v1858 = vsel %vm393, %v1831, 0
      %v1861 = vsel %vm393, %v1832, 0
      %v1864 = vsel %vm393, %v1833, 0
      %v1867 = vsel %vm393, %v1834, 0
      %v1870 = vsel %vm393, %v1835, 0
      %v1873 = vsel %vm393, %v1836, 0
      %v1876 = vsel %vm393, %v1837, 0
      %v1879 = vsel %vm393, %v1838, 0
      %v1882 = vsel %vm393, %v1839, 0
      %v1885 = vsel %vm393, %v1840, 0
      %v1888 = vsel %vm393, %v1841, 0
      %v1891 = vsel %vm442, %v1761, 0
      %1893 = vmatprep.subr.bf16.mxu0 0
      %1894 = vmatpush1.bf16.msra.mxu0 %v1891
      %1895 = vmatprep.subr.bf16.mxu0 0
      %1896 = vmatpush1.bf16.msra.mxu0 0
      %1897 = vmatprep.subr.bf16.mxu0 0
      %1898 = vmatpush1.bf16.msra.mxu0 0
      %1899 = vmatprep.subr.bf16.mxu0 0
      %1900 = vmatpush1.bf16.msra.mxu0 0
      %1901 = vmatprep.subr.bf16.mxu0 0
      %1902 = vmatpush1.bf16.msra.mxu0 0
      %1903 = vmatprep.subr.bf16.mxu0 0
      %1904 = vmatpush1.bf16.msra.mxu0 0
      %1905 = vmatprep.subr.bf16.mxu0 0
      %1906 = vmatpush1.bf16.msra.mxu0 0
      %1907 = vmatprep.subr.bf16.mxu0 0
      %1908 = vmatpush1.bf16.msra.mxu0 0
      %1909 = vmatprep.subr.bf16.mxu0 0
      %1910 = vmatpush1.bf16.msra.mxu0 0
      %1911 = vmatprep.subr.bf16.mxu0 0
      %1912 = vmatpush1.bf16.msra.mxu0 0
      %1913 = vmatprep.subr.bf16.mxu0 0
      %1914 = vmatpush1.bf16.msra.mxu0 0
      %1915 = vmatprep.subr.bf16.mxu0 0
      %1916 = vmatpush1.bf16.msra.mxu0 0
      %1917 = vmatprep.subr.bf16.mxu0 0
      %1918 = vmatpush1.bf16.msra.mxu0 0
      %1919 = vmatprep.subr.bf16.mxu0 0
      %1920 = vmatpush1.bf16.msra.mxu0 0
      %1921 = vmatprep.subr.bf16.mxu0 0
      %1922 = vmatpush1.bf16.msra.mxu0 0
      %1923 = vmatprep.subr.bf16.mxu0 0
      %1924 = vmatpush1.bf16.msra.mxu0 0
      %1925 = vmatprep.mubr.bf16.mxu0 0
      %1926 = vmatmul.mubr.bf16.gmra.mrb[0].mxu0 %v1843
      %v1927 = vpop.f32.mrb[0].mxu0
      %v1928 = vadd.f32 0.0, %v1927
      %v1929 = vpop.f32.mrb[0].mxu0
      %v1930 = vpop.f32.mrb[0].mxu0
      %v1931 = vadd.f32 0.0, %v1930
      %v1932 = vpop.f32.mrb[0].mxu0
      %1933 = vmatprep.mubr.bf16.mxu0 0
      %1934 = vmatmul.mubr.bf16.gmra.mrb[0].mxu0 %v1846
      %v1935 = vpop.f32.mrb[0].mxu0
      %v1936 = vadd.f32 0.0, %v1935
      %v1937 = vpop.f32.mrb[0].mxu0
      %v1938 = vpop.f32.mrb[0].mxu0
      %v1939 = vadd.f32 0.0, %v1938
      %v1940 = vpop.f32.mrb[0].mxu0
      %1941 = vmatprep.mubr.bf16.mxu0 0
      %1942 = vmatmul.mubr.bf16.gmra.mrb[0].mxu0 %v1849
      %v1943 = vpop.f32.mrb[0].mxu0
      %v1944 = vadd.f32 0.0, %v1943
      %v1945 = vpop.f32.mrb[0].mxu0
      %v1946 = vpop.f32.mrb[0].mxu0
      %v1947 = vadd.f32 0.0, %v1946
      %v1948 = vpop.f32.mrb[0].mxu0
      %1949 = vmatprep.mubr.bf16.mxu0 0
      %1950 = vmatmul.mubr.bf16.gmra.mrb[0].mxu0 %v1852
      %v1951 = vpop.f32.mrb[0].mxu0
      %v1952 = vadd.f32 0.0, %v1951
      %v1953 = vpop.f32.mrb[0].mxu0
      %v1954 = vpop.f32.mrb[0].mxu0
      %v1955 = vadd.f32 0.0, %v1954
      %v1956 = vpop.f32.mrb[0].mxu0
      %1957 = vmatprep.mubr.bf16.mxu0 0
      %1958 = vmatmul.mubr.bf16.gmra.mrb[0].mxu0 %v1855
      %v1959 = vpop.f32.mrb[0].mxu0
      %v1960 = vadd.f32 0.0, %v1959
      %v1961 = vpop.f32.mrb[0].mxu0
      %v1962 = vpop.f32.mrb[0].mxu0
      %v1963 = vadd.f32 0.0, %v1962
      %v1964 = vpop.f32.mrb[0].mxu0
      %1965 = vmatprep.mubr.bf16.mxu0 0
      %1966 = vmatmul.mubr.bf16.gmra.mrb[0].mxu0 %v1858
      %v1967 = vpop.f32.mrb[0].mxu0
      %v1968 = vadd.f32 0.0, %v1967
      %v1969 = vpop.f32.mrb[0].mxu0
      %v1970 = vpop.f32.mrb[0].mxu0
      %v1971 = vadd.f32 0.0, %v1970
      %v1972 = vpop.f32.mrb[0].mxu0
      %1973 = vmatprep.mubr.bf16.mxu0 0
      %1974 = vmatmul.mubr.bf16.gmra.mrb[0].mxu0 %v1861
      %v1975 = vpop.f32.mrb[0].mxu0
      %v1976 = vadd.f32 0.0, %v1975
      %v1977 = vpop.f32.mrb[0].mxu0
      %v1978 = vpop.f32.mrb[0].mxu0
      %v1979 = vadd.f32 0.0, %v1978
      %v1980 = vpop.f32.mrb[0].mxu0
      %1981 = vmatprep.mubr.bf16.mxu0 0
      %1982 = vmatmul.mubr.bf16.gmra.mrb[0].mxu0 %v1864
      %v1983 = vpop.f32.mrb[0].mxu0
      %v1984 = vadd.f32 0.0, %v1983
      %v1985 = vpop.f32.mrb[0].mxu0
      %v1986 = vpop.f32.mrb[0].mxu0
      %v1987 = vadd.f32 0.0, %v1986
      %v1988 = vpop.f32.mrb[0].mxu0
      %1989 = vmatprep.mubr.bf16.mxu0 0
      %1990 = vmatmul.mubr.bf16.gmra.mrb[0].mxu0 %v1867
      %v1991 = vpop.f32.mrb[0].mxu0
      %v1992 = vadd.f32 0.0, %v1991
      %v1993 = vpop.f32.mrb[0].mxu0
      %v1994 = vpop.f32.mrb[0].mxu0
      %v1995 = vadd.f32 0.0, %v1994
      %v1996 = vpop.f32.mrb[0].mxu0
      %1997 = vmatprep.mubr.bf16.mxu0 0
      %1998 = vmatmul.mubr.bf16.gmra.mrb[0].mxu0 %v1870
      %v1999 = vpop.f32.mrb[0].mxu0
      %v2000 = vadd.f32 0.0, %v1999
      %v2001 = vpop.f32.mrb[0].mxu0
      %v2002 = vpop.f32.mrb[0].mxu0
      %v2003 = vadd.f32 0.0, %v2002
      %v2004 = vpop.f32.mrb[0].mxu0
      %2005 = vmatprep.mubr.bf16.mxu0 0
      %2006 = vmatmul.mubr.bf16.gmra.mrb[0].mxu0 %v1873
      %v2007 = vpop.f32.mrb[0].mxu0
      %v2008 = vadd.f32 0.0, %v2007
      %v2009 = vpop.f32.mrb[0].mxu0
      %v2010 = vpop.f32.mrb[0].mxu0
      %v2011 = vadd.f32 0.0, %v2010
      %v2012 = vpop.f32.mrb[0].mxu0
      %2013 = vmatprep.mubr.bf16.mxu0 0
      %2014 = vmatmul.mubr.bf16.gmra.mrb[0].mxu0 %v1876
      %v2015 = vpop.f32.mrb[0].mxu0
      %v2016 = vadd.f32 0.0, %v2015
      %v2017 = vpop.f32.mrb[0].mxu0
      %v2018 = vpop.f32.mrb[0].mxu0
      %v2019 = vadd.f32 0.0, %v2018
      %v2020 = vpop.f32.mrb[0].mxu0
      %2021 = vmatprep.mubr.bf16.mxu0 0
      %2022 = vmatmul.mubr.bf16.gmra.mrb[0].mxu0 %v1879
      %v2023 = vpop.f32.mrb[0].mxu0
      %v2024 = vadd.f32 0.0, %v2023
      %v2025 = vpop.f32.mrb[0].mxu0
      %v2026 = vpop.f32.mrb[0].mxu0
      %v2027 = vadd.f32 0.0, %v2026
      %v2028 = vpop.f32.mrb[0].mxu0
      %2029 = vmatprep.mubr.bf16.mxu0 0
      %2030 = vmatmul.mubr.bf16.gmra.mrb[0].mxu0 %v1882
      %v2031 = vpop.f32.mrb[0].mxu0
      %v2032 = vadd.f32 0.0, %v2031
      %v2033 = vpop.f32.mrb[0].mxu0
      %v2034 = vpop.f32.mrb[0].mxu0
      %v2035 = vadd.f32 0.0, %v2034
      %v2036 = vpop.f32.mrb[0].mxu0
      %2037 = vmatprep.mubr.bf16.mxu0 0
      %2038 = vmatmul.mubr.bf16.gmra.mrb[0].mxu0 %v1885
      %v2039 = vpop.f32.mrb[0].mxu0
      %v2040 = vadd.f32 0.0, %v2039
      %v2041 = vpop.f32.mrb[0].mxu0
      %v2042 = vpop.f32.mrb[0].mxu0
      %v2043 = vadd.f32 0.0, %v2042
      %v2044 = vpop.f32.mrb[0].mxu0
      %2045 = vmatprep.mubr.bf16.mxu0 0
      %2046 = vmatmul.mubr.bf16.gmra.mrb[0].mxu0 %v1888
      %v2047 = vpop.f32.mrb[0].mxu0
      %v2048 = vadd.f32 0.0, %v2047
      %v2049 = vpop.f32.mrb[0].mxu0
      %v2050 = vpop.f32.mrb[0].mxu0
      %v2051 = vadd.f32 0.0, %v2050
      %v2052 = vpop.f32.mrb[0].mxu0
      %2053 = vdwg.mxu0
      %v2054 = vadd.f32 %v1695, %v1928
      %v2055 = vadd.f32 %v1696, %v1931
      %v2056 = vadd.f32 %v1697, %v1936
      %v2057 = vadd.f32 %v1698, %v1939
      %v2058 = vadd.f32 %v1699, %v1944
      %v2059 = vadd.f32 %v1700, %v1947
      %v2060 = vadd.f32 %v1701, %v1952
      %v2061 = vadd.f32 %v1702, %v1955
      %v2062 = vadd.f32 %v1703, %v1960
      %v2063 = vadd.f32 %v1704, %v1963
      %v2064 = vadd.f32 %v1705, %v1968
      %v2065 = vadd.f32 %v1706, %v1971
      %v2066 = vadd.f32 %v1707, %v1976
      %v2067 = vadd.f32 %v1708, %v1979
      %v2068 = vadd.f32 %v1709, %v1984
      %v2069 = vadd.f32 %v1710, %v1987
      %v2070 = vadd.f32 %v1711, %v1992
      %v2071 = vadd.f32 %v1712, %v1995
      %v2072 = vadd.f32 %v1713, %v2000
      %v2073 = vadd.f32 %v1714, %v2003
      %v2074 = vadd.f32 %v1715, %v2008
      %v2075 = vadd.f32 %v1716, %v2011
      %v2076 = vadd.f32 %v1717, %v2016
      %v2077 = vadd.f32 %v1718, %v2019
      %v2078 = vadd.f32 %v1719, %v2024
      %v2079 = vadd.f32 %v1720, %v2027
      %v2080 = vadd.f32 %v1721, %v2032
      %v2081 = vadd.f32 %v1722, %v2035
      %v2082 = vadd.f32 %v1723, %v2040
      %v2083 = vadd.f32 %v1724, %v2043
      %v2084 = vadd.f32 %v1725, %v2048
      %v2085 = vadd.f32 %v1726, %v2051
      %s2086 = scalar_lea.vmem %s194, 612
      %v2087 = vld [vmem:[%s2086] sm:$0xf]
      %v2088 = vld [vmem:[%s2086 + $0x4] sm:$0xf]
      %v2089 = vld [vmem:[%s2086 + $0xc] sm:$0xf]
      %v2090 = vld [vmem:[%s2086 + $0x10] sm:$0xf]
      %v2091 = vld [vmem:[%s2086 + $0x18] sm:$0xf]
      %v2092 = vld [vmem:[%s2086 + $0x1c] sm:$0xf]
      %v2093 = vld [vmem:[%s2086 + $0x24] sm:$0xf]
      %v2094 = vld [vmem:[%s2086 + $0x28] sm:$0xf]
      %v2095 = vld [vmem:[%s2086 + $0x30] sm:$0xf]
      %v2096 = vld [vmem:[%s2086 + $0x34] sm:$0xf]
      %v2097 = vld [vmem:[%s2086 + $0x3c] sm:$0xf]
      %v2098 = vld [vmem:[%s2086 + $0x40] sm:$0xf]
      %v2099 = vld [vmem:[%s2086 + $0x48] sm:$0xf]
      %v2100 = vld [vmem:[%s2086 + $0x4c] sm:$0xf]
      %v2101 = vld [vmem:[%s2086 + $0x54] sm:$0xf]
      %v2102 = vld [vmem:[%s2086 + $0x58] sm:$0xf]
      %v2103 = vld [vmem:[%s2086 + $0x60] sm:$0xf]
      %v2104 = vld [vmem:[%s2086 + $0x64] sm:$0xf]
      %v2105 = vld [vmem:[%s2086 + $0x6c] sm:$0xf]
      %v2106 = vld [vmem:[%s2086 + $0x70] sm:$0xf]
      %v2107 = vld [vmem:[%s2086 + $0x78] sm:$0xf]
      %v2108 = vld [vmem:[%s2086 + $0x7c] sm:$0xf]
      %v2109 = vld [vmem:[%s2086 + $0x84] sm:$0xf]
      %v2110 = vld [vmem:[%s2086 + $0x88] sm:$0xf]
      %v2111 = vld [vmem:[%s2086 + $0x90] sm:$0xf]
      %v2112 = vld [vmem:[%s2086 + $0x94] sm:$0xf]
      %v2113 = vld [vmem:[%s2086 + $0x9c] sm:$0xf]
      %v2114 = vld [vmem:[%s2086 + $0xa0] sm:$0xf]
      %v2115 = vld [vmem:[%s2086 + $0xa8] sm:$0xf]
      %v2116 = vld [vmem:[%s2086 + $0xac] sm:$0xf]
      %v2117 = vld [vmem:[%s2086 + $0xb4] sm:$0xf]
      %v2118 = vld [vmem:[%s2086 + $0xb8] sm:$0xf]
      %s2119 = scalar_lea.vmem %s201, 8
      %v2120 = vld [vmem:[%s2119] sm:$0x3]
      %v2153 = vunpack.c.l.b16 %v2087
      %v2154 = vunpack.c.l.b16 %v2088
      %v2155 = vunpack.c.l.b16 %v2089
      %v2156 = vunpack.c.l.b16 %v2090
      %v2157 = vunpack.c.l.b16 %v2091
      %v2158 = vunpack.c.l.b16 %v2092
      %v2159 = vunpack.c.l.b16 %v2093
      %v2160 = vunpack.c.l.b16 %v2094
      %v2161 = vunpack.c.l.b16 %v2095
      %v2162 = vunpack.c.l.b16 %v2096
      %v2163 = vunpack.c.l.b16 %v2097
      %v2164 = vunpack.c.l.b16 %v2098
      %v2165 = vunpack.c.l.b16 %v2099
      %v2166 = vunpack.c.l.b16 %v2100
      %v2167 = vunpack.c.l.b16 %v2101
      %v2168 = vunpack.c.l.b16 %v2102
      %v2169 = vunpack.c.l.b16 %v2103
      %v2170 = vunpack.c.l.b16 %v2104
      %v2171 = vunpack.c.l.b16 %v2105
      %v2172 = vunpack.c.l.b16 %v2106
      %v2173 = vunpack.c.l.b16 %v2107
      %v2174 = vunpack.c.l.b16 %v2108
      %v2175 = vunpack.c.l.b16 %v2109
      %v2176 = vunpack.c.l.b16 %v2110
      %v2177 = vunpack.c.l.b16 %v2111
      %v2178 = vunpack.c.l.b16 %v2112
      %v2179 = vunpack.c.l.b16 %v2113
      %v2180 = vunpack.c.l.b16 %v2114
      %v2181 = vunpack.c.l.b16 %v2115
      %v2182 = vunpack.c.l.b16 %v2116
      %v2183 = vunpack.c.l.b16 %v2117
      %v2184 = vunpack.c.l.b16 %v2118
      %v2185 = vpack.c.b16 %v2154, %v2153
      %v2186 = vpack.c.b16 %v2156, %v2155
      %v2187 = vpack.c.b16 %v2158, %v2157
      %v2188 = vpack.c.b16 %v2160, %v2159
      %v2189 = vpack.c.b16 %v2162, %v2161
      %v2190 = vpack.c.b16 %v2164, %v2163
      %v2191 = vpack.c.b16 %v2166, %v2165
      %v2192 = vpack.c.b16 %v2168, %v2167
      %v2193 = vpack.c.b16 %v2170, %v2169
      %v2194 = vpack.c.b16 %v2172, %v2171
      %v2195 = vpack.c.b16 %v2174, %v2173
      %v2196 = vpack.c.b16 %v2176, %v2175
      %v2197 = vpack.c.b16 %v2178, %v2177
      %v2198 = vpack.c.b16 %v2180, %v2179
      %v2199 = vpack.c.b16 %v2182, %v2181
      %v2200 = vpack.c.b16 %v2184, %v2183
      %v2202 = vsel %vm393, %v2185, 0
      %v2205 = vsel %vm393, %v2186, 0
      %v2208 = vsel %vm393, %v2187, 0
      %v2211 = vsel %vm393, %v2188, 0
      %v2214 = vsel %vm393, %v2189, 0
      %v2217 = vsel %vm393, %v2190, 0
      %v2220 = vsel %vm393, %v2191, 0
      %v2223 = vsel %vm393, %v2192, 0
      %v2226 = vsel %vm393, %v2193, 0
      %v2229 = vsel %vm393, %v2194, 0
      %v2232 = vsel %vm393, %v2195, 0
      %v2235 = vsel %vm393, %v2196, 0
      %v2238 = vsel %vm393, %v2197, 0
      %v2241 = vsel %vm393, %v2198, 0
      %v2244 = vsel %vm393, %v2199, 0
      %v2247 = vsel %vm393, %v2200, 0
      %v2250 = vsel %vm442, %v2120, 0
      %2252 = vmatprep.subr.bf16.mxu0 0
      %2253 = vmatpush1.bf16.msra.mxu0 %v2250
      %2254 = vmatprep.subr.bf16.mxu0 0
      %2255 = vmatpush1.bf16.msra.mxu0 0
      %2256 = vmatprep.subr.bf16.mxu0 0
      %2257 = vmatpush1.bf16.msra.mxu0 0
      %2258 = vmatprep.subr.bf16.mxu0 0
      %2259 = vmatpush1.bf16.msra.mxu0 0
      %2260 = vmatprep.subr.bf16.mxu0 0
      %2261 = vmatpush1.bf16.msra.mxu0 0
      %2262 = vmatprep.subr.bf16.mxu0 0
      %2263 = vmatpush1.bf16.msra.mxu0 0
      %2264 = vmatprep.subr.bf16.mxu0 0
      %2265 = vmatpush1.bf16.msra.mxu0 0
      %2266 = vmatprep.subr.bf16.mxu0 0
      %2267 = vmatpush1.bf16.msra.mxu0 0
      %2268 = vmatprep.subr.bf16.mxu0 0
      %2269 = vmatpush1.bf16.msra.mxu0 0
      %2270 = vmatprep.subr.bf16.mxu0 0
      %2271 = vmatpush1.bf16.msra.mxu0 0
      %2272 = vmatprep.subr.bf16.mxu0 0
      %2273 = vmatpush1.bf16.msra.mxu0 0
      %2274 = vmatprep.subr.bf16.mxu0 0
      %2275 = vmatpush1.bf16.msra.mxu0 0
      %2276 = vmatprep.subr.bf16.mxu0 0
      %2277 = vmatpush1.bf16.msra.mxu0 0
      %2278 = vmatprep.subr.bf16.mxu0 0
      %2279 = vmatpush1.bf16.msra.mxu0 0
      %2280 = vmatprep.subr.bf16.mxu0 0
      %2281 = vmatpush1.bf16.msra.mxu0 0
      %2282 = vmatprep.subr.bf16.mxu0 0
      %2283 = vmatpush1.bf16.msra.mxu0 0
      %2284 = vmatprep.mubr.bf16.mxu0 0
      %2285 = vmatmul.mubr.bf16.gmra.mrb[0].mxu0 %v2202
      %v2286 = vpop.f32.mrb[0].mxu0
      %v2287 = vadd.f32 0.0, %v2286
      %v2288 = vpop.f32.mrb[0].mxu0
      %v2289 = vpop.f32.mrb[0].mxu0
      %v2290 = vadd.f32 0.0, %v2289
      %v2291 = vpop.f32.mrb[0].mxu0
      %2292 = vmatprep.mubr.bf16.mxu0 0
      %2293 = vmatmul.mubr.bf16.gmra.mrb[0].mxu0 %v2205
      %v2294 = vpop.f32.mrb[0].mxu0
      %v2295 = vadd.f32 0.0, %v2294
      %v2296 = vpop.f32.mrb[0].mxu0
      %v2297 = vpop.f32.mrb[0].mxu0
      %v2298 = vadd.f32 0.0, %v2297
      %v2299 = vpop.f32.mrb[0].mxu0
      %2300 = vmatprep.mubr.bf16.mxu0 0
      %2301 = vmatmul.mubr.bf16.gmra.mrb[0].mxu0 %v2208
      %v2302 = vpop.f32.mrb[0].mxu0
      %v2303 = vadd.f32 0.0, %v2302
      %v2304 = vpop.f32.mrb[0].mxu0
      %v2305 = vpop.f32.mrb[0].mxu0
      %v2306 = vadd.f32 0.0, %v2305
      %v2307 = vpop.f32.mrb[0].mxu0
      %2308 = vmatprep.mubr.bf16.mxu0 0
      %2309 = vmatmul.mubr.bf16.gmra.mrb[0].mxu0 %v2211
      %v2310 = vpop.f32.mrb[0].mxu0
      %v2311 = vadd.f32 0.0, %v2310
      %v2312 = vpop.f32.mrb[0].mxu0
      %v2313 = vpop.f32.mrb[0].mxu0
      %v2314 = vadd.f32 0.0, %v2313
      %v2315 = vpop.f32.mrb[0].mxu0
      %2316 = vmatprep.mubr.bf16.mxu0 0
      %2317 = vmatmul.mubr.bf16.gmra.mrb[0].mxu0 %v2214
      %v2318 = vpop.f32.mrb[0].mxu0
      %v2319 = vadd.f32 0.0, %v2318
      %v2320 = vpop.f32.mrb[0].mxu0
      %v2321 = vpop.f32.mrb[0].mxu0
      %v2322 = vadd.f32 0.0, %v2321
      %v2323 = vpop.f32.mrb[0].mxu0
      %2324 = vmatprep.mubr.bf16.mxu0 0
      %2325 = vmatmul.mubr.bf16.gmra.mrb[0].mxu0 %v2217
      %v2326 = vpop.f32.mrb[0].mxu0
      %v2327 = vadd.f32 0.0, %v2326
      %v2328 = vpop.f32.mrb[0].mxu0
      %v2329 = vpop.f32.mrb[0].mxu0
      %v2330 = vadd.f32 0.0, %v2329
      %v2331 = vpop.f32.mrb[0].mxu0
      %2332 = vmatprep.mubr.bf16.mxu0 0
      %2333 = vmatmul.mubr.bf16.gmra.mrb[0].mxu0 %v2220
      %v2334 = vpop.f32.mrb[0].mxu0
      %v2335 = vadd.f32 0.0, %v2334
      %v2336 = vpop.f32.mrb[0].mxu0
      %v2337 = vpop.f32.mrb[0].mxu0
      %v2338 = vadd.f32 0.0, %v2337
      %v2339 = vpop.f32.mrb[0].mxu0
      %2340 = vmatprep.mubr.bf16.mxu0 0
      %2341 = vmatmul.mubr.bf16.gmra.mrb[0].mxu0 %v2223
      %v2342 = vpop.f32.mrb[0].mxu0
      %v2343 = vadd.f32 0.0, %v2342
      %v2344 = vpop.f32.mrb[0].mxu0
      %v2345 = vpop.f32.mrb[0].mxu0
      %v2346 = vadd.f32 0.0, %v2345
      %v2347 = vpop.f32.mrb[0].mxu0
      %2348 = vmatprep.mubr.bf16.mxu0 0
      %2349 = vmatmul.mubr.bf16.gmra.mrb[0].mxu0 %v2226
      %v2350 = vpop.f32.mrb[0].mxu0
      %v2351 = vadd.f32 0.0, %v2350
      %v2352 = vpop.f32.mrb[0].mxu0
      %v2353 = vpop.f32.mrb[0].mxu0
      %v2354 = vadd.f32 0.0, %v2353
      %v2355 = vpop.f32.mrb[0].mxu0
      %2356 = vmatprep.mubr.bf16.mxu0 0
      %2357 = vmatmul.mubr.bf16.gmra.mrb[0].mxu0 %v2229
      %v2358 = vpop.f32.mrb[0].mxu0
      %v2359 = vadd.f32 0.0, %v2358
      %v2360 = vpop.f32.mrb[0].mxu0
      %v2361 = vpop.f32.mrb[0].mxu0
      %v2362 = vadd.f32 0.0, %v2361
      %v2363 = vpop.f32.mrb[0].mxu0
      %2364 = vmatprep.mubr.bf16.mxu0 0
      %2365 = vmatmul.mubr.bf16.gmra.mrb[0].mxu0 %v2232
      %v2366 = vpop.f32.mrb[0].mxu0
      %v2367 = vadd.f32 0.0, %v2366
      %v2368 = vpop.f32.mrb[0].mxu0
      %v2369 = vpop.f32.mrb[0].mxu0
      %v2370 = vadd.f32 0.0, %v2369
      %v2371 = vpop.f32.mrb[0].mxu0
      %2372 = vmatprep.mubr.bf16.mxu0 0
      %2373 = vmatmul.mubr.bf16.gmra.mrb[0].mxu0 %v2235
      %v2374 = vpop.f32.mrb[0].mxu0
      %v2375 = vadd.f32 0.0, %v2374
      %v2376 = vpop.f32.mrb[0].mxu0
      %v2377 = vpop.f32.mrb[0].mxu0
      %v2378 = vadd.f32 0.0, %v2377
      %v2379 = vpop.f32.mrb[0].mxu0
      %2380 = vmatprep.mubr.bf16.mxu0 0
      %2381 = vmatmul.mubr.bf16.gmra.mrb[0].mxu0 %v2238
      %v2382 = vpop.f32.mrb[0].mxu0
      %v2383 = vadd.f32 0.0, %v2382
      %v2384 = vpop.f32.mrb[0].mxu0
      %v2385 = vpop.f32.mrb[0].mxu0
      %v2386 = vadd.f32 0.0, %v2385
      %v2387 = vpop.f32.mrb[0].mxu0
      %2388 = vmatprep.mubr.bf16.mxu0 0
      %2389 = vmatmul.mubr.bf16.gmra.mrb[0].mxu0 %v2241
      %v2390 = vpop.f32.mrb[0].mxu0
      %v2391 = vadd.f32 0.0, %v2390
      %v2392 = vpop.f32.mrb[0].mxu0
      %v2393 = vpop.f32.mrb[0].mxu0
      %v2394 = vadd.f32 0.0, %v2393
      %v2395 = vpop.f32.mrb[0].mxu0
      %2396 = vmatprep.mubr.bf16.mxu0 0
      %2397 = vmatmul.mubr.bf16.gmra.mrb[0].mxu0 %v2244
      %v2398 = vpop.f32.mrb[0].mxu0
      %v2399 = vadd.f32 0.0, %v2398
      %v2400 = vpop.f32.mrb[0].mxu0
      %v2401 = vpop.f32.mrb[0].mxu0
      %v2402 = vadd.f32 0.0, %v2401
      %v2403 = vpop.f32.mrb[0].mxu0
      %2404 = vmatprep.mubr.bf16.mxu0 0
      %2405 = vmatmul.mubr.bf16.gmra.mrb[0].mxu0 %v2247
      %v2406 = vpop.f32.mrb[0].mxu0
      %v2407 = vadd.f32 0.0, %v2406
      %v2408 = vpop.f32.mrb[0].mxu0
      %v2409 = vpop.f32.mrb[0].mxu0
      %v2410 = vadd.f32 0.0, %v2409
      %v2411 = vpop.f32.mrb[0].mxu0
      %2412 = vdwg.mxu0
      %v2413 = vadd.f32 %v2054, %v2287
      %v2414 = vadd.f32 %v2055, %v2290
      %v2415 = vadd.f32 %v2056, %v2295
      %v2416 = vadd.f32 %v2057, %v2298
      %v2417 = vadd.f32 %v2058, %v2303
      %v2418 = vadd.f32 %v2059, %v2306
      %v2419 = vadd.f32 %v2060, %v2311
      %v2420 = vadd.f32 %v2061, %v2314
      %v2421 = vadd.f32 %v2062, %v2319
      %v2422 = vadd.f32 %v2063, %v2322
      %v2423 = vadd.f32 %v2064, %v2327
      %v2424 = vadd.f32 %v2065, %v2330
      %v2425 = vadd.f32 %v2066, %v2335
      %v2426 = vadd.f32 %v2067, %v2338
      %v2427 = vadd.f32 %v2068, %v2343
      %v2428 = vadd.f32 %v2069, %v2346
      %v2429 = vadd.f32 %v2070, %v2351
      %v2430 = vadd.f32 %v2071, %v2354
      %v2431 = vadd.f32 %v2072, %v2359
      %v2432 = vadd.f32 %v2073, %v2362
      %v2433 = vadd.f32 %v2074, %v2367
      %v2434 = vadd.f32 %v2075, %v2370
      %v2435 = vadd.f32 %v2076, %v2375
      %v2436 = vadd.f32 %v2077, %v2378
      %v2437 = vadd.f32 %v2078, %v2383
      %v2438 = vadd.f32 %v2079, %v2386
      %v2439 = vadd.f32 %v2080, %v2391
      %v2440 = vadd.f32 %v2081, %v2394
      %v2441 = vadd.f32 %v2082, %v2399
      %v2442 = vadd.f32 %v2083, %v2402
      %v2443 = vadd.f32 %v2084, %v2407
      %v2444 = vadd.f32 %v2085, %v2410
      %v2445 = vld [vmem:[%s1727] sm:$0xf]
      %v2446 = vld [vmem:[%s1727 + $0x4] sm:$0xf]
      %v2447 = vld [vmem:[%s1727 + $0x8] sm:$0x1]
      %v2448 = vld [vmem:[%s1727 + $0xc] sm:$0xf]
      %v2449 = vld [vmem:[%s1727 + $0x10] sm:$0xf]
      %v2450 = vld [vmem:[%s1727 + $0x14] sm:$0x1]
      %v2451 = vld [vmem:[%s1727 + $0x18] sm:$0xf]
      %v2452 = vld [vmem:[%s1727 + $0x1c] sm:$0xf]
      %v2453 = vld [vmem:[%s1727 + $0x20] sm:$0x1]
      %v2454 = vld [vmem:[%s1727 + $0x24] sm:$0xf]
      %v2455 = vld [vmem:[%s1727 + $0x28] sm:$0xf]
      %v2456 = vld [vmem:[%s1727 + $0x2c] sm:$0x1]
      %v2457 = vld [vmem:[%s1727 + $0x30] sm:$0xf]
      %v2458 = vld [vmem:[%s1727 + $0x34] sm:$0xf]
      %v2459 = vld [vmem:[%s1727 + $0x38] sm:$0x1]
      %v2460 = vld [vmem:[%s1727 + $0x3c] sm:$0xf]
      %v2461 = vld [vmem:[%s1727 + $0x40] sm:$0xf]
      %v2462 = vld [vmem:[%s1727 + $0x44] sm:$0x1]
      %v2463 = vld [vmem:[%s1727 + $0x48] sm:$0xf]
      %v2464 = vld [vmem:[%s1727 + $0x4c] sm:$0xf]
      %v2465 = vld [vmem:[%s1727 + $0x50] sm:$0x1]
      %v2466 = vld [vmem:[%s1727 + $0x54] sm:$0xf]
      %v2467 = vld [vmem:[%s1727 + $0x58] sm:$0xf]
      %v2468 = vld [vmem:[%s1727 + $0x5c] sm:$0x1]
      %v2469 = vld [vmem:[%s1727 + $0x60] sm:$0xf]
      %v2470 = vld [vmem:[%s1727 + $0x64] sm:$0xf]
      %v2471 = vld [vmem:[%s1727 + $0x68] sm:$0x1]
      %v2472 = vld [vmem:[%s1727 + $0x6c] sm:$0xf]
      %v2473 = vld [vmem:[%s1727 + $0x70] sm:$0xf]
      %v2474 = vld [vmem:[%s1727 + $0x74] sm:$0x1]
      %v2475 = vld [vmem:[%s1727 + $0x78] sm:$0xf]
      %v2476 = vld [vmem:[%s1727 + $0x7c] sm:$0xf]
      %v2477 = vld [vmem:[%s1727 + $0x80] sm:$0x1]
      %v2478 = vld [vmem:[%s1727 + $0x84] sm:$0xf]
      %v2479 = vld [vmem:[%s1727 + $0x88] sm:$0xf]
      %v2480 = vld [vmem:[%s1727 + $0x8c] sm:$0x1]
      %v2481 = vld [vmem:[%s1727 + $0x90] sm:$0xf]
      %v2482 = vld [vmem:[%s1727 + $0x94] sm:$0xf]
      %v2483 = vld [vmem:[%s1727 + $0x98] sm:$0x1]
      %v2484 = vld [vmem:[%s1727 + $0x9c] sm:$0xf]
      %v2485 = vld [vmem:[%s1727 + $0xa0] sm:$0xf]
      %v2486 = vld [vmem:[%s1727 + $0xa4] sm:$0x1]
      %v2487 = vld [vmem:[%s1727 + $0xa8] sm:$0xf]
      %v2488 = vld [vmem:[%s1727 + $0xac] sm:$0xf]
      %v2489 = vld [vmem:[%s1727 + $0xb0] sm:$0x1]
      %v2490 = vld [vmem:[%s1727 + $0xb4] sm:$0xf]
      %v2491 = vld [vmem:[%s1727 + $0xb8] sm:$0xf]
      %v2492 = vld [vmem:[%s1727 + $0xbc] sm:$0x1]
      %v2494 = vshrl.u32 %v2445, 16
      %v2496 = vrot.slane %v2494, 4
      %v2497 = vshll.u32 %v2445, 16
      %v2499 = vrot.slane %v2497, 5
      %v2500 = vor.u32 %v2496, %v2499
      %v2501 = vrot.slane %v2500, 4
      %v2503 = vshll.u32 %v2446, 16
      %v2505 = vrot.slane %v2503, 5
      %v2506 = vsel %vm1048, %v2501, %v2505
      %v2507 = vshrl.u32 %v2446, 16
      %v2509 = vrot.slane %v2507, 4
      %v2510 = vor.u32 %v2509, %v2505
      %v2511 = vrot.slane %v2510, 4
      %v2513 = vshll.u32 %v2447, 16
      %v2515 = vrot.slane %v2513, 5
      %v2516 = vsel %vm1048, %v2511, %v2515
      %v2518 = vshrl.u32 %v2448, 16
      %v2520 = vrot.slane %v2518, 4
      %v2521 = vshll.u32 %v2448, 16
      %v2523 = vrot.slane %v2521, 5
      %v2524 = vor.u32 %v2520, %v2523
      %v2525 = vrot.slane %v2524, 4
      %v2527 = vshll.u32 %v2449, 16
      %v2529 = vrot.slane %v2527, 5
      %v2530 = vsel %vm1048, %v2525, %v2529
      %v2531 = vshrl.u32 %v2449, 16
      %v2533 = vrot.slane %v2531, 4
      %v2534 = vor.u32 %v2533, %v2529
      %v2535 = vrot.slane %v2534, 4
      %v2537 = vshll.u32 %v2450, 16
      %v2539 = vrot.slane %v2537, 5
      %v2540 = vsel %vm1048, %v2535, %v2539
      %v2542 = vshrl.u32 %v2451, 16
      %v2544 = vrot.slane %v2542, 4
      %v2545 = vshll.u32 %v2451, 16
      %v2547 = vrot.slane %v2545, 5
      %v2548 = vor.u32 %v2544, %v2547
      %v2549 = vrot.slane %v2548, 4
      %v2551 = vshll.u32 %v2452, 16
      %v2553 = vrot.slane %v2551, 5
      %v2554 = vsel %vm1048, %v2549, %v2553
      %v2555 = vshrl.u32 %v2452, 16
      %v2557 = vrot.slane %v2555, 4
      %v2558 = vor.u32 %v2557, %v2553
      %v2559 = vrot.slane %v2558, 4
      %v2561 = vshll.u32 %v2453, 16
      %v2563 = vrot.slane %v2561, 5
      %v2564 = vsel %vm1048, %v2559, %v2563
      %v2566 = vshrl.u32 %v2454, 16
      %v2568 = vrot.slane %v2566, 4
      %v2569 = vshll.u32 %v2454, 16
      %v2571 = vrot.slane %v2569, 5
      %v2572 = vor.u32 %v2568, %v2571
      %v2573 = vrot.slane %v2572, 4
      %v2575 = vshll.u32 %v2455, 16
      %v2577 = vrot.slane %v2575, 5
      %v2578 = vsel %vm1048, %v2573, %v2577
      %v2579 = vshrl.u32 %v2455, 16
      %v2581 = vrot.slane %v2579, 4
      %v2582 = vor.u32 %v2581, %v2577
      %v2583 = vrot.slane %v2582, 4
      %v2585 = vshll.u32 %v2456, 16
      %v2587 = vrot.slane %v2585, 5
      %v2588 = vsel %vm1048, %v2583, %v2587
      %v2590 = vshrl.u32 %v2457, 16
      %v2592 = vrot.slane %v2590, 4
      %v2593 = vshll.u32 %v2457, 16
      %v2595 = vrot.slane %v2593, 5
      %v2596 = vor.u32 %v2592, %v2595
      %v2597 = vrot.slane %v2596, 4
      %v2599 = vshll.u32 %v2458, 16
      %v2601 = vrot.slane %v2599, 5
      %v2602 = vsel %vm1048, %v2597, %v2601
      %v2603 = vshrl.u32 %v2458, 16
      %v2605 = vrot.slane %v2603, 4
      %v2606 = vor.u32 %v2605, %v2601
      %v2607 = vrot.slane %v2606, 4
      %v2609 = vshll.u32 %v2459, 16
      %v2611 = vrot.slane %v2609, 5
      %v2612 = vsel %vm1048, %v2607, %v2611
      %v2614 = vshrl.u32 %v2460, 16
      %v2616 = vrot.slane %v2614, 4
      %v2617 = vshll.u32 %v2460, 16
      %v2619 = vrot.slane %v2617, 5
      %v2620 = vor.u32 %v2616, %v2619
      %v2621 = vrot.slane %v2620, 4
      %v2623 = vshll.u32 %v2461, 16
      %v2625 = vrot.slane %v2623, 5
      %v2626 = vsel %vm1048, %v2621, %v2625
      %v2627 = vshrl.u32 %v2461, 16
      %v2629 = vrot.slane %v2627, 4
      %v2630 = vor.u32 %v2629, %v2625
      %v2631 = vrot.slane %v2630, 4
      %v2633 = vshll.u32 %v2462, 16
      %v2635 = vrot.slane %v2633, 5
      %v2636 = vsel %vm1048, %v2631, %v2635
      %v2638 = vshrl.u32 %v2463, 16
      %v2640 = vrot.slane %v2638, 4
      %v2641 = vshll.u32 %v2463, 16
      %v2643 = vrot.slane %v2641, 5
      %v2644 = vor.u32 %v2640, %v2643
      %v2645 = vrot.slane %v2644, 4
      %v2647 = vshll.u32 %v2464, 16
      %v2649 = vrot.slane %v2647, 5
      %v2650 = vsel %vm1048, %v2645, %v2649
      %v2651 = vshrl.u32 %v2464, 16
      %v2653 = vrot.slane %v2651, 4
      %v2654 = vor.u32 %v2653, %v2649
      %v2655 = vrot.slane %v2654, 4
      %v2657 = vshll.u32 %v2465, 16
      %v2659 = vrot.slane %v2657, 5
      %v2660 = vsel %vm1048, %v2655, %v2659
      %v2662 = vshrl.u32 %v2466, 16
      %v2664 = vrot.slane %v2662, 4
      %v2665 = vshll.u32 %v2466, 16
      %v2667 = vrot.slane %v2665, 5
      %v2668 = vor.u32 %v2664, %v2667
      %v2669 = vrot.slane %v2668, 4
      %v2671 = vshll.u32 %v2467, 16
      %v2673 = vrot.slane %v2671, 5
      %v2674 = vsel %vm1048, %v2669, %v2673
      %v2675 = vshrl.u32 %v2467, 16
      %v2677 = vrot.slane %v2675, 4
      %v2678 = vor.u32 %v2677, %v2673
      %v2679 = vrot.slane %v2678, 4
      %v2681 = vshll.u32 %v2468, 16
      %v2683 = vrot.slane %v2681, 5
      %v2684 = vsel %vm1048, %v2679, %v2683
      %v2686 = vshrl.u32 %v2469, 16
      %v2688 = vrot.slane %v2686, 4
      %v2689 = vshll.u32 %v2469, 16
      %v2691 = vrot.slane %v2689, 5
      %v2692 = vor.u32 %v2688, %v2691
      %v2693 = vrot.slane %v2692, 4
      %v2695 = vshll.u32 %v2470, 16
      %v2697 = vrot.slane %v2695, 5
      %v2698 = vsel %vm1048, %v2693, %v2697
      %v2699 = vshrl.u32 %v2470, 16
      %v2701 = vrot.slane %v2699, 4
      %v2702 = vor.u32 %v2701, %v2697
      %v2703 = vrot.slane %v2702, 4
      %v2705 = vshll.u32 %v2471, 16
      %v2707 = vrot.slane %v2705, 5
      %v2708 = vsel %vm1048, %v2703, %v2707
      %v2710 = vshrl.u32 %v2472, 16
      %v2712 = vrot.slane %v2710, 4
      %v2713 = vshll.u32 %v2472, 16
      %v2715 = vrot.slane %v2713, 5
      %v2716 = vor.u32 %v2712, %v2715
      %v2717 = vrot.slane %v2716, 4
      %v2719 = vshll.u32 %v2473, 16
      %v2721 = vrot.slane %v2719, 5
      %v2722 = vsel %vm1048, %v2717, %v2721
      %v2723 = vshrl.u32 %v2473, 16
      %v2725 = vrot.slane %v2723, 4
      %v2726 = vor.u32 %v2725, %v2721
      %v2727 = vrot.slane %v2726, 4
      %v2729 = vshll.u32 %v2474, 16
      %v2731 = vrot.slane %v2729, 5
      %v2732 = vsel %vm1048, %v2727, %v2731
      %v2734 = vshrl.u32 %v2475, 16
      %v2736 = vrot.slane %v2734, 4
      %v2737 = vshll.u32 %v2475, 16
      %v2739 = vrot.slane %v2737, 5
      %v2740 = vor.u32 %v2736, %v2739
      %v2741 = vrot.slane %v2740, 4
      %v2743 = vshll.u32 %v2476, 16
      %v2745 = vrot.slane %v2743, 5
      %v2746 = vsel %vm1048, %v2741, %v2745
      %v2747 = vshrl.u32 %v2476, 16
      %v2749 = vrot.slane %v2747, 4
      %v2750 = vor.u32 %v2749, %v2745
      %v2751 = vrot.slane %v2750, 4
      %v2753 = vshll.u32 %v2477, 16
      %v2755 = vrot.slane %v2753, 5
      %v2756 = vsel %vm1048, %v2751, %v2755
      %v2758 = vshrl.u32 %v2478, 16
      %v2760 = vrot.slane %v2758, 4
      %v2761 = vshll.u32 %v2478, 16
      %v2763 = vrot.slane %v2761, 5
      %v2764 = vor.u32 %v2760, %v2763
      %v2765 = vrot.slane %v2764, 4
      %v2767 = vshll.u32 %v2479, 16
      %v2769 = vrot.slane %v2767, 5
      %v2770 = vsel %vm1048, %v2765, %v2769
      %v2771 = vshrl.u32 %v2479, 16
      %v2773 = vrot.slane %v2771, 4
      %v2774 = vor.u32 %v2773, %v2769
      %v2775 = vrot.slane %v2774, 4
      %v2777 = vshll.u32 %v2480, 16
      %v2779 = vrot.slane %v2777, 5
      %v2780 = vsel %vm1048, %v2775, %v2779
      %v2782 = vshrl.u32 %v2481, 16
      %v2784 = vrot.slane %v2782, 4
      %v2785 = vshll.u32 %v2481, 16
      %v2787 = vrot.slane %v2785, 5
      %v2788 = vor.u32 %v2784, %v2787
      %v2789 = vrot.slane %v2788, 4
      %v2791 = vshll.u32 %v2482, 16
      %v2793 = vrot.slane %v2791, 5
      %v2794 = vsel %vm1048, %v2789, %v2793
      %v2795 = vshrl.u32 %v2482, 16
      %v2797 = vrot.slane %v2795, 4
      %v2798 = vor.u32 %v2797, %v2793
      %v2799 = vrot.slane %v2798, 4
      %v2801 = vshll.u32 %v2483, 16
      %v2803 = vrot.slane %v2801, 5
      %v2804 = vsel %vm1048, %v2799, %v2803
      %v2806 = vshrl.u32 %v2484, 16
      %v2808 = vrot.slane %v2806, 4
      %v2809 = vshll.u32 %v2484, 16
      %v2811 = vrot.slane %v2809, 5
      %v2812 = vor.u32 %v2808, %v2811
      %v2813 = vrot.slane %v2812, 4
      %v2815 = vshll.u32 %v2485, 16
      %v2817 = vrot.slane %v2815, 5
      %v2818 = vsel %vm1048, %v2813, %v2817
      %v2819 = vshrl.u32 %v2485, 16
      %v2821 = vrot.slane %v2819, 4
      %v2822 = vor.u32 %v2821, %v2817
      %v2823 = vrot.slane %v2822, 4
      %v2825 = vshll.u32 %v2486, 16
      %v2827 = vrot.slane %v2825, 5
      %v2828 = vsel %vm1048, %v2823, %v2827
      %v2830 = vshrl.u32 %v2487, 16
      %v2832 = vrot.slane %v2830, 4
      %v2833 = vshll.u32 %v2487, 16
      %v2835 = vrot.slane %v2833, 5
      %v2836 = vor.u32 %v2832, %v2835
      %v2837 = vrot.slane %v2836, 4
      %v2839 = vshll.u32 %v2488, 16
      %v2841 = vrot.slane %v2839, 5
      %v2842 = vsel %vm1048, %v2837, %v2841
      %v2843 = vshrl.u32 %v2488, 16
      %v2845 = vrot.slane %v2843, 4
      %v2846 = vor.u32 %v2845, %v2841
      %v2847 = vrot.slane %v2846, 4
      %v2849 = vshll.u32 %v2489, 16
      %v2851 = vrot.slane %v2849, 5
      %v2852 = vsel %vm1048, %v2847, %v2851
      %v2854 = vshrl.u32 %v2490, 16
      %v2856 = vrot.slane %v2854, 4
      %v2857 = vshll.u32 %v2490, 16
      %v2859 = vrot.slane %v2857, 5
      %v2860 = vor.u32 %v2856, %v2859
      %v2861 = vrot.slane %v2860, 4
      %v2863 = vshll.u32 %v2491, 16
      %v2865 = vrot.slane %v2863, 5
      %v2866 = vsel %vm1048, %v2861, %v2865
      %v2867 = vshrl.u32 %v2491, 16
      %v2869 = vrot.slane %v2867, 4
      %v2870 = vor.u32 %v2869, %v2865
      %v2871 = vrot.slane %v2870, 4
      %v2873 = vshll.u32 %v2492, 16
      %v2875 = vrot.slane %v2873, 5
      %v2876 = vsel %vm1048, %v2871, %v2875
      %s2877 = scalar_lea.vmem %s201, 10
      %v2878 = vld [vmem:[%s2877] sm:$0x3]
      %v2879 = vunpack.c.l.b16 %v2506
      %v2880 = vunpack.c.l.b16 %v2516
      %v2881 = vunpack.c.l.b16 %v2530
      %v2882 = vunpack.c.l.b16 %v2540
      %v2883 = vunpack.c.l.b16 %v2554
      %v2884 = vunpack.c.l.b16 %v2564
      %v2885 = vunpack.c.l.b16 %v2578
      %v2886 = vunpack.c.l.b16 %v2588
      %v2887 = vunpack.c.l.b16 %v2602
      %v2888 = vunpack.c.l.b16 %v2612
      %v2889 = vunpack.c.l.b16 %v2626
      %v2890 = vunpack.c.l.b16 %v2636
      %v2891 = vunpack.c.l.b16 %v2650
      %v2892 = vunpack.c.l.b16 %v2660
      %v2893 = vunpack.c.l.b16 %v2674
      %v2894 = vunpack.c.l.b16 %v2684
      %v2895 = vunpack.c.l.b16 %v2698
      %v2896 = vunpack.c.l.b16 %v2708
      %v2897 = vunpack.c.l.b16 %v2722
      %v2898 = vunpack.c.l.b16 %v2732
      %v2899 = vunpack.c.l.b16 %v2746
      %v2900 = vunpack.c.l.b16 %v2756
      %v2901 = vunpack.c.l.b16 %v2770
      %v2902 = vunpack.c.l.b16 %v2780
      %v2903 = vunpack.c.l.b16 %v2794
      %v2904 = vunpack.c.l.b16 %v2804
      %v2905 = vunpack.c.l.b16 %v2818
      %v2906 = vunpack.c.l.b16 %v2828
      %v2907 = vunpack.c.l.b16 %v2842
      %v2908 = vunpack.c.l.b16 %v2852
      %v2909 = vunpack.c.l.b16 %v2866
      %v2910 = vunpack.c.l.b16 %v2876
      %v2911 = vpack.c.b16 %v2880, %v2879
      %v2912 = vpack.c.b16 %v2882, %v2881
      %v2913 = vpack.c.b16 %v2884, %v2883
      %v2914 = vpack.c.b16 %v2886, %v2885
      %v2915 = vpack.c.b16 %v2888, %v2887
      %v2916 = vpack.c.b16 %v2890, %v2889
      %v2917 = vpack.c.b16 %v2892, %v2891
      %v2918 = vpack.c.b16 %v2894, %v2893
      %v2919 = vpack.c.b16 %v2896, %v2895
      %v2920 = vpack.c.b16 %v2898, %v2897
      %v2921 = vpack.c.b16 %v2900, %v2899
      %v2922 = vpack.c.b16 %v2902, %v2901
      %v2923 = vpack.c.b16 %v2904, %v2903
      %v2924 = vpack.c.b16 %v2906, %v2905
      %v2925 = vpack.c.b16 %v2908, %v2907
      %v2926 = vpack.c.b16 %v2910, %v2909
      %v2928 = vsel %vm393, %v2911, 0
      %v2931 = vsel %vm393, %v2912, 0
      %v2934 = vsel %vm393, %v2913, 0
      %v2937 = vsel %vm393, %v2914, 0
      %v2940 = vsel %vm393, %v2915, 0
      %v2943 = vsel %vm393, %v2916, 0
      %v2946 = vsel %vm393, %v2917, 0
      %v2949 = vsel %vm393, %v2918, 0
      %v2952 = vsel %vm393, %v2919, 0
      %v2955 = vsel %vm393, %v2920, 0
      %v2958 = vsel %vm393, %v2921, 0
      %v2961 = vsel %vm393, %v2922, 0
      %v2964 = vsel %vm393, %v2923, 0
      %v2967 = vsel %vm393, %v2924, 0
      %v2970 = vsel %vm393, %v2925, 0
      %v2973 = vsel %vm393, %v2926, 0
      %v2976 = vsel %vm442, %v2878, 0
      %2978 = vmatprep.subr.bf16.mxu0 0
      %2979 = vmatpush1.bf16.msra.mxu0 %v2976
      %2980 = vmatprep.subr.bf16.mxu0 0
      %2981 = vmatpush1.bf16.msra.mxu0 0
      %2982 = vmatprep.subr.bf16.mxu0 0
      %2983 = vmatpush1.bf16.msra.mxu0 0
      %2984 = vmatprep.subr.bf16.mxu0 0
      %2985 = vmatpush1.bf16.msra.mxu0 0
      %2986 = vmatprep.subr.bf16.mxu0 0
      %2987 = vmatpush1.bf16.msra.mxu0 0
      %2988 = vmatprep.subr.bf16.mxu0 0
      %2989 = vmatpush1.bf16.msra.mxu0 0
      %2990 = vmatprep.subr.bf16.mxu0 0
      %2991 = vmatpush1.bf16.msra.mxu0 0
      %2992 = vmatprep.subr.bf16.mxu0 0
      %2993 = vmatpush1.bf16.msra.mxu0 0
      %2994 = vmatprep.subr.bf16.mxu0 0
      %2995 = vmatpush1.bf16.msra.mxu0 0
      %2996 = vmatprep.subr.bf16.mxu0 0
      %2997 = vmatpush1.bf16.msra.mxu0 0
      %2998 = vmatprep.subr.bf16.mxu0 0
      %2999 = vmatpush1.bf16.msra.mxu0 0
      %3000 = vmatprep.subr.bf16.mxu0 0
      %3001 = vmatpush1.bf16.msra.mxu0 0
      %3002 = vmatprep.subr.bf16.mxu0 0
      %3003 = vmatpush1.bf16.msra.mxu0 0
      %3004 = vmatprep.subr.bf16.mxu0 0
      %3005 = vmatpush1.bf16.msra.mxu0 0
      %3006 = vmatprep.subr.bf16.mxu0 0
      %3007 = vmatpush1.bf16.msra.mxu0 0
      %3008 = vmatprep.subr.bf16.mxu0 0
      %3009 = vmatpush1.bf16.msra.mxu0 0
      %3010 = vmatprep.mubr.bf16.mxu0 0
      %3011 = vmatmul.mubr.bf16.gmra.mrb[0].mxu0 %v2928
      %v3012 = vpop.f32.mrb[0].mxu0
      %v3013 = vadd.f32 0.0, %v3012
      %v3014 = vpop.f32.mrb[0].mxu0
      %v3015 = vpop.f32.mrb[0].mxu0
      %v3016 = vadd.f32 0.0, %v3015
      %v3017 = vpop.f32.mrb[0].mxu0
      %3018 = vmatprep.mubr.bf16.mxu0 0
      %3019 = vmatmul.mubr.bf16.gmra.mrb[0].mxu0 %v2931
      %v3020 = vpop.f32.mrb[0].mxu0
      %v3021 = vadd.f32 0.0, %v3020
      %v3022 = vpop.f32.mrb[0].mxu0
      %v3023 = vpop.f32.mrb[0].mxu0
      %v3024 = vadd.f32 0.0, %v3023
      %v3025 = vpop.f32.mrb[0].mxu0
      %3026 = vmatprep.mubr.bf16.mxu0 0
      %3027 = vmatmul.mubr.bf16.gmra.mrb[0].mxu0 %v2934
      %v3028 = vpop.f32.mrb[0].mxu0
      %v3029 = vadd.f32 0.0, %v3028
      %v3030 = vpop.f32.mrb[0].mxu0
      %v3031 = vpop.f32.mrb[0].mxu0
      %v3032 = vadd.f32 0.0, %v3031
      %v3033 = vpop.f32.mrb[0].mxu0
      %3034 = vmatprep.mubr.bf16.mxu0 0
      %3035 = vmatmul.mubr.bf16.gmra.mrb[0].mxu0 %v2937
      %v3036 = vpop.f32.mrb[0].mxu0
      %v3037 = vadd.f32 0.0, %v3036
      %v3038 = vpop.f32.mrb[0].mxu0
      %v3039 = vpop.f32.mrb[0].mxu0
      %v3040 = vadd.f32 0.0, %v3039
      %v3041 = vpop.f32.mrb[0].mxu0
      %3042 = vmatprep.mubr.bf16.mxu0 0
      %3043 = vmatmul.mubr.bf16.gmra.mrb[0].mxu0 %v2940
      %v3044 = vpop.f32.mrb[0].mxu0
      %v3045 = vadd.f32 0.0, %v3044
      %v3046 = vpop.f32.mrb[0].mxu0
      %v3047 = vpop.f32.mrb[0].mxu0
      %v3048 = vadd.f32 0.0, %v3047
      %v3049 = vpop.f32.mrb[0].mxu0
      %3050 = vmatprep.mubr.bf16.mxu0 0
      %3051 = vmatmul.mubr.bf16.gmra.mrb[0].mxu0 %v2943
      %v3052 = vpop.f32.mrb[0].mxu0
      %v3053 = vadd.f32 0.0, %v3052
      %v3054 = vpop.f32.mrb[0].mxu0
      %v3055 = vpop.f32.mrb[0].mxu0
      %v3056 = vadd.f32 0.0, %v3055
      %v3057 = vpop.f32.mrb[0].mxu0
      %3058 = vmatprep.mubr.bf16.mxu0 0
      %3059 = vmatmul.mubr.bf16.gmra.mrb[0].mxu0 %v2946
      %v3060 = vpop.f32.mrb[0].mxu0
      %v3061 = vadd.f32 0.0, %v3060
      %v3062 = vpop.f32.mrb[0].mxu0
      %v3063 = vpop.f32.mrb[0].mxu0
      %v3064 = vadd.f32 0.0, %v3063
      %v3065 = vpop.f32.mrb[0].mxu0
      %3066 = vmatprep.mubr.bf16.mxu0 0
      %3067 = vmatmul.mubr.bf16.gmra.mrb[0].mxu0 %v2949
      %v3068 = vpop.f32.mrb[0].mxu0
      %v3069 = vadd.f32 0.0, %v3068
      %v3070 = vpop.f32.mrb[0].mxu0
      %v3071 = vpop.f32.mrb[0].mxu0
      %v3072 = vadd.f32 0.0, %v3071
      %v3073 = vpop.f32.mrb[0].mxu0
      %3074 = vmatprep.mubr.bf16.mxu0 0
      %3075 = vmatmul.mubr.bf16.gmra.mrb[0].mxu0 %v2952
      %v3076 = vpop.f32.mrb[0].mxu0
      %v3077 = vadd.f32 0.0, %v3076
      %v3078 = vpop.f32.mrb[0].mxu0
      %v3079 = vpop.f32.mrb[0].mxu0
      %v3080 = vadd.f32 0.0, %v3079
      %v3081 = vpop.f32.mrb[0].mxu0
      %3082 = vmatprep.mubr.bf16.mxu0 0
      %3083 = vmatmul.mubr.bf16.gmra.mrb[0].mxu0 %v2955
      %v3084 = vpop.f32.mrb[0].mxu0
      %v3085 = vadd.f32 0.0, %v3084
      %v3086 = vpop.f32.mrb[0].mxu0
      %v3087 = vpop.f32.mrb[0].mxu0
      %v3088 = vadd.f32 0.0, %v3087
      %v3089 = vpop.f32.mrb[0].mxu0
      %3090 = vmatprep.mubr.bf16.mxu0 0
      %3091 = vmatmul.mubr.bf16.gmra.mrb[0].mxu0 %v2958
      %v3092 = vpop.f32.mrb[0].mxu0
      %v3093 = vadd.f32 0.0, %v3092
      %v3094 = vpop.f32.mrb[0].mxu0
      %v3095 = vpop.f32.mrb[0].mxu0
      %v3096 = vadd.f32 0.0, %v3095
      %v3097 = vpop.f32.mrb[0].mxu0
      %3098 = vmatprep.mubr.bf16.mxu0 0
      %3099 = vmatmul.mubr.bf16.gmra.mrb[0].mxu0 %v2961
      %v3100 = vpop.f32.mrb[0].mxu0
      %v3101 = vadd.f32 0.0, %v3100
      %v3102 = vpop.f32.mrb[0].mxu0
      %v3103 = vpop.f32.mrb[0].mxu0
      %v3104 = vadd.f32 0.0, %v3103
      %v3105 = vpop.f32.mrb[0].mxu0
      %3106 = vmatprep.mubr.bf16.mxu0 0
      %3107 = vmatmul.mubr.bf16.gmra.mrb[0].mxu0 %v2964
      %v3108 = vpop.f32.mrb[0].mxu0
      %v3109 = vadd.f32 0.0, %v3108
      %v3110 = vpop.f32.mrb[0].mxu0
      %v3111 = vpop.f32.mrb[0].mxu0
      %v3112 = vadd.f32 0.0, %v3111
      %v3113 = vpop.f32.mrb[0].mxu0
      %3114 = vmatprep.mubr.bf16.mxu0 0
      %3115 = vmatmul.mubr.bf16.gmra.mrb[0].mxu0 %v2967
      %v3116 = vpop.f32.mrb[0].mxu0
      %v3117 = vadd.f32 0.0, %v3116
      %v3118 = vpop.f32.mrb[0].mxu0
      %v3119 = vpop.f32.mrb[0].mxu0
      %v3120 = vadd.f32 0.0, %v3119
      %v3121 = vpop.f32.mrb[0].mxu0
      %3122 = vmatprep.mubr.bf16.mxu0 0
      %3123 = vmatmul.mubr.bf16.gmra.mrb[0].mxu0 %v2970
      %v3124 = vpop.f32.mrb[0].mxu0
      %v3125 = vadd.f32 0.0, %v3124
      %v3126 = vpop.f32.mrb[0].mxu0
      %v3127 = vpop.f32.mrb[0].mxu0
      %v3128 = vadd.f32 0.0, %v3127
      %v3129 = vpop.f32.mrb[0].mxu0
      %3130 = vmatprep.mubr.bf16.mxu0 0
      %3131 = vmatmul.mubr.bf16.gmra.mrb[0].mxu0 %v2973
      %v3132 = vpop.f32.mrb[0].mxu0
      %v3133 = vadd.f32 0.0, %v3132
      %v3134 = vpop.f32.mrb[0].mxu0
      %v3135 = vpop.f32.mrb[0].mxu0
      %v3136 = vadd.f32 0.0, %v3135
      %v3137 = vpop.f32.mrb[0].mxu0
      %3138 = vdwg.mxu0
      %v3139 = vadd.f32 %v2413, %v3013
      %v3140 = vadd.f32 %v2414, %v3016
      %v3141 = vadd.f32 %v2415, %v3021
      %v3142 = vadd.f32 %v2416, %v3024
      %v3143 = vadd.f32 %v2417, %v3029
      %v3144 = vadd.f32 %v2418, %v3032
      %v3145 = vadd.f32 %v2419, %v3037
      %v3146 = vadd.f32 %v2420, %v3040
      %v3147 = vadd.f32 %v2421, %v3045
      %v3148 = vadd.f32 %v2422, %v3048
      %v3149 = vadd.f32 %v2423, %v3053
      %v3150 = vadd.f32 %v2424, %v3056
      %v3151 = vadd.f32 %v2425, %v3061
      %v3152 = vadd.f32 %v2426, %v3064
      %v3153 = vadd.f32 %v2427, %v3069
      %v3154 = vadd.f32 %v2428, %v3072
      %v3155 = vadd.f32 %v2429, %v3077
      %v3156 = vadd.f32 %v2430, %v3080
      %v3157 = vadd.f32 %v2431, %v3085
      %v3158 = vadd.f32 %v2432, %v3088
      %v3159 = vadd.f32 %v2433, %v3093
      %v3160 = vadd.f32 %v2434, %v3096
      %v3161 = vadd.f32 %v2435, %v3101
      %v3162 = vadd.f32 %v2436, %v3104
      %v3163 = vadd.f32 %v2437, %v3109
      %v3164 = vadd.f32 %v2438, %v3112
      %v3165 = vadd.f32 %v2439, %v3117
      %v3166 = vadd.f32 %v2440, %v3120
      %v3167 = vadd.f32 %v2441, %v3125
      %v3168 = vadd.f32 %v2442, %v3128
      %v3169 = vadd.f32 %v2443, %v3133
      %v3170 = vadd.f32 %v2444, %v3136
      %s3171 = scalar_lea.vmem %s194, 12
      %v3172 = vld [vmem:[%s3171] sm:$0xf]
      %v3173 = vld [vmem:[%s3171 + $0x4] sm:$0xf]
      %v3174 = vld [vmem:[%s3171 + $0xc] sm:$0xf]
      %v3175 = vld [vmem:[%s3171 + $0x10] sm:$0xf]
      %v3176 = vld [vmem:[%s3171 + $0x18] sm:$0xf]
      %v3177 = vld [vmem:[%s3171 + $0x1c] sm:$0xf]
      %v3178 = vld [vmem:[%s3171 + $0x24] sm:$0xf]
      %v3179 = vld [vmem:[%s3171 + $0x28] sm:$0xf]
      %v3180 = vld [vmem:[%s3171 + $0x30] sm:$0xf]
      %v3181 = vld [vmem:[%s3171 + $0x34] sm:$0xf]
      %v3182 = vld [vmem:[%s3171 + $0x3c] sm:$0xf]
      %v3183 = vld [vmem:[%s3171 + $0x40] sm:$0xf]
      %v3184 = vld [vmem:[%s3171 + $0x48] sm:$0xf]
      %v3185 = vld [vmem:[%s3171 + $0x4c] sm:$0xf]
      %v3186 = vld [vmem:[%s3171 + $0x54] sm:$0xf]
      %v3187 = vld [vmem:[%s3171 + $0x58] sm:$0xf]
      %v3188 = vld [vmem:[%s3171 + $0x60] sm:$0xf]
      %v3189 = vld [vmem:[%s3171 + $0x64] sm:$0xf]
      %v3190 = vld [vmem:[%s3171 + $0x6c] sm:$0xf]
      %v3191 = vld [vmem:[%s3171 + $0x70] sm:$0xf]
      %v3192 = vld [vmem:[%s3171 + $0x78] sm:$0xf]
      %v3193 = vld [vmem:[%s3171 + $0x7c] sm:$0xf]
      %v3194 = vld [vmem:[%s3171 + $0x84] sm:$0xf]
      %v3195 = vld [vmem:[%s3171 + $0x88] sm:$0xf]
      %v3196 = vld [vmem:[%s3171 + $0x90] sm:$0xf]
      %v3197 = vld [vmem:[%s3171 + $0x94] sm:$0xf]
      %v3198 = vld [vmem:[%s3171 + $0x9c] sm:$0xf]
      %v3199 = vld [vmem:[%s3171 + $0xa0] sm:$0xf]
      %v3200 = vld [vmem:[%s3171 + $0xa8] sm:$0xf]
      %v3201 = vld [vmem:[%s3171 + $0xac] sm:$0xf]
      %v3202 = vld [vmem:[%s3171 + $0xb4] sm:$0xf]
      %v3203 = vld [vmem:[%s3171 + $0xb8] sm:$0xf]
      %s3204 = scalar_lea.vmem %s201, 12
      %v3205 = vld [vmem:[%s3204] sm:$0x3]
      %v3238 = vunpack.c.l.b16 %v3172
      %v3239 = vunpack.c.l.b16 %v3173
      %v3240 = vunpack.c.l.b16 %v3174
      %v3241 = vunpack.c.l.b16 %v3175
      %v3242 = vunpack.c.l.b16 %v3176
      %v3243 = vunpack.c.l.b16 %v3177
      %v3244 = vunpack.c.l.b16 %v3178
      %v3245 = vunpack.c.l.b16 %v3179
      %v3246 = vunpack.c.l.b16 %v3180
      %v3247 = vunpack.c.l.b16 %v3181
      %v3248 = vunpack.c.l.b16 %v3182
      %v3249 = vunpack.c.l.b16 %v3183
      %v3250 = vunpack.c.l.b16 %v3184
      %v3251 = vunpack.c.l.b16 %v3185
      %v3252 = vunpack.c.l.b16 %v3186
      %v3253 = vunpack.c.l.b16 %v3187
      %v3254 = vunpack.c.l.b16 %v3188
      %v3255 = vunpack.c.l.b16 %v3189
      %v3256 = vunpack.c.l.b16 %v3190
      %v3257 = vunpack.c.l.b16 %v3191
      %v3258 = vunpack.c.l.b16 %v3192
      %v3259 = vunpack.c.l.b16 %v3193
      %v3260 = vunpack.c.l.b16 %v3194
      %v3261 = vunpack.c.l.b16 %v3195
      %v3262 = vunpack.c.l.b16 %v3196
      %v3263 = vunpack.c.l.b16 %v3197
      %v3264 = vunpack.c.l.b16 %v3198
      %v3265 = vunpack.c.l.b16 %v3199
      %v3266 = vunpack.c.l.b16 %v3200
      %v3267 = vunpack.c.l.b16 %v3201
      %v3268 = vunpack.c.l.b16 %v3202
      %v3269 = vunpack.c.l.b16 %v3203
      %v3270 = vpack.c.b16 %v3239, %v3238
      %v3271 = vpack.c.b16 %v3241, %v3240
      %v3272 = vpack.c.b16 %v3243, %v3242
      %v3273 = vpack.c.b16 %v3245, %v3244
      %v3274 = vpack.c.b16 %v3247, %v3246
      %v3275 = vpack.c.b16 %v3249, %v3248
      %v3276 = vpack.c.b16 %v3251, %v3250
      %v3277 = vpack.c.b16 %v3253, %v3252
      %v3278 = vpack.c.b16 %v3255, %v3254
      %v3279 = vpack.c.b16 %v3257, %v3256
      %v3280 = vpack.c.b16 %v3259, %v3258
      %v3281 = vpack.c.b16 %v3261, %v3260
      %v3282 = vpack.c.b16 %v3263, %v3262
      %v3283 = vpack.c.b16 %v3265, %v3264
      %v3284 = vpack.c.b16 %v3267, %v3266
      %v3285 = vpack.c.b16 %v3269, %v3268
      %v3287 = vsel %vm393, %v3270, 0
      %v3290 = vsel %vm393, %v3271, 0
      %v3293 = vsel %vm393, %v3272, 0
      %v3296 = vsel %vm393, %v3273, 0
      %v3299 = vsel %vm393, %v3274, 0
      %v3302 = vsel %vm393, %v3275, 0
      %v3305 = vsel %vm393, %v3276, 0
      %v3308 = vsel %vm393, %v3277, 0
      %v3311 = vsel %vm393, %v3278, 0
      %v3314 = vsel %vm393, %v3279, 0
      %v3317 = vsel %vm393, %v3280, 0
      %v3320 = vsel %vm393, %v3281, 0
      %v3323 = vsel %vm393, %v3282, 0
      %v3326 = vsel %vm393, %v3283, 0
      %v3329 = vsel %vm393, %v3284, 0
      %v3332 = vsel %vm393, %v3285, 0
      %v3335 = vsel %vm442, %v3205, 0
      %3337 = vmatprep.subr.bf16.mxu0 0
      %3338 = vmatpush1.bf16.msra.mxu0 %v3335
      %3339 = vmatprep.subr.bf16.mxu0 0
      %3340 = vmatpush1.bf16.msra.mxu0 0
      %3341 = vmatprep.subr.bf16.mxu0 0
      %3342 = vmatpush1.bf16.msra.mxu0 0
      %3343 = vmatprep.subr.bf16.mxu0 0
      %3344 = vmatpush1.bf16.msra.mxu0 0
      %3345 = vmatprep.subr.bf16.mxu0 0
      %3346 = vmatpush1.bf16.msra.mxu0 0
      %3347 = vmatprep.subr.bf16.mxu0 0
      %3348 = vmatpush1.bf16.msra.mxu0 0
      %3349 = vmatprep.subr.bf16.mxu0 0
      %3350 = vmatpush1.bf16.msra.mxu0 0
      %3351 = vmatprep.subr.bf16.mxu0 0
      %3352 = vmatpush1.bf16.msra.mxu0 0
      %3353 = vmatprep.subr.bf16.mxu0 0
      %3354 = vmatpush1.bf16.msra.mxu0 0
      %3355 = vmatprep.subr.bf16.mxu0 0
      %3356 = vmatpush1.bf16.msra.mxu0 0
      %3357 = vmatprep.subr.bf16.mxu0 0
      %3358 = vmatpush1.bf16.msra.mxu0 0
      %3359 = vmatprep.subr.bf16.mxu0 0
      %3360 = vmatpush1.bf16.msra.mxu0 0
      %3361 = vmatprep.subr.bf16.mxu0 0
      %3362 = vmatpush1.bf16.msra.mxu0 0
      %3363 = vmatprep.subr.bf16.mxu0 0
      %3364 = vmatpush1.bf16.msra.mxu0 0
      %3365 = vmatprep.subr.bf16.mxu0 0
      %3366 = vmatpush1.bf16.msra.mxu0 0
      %3367 = vmatprep.subr.bf16.mxu0 0
      %3368 = vmatpush1.bf16.msra.mxu0 0
      %3369 = vmatprep.mubr.bf16.mxu0 0
      %3370 = vmatmul.mubr.bf16.gmra.mrb[0].mxu0 %v3287
      %v3371 = vpop.f32.mrb[0].mxu0
      %v3372 = vadd.f32 0.0, %v3371
      %v3373 = vpop.f32.mrb[0].mxu0
      %v3374 = vpop.f32.mrb[0].mxu0
      %v3375 = vadd.f32 0.0, %v3374
      %v3376 = vpop.f32.mrb[0].mxu0
      %3377 = vmatprep.mubr.bf16.mxu0 0
      %3378 = vmatmul.mubr.bf16.gmra.mrb[0].mxu0 %v3290
      %v3379 = vpop.f32.mrb[0].mxu0
      %v3380 = vadd.f32 0.0, %v3379
      %v3381 = vpop.f32.mrb[0].mxu0
      %v3382 = vpop.f32.mrb[0].mxu0
      %v3383 = vadd.f32 0.0, %v3382
      %v3384 = vpop.f32.mrb[0].mxu0
      %3385 = vmatprep.mubr.bf16.mxu0 0
      %3386 = vmatmul.mubr.bf16.gmra.mrb[0].mxu0 %v3293
      %v3387 = vpop.f32.mrb[0].mxu0
      %v3388 = vadd.f32 0.0, %v3387
      %v3389 = vpop.f32.mrb[0].mxu0
      %v3390 = vpop.f32.mrb[0].mxu0
      %v3391 = vadd.f32 0.0, %v3390
      %v3392 = vpop.f32.mrb[0].mxu0
      %3393 = vmatprep.mubr.bf16.mxu0 0
      %3394 = vmatmul.mubr.bf16.gmra.mrb[0].mxu0 %v3296
      %v3395 = vpop.f32.mrb[0].mxu0
      %v3396 = vadd.f32 0.0, %v3395
      %v3397 = vpop.f32.mrb[0].mxu0
      %v3398 = vpop.f32.mrb[0].mxu0
      %v3399 = vadd.f32 0.0, %v3398
      %v3400 = vpop.f32.mrb[0].mxu0
      %3401 = vmatprep.mubr.bf16.mxu0 0
      %3402 = vmatmul.mubr.bf16.gmra.mrb[0].mxu0 %v3299
      %v3403 = vpop.f32.mrb[0].mxu0
      %v3404 = vadd.f32 0.0, %v3403
      %v3405 = vpop.f32.mrb[0].mxu0
      %v3406 = vpop.f32.mrb[0].mxu0
      %v3407 = vadd.f32 0.0, %v3406
      %v3408 = vpop.f32.mrb[0].mxu0
      %3409 = vmatprep.mubr.bf16.mxu0 0
      %3410 = vmatmul.mubr.bf16.gmra.mrb[0].mxu0 %v3302
      %v3411 = vpop.f32.mrb[0].mxu0
      %v3412 = vadd.f32 0.0, %v3411
      %v3413 = vpop.f32.mrb[0].mxu0
      %v3414 = vpop.f32.mrb[0].mxu0
      %v3415 = vadd.f32 0.0, %v3414
      %v3416 = vpop.f32.mrb[0].mxu0
      %3417 = vmatprep.mubr.bf16.mxu0 0
      %3418 = vmatmul.mubr.bf16.gmra.mrb[0].mxu0 %v3305
      %v3419 = vpop.f32.mrb[0].mxu0
      %v3420 = vadd.f32 0.0, %v3419
      %v3421 = vpop.f32.mrb[0].mxu0
      %v3422 = vpop.f32.mrb[0].mxu0
      %v3423 = vadd.f32 0.0, %v3422
      %v3424 = vpop.f32.mrb[0].mxu0
      %3425 = vmatprep.mubr.bf16.mxu0 0
      %3426 = vmatmul.mubr.bf16.gmra.mrb[0].mxu0 %v3308
      %v3427 = vpop.f32.mrb[0].mxu0
      %v3428 = vadd.f32 0.0, %v3427
      %v3429 = vpop.f32.mrb[0].mxu0
      %v3430 = vpop.f32.mrb[0].mxu0
      %v3431 = vadd.f32 0.0, %v3430
      %v3432 = vpop.f32.mrb[0].mxu0
      %3433 = vmatprep.mubr.bf16.mxu0 0
      %3434 = vmatmul.mubr.bf16.gmra.mrb[0].mxu0 %v3311
      %v3435 = vpop.f32.mrb[0].mxu0
      %v3436 = vadd.f32 0.0, %v3435
      %v3437 = vpop.f32.mrb[0].mxu0
      %v3438 = vpop.f32.mrb[0].mxu0
      %v3439 = vadd.f32 0.0, %v3438
      %v3440 = vpop.f32.mrb[0].mxu0
      %3441 = vmatprep.mubr.bf16.mxu0 0
      %3442 = vmatmul.mubr.bf16.gmra.mrb[0].mxu0 %v3314
      %v3443 = vpop.f32.mrb[0].mxu0
      %v3444 = vadd.f32 0.0, %v3443
      %v3445 = vpop.f32.mrb[0].mxu0
      %v3446 = vpop.f32.mrb[0].mxu0
      %v3447 = vadd.f32 0.0, %v3446
      %v3448 = vpop.f32.mrb[0].mxu0
      %3449 = vmatprep.mubr.bf16.mxu0 0
      %3450 = vmatmul.mubr.bf16.gmra.mrb[0].mxu0 %v3317
      %v3451 = vpop.f32.mrb[0].mxu0
      %v3452 = vadd.f32 0.0, %v3451
      %v3453 = vpop.f32.mrb[0].mxu0
      %v3454 = vpop.f32.mrb[0].mxu0
      %v3455 = vadd.f32 0.0, %v3454
      %v3456 = vpop.f32.mrb[0].mxu0
      %3457 = vmatprep.mubr.bf16.mxu0 0
      %3458 = vmatmul.mubr.bf16.gmra.mrb[0].mxu0 %v3320
      %v3459 = vpop.f32.mrb[0].mxu0
      %v3460 = vadd.f32 0.0, %v3459
      %v3461 = vpop.f32.mrb[0].mxu0
      %v3462 = vpop.f32.mrb[0].mxu0
      %v3463 = vadd.f32 0.0, %v3462
      %v3464 = vpop.f32.mrb[0].mxu0
      %3465 = vmatprep.mubr.bf16.mxu0 0
      %3466 = vmatmul.mubr.bf16.gmra.mrb[0].mxu0 %v3323
      %v3467 = vpop.f32.mrb[0].mxu0
      %v3468 = vadd.f32 0.0, %v3467
      %v3469 = vpop.f32.mrb[0].mxu0
      %v3470 = vpop.f32.mrb[0].mxu0
      %v3471 = vadd.f32 0.0, %v3470
      %v3472 = vpop.f32.mrb[0].mxu0
      %3473 = vmatprep.mubr.bf16.mxu0 0
      %3474 = vmatmul.mubr.bf16.gmra.mrb[0].mxu0 %v3326
      %v3475 = vpop.f32.mrb[0].mxu0
      %v3476 = vadd.f32 0.0, %v3475
      %v3477 = vpop.f32.mrb[0].mxu0
      %v3478 = vpop.f32.mrb[0].mxu0
      %v3479 = vadd.f32 0.0, %v3478
      %v3480 = vpop.f32.mrb[0].mxu0
      %3481 = vmatprep.mubr.bf16.mxu0 0
      %3482 = vmatmul.mubr.bf16.gmra.mrb[0].mxu0 %v3329
      %v3483 = vpop.f32.mrb[0].mxu0
      %v3484 = vadd.f32 0.0, %v3483
      %v3485 = vpop.f32.mrb[0].mxu0
      %v3486 = vpop.f32.mrb[0].mxu0
      %v3487 = vadd.f32 0.0, %v3486
      %v3488 = vpop.f32.mrb[0].mxu0
      %3489 = vmatprep.mubr.bf16.mxu0 0
      %3490 = vmatmul.mubr.bf16.gmra.mrb[0].mxu0 %v3332
      %v3491 = vpop.f32.mrb[0].mxu0
      %v3492 = vadd.f32 0.0, %v3491
      %v3493 = vpop.f32.mrb[0].mxu0
      %v3494 = vpop.f32.mrb[0].mxu0
      %v3495 = vadd.f32 0.0, %v3494
      %v3496 = vpop.f32.mrb[0].mxu0
      %3497 = vdwg.mxu0
      %v3498 = vadd.f32 %v3139, %v3372
      %v3499 = vadd.f32 %v3140, %v3375
      %v3500 = vadd.f32 %v3141, %v3380
      %v3501 = vadd.f32 %v3142, %v3383
      %v3502 = vadd.f32 %v3143, %v3388
      %v3503 = vadd.f32 %v3144, %v3391
      %v3504 = vadd.f32 %v3145, %v3396
      %v3505 = vadd.f32 %v3146, %v3399
      %v3506 = vadd.f32 %v3147, %v3404
      %v3507 = vadd.f32 %v3148, %v3407
      %v3508 = vadd.f32 %v3149, %v3412
      %v3509 = vadd.f32 %v3150, %v3415
      %v3510 = vadd.f32 %v3151, %v3420
      %v3511 = vadd.f32 %v3152, %v3423
      %v3512 = vadd.f32 %v3153, %v3428
      %v3513 = vadd.f32 %v3154, %v3431
      %v3514 = vadd.f32 %v3155, %v3436
      %v3515 = vadd.f32 %v3156, %v3439
      %v3516 = vadd.f32 %v3157, %v3444
      %v3517 = vadd.f32 %v3158, %v3447
      %v3518 = vadd.f32 %v3159, %v3452
      %v3519 = vadd.f32 %v3160, %v3455
      %v3520 = vadd.f32 %v3161, %v3460
      %v3521 = vadd.f32 %v3162, %v3463
      %v3522 = vadd.f32 %v3163, %v3468
      %v3523 = vadd.f32 %v3164, %v3471
      %v3524 = vadd.f32 %v3165, %v3476
      %v3525 = vadd.f32 %v3166, %v3479
      %v3526 = vadd.f32 %v3167, %v3484
      %v3527 = vadd.f32 %v3168, %v3487
      %v3528 = vadd.f32 %v3169, %v3492
      %v3529 = vadd.f32 %v3170, %v3495
      %s3530 = scalar_lea.vmem %s194, 216
      %v3531 = vld [vmem:[%s3530] sm:$0xf]
      %v3532 = vld [vmem:[%s3530 + $0x4] sm:$0xf]
      %v3533 = vld [vmem:[%s3530 + $0xc] sm:$0xf]
      %v3534 = vld [vmem:[%s3530 + $0x10] sm:$0xf]
      %v3535 = vld [vmem:[%s3530 + $0x18] sm:$0xf]
      %v3536 = vld [vmem:[%s3530 + $0x1c] sm:$0xf]
      %v3537 = vld [vmem:[%s3530 + $0x24] sm:$0xf]
      %v3538 = vld [vmem:[%s3530 + $0x28] sm:$0xf]
      %v3539 = vld [vmem:[%s3530 + $0x30] sm:$0xf]
      %v3540 = vld [vmem:[%s3530 + $0x34] sm:$0xf]
      %v3541 = vld [vmem:[%s3530 + $0x3c] sm:$0xf]
      %v3542 = vld [vmem:[%s3530 + $0x40] sm:$0xf]
      %v3543 = vld [vmem:[%s3530 + $0x48] sm:$0xf]
      %v3544 = vld [vmem:[%s3530 + $0x4c] sm:$0xf]
      %v3545 = vld [vmem:[%s3530 + $0x54] sm:$0xf]
      %v3546 = vld [vmem:[%s3530 + $0x58] sm:$0xf]
      %v3547 = vld [vmem:[%s3530 + $0x60] sm:$0xf]
      %v3548 = vld [vmem:[%s3530 + $0x64] sm:$0xf]
      %v3549 = vld [vmem:[%s3530 + $0x6c] sm:$0xf]
      %v3550 = vld [vmem:[%s3530 + $0x70] sm:$0xf]
      %v3551 = vld [vmem:[%s3530 + $0x78] sm:$0xf]
      %v3552 = vld [vmem:[%s3530 + $0x7c] sm:$0xf]
      %v3553 = vld [vmem:[%s3530 + $0x84] sm:$0xf]
      %v3554 = vld [vmem:[%s3530 + $0x88] sm:$0xf]
      %v3555 = vld [vmem:[%s3530 + $0x90] sm:$0xf]
      %v3556 = vld [vmem:[%s3530 + $0x94] sm:$0xf]
      %v3557 = vld [vmem:[%s3530 + $0x9c] sm:$0xf]
      %v3558 = vld [vmem:[%s3530 + $0xa0] sm:$0xf]
      %v3559 = vld [vmem:[%s3530 + $0xa8] sm:$0xf]
      %v3560 = vld [vmem:[%s3530 + $0xac] sm:$0xf]
      %v3561 = vld [vmem:[%s3530 + $0xb4] sm:$0xf]
      %v3562 = vld [vmem:[%s3530 + $0xb8] sm:$0xf]
      %s3563 = scalar_lea.vmem %s201, 14
      %v3564 = vld [vmem:[%s3563] sm:$0x3]
      %v3597 = vunpack.c.l.b16 %v3531
      %v3598 = vunpack.c.l.b16 %v3532
      %v3599 = vunpack.c.l.b16 %v3533
      %v3600 = vunpack.c.l.b16 %v3534
      %v3601 = vunpack.c.l.b16 %v3535
      %v3602 = vunpack.c.l.b16 %v3536
      %v3603 = vunpack.c.l.b16 %v3537
      %v3604 = vunpack.c.l.b16 %v3538
      %v3605 = vunpack.c.l.b16 %v3539
      %v3606 = vunpack.c.l.b16 %v3540
      %v3607 = vunpack.c.l.b16 %v3541
      %v3608 = vunpack.c.l.b16 %v3542
      %v3609 = vunpack.c.l.b16 %v3543
      %v3610 = vunpack.c.l.b16 %v3544
      %v3611 = vunpack.c.l.b16 %v3545
      %v3612 = vunpack.c.l.b16 %v3546
      %v3613 = vunpack.c.l.b16 %v3547
      %v3614 = vunpack.c.l.b16 %v3548
      %v3615 = vunpack.c.l.b16 %v3549
      %v3616 = vunpack.c.l.b16 %v3550
      %v3617 = vunpack.c.l.b16 %v3551
      %v3618 = vunpack.c.l.b16 %v3552
      %v3619 = vunpack.c.l.b16 %v3553
      %v3620 = vunpack.c.l.b16 %v3554
      %v3621 = vunpack.c.l.b16 %v3555
      %v3622 = vunpack.c.l.b16 %v3556
      %v3623 = vunpack.c.l.b16 %v3557
      %v3624 = vunpack.c.l.b16 %v3558
      %v3625 = vunpack.c.l.b16 %v3559
      %v3626 = vunpack.c.l.b16 %v3560
      %v3627 = vunpack.c.l.b16 %v3561
      %v3628 = vunpack.c.l.b16 %v3562
      %v3629 = vpack.c.b16 %v3598, %v3597
      %v3630 = vpack.c.b16 %v3600, %v3599
      %v3631 = vpack.c.b16 %v3602, %v3601
      %v3632 = vpack.c.b16 %v3604, %v3603
      %v3633 = vpack.c.b16 %v3606, %v3605
      %v3634 = vpack.c.b16 %v3608, %v3607
      %v3635 = vpack.c.b16 %v3610, %v3609
      %v3636 = vpack.c.b16 %v3612, %v3611
      %v3637 = vpack.c.b16 %v3614, %v3613
      %v3638 = vpack.c.b16 %v3616, %v3615
      %v3639 = vpack.c.b16 %v3618, %v3617
      %v3640 = vpack.c.b16 %v3620, %v3619
      %v3641 = vpack.c.b16 %v3622, %v3621
      %v3642 = vpack.c.b16 %v3624, %v3623
      %v3643 = vpack.c.b16 %v3626, %v3625
      %v3644 = vpack.c.b16 %v3628, %v3627
      %v3646 = vsel %vm393, %v3629, 0
      %v3649 = vsel %vm393, %v3630, 0
      %v3652 = vsel %vm393, %v3631, 0
      %v3655 = vsel %vm393, %v3632, 0
      %v3658 = vsel %vm393, %v3633, 0
      %v3661 = vsel %vm393, %v3634, 0
      %v3664 = vsel %vm393, %v3635, 0
      %v3667 = vsel %vm393, %v3636, 0
      %v3670 = vsel %vm393, %v3637, 0
      %v3673 = vsel %vm393, %v3638, 0
      %v3676 = vsel %vm393, %v3639, 0
      %v3679 = vsel %vm393, %v3640, 0
      %v3682 = vsel %vm393, %v3641, 0
      %v3685 = vsel %vm393, %v3642, 0
      %v3688 = vsel %vm393, %v3643, 0
      %v3691 = vsel %vm393, %v3644, 0
      %v3694 = vsel %vm442, %v3564, 0
      %3696 = vmatprep.subr.bf16.mxu0 0
      %3697 = vmatpush1.bf16.msra.mxu0 %v3694
      %3698 = vmatprep.subr.bf16.mxu0 0
      %3699 = vmatpush1.bf16.msra.mxu0 0
      %3700 = vmatprep.subr.bf16.mxu0 0
      %3701 = vmatpush1.bf16.msra.mxu0 0
      %3702 = vmatprep.subr.bf16.mxu0 0
      %3703 = vmatpush1.bf16.msra.mxu0 0
      %3704 = vmatprep.subr.bf16.mxu0 0
      %3705 = vmatpush1.bf16.msra.mxu0 0
      %3706 = vmatprep.subr.bf16.mxu0 0
      %3707 = vmatpush1.bf16.msra.mxu0 0
      %3708 = vmatprep.subr.bf16.mxu0 0
      %3709 = vmatpush1.bf16.msra.mxu0 0
      %3710 = vmatprep.subr.bf16.mxu0 0
      %3711 = vmatpush1.bf16.msra.mxu0 0
      %3712 = vmatprep.subr.bf16.mxu0 0
      %3713 = vmatpush1.bf16.msra.mxu0 0
      %3714 = vmatprep.subr.bf16.mxu0 0
      %3715 = vmatpush1.bf16.msra.mxu0 0
      %3716 = vmatprep.subr.bf16.mxu0 0
      %3717 = vmatpush1.bf16.msra.mxu0 0
      %3718 = vmatprep.subr.bf16.mxu0 0
      %3719 = vmatpush1.bf16.msra.mxu0 0
      %3720 = vmatprep.subr.bf16.mxu0 0
      %3721 = vmatpush1.bf16.msra.mxu0 0
      %3722 = vmatprep.subr.bf16.mxu0 0
      %3723 = vmatpush1.bf16.msra.mxu0 0
      %3724 = vmatprep.subr.bf16.mxu0 0
      %3725 = vmatpush1.bf16.msra.mxu0 0
      %3726 = vmatprep.subr.bf16.mxu0 0
      %3727 = vmatpush1.bf16.msra.mxu0 0
      %3728 = vmatprep.mubr.bf16.mxu0 0
      %3729 = vmatmul.mubr.bf16.gmra.mrb[0].mxu0 %v3646
      %v3730 = vpop.f32.mrb[0].mxu0
      %v3731 = vadd.f32 0.0, %v3730
      %v3732 = vpop.f32.mrb[0].mxu0
      %v3733 = vpop.f32.mrb[0].mxu0
      %v3734 = vadd.f32 0.0, %v3733
      %v3735 = vpop.f32.mrb[0].mxu0
      %3736 = vmatprep.mubr.bf16.mxu0 0
      %3737 = vmatmul.mubr.bf16.gmra.mrb[0].mxu0 %v3649
      %v3738 = vpop.f32.mrb[0].mxu0
      %v3739 = vadd.f32 0.0, %v3738
      %v3740 = vpop.f32.mrb[0].mxu0
      %v3741 = vpop.f32.mrb[0].mxu0
      %v3742 = vadd.f32 0.0, %v3741
      %v3743 = vpop.f32.mrb[0].mxu0
      %3744 = vmatprep.mubr.bf16.mxu0 0
      %3745 = vmatmul.mubr.bf16.gmra.mrb[0].mxu0 %v3652
      %v3746 = vpop.f32.mrb[0].mxu0
      %v3747 = vadd.f32 0.0, %v3746
      %v3748 = vpop.f32.mrb[0].mxu0
      %v3749 = vpop.f32.mrb[0].mxu0
      %v3750 = vadd.f32 0.0, %v3749
      %v3751 = vpop.f32.mrb[0].mxu0
      %3752 = vmatprep.mubr.bf16.mxu0 0
      %3753 = vmatmul.mubr.bf16.gmra.mrb[0].mxu0 %v3655
      %v3754 = vpop.f32.mrb[0].mxu0
      %v3755 = vadd.f32 0.0, %v3754
      %v3756 = vpop.f32.mrb[0].mxu0
      %v3757 = vpop.f32.mrb[0].mxu0
      %v3758 = vadd.f32 0.0, %v3757
      %v3759 = vpop.f32.mrb[0].mxu0
      %3760 = vmatprep.mubr.bf16.mxu0 0
      %3761 = vmatmul.mubr.bf16.gmra.mrb[0].mxu0 %v3658
      %v3762 = vpop.f32.mrb[0].mxu0
      %v3763 = vadd.f32 0.0, %v3762
      %v3764 = vpop.f32.mrb[0].mxu0
      %v3765 = vpop.f32.mrb[0].mxu0
      %v3766 = vadd.f32 0.0, %v3765
      %v3767 = vpop.f32.mrb[0].mxu0
      %3768 = vmatprep.mubr.bf16.mxu0 0
      %3769 = vmatmul.mubr.bf16.gmra.mrb[0].mxu0 %v3661
      %v3770 = vpop.f32.mrb[0].mxu0
      %v3771 = vadd.f32 0.0, %v3770
      %v3772 = vpop.f32.mrb[0].mxu0
      %v3773 = vpop.f32.mrb[0].mxu0
      %v3774 = vadd.f32 0.0, %v3773
      %v3775 = vpop.f32.mrb[0].mxu0
      %3776 = vmatprep.mubr.bf16.mxu0 0
      %3777 = vmatmul.mubr.bf16.gmra.mrb[0].mxu0 %v3664
      %v3778 = vpop.f32.mrb[0].mxu0
      %v3779 = vadd.f32 0.0, %v3778
      %v3780 = vpop.f32.mrb[0].mxu0
      %v3781 = vpop.f32.mrb[0].mxu0
      %v3782 = vadd.f32 0.0, %v3781
      %v3783 = vpop.f32.mrb[0].mxu0
      %3784 = vmatprep.mubr.bf16.mxu0 0
      %3785 = vmatmul.mubr.bf16.gmra.mrb[0].mxu0 %v3667
      %v3786 = vpop.f32.mrb[0].mxu0
      %v3787 = vadd.f32 0.0, %v3786
      %v3788 = vpop.f32.mrb[0].mxu0
      %v3789 = vpop.f32.mrb[0].mxu0
      %v3790 = vadd.f32 0.0, %v3789
      %v3791 = vpop.f32.mrb[0].mxu0
      %3792 = vmatprep.mubr.bf16.mxu0 0
      %3793 = vmatmul.mubr.bf16.gmra.mrb[0].mxu0 %v3670
      %v3794 = vpop.f32.mrb[0].mxu0
      %v3795 = vadd.f32 0.0, %v3794
      %v3796 = vpop.f32.mrb[0].mxu0
      %v3797 = vpop.f32.mrb[0].mxu0
      %v3798 = vadd.f32 0.0, %v3797
      %v3799 = vpop.f32.mrb[0].mxu0
      %3800 = vmatprep.mubr.bf16.mxu0 0
      %3801 = vmatmul.mubr.bf16.gmra.mrb[0].mxu0 %v3673
      %v3802 = vpop.f32.mrb[0].mxu0
      %v3803 = vadd.f32 0.0, %v3802
      %v3804 = vpop.f32.mrb[0].mxu0
      %v3805 = vpop.f32.mrb[0].mxu0
      %v3806 = vadd.f32 0.0, %v3805
      %v3807 = vpop.f32.mrb[0].mxu0
      %3808 = vmatprep.mubr.bf16.mxu0 0
      %3809 = vmatmul.mubr.bf16.gmra.mrb[0].mxu0 %v3676
      %v3810 = vpop.f32.mrb[0].mxu0
      %v3811 = vadd.f32 0.0, %v3810
      %v3812 = vpop.f32.mrb[0].mxu0
      %v3813 = vpop.f32.mrb[0].mxu0
      %v3814 = vadd.f32 0.0, %v3813
      %v3815 = vpop.f32.mrb[0].mxu0
      %3816 = vmatprep.mubr.bf16.mxu0 0
      %3817 = vmatmul.mubr.bf16.gmra.mrb[0].mxu0 %v3679
      %v3818 = vpop.f32.mrb[0].mxu0
      %v3819 = vadd.f32 0.0, %v3818
      %v3820 = vpop.f32.mrb[0].mxu0
      %v3821 = vpop.f32.mrb[0].mxu0
      %v3822 = vadd.f32 0.0, %v3821
      %v3823 = vpop.f32.mrb[0].mxu0
      %3824 = vmatprep.mubr.bf16.mxu0 0
      %3825 = vmatmul.mubr.bf16.gmra.mrb[0].mxu0 %v3682
      %v3826 = vpop.f32.mrb[0].mxu0
      %v3827 = vadd.f32 0.0, %v3826
      %v3828 = vpop.f32.mrb[0].mxu0
      %v3829 = vpop.f32.mrb[0].mxu0
      %v3830 = vadd.f32 0.0, %v3829
      %v3831 = vpop.f32.mrb[0].mxu0
      %3832 = vmatprep.mubr.bf16.mxu0 0
      %3833 = vmatmul.mubr.bf16.gmra.mrb[0].mxu0 %v3685
      %v3834 = vpop.f32.mrb[0].mxu0
      %v3835 = vadd.f32 0.0, %v3834
      %v3836 = vpop.f32.mrb[0].mxu0
      %v3837 = vpop.f32.mrb[0].mxu0
      %v3838 = vadd.f32 0.0, %v3837
      %v3839 = vpop.f32.mrb[0].mxu0
      %3840 = vmatprep.mubr.bf16.mxu0 0
      %3841 = vmatmul.mubr.bf16.gmra.mrb[0].mxu0 %v3688
      %v3842 = vpop.f32.mrb[0].mxu0
      %v3843 = vadd.f32 0.0, %v3842
      %v3844 = vpop.f32.mrb[0].mxu0
      %v3845 = vpop.f32.mrb[0].mxu0
      %v3846 = vadd.f32 0.0, %v3845
      %v3847 = vpop.f32.mrb[0].mxu0
      %3848 = vmatprep.mubr.bf16.mxu0 0
      %3849 = vmatmul.mubr.bf16.gmra.mrb[0].mxu0 %v3691
      %v3850 = vpop.f32.mrb[0].mxu0
      %v3851 = vadd.f32 0.0, %v3850
      %v3852 = vpop.f32.mrb[0].mxu0
      %v3853 = vpop.f32.mrb[0].mxu0
      %v3854 = vadd.f32 0.0, %v3853
      %v3855 = vpop.f32.mrb[0].mxu0
      %3856 = vdwg.mxu0
      %v3857 = vadd.f32 %v3498, %v3731
      %v3858 = vadd.f32 %v3499, %v3734
      %v3859 = vadd.f32 %v3500, %v3739
      %v3860 = vadd.f32 %v3501, %v3742
      %v3861 = vadd.f32 %v3502, %v3747
      %v3862 = vadd.f32 %v3503, %v3750
      %v3863 = vadd.f32 %v3504, %v3755
      %v3864 = vadd.f32 %v3505, %v3758
      %v3865 = vadd.f32 %v3506, %v3763
      %v3866 = vadd.f32 %v3507, %v3766
      %v3867 = vadd.f32 %v3508, %v3771
      %v3868 = vadd.f32 %v3509, %v3774
      %v3869 = vadd.f32 %v3510, %v3779
      %v3870 = vadd.f32 %v3511, %v3782
      %v3871 = vadd.f32 %v3512, %v3787
      %v3872 = vadd.f32 %v3513, %v3790
      %v3873 = vadd.f32 %v3514, %v3795
      %v3874 = vadd.f32 %v3515, %v3798
      %v3875 = vadd.f32 %v3516, %v3803
      %v3876 = vadd.f32 %v3517, %v3806
      %v3877 = vadd.f32 %v3518, %v3811
      %v3878 = vadd.f32 %v3519, %v3814
      %v3879 = vadd.f32 %v3520, %v3819
      %v3880 = vadd.f32 %v3521, %v3822
      %v3881 = vadd.f32 %v3522, %v3827
      %v3882 = vadd.f32 %v3523, %v3830
      %v3883 = vadd.f32 %v3524, %v3835
      %v3884 = vadd.f32 %v3525, %v3838
      %v3885 = vadd.f32 %v3526, %v3843
      %v3886 = vadd.f32 %v3527, %v3846
      %v3887 = vadd.f32 %v3528, %v3851
      %v3888 = vadd.f32 %v3529, %v3854
      %v3889 = vld [vmem:[%s3171] sm:$0xf]
      %v3890 = vld [vmem:[%s3171 + $0x4] sm:$0xf]
      %v3891 = vld [vmem:[%s3171 + $0x8] sm:$0x1]
      %v3892 = vld [vmem:[%s3171 + $0xc] sm:$0xf]
      %v3893 = vld [vmem:[%s3171 + $0x10] sm:$0xf]
      %v3894 = vld [vmem:[%s3171 + $0x14] sm:$0x1]
      %v3895 = vld [vmem:[%s3171 + $0x18] sm:$0xf]
      %v3896 = vld [vmem:[%s3171 + $0x1c] sm:$0xf]
      %v3897 = vld [vmem:[%s3171 + $0x20] sm:$0x1]
      %v3898 = vld [vmem:[%s3171 + $0x24] sm:$0xf]
      %v3899 = vld [vmem:[%s3171 + $0x28] sm:$0xf]
      %v3900 = vld [vmem:[%s3171 + $0x2c] sm:$0x1]
      %v3901 = vld [vmem:[%s3171 + $0x30] sm:$0xf]
      %v3902 = vld [vmem:[%s3171 + $0x34] sm:$0xf]
      %v3903 = vld [vmem:[%s3171 + $0x38] sm:$0x1]
      %v3904 = vld [vmem:[%s3171 + $0x3c] sm:$0xf]
      %v3905 = vld [vmem:[%s3171 + $0x40] sm:$0xf]
      %v3906 = vld [vmem:[%s3171 + $0x44] sm:$0x1]
      %v3907 = vld [vmem:[%s3171 + $0x48] sm:$0xf]
      %v3908 = vld [vmem:[%s3171 + $0x4c] sm:$0xf]
      %v3909 = vld [vmem:[%s3171 + $0x50] sm:$0x1]
      %v3910 = vld [vmem:[%s3171 + $0x54] sm:$0xf]
      %v3911 = vld [vmem:[%s3171 + $0x58] sm:$0xf]
      %v3912 = vld [vmem:[%s3171 + $0x5c] sm:$0x1]
      %v3913 = vld [vmem:[%s3171 + $0x60] sm:$0xf]
      %v3914 = vld [vmem:[%s3171 + $0x64] sm:$0xf]
      %v3915 = vld [vmem:[%s3171 + $0x68] sm:$0x1]
      %v3916 = vld [vmem:[%s3171 + $0x6c] sm:$0xf]
      %v3917 = vld [vmem:[%s3171 + $0x70] sm:$0xf]
      %v3918 = vld [vmem:[%s3171 + $0x74] sm:$0x1]
      %v3919 = vld [vmem:[%s3171 + $0x78] sm:$0xf]
      %v3920 = vld [vmem:[%s3171 + $0x7c] sm:$0xf]
      %v3921 = vld [vmem:[%s3171 + $0x80] sm:$0x1]
      %v3922 = vld [vmem:[%s3171 + $0x84] sm:$0xf]
      %v3923 = vld [vmem:[%s3171 + $0x88] sm:$0xf]
      %v3924 = vld [vmem:[%s3171 + $0x8c] sm:$0x1]
      %v3925 = vld [vmem:[%s3171 + $0x90] sm:$0xf]
      %v3926 = vld [vmem:[%s3171 + $0x94] sm:$0xf]
      %v3927 = vld [vmem:[%s3171 + $0x98] sm:$0x1]
      %v3928 = vld [vmem:[%s3171 + $0x9c] sm:$0xf]
      %v3929 = vld [vmem:[%s3171 + $0xa0] sm:$0xf]
      %v3930 = vld [vmem:[%s3171 + $0xa4] sm:$0x1]
      %v3931 = vld [vmem:[%s3171 + $0xa8] sm:$0xf]
      %v3932 = vld [vmem:[%s3171 + $0xac] sm:$0xf]
      %v3933 = vld [vmem:[%s3171 + $0xb0] sm:$0x1]
      %v3934 = vld [vmem:[%s3171 + $0xb4] sm:$0xf]
      %v3935 = vld [vmem:[%s3171 + $0xb8] sm:$0xf]
      %v3936 = vld [vmem:[%s3171 + $0xbc] sm:$0x1]
      %v3938 = vshrl.u32 %v3889, 16
      %v3940 = vrot.slane %v3938, 4
      %v3941 = vshll.u32 %v3889, 16
      %v3943 = vrot.slane %v3941, 5
      %v3944 = vor.u32 %v3940, %v3943
      %v3945 = vrot.slane %v3944, 4
      %v3947 = vshll.u32 %v3890, 16
      %v3949 = vrot.slane %v3947, 5
      %v3950 = vsel %vm1048, %v3945, %v3949
      %v3951 = vshrl.u32 %v3890, 16
      %v3953 = vrot.slane %v3951, 4
      %v3954 = vor.u32 %v3953, %v3949
      %v3955 = vrot.slane %v3954, 4
      %v3957 = vshll.u32 %v3891, 16
      %v3959 = vrot.slane %v3957, 5
      %v3960 = vsel %vm1048, %v3955, %v3959
      %v3962 = vshrl.u32 %v3892, 16
      %v3964 = vrot.slane %v3962, 4
      %v3965 = vshll.u32 %v3892, 16
      %v3967 = vrot.slane %v3965, 5
      %v3968 = vor.u32 %v3964, %v3967
      %v3969 = vrot.slane %v3968, 4
      %v3971 = vshll.u32 %v3893, 16
      %v3973 = vrot.slane %v3971, 5
      %v3974 = vsel %vm1048, %v3969, %v3973
      %v3975 = vshrl.u32 %v3893, 16
      %v3977 = vrot.slane %v3975, 4
      %v3978 = vor.u32 %v3977, %v3973
      %v3979 = vrot.slane %v3978, 4
      %v3981 = vshll.u32 %v3894, 16
      %v3983 = vrot.slane %v3981, 5
      %v3984 = vsel %vm1048, %v3979, %v3983
      %v3986 = vshrl.u32 %v3895, 16
      %v3988 = vrot.slane %v3986, 4
      %v3989 = vshll.u32 %v3895, 16
      %v3991 = vrot.slane %v3989, 5
      %v3992 = vor.u32 %v3988, %v3991
      %v3993 = vrot.slane %v3992, 4
      %v3995 = vshll.u32 %v3896, 16
      %v3997 = vrot.slane %v3995, 5
      %v3998 = vsel %vm1048, %v3993, %v3997
      %v3999 = vshrl.u32 %v3896, 16
      %v4001 = vrot.slane %v3999, 4
      %v4002 = vor.u32 %v4001, %v3997
      %v4003 = vrot.slane %v4002, 4
      %v4005 = vshll.u32 %v3897, 16
      %v4007 = vrot.slane %v4005, 5
      %v4008 = vsel %vm1048, %v4003, %v4007
      %v4010 = vshrl.u32 %v3898, 16
      %v4012 = vrot.slane %v4010, 4
      %v4013 = vshll.u32 %v3898, 16
      %v4015 = vrot.slane %v4013, 5
      %v4016 = vor.u32 %v4012, %v4015
      %v4017 = vrot.slane %v4016, 4
      %v4019 = vshll.u32 %v3899, 16
      %v4021 = vrot.slane %v4019, 5
      %v4022 = vsel %vm1048, %v4017, %v4021
      %v4023 = vshrl.u32 %v3899, 16
      %v4025 = vrot.slane %v4023, 4
      %v4026 = vor.u32 %v4025, %v4021
      %v4027 = vrot.slane %v4026, 4
      %v4029 = vshll.u32 %v3900, 16
      %v4031 = vrot.slane %v4029, 5
      %v4032 = vsel %vm1048, %v4027, %v4031
      %v4034 = vshrl.u32 %v3901, 16
      %v4036 = vrot.slane %v4034, 4
      %v4037 = vshll.u32 %v3901, 16
      %v4039 = vrot.slane %v4037, 5
      %v4040 = vor.u32 %v4036, %v4039
      %v4041 = vrot.slane %v4040, 4
      %v4043 = vshll.u32 %v3902, 16
      %v4045 = vrot.slane %v4043, 5
      %v4046 = vsel %vm1048, %v4041, %v4045
      %v4047 = vshrl.u32 %v3902, 16
      %v4049 = vrot.slane %v4047, 4
      %v4050 = vor.u32 %v4049, %v4045
      %v4051 = vrot.slane %v4050, 4
      %v4053 = vshll.u32 %v3903, 16
      %v4055 = vrot.slane %v4053, 5
      %v4056 = vsel %vm1048, %v4051, %v4055
      %v4058 = vshrl.u32 %v3904, 16
      %v4060 = vrot.slane %v4058, 4
      %v4061 = vshll.u32 %v3904, 16
      %v4063 = vrot.slane %v4061, 5
      %v4064 = vor.u32 %v4060, %v4063
      %v4065 = vrot.slane %v4064, 4
      %v4067 = vshll.u32 %v3905, 16
      %v4069 = vrot.slane %v4067, 5
      %v4070 = vsel %vm1048, %v4065, %v4069
      %v4071 = vshrl.u32 %v3905, 16
      %v4073 = vrot.slane %v4071, 4
      %v4074 = vor.u32 %v4073, %v4069
      %v4075 = vrot.slane %v4074, 4
      %v4077 = vshll.u32 %v3906, 16
      %v4079 = vrot.slane %v4077, 5
      %v4080 = vsel %vm1048, %v4075, %v4079
      %v4082 = vshrl.u32 %v3907, 16
      %v4084 = vrot.slane %v4082, 4
      %v4085 = vshll.u32 %v3907, 16
      %v4087 = vrot.slane %v4085, 5
      %v4088 = vor.u32 %v4084, %v4087
      %v4089 = vrot.slane %v4088, 4
      %v4091 = vshll.u32 %v3908, 16
      %v4093 = vrot.slane %v4091, 5
      %v4094 = vsel %vm1048, %v4089, %v4093
      %v4095 = vshrl.u32 %v3908, 16
      %v4097 = vrot.slane %v4095, 4
      %v4098 = vor.u32 %v4097, %v4093
      %v4099 = vrot.slane %v4098, 4
      %v4101 = vshll.u32 %v3909, 16
      %v4103 = vrot.slane %v4101, 5
      %v4104 = vsel %vm1048, %v4099, %v4103
      %v4106 = vshrl.u32 %v3910, 16
      %v4108 = vrot.slane %v4106, 4
      %v4109 = vshll.u32 %v3910, 16
      %v4111 = vrot.slane %v4109, 5
      %v4112 = vor.u32 %v4108, %v4111
      %v4113 = vrot.slane %v4112, 4
      %v4115 = vshll.u32 %v3911, 16
      %v4117 = vrot.slane %v4115, 5
      %v4118 = vsel %vm1048, %v4113, %v4117
      %v4119 = vshrl.u32 %v3911, 16
      %v4121 = vrot.slane %v4119, 4
      %v4122 = vor.u32 %v4121, %v4117
      %v4123 = vrot.slane %v4122, 4
      %v4125 = vshll.u32 %v3912, 16
      %v4127 = vrot.slane %v4125, 5
      %v4128 = vsel %vm1048, %v4123, %v4127
      %v4130 = vshrl.u32 %v3913, 16
      %v4132 = vrot.slane %v4130, 4
      %v4133 = vshll.u32 %v3913, 16
      %v4135 = vrot.slane %v4133, 5
      %v4136 = vor.u32 %v4132, %v4135
      %v4137 = vrot.slane %v4136, 4
      %v4139 = vshll.u32 %v3914, 16
      %v4141 = vrot.slane %v4139, 5
      %v4142 = vsel %vm1048, %v4137, %v4141
      %v4143 = vshrl.u32 %v3914, 16
      %v4145 = vrot.slane %v4143, 4
      %v4146 = vor.u32 %v4145, %v4141
      %v4147 = vrot.slane %v4146, 4
      %v4149 = vshll.u32 %v3915, 16
      %v4151 = vrot.slane %v4149, 5
      %v4152 = vsel %vm1048, %v4147, %v4151
      %v4154 = vshrl.u32 %v3916, 16
      %v4156 = vrot.slane %v4154, 4
      %v4157 = vshll.u32 %v3916, 16
      %v4159 = vrot.slane %v4157, 5
      %v4160 = vor.u32 %v4156, %v4159
      %v4161 = vrot.slane %v4160, 4
      %v4163 = vshll.u32 %v3917, 16
      %v4165 = vrot.slane %v4163, 5
      %v4166 = vsel %vm1048, %v4161, %v4165
      %v4167 = vshrl.u32 %v3917, 16
      %v4169 = vrot.slane %v4167, 4
      %v4170 = vor.u32 %v4169, %v4165
      %v4171 = vrot.slane %v4170, 4
      %v4173 = vshll.u32 %v3918, 16
      %v4175 = vrot.slane %v4173, 5
      %v4176 = vsel %vm1048, %v4171, %v4175
      %v4178 = vshrl.u32 %v3919, 16
      %v4180 = vrot.slane %v4178, 4
      %v4181 = vshll.u32 %v3919, 16
      %v4183 = vrot.slane %v4181, 5
      %v4184 = vor.u32 %v4180, %v4183
      %v4185 = vrot.slane %v4184, 4
      %v4187 = vshll.u32 %v3920, 16
      %v4189 = vrot.slane %v4187, 5
      %v4190 = vsel %vm1048, %v4185, %v4189
      %v4191 = vshrl.u32 %v3920, 16
      %v4193 = vrot.slane %v4191, 4
      %v4194 = vor.u32 %v4193, %v4189
      %v4195 = vrot.slane %v4194, 4
      %v4197 = vshll.u32 %v3921, 16
      %v4199 = vrot.slane %v4197, 5
      %v4200 = vsel %vm1048, %v4195, %v4199
      %v4202 = vshrl.u32 %v3922, 16
      %v4204 = vrot.slane %v4202, 4
      %v4205 = vshll.u32 %v3922, 16
      %v4207 = vrot.slane %v4205, 5
      %v4208 = vor.u32 %v4204, %v4207
      %v4209 = vrot.slane %v4208, 4
      %v4211 = vshll.u32 %v3923, 16
      %v4213 = vrot.slane %v4211, 5
      %v4214 = vsel %vm1048, %v4209, %v4213
      %v4215 = vshrl.u32 %v3923, 16
      %v4217 = vrot.slane %v4215, 4
      %v4218 = vor.u32 %v4217, %v4213
      %v4219 = vrot.slane %v4218, 4
      %v4221 = vshll.u32 %v3924, 16
      %v4223 = vrot.slane %v4221, 5
      %v4224 = vsel %vm1048, %v4219, %v4223
      %v4226 = vshrl.u32 %v3925, 16
      %v4228 = vrot.slane %v4226, 4
      %v4229 = vshll.u32 %v3925, 16
      %v4231 = vrot.slane %v4229, 5
      %v4232 = vor.u32 %v4228, %v4231
      %v4233 = vrot.slane %v4232, 4
      %v4235 = vshll.u32 %v3926, 16
      %v4237 = vrot.slane %v4235, 5
      %v4238 = vsel %vm1048, %v4233, %v4237
      %v4239 = vshrl.u32 %v3926, 16
      %v4241 = vrot.slane %v4239, 4
      %v4242 = vor.u32 %v4241, %v4237
      %v4243 = vrot.slane %v4242, 4
      %v4245 = vshll.u32 %v3927, 16
      %v4247 = vrot.slane %v4245, 5
      %v4248 = vsel %vm1048, %v4243, %v4247
      %v4250 = vshrl.u32 %v3928, 16
      %v4252 = vrot.slane %v4250, 4
      %v4253 = vshll.u32 %v3928, 16
      %v4255 = vrot.slane %v4253, 5
      %v4256 = vor.u32 %v4252, %v4255
      %v4257 = vrot.slane %v4256, 4
      %v4259 = vshll.u32 %v3929, 16
      %v4261 = vrot.slane %v4259, 5
      %v4262 = vsel %vm1048, %v4257, %v4261
      %v4263 = vshrl.u32 %v3929, 16
      %v4265 = vrot.slane %v4263, 4
      %v4266 = vor.u32 %v4265, %v4261
      %v4267 = vrot.slane %v4266, 4
      %v4269 = vshll.u32 %v3930, 16
      %v4271 = vrot.slane %v4269, 5
      %v4272 = vsel %vm1048, %v4267, %v4271
      %v4274 = vshrl.u32 %v3931, 16
      %v4276 = vrot.slane %v4274, 4
      %v4277 = vshll.u32 %v3931, 16
      %v4279 = vrot.slane %v4277, 5
      %v4280 = vor.u32 %v4276, %v4279
      %v4281 = vrot.slane %v4280, 4
      %v4283 = vshll.u32 %v3932, 16
      %v4285 = vrot.slane %v4283, 5
      %v4286 = vsel %vm1048, %v4281, %v4285
      %v4287 = vshrl.u32 %v3932, 16
      %v4289 = vrot.slane %v4287, 4
      %v4290 = vor.u32 %v4289, %v4285
      %v4291 = vrot.slane %v4290, 4
      %v4293 = vshll.u32 %v3933, 16
      %v4295 = vrot.slane %v4293, 5
      %v4296 = vsel %vm1048, %v4291, %v4295
      %v4298 = vshrl.u32 %v3934, 16
      %v4300 = vrot.slane %v4298, 4
      %v4301 = vshll.u32 %v3934, 16
      %v4303 = vrot.slane %v4301, 5
      %v4304 = vor.u32 %v4300, %v4303
      %v4305 = vrot.slane %v4304, 4
      %v4307 = vshll.u32 %v3935, 16
      %v4309 = vrot.slane %v4307, 5
      %v4310 = vsel %vm1048, %v4305, %v4309
      %v4311 = vshrl.u32 %v3935, 16
      %v4313 = vrot.slane %v4311, 4
      %v4314 = vor.u32 %v4313, %v4309
      %v4315 = vrot.slane %v4314, 4
      %v4317 = vshll.u32 %v3936, 16
      %v4319 = vrot.slane %v4317, 5
      %v4320 = vsel %vm1048, %v4315, %v4319
      %s4321 = scalar_lea.vmem %s201, 16
      %v4322 = vld [vmem:[%s4321] sm:$0x3]
      %v4323 = vunpack.c.l.b16 %v3950
      %v4324 = vunpack.c.l.b16 %v3960
      %v4325 = vunpack.c.l.b16 %v3974
      %v4326 = vunpack.c.l.b16 %v3984
      %v4327 = vunpack.c.l.b16 %v3998
      %v4328 = vunpack.c.l.b16 %v4008
      %v4329 = vunpack.c.l.b16 %v4022
      %v4330 = vunpack.c.l.b16 %v4032
      %v4331 = vunpack.c.l.b16 %v4046
      %v4332 = vunpack.c.l.b16 %v4056
      %v4333 = vunpack.c.l.b16 %v4070
      %v4334 = vunpack.c.l.b16 %v4080
      %v4335 = vunpack.c.l.b16 %v4094
      %v4336 = vunpack.c.l.b16 %v4104
      %v4337 = vunpack.c.l.b16 %v4118
      %v4338 = vunpack.c.l.b16 %v4128
      %v4339 = vunpack.c.l.b16 %v4142
      %v4340 = vunpack.c.l.b16 %v4152
      %v4341 = vunpack.c.l.b16 %v4166
      %v4342 = vunpack.c.l.b16 %v4176
      %v4343 = vunpack.c.l.b16 %v4190
      %v4344 = vunpack.c.l.b16 %v4200
      %v4345 = vunpack.c.l.b16 %v4214
      %v4346 = vunpack.c.l.b16 %v4224
      %v4347 = vunpack.c.l.b16 %v4238
      %v4348 = vunpack.c.l.b16 %v4248
      %v4349 = vunpack.c.l.b16 %v4262
      %v4350 = vunpack.c.l.b16 %v4272
      %v4351 = vunpack.c.l.b16 %v4286
      %v4352 = vunpack.c.l.b16 %v4296
      %v4353 = vunpack.c.l.b16 %v4310
      %v4354 = vunpack.c.l.b16 %v4320
      %v4355 = vpack.c.b16 %v4324, %v4323
      %v4356 = vpack.c.b16 %v4326, %v4325
      %v4357 = vpack.c.b16 %v4328, %v4327
      %v4358 = vpack.c.b16 %v4330, %v4329
      %v4359 = vpack.c.b16 %v4332, %v4331
      %v4360 = vpack.c.b16 %v4334, %v4333
      %v4361 = vpack.c.b16 %v4336, %v4335
      %v4362 = vpack.c.b16 %v4338, %v4337
      %v4363 = vpack.c.b16 %v4340, %v4339
      %v4364 = vpack.c.b16 %v4342, %v4341
      %v4365 = vpack.c.b16 %v4344, %v4343
      %v4366 = vpack.c.b16 %v4346, %v4345
      %v4367 = vpack.c.b16 %v4348, %v4347
      %v4368 = vpack.c.b16 %v4350, %v4349
      %v4369 = vpack.c.b16 %v4352, %v4351
      %v4370 = vpack.c.b16 %v4354, %v4353
      %v4372 = vsel %vm393, %v4355, 0
      %v4375 = vsel %vm393, %v4356, 0
      %v4378 = vsel %vm393, %v4357, 0
      %v4381 = vsel %vm393, %v4358, 0
      %v4384 = vsel %vm393, %v4359, 0
      %v4387 = vsel %vm393, %v4360, 0
      %v4390 = vsel %vm393, %v4361, 0
      %v4393 = vsel %vm393, %v4362, 0
      %v4396 = vsel %vm393, %v4363, 0
      %v4399 = vsel %vm393, %v4364, 0
      %v4402 = vsel %vm393, %v4365, 0
      %v4405 = vsel %vm393, %v4366, 0
      %v4408 = vsel %vm393, %v4367, 0
      %v4411 = vsel %vm393, %v4368, 0
      %v4414 = vsel %vm393, %v4369, 0
      %v4417 = vsel %vm393, %v4370, 0
      %v4420 = vsel %vm442, %v4322, 0
      %4422 = vmatprep.subr.bf16.mxu0 0
      %4423 = vmatpush1.bf16.msra.mxu0 %v4420
      %4424 = vmatprep.subr.bf16.mxu0 0
      %4425 = vmatpush1.bf16.msra.mxu0 0
      %4426 = vmatprep.subr.bf16.mxu0 0
      %4427 = vmatpush1.bf16.msra.mxu0 0
      %4428 = vmatprep.subr.bf16.mxu0 0
      %4429 = vmatpush1.bf16.msra.mxu0 0
      %4430 = vmatprep.subr.bf16.mxu0 0
      %4431 = vmatpush1.bf16.msra.mxu0 0
      %4432 = vmatprep.subr.bf16.mxu0 0
      %4433 = vmatpush1.bf16.msra.mxu0 0
      %4434 = vmatprep.subr.bf16.mxu0 0
      %4435 = vmatpush1.bf16.msra.mxu0 0
      %4436 = vmatprep.subr.bf16.mxu0 0
      %4437 = vmatpush1.bf16.msra.mxu0 0
      %4438 = vmatprep.subr.bf16.mxu0 0
      %4439 = vmatpush1.bf16.msra.mxu0 0
      %4440 = vmatprep.subr.bf16.mxu0 0
      %4441 = vmatpush1.bf16.msra.mxu0 0
      %4442 = vmatprep.subr.bf16.mxu0 0
      %4443 = vmatpush1.bf16.msra.mxu0 0
      %4444 = vmatprep.subr.bf16.mxu0 0
      %4445 = vmatpush1.bf16.msra.mxu0 0
      %4446 = vmatprep.subr.bf16.mxu0 0
      %4447 = vmatpush1.bf16.msra.mxu0 0
      %4448 = vmatprep.subr.bf16.mxu0 0
      %4449 = vmatpush1.bf16.msra.mxu0 0
      %4450 = vmatprep.subr.bf16.mxu0 0
      %4451 = vmatpush1.bf16.msra.mxu0 0
      %4452 = vmatprep.subr.bf16.mxu0 0
      %4453 = vmatpush1.bf16.msra.mxu0 0
      %4454 = vmatprep.mubr.bf16.mxu0 0
      %4455 = vmatmul.mubr.bf16.gmra.mrb[0].mxu0 %v4372
      %v4456 = vpop.f32.mrb[0].mxu0
      %v4457 = vadd.f32 0.0, %v4456
      %v4458 = vpop.f32.mrb[0].mxu0
      %v4459 = vpop.f32.mrb[0].mxu0
      %v4460 = vadd.f32 0.0, %v4459
      %v4461 = vpop.f32.mrb[0].mxu0
      %4462 = vmatprep.mubr.bf16.mxu0 0
      %4463 = vmatmul.mubr.bf16.gmra.mrb[0].mxu0 %v4375
      %v4464 = vpop.f32.mrb[0].mxu0
      %v4465 = vadd.f32 0.0, %v4464
      %v4466 = vpop.f32.mrb[0].mxu0
      %v4467 = vpop.f32.mrb[0].mxu0
      %v4468 = vadd.f32 0.0, %v4467
      %v4469 = vpop.f32.mrb[0].mxu0
      %4470 = vmatprep.mubr.bf16.mxu0 0
      %4471 = vmatmul.mubr.bf16.gmra.mrb[0].mxu0 %v4378
      %v4472 = vpop.f32.mrb[0].mxu0
      %v4473 = vadd.f32 0.0, %v4472
      %v4474 = vpop.f32.mrb[0].mxu0
      %v4475 = vpop.f32.mrb[0].mxu0
      %v4476 = vadd.f32 0.0, %v4475
      %v4477 = vpop.f32.mrb[0].mxu0
      %4478 = vmatprep.mubr.bf16.mxu0 0
      %4479 = vmatmul.mubr.bf16.gmra.mrb[0].mxu0 %v4381
      %v4480 = vpop.f32.mrb[0].mxu0
      %v4481 = vadd.f32 0.0, %v4480
      %v4482 = vpop.f32.mrb[0].mxu0
      %v4483 = vpop.f32.mrb[0].mxu0
      %v4484 = vadd.f32 0.0, %v4483
      %v4485 = vpop.f32.mrb[0].mxu0
      %4486 = vmatprep.mubr.bf16.mxu0 0
      %4487 = vmatmul.mubr.bf16.gmra.mrb[0].mxu0 %v4384
      %v4488 = vpop.f32.mrb[0].mxu0
      %v4489 = vadd.f32 0.0, %v4488
      %v4490 = vpop.f32.mrb[0].mxu0
      %v4491 = vpop.f32.mrb[0].mxu0
      %v4492 = vadd.f32 0.0, %v4491
      %v4493 = vpop.f32.mrb[0].mxu0
      %4494 = vmatprep.mubr.bf16.mxu0 0
      %4495 = vmatmul.mubr.bf16.gmra.mrb[0].mxu0 %v4387
      %v4496 = vpop.f32.mrb[0].mxu0
      %v4497 = vadd.f32 0.0, %v4496
      %v4498 = vpop.f32.mrb[0].mxu0
      %v4499 = vpop.f32.mrb[0].mxu0
      %v4500 = vadd.f32 0.0, %v4499
      %v4501 = vpop.f32.mrb[0].mxu0
      %4502 = vmatprep.mubr.bf16.mxu0 0
      %4503 = vmatmul.mubr.bf16.gmra.mrb[0].mxu0 %v4390
      %v4504 = vpop.f32.mrb[0].mxu0
      %v4505 = vadd.f32 0.0, %v4504
      %v4506 = vpop.f32.mrb[0].mxu0
      %v4507 = vpop.f32.mrb[0].mxu0
      %v4508 = vadd.f32 0.0, %v4507
      %v4509 = vpop.f32.mrb[0].mxu0
      %4510 = vmatprep.mubr.bf16.mxu0 0
      %4511 = vmatmul.mubr.bf16.gmra.mrb[0].mxu0 %v4393
      %v4512 = vpop.f32.mrb[0].mxu0
      %v4513 = vadd.f32 0.0, %v4512
      %v4514 = vpop.f32.mrb[0].mxu0
      %v4515 = vpop.f32.mrb[0].mxu0
      %v4516 = vadd.f32 0.0, %v4515
      %v4517 = vpop.f32.mrb[0].mxu0
      %4518 = vmatprep.mubr.bf16.mxu0 0
      %4519 = vmatmul.mubr.bf16.gmra.mrb[0].mxu0 %v4396
      %v4520 = vpop.f32.mrb[0].mxu0
      %v4521 = vadd.f32 0.0, %v4520
      %v4522 = vpop.f32.mrb[0].mxu0
      %v4523 = vpop.f32.mrb[0].mxu0
      %v4524 = vadd.f32 0.0, %v4523
      %v4525 = vpop.f32.mrb[0].mxu0
      %4526 = vmatprep.mubr.bf16.mxu0 0
      %4527 = vmatmul.mubr.bf16.gmra.mrb[0].mxu0 %v4399
      %v4528 = vpop.f32.mrb[0].mxu0
      %v4529 = vadd.f32 0.0, %v4528
      %v4530 = vpop.f32.mrb[0].mxu0
      %v4531 = vpop.f32.mrb[0].mxu0
      %v4532 = vadd.f32 0.0, %v4531
      %v4533 = vpop.f32.mrb[0].mxu0
      %4534 = vmatprep.mubr.bf16.mxu0 0
      %4535 = vmatmul.mubr.bf16.gmra.mrb[0].mxu0 %v4402
      %v4536 = vpop.f32.mrb[0].mxu0
      %v4537 = vadd.f32 0.0, %v4536
      %v4538 = vpop.f32.mrb[0].mxu0
      %v4539 = vpop.f32.mrb[0].mxu0
      %v4540 = vadd.f32 0.0, %v4539
      %v4541 = vpop.f32.mrb[0].mxu0
      %4542 = vmatprep.mubr.bf16.mxu0 0
      %4543 = vmatmul.mubr.bf16.gmra.mrb[0].mxu0 %v4405
      %v4544 = vpop.f32.mrb[0].mxu0
      %v4545 = vadd.f32 0.0, %v4544
      %v4546 = vpop.f32.mrb[0].mxu0
      %v4547 = vpop.f32.mrb[0].mxu0
      %v4548 = vadd.f32 0.0, %v4547
      %v4549 = vpop.f32.mrb[0].mxu0
      %4550 = vmatprep.mubr.bf16.mxu0 0
      %4551 = vmatmul.mubr.bf16.gmra.mrb[0].mxu0 %v4408
      %v4552 = vpop.f32.mrb[0].mxu0
      %v4553 = vadd.f32 0.0, %v4552
      %v4554 = vpop.f32.mrb[0].mxu0
      %v4555 = vpop.f32.mrb[0].mxu0
      %v4556 = vadd.f32 0.0, %v4555
      %v4557 = vpop.f32.mrb[0].mxu0
      %4558 = vmatprep.mubr.bf16.mxu0 0
      %4559 = vmatmul.mubr.bf16.gmra.mrb[0].mxu0 %v4411
      %v4560 = vpop.f32.mrb[0].mxu0
      %v4561 = vadd.f32 0.0, %v4560
      %v4562 = vpop.f32.mrb[0].mxu0
      %v4563 = vpop.f32.mrb[0].mxu0
      %v4564 = vadd.f32 0.0, %v4563
      %v4565 = vpop.f32.mrb[0].mxu0
      %4566 = vmatprep.mubr.bf16.mxu0 0
      %4567 = vmatmul.mubr.bf16.gmra.mrb[0].mxu0 %v4414
      %v4568 = vpop.f32.mrb[0].mxu0
      %v4569 = vadd.f32 0.0, %v4568
      %v4570 = vpop.f32.mrb[0].mxu0
      %v4571 = vpop.f32.mrb[0].mxu0
      %v4572 = vadd.f32 0.0, %v4571
      %v4573 = vpop.f32.mrb[0].mxu0
      %4574 = vmatprep.mubr.bf16.mxu0 0
      %4575 = vmatmul.mubr.bf16.gmra.mrb[0].mxu0 %v4417
      %v4576 = vpop.f32.mrb[0].mxu0
      %v4577 = vadd.f32 0.0, %v4576
      %v4578 = vpop.f32.mrb[0].mxu0
      %v4579 = vpop.f32.mrb[0].mxu0
      %v4580 = vadd.f32 0.0, %v4579
      %v4581 = vpop.f32.mrb[0].mxu0
      %4582 = vdwg.mxu0
      %v4583 = vadd.f32 %v3857, %v4457
      %v4584 = vadd.f32 %v3858, %v4460
      %v4585 = vadd.f32 %v3859, %v4465
      %v4586 = vadd.f32 %v3860, %v4468
      %v4587 = vadd.f32 %v3861, %v4473
      %v4588 = vadd.f32 %v3862, %v4476
      %v4589 = vadd.f32 %v3863, %v4481
      %v4590 = vadd.f32 %v3864, %v4484
      %v4591 = vadd.f32 %v3865, %v4489
      %v4592 = vadd.f32 %v3866, %v4492
      %v4593 = vadd.f32 %v3867, %v4497
      %v4594 = vadd.f32 %v3868, %v4500
      %v4595 = vadd.f32 %v3869, %v4505
      %v4596 = vadd.f32 %v3870, %v4508
      %v4597 = vadd.f32 %v3871, %v4513
      %v4598 = vadd.f32 %v3872, %v4516
      %v4599 = vadd.f32 %v3873, %v4521
      %v4600 = vadd.f32 %v3874, %v4524
      %v4601 = vadd.f32 %v3875, %v4529
      %v4602 = vadd.f32 %v3876, %v4532
      %v4603 = vadd.f32 %v3877, %v4537
      %v4604 = vadd.f32 %v3878, %v4540
      %v4605 = vadd.f32 %v3879, %v4545
      %v4606 = vadd.f32 %v3880, %v4548
      %v4607 = vadd.f32 %v3881, %v4553
      %v4608 = vadd.f32 %v3882, %v4556
      %v4609 = vadd.f32 %v3883, %v4561
      %v4610 = vadd.f32 %v3884, %v4564
      %v4611 = vadd.f32 %v3885, %v4569
      %v4612 = vadd.f32 %v3886, %v4572
      %v4613 = vadd.f32 %v3887, %v4577
      %v4614 = vadd.f32 %v3888, %v4580
      %vm4615 = vcmask 64512
      %4616 = vst.msk [vmem:[#allocation2] sm:$0xff] %vm4615, %v4583
      %4617 = vst.msk [vmem:[#allocation2 + $0x8] sm:$0xff] %vm4615, %v4584
      %4618 = vst.msk [vmem:[#allocation2 + $0x10] sm:$0xff] %vm4615, %v4585
      %4619 = vst.msk [vmem:[#allocation2 + $0x18] sm:$0xff] %vm4615, %v4586
      %4620 = vst.msk [vmem:[#allocation2 + $0x20] sm:$0xff] %vm4615, %v4587
      %4621 = vst.msk [vmem:[#allocation2 + $0x28] sm:$0xff] %vm4615, %v4588
      %4622 = vst.msk [vmem:[#allocation2 + $0x30] sm:$0xff] %vm4615, %v4589
      %4623 = vst.msk [vmem:[#allocation2 + $0x38] sm:$0xff] %vm4615, %v4590
      %4624 = vst.msk [vmem:[#allocation2 + $0x40] sm:$0xff] %vm4615, %v4591
      %4625 = vst.msk [vmem:[#allocation2 + $0x48] sm:$0xff] %vm4615, %v4592
      %4626 = vst.msk [vmem:[#allocation2 + $0x50] sm:$0xff] %vm4615, %v4593
      %4627 = vst.msk [vmem:[#allocation2 + $0x58] sm:$0xff] %vm4615, %v4594
      %4628 = vst.msk [vmem:[#allocation2 + $0x60] sm:$0xff] %vm4615, %v4595
      %4629 = vst.msk [vmem:[#allocation2 + $0x68] sm:$0xff] %vm4615, %v4596
      %4630 = vst.msk [vmem:[#allocation2 + $0x70] sm:$0xff] %vm4615, %v4597
      %4631 = vst.msk [vmem:[#allocation2 + $0x78] sm:$0xff] %vm4615, %v4598
      %4632 = vst.msk [vmem:[#allocation2 + $0x80] sm:$0xff] %vm4615, %v4599
      %4633 = vst.msk [vmem:[#allocation2 + $0x88] sm:$0xff] %vm4615, %v4600
      %4634 = vst.msk [vmem:[#allocation2 + $0x90] sm:$0xff] %vm4615, %v4601
      %4635 = vst.msk [vmem:[#allocation2 + $0x98] sm:$0xff] %vm4615, %v4602
      %4636 = vst.msk [vmem:[#allocation2 + $0xa0] sm:$0xff] %vm4615, %v4603
      %4637 = vst.msk [vmem:[#allocation2 + $0xa8] sm:$0xff] %vm4615, %v4604
      %4638 = vst.msk [vmem:[#allocation2 + $0xb0] sm:$0xff] %vm4615, %v4605
      %4639 = vst.msk [vmem:[#allocation2 + $0xb8] sm:$0xff] %vm4615, %v4606
      %4640 = vst.msk [vmem:[#allocation2 + $0xc0] sm:$0xff] %vm4615, %v4607
      %4641 = vst.msk [vmem:[#allocation2 + $0xc8] sm:$0xff] %vm4615, %v4608
      %4642 = vst.msk [vmem:[#allocation2 + $0xd0] sm:$0xff] %vm4615, %v4609
      %4643 = vst.msk [vmem:[#allocation2 + $0xd8] sm:$0xff] %vm4615, %v4610
      %4644 = vst.msk [vmem:[#allocation2 + $0xe0] sm:$0xff] %vm4615, %v4611
      %4645 = vst.msk [vmem:[#allocation2 + $0xe8] sm:$0xff] %vm4615, %v4612
      %4646 = vst.msk [vmem:[#allocation2 + $0xf0] sm:$0xff] %vm4615, %v4613
      %4647 = vst.msk [vmem:[#allocation2 + $0xf8] sm:$0xff] %vm4615, %v4614
      // Predicated region
      $region33: #{a_call__.4} parent=27 // pred_check
        %p4648 = pneg %p211
      $region34: #{a_call__.4} parent=27 // pred_check_branch
        %4650 = sbr.rel (%p4648) target = $region36
      $region35: #{a_call__.4} parent=27 // pred_region
        %v4651 = vpack.c.bf16 %v4584, %v4583
        %v4652 = vpack.c.bf16 %v4586, %v4585
        %v4653 = vpack.c.bf16 %v4588, %v4587
        %v4654 = vpack.c.bf16 %v4590, %v4589
        %v4655 = vpack.c.bf16 %v4592, %v4591
        %v4656 = vpack.c.bf16 %v4594, %v4593
        %v4657 = vpack.c.bf16 %v4596, %v4595
        %v4658 = vpack.c.bf16 %v4598, %v4597
        %v4659 = vpack.c.bf16 %v4600, %v4599
        %v4660 = vpack.c.bf16 %v4602, %v4601
        %v4661 = vpack.c.bf16 %v4604, %v4603
        %v4662 = vpack.c.bf16 %v4606, %v4605
        %v4663 = vpack.c.bf16 %v4608, %v4607
        %v4664 = vpack.c.bf16 %v4610, %v4609
        %v4665 = vpack.c.bf16 %v4612, %v4611
        %v4666 = vpack.c.bf16 %v4614, %v4613
        %v4683 = vunpack.c.l.b16 %v4651
        %v4684 = vunpack.c.h.b16 %v4651
        %v4685 = vunpack.c.l.b16 %v4652
        %v4686 = vunpack.c.h.b16 %v4652
        %v4687 = vunpack.c.l.b16 %v4653
        %v4688 = vunpack.c.h.b16 %v4653
        %v4689 = vunpack.c.l.b16 %v4654
        %v4690 = vunpack.c.h.b16 %v4654
        %v4691 = vunpack.c.l.b16 %v4655
        %v4692 = vunpack.c.h.b16 %v4655
        %v4693 = vunpack.c.l.b16 %v4656
        %v4694 = vunpack.c.h.b16 %v4656
        %v4695 = vunpack.c.l.b16 %v4657
        %v4696 = vunpack.c.h.b16 %v4657
        %v4697 = vunpack.c.l.b16 %v4658
        %v4698 = vunpack.c.h.b16 %v4658
        %v4699 = vunpack.c.l.b16 %v4659
        %v4700 = vunpack.c.h.b16 %v4659
        %v4701 = vunpack.c.l.b16 %v4660
        %v4702 = vunpack.c.h.b16 %v4660
        %v4703 = vunpack.c.l.b16 %v4661
        %v4704 = vunpack.c.h.b16 %v4661
        %v4705 = vunpack.c.l.b16 %v4662
        %v4706 = vunpack.c.h.b16 %v4662
        %v4707 = vunpack.c.l.b16 %v4663
        %v4708 = vunpack.c.h.b16 %v4663
        %v4709 = vunpack.c.l.b16 %v4664
        %v4710 = vunpack.c.h.b16 %v4664
        %v4711 = vunpack.c.l.b16 %v4665
        %v4712 = vunpack.c.h.b16 %v4665
        %v4713 = vunpack.c.l.b16 %v4666
        %v4714 = vunpack.c.h.b16 %v4666
        %v4715 = vpack.c.b16 %v4683, %v4683
        %v4716 = vpack.c.b16 %v4684, %v4684
        %v4717 = vpack.c.b16 %v4685, %v4685
        %v4718 = vpack.c.b16 %v4686, %v4686
        %v4719 = vpack.c.b16 %v4687, %v4687
        %v4720 = vpack.c.b16 %v4688, %v4688
        %v4721 = vpack.c.b16 %v4689, %v4689
        %v4722 = vpack.c.b16 %v4690, %v4690
        %v4723 = vpack.c.b16 %v4691, %v4691
        %v4724 = vpack.c.b16 %v4692, %v4692
        %v4725 = vpack.c.b16 %v4693, %v4693
        %v4726 = vpack.c.b16 %v4694, %v4694
        %v4727 = vpack.c.b16 %v4695, %v4695
        %v4728 = vpack.c.b16 %v4696, %v4696
        %v4729 = vpack.c.b16 %v4697, %v4697
        %v4730 = vpack.c.b16 %v4698, %v4698
        %v4731 = vpack.c.b16 %v4699, %v4699
        %v4732 = vpack.c.b16 %v4700, %v4700
        %v4733 = vpack.c.b16 %v4701, %v4701
        %v4734 = vpack.c.b16 %v4702, %v4702
        %v4735 = vpack.c.b16 %v4703, %v4703
        %v4736 = vpack.c.b16 %v4704, %v4704
        %v4737 = vpack.c.b16 %v4705, %v4705
        %v4738 = vpack.c.b16 %v4706, %v4706
        %v4739 = vpack.c.b16 %v4707, %v4707
        %v4740 = vpack.c.b16 %v4708, %v4708
        %v4741 = vpack.c.b16 %v4709, %v4709
        %v4742 = vpack.c.b16 %v4710, %v4710
        %v4743 = vpack.c.b16 %v4711, %v4711
        %v4744 = vpack.c.b16 %v4712, %v4712
        %v4745 = vpack.c.b16 %v4713, %v4713
        %v4746 = vpack.c.b16 %v4714, %v4714
        %vm4779 = vcmask 60416
        %4780 = vst.msk [vmem:[%s209] sm:$0xf] %vm4779, %v4715
        %4781 = vst.msk [vmem:[%s209 + $0x4] sm:$0xf] %vm4779, %v4716
        %4782 = vst.msk [vmem:[%s209 + $0x8] sm:$0xf] %vm4779, %v4717
        %4783 = vst.msk [vmem:[%s209 + $0xc] sm:$0xf] %vm4779, %v4718
        %4784 = vst.msk [vmem:[%s209 + $0x10] sm:$0xf] %vm4779, %v4719
        %4785 = vst.msk [vmem:[%s209 + $0x14] sm:$0xf] %vm4779, %v4720
        %4786 = vst.msk [vmem:[%s209 + $0x18] sm:$0xf] %vm4779, %v4721
        %4787 = vst.msk [vmem:[%s209 + $0x1c] sm:$0xf] %vm4779, %v4722
        %4788 = vst.msk [vmem:[%s209 + $0x20] sm:$0xf] %vm4779, %v4723
        %4789 = vst.msk [vmem:[%s209 + $0x24] sm:$0xf] %vm4779, %v4724
        %4790 = vst.msk [vmem:[%s209 + $0x28] sm:$0xf] %vm4779, %v4725
        %4791 = vst.msk [vmem:[%s209 + $0x2c] sm:$0xf] %vm4779, %v4726
        %4792 = vst.msk [vmem:[%s209 + $0x30] sm:$0xf] %vm4779, %v4727
        %4793 = vst.msk [vmem:[%s209 + $0x34] sm:$0xf] %vm4779, %v4728
        %4794 = vst.msk [vmem:[%s209 + $0x38] sm:$0xf] %vm4779, %v4729
        %4795 = vst.msk [vmem:[%s209 + $0x3c] sm:$0xf] %vm4779, %v4730
        %4796 = vst.msk [vmem:[%s209 + $0x40] sm:$0xf] %vm4779, %v4731
        %4797 = vst.msk [vmem:[%s209 + $0x44] sm:$0xf] %vm4779, %v4732
        %4798 = vst.msk [vmem:[%s209 + $0x48] sm:$0xf] %vm4779, %v4733
        %4799 = vst.msk [vmem:[%s209 + $0x4c] sm:$0xf] %vm4779, %v4734
        %4800 = vst.msk [vmem:[%s209 + $0x50] sm:$0xf] %vm4779, %v4735
        %4801 = vst.msk [vmem:[%s209 + $0x54] sm:$0xf] %vm4779, %v4736
        %4802 = vst.msk [vmem:[%s209 + $0x58] sm:$0xf] %vm4779, %v4737
        %4803 = vst.msk [vmem:[%s209 + $0x5c] sm:$0xf] %vm4779, %v4738
        %4804 = vst.msk [vmem:[%s209 + $0x60] sm:$0xf] %vm4779, %v4739
        %4805 = vst.msk [vmem:[%s209 + $0x64] sm:$0xf] %vm4779, %v4740
        %4806 = vst.msk [vmem:[%s209 + $0x68] sm:$0xf] %vm4779, %v4741
        %4807 = vst.msk [vmem:[%s209 + $0x6c] sm:$0xf] %vm4779, %v4742
        %4808 = vst.msk [vmem:[%s209 + $0x70] sm:$0xf] %vm4779, %v4743
        %4809 = vst.msk [vmem:[%s209 + $0x74] sm:$0xf] %vm4779, %v4744
        %4810 = vst.msk [vmem:[%s209 + $0x78] sm:$0xf] %vm4779, %v4745
        %4811 = vst.msk [vmem:[%s209 + $0x7c] sm:$0xf] %vm4779, %v4746
      $region36: #{a_call__.4} parent=27 // pred_fallthru
        _
      %p4812 = scmp.lt.s32.totalorder %s18, 1
      %s4813 = scalar_select %p4812, %s18, 1
      %p4814 = scmp.lt.s32.totalorder %s19, 0
      %s4815 = scalar_select %p4814, %s19, 0
      %s4816 = smul.addr %s4813, 32
      %s4817 = sadd.s32 %s4815, %s4816
      %s4818 = smul.addr %s4817, 4
      %s4819 = scalar_lea.vmem %s2, %s4818
      // Predicated region
      $region37: #{a_call__.4} parent=27 // pred_check
        %p4820 = pneg %p108
      $region38: #{a_call__.4} parent=27 // pred_check_branch
        %4822 = sbr.rel (%p4820) target = $region40
      $region39: #{a_call__.4} parent=27 // pred_region
        _
      $region40: #{a_call__.4} parent=27 // pred_fallthru
        _
    $region28: #{a_call__.4} parent=5 // pred_fallthru
      _
    %p4823 = scmp.le.s32.totalorder 2, %s8
    // Predicated region
    $region41: #{a_call__.4} parent=5 // pred_check
      %p4824 = pneg %p4823
    $region42: #{a_call__.4} parent=5 // pred_check_branch
      %4826 = sbr.rel (%p4824) target = $region44
    $region43: #{a_call__.4} parent=5 // pred_region
      %s4827 = ssub.s32 %s8, 2
      // Predicated region
      $region45: #{a_call__.4} parent=43 // pred_check
        %p4828 = pneg %p114
      $region46: #{a_call__.4} parent=43 // pred_check_branch
        %4830 = sbr.rel (%p4828) target = $region48
      $region47: #{a_call__.4} parent=43 // pred_region
        %p4831 = scmp.lt.s32.totalorder %s21, 1
        %s4832 = scalar_select %p4831, %s21, 1
        %p4833 = scmp.lt.s32.totalorder %s22, 0
        %s4834 = scalar_select %p4833, %s22, 0
        %s4835 = smul.addr %s4832, 32
        %s4836 = sadd.s32 %s4834, %s4835
        %s4837 = smul.addr %s4836, 4
        %s4838 = scalar_lea.vmem %s2, %s4837
      $region48: #{a_call__.4} parent=43 // pred_fallthru
        _
    $region44: #{a_call__.4} parent=5 // pred_fallthru
      _
  $region6: #{a_call__.4} parent=0 // loop_footer
    %s12 = sadd.s32 1, %s8
  $region7: #{a_call__.4} parent=0 // loop_footer_branch
    %7 = sbr.rel target = $region3
  $region8: #{a_call__.4} parent=0 // loop_exit
    _

// kernel: a_call__.5
$region0: #{a_call__.5}
  #allocation0 [shape = 'u32[]', space=smem, size = 0x4, offset = 0x4, fixed_abs, tag = 'smem constant byte address 0x4 - core index']
  #allocation1 [shape = 'u32[144,128]{1,0:T(1,128)}', space=vmem, size = 0x12000, scoped, tag = 'internal scratch']
  #allocation2 [shape = 'f32[64,16]{1,0:T(8,128)}', space=vmem, size = 0x8000, scoped, tag = 'scratch operand']
  %s0 = inlined_call_operand.vmem [shape: bf16[2,4,9,9,8], index: 0, kind: input, shape index: {}]
  %s1 = inlined_call_operand.vmem [shape: bf16[3,3,8,16], index: 1, kind: input, shape index: {}]
  %s2 = inlined_call_operand.hbm [shape: f32[2,64,16], index: 2, kind: output, shape index: {}]
  %s3 = sld [smem:[#allocation0]]
  $region49: #{a_call__.5} parent=0
    _
  %s5 = ssub.s32 1, %s3
  %s6 = scalar_select 0, %s5, %s3
  $region1: #{a_call__.5} parent=0
    #allocation3 [shape = 'u8[65536]{0}', space=vmem, size = 0x10000, scoped, tag = 'output window, operand 0']
    #allocation4 [shape = 's32[2]{0}', space=sflag, size = 0x8, scoped, tag = 'scoped memory for a_call__.5']
    %7 = vsyncpa [#allocation4], 0
    %s8 = scalar_lea.sflag [#allocation4], 1
    %9 = vsyncpa %s8, 0
    loop: start=0, step=1, limit=4
    $region2: #{a_call__.5} parent=1 // loop_pre_header
      _
    $region3: #{a_call__.5} parent=1 // loop_header
      %s11 = sphi 0, %s15
      %p12 = scmp.ge.s32.totalorder %s11, 4
      %s18 = sphi 0, %s37
      %s19 = sphi 0, %s33
      %s20 = sphi 0, %s29
      %s21 = sphi 0, %s18
      %s22 = sphi 0, %s19
      %s23 = sphi 0, %s20
      %s24 = sphi 0, %s21
      %s25 = sphi 0, %s22
      %s26 = sphi 0, %s23
      %s42 = sphi 0, %s44
      %s45 = sphi 0, %s42
      %s46 = sphi 0, %s45
      %s62 = sphi 0, %s46
      %s70 = sphi 0, %s72
      %s73 = sphi 0, %s70
      %s74 = sphi 0, %s73
      %s90 = sphi 0, %s74
      %s98 = sphi 0, %s100
      %s101 = sphi 0, %s98
      %s102 = sphi 0, %s101
      %s118 = sphi 0, %s102
    $region4: #{a_call__.5} parent=1 // loop_header_branch
      %14 = sbr.rel (%p12) target = $region8
    $region5: #{a_call__.5} parent=1 // loop_body
      %s16 = ssub.s32 %s11, 1
      %s17 = ssub.s32 %s11, 2
      %s27 = sadd.s32 1, %s20
      %p28 = scmp.ge.s32.totalorder %s27, 1
      %s29 = scalar_select %p28, 0, %s27
      %s30 = sadd.s32 1, %s19
      %s31 = scalar_select %p28, %s30, %s19
      %p32 = scmp.ge.s32.totalorder %s31, 1
      %s33 = scalar_select %p32, 0, %s31
      %s34 = sadd.s32 1, %s18
      %s35 = scalar_select %p32, %s34, %s18
      %p36 = scmp.ge.s32.totalorder %s35, 2
      %s37 = scalar_select %p36, 0, %s35
      %s38 = ssub.s32 %s18, %s37
      %s39 = ssub.s32 %s20, %s29
      %s40 = sor.u32 %s38, %s39
      %p41 = scmp.eq.s32.totalorder %s40, 0
      %s43 = sadd.s32 %s42, 1
      %s44 = scalar_select %p41, %s42, %s43
      %p47 = pneg %p41
      %p48 = scmp.eq.s32.totalorder %s11, 1
      %p49 = por %p47, %p48
      %p50 = scmp.ne.s32.totalorder %s42, %s45
      %p51 = scmp.eq.s32.totalorder %s11, 0
      %p52 = por %p50, %p51
      %p53 = scmp.ne.s32.totalorder %s42, %s45
      %p54 = scmp.eq.s32.totalorder %s16, 1
      %p55 = por %p53, %p54
      %p56 = scmp.ne.s32.totalorder %s45, %s46
      %p57 = scmp.eq.s32.totalorder %s16, 0
      %p58 = por %p56, %p57
      %p59 = scmp.ne.s32.totalorder %s45, %s46
      %p60 = scmp.eq.s32.totalorder %s17, 1
      %p61 = por %p59, %p60
      %p63 = scmp.ne.s32.totalorder %s46, %s62
      %p64 = scmp.eq.s32.totalorder %s17, 0
      %p65 = por %p63, %p64
      %s66 = ssub.s32 %s20, %s29
      %s67 = ssub.s32 %s19, %s33
      %s68 = sor.u32 %s66, %s67
      %p69 = scmp.eq.s32.totalorder %s68, 0
      %s71 = sadd.s32 %s70, 1
      %s72 = scalar_select %p69, %s70, %s71
      %p75 = pneg %p69
      %p76 = scmp.eq.s32.totalorder %s11, 1
      %p77 = por %p75, %p76
      %p78 = scmp.ne.s32.totalorder %s70, %s73
      %p79 = scmp.eq.s32.totalorder %s11, 0
      %p80 = por %p78, %p79
      %p81 = scmp.ne.s32.totalorder %s70, %s73
      %p82 = scmp.eq.s32.totalorder %s16, 1
      %p83 = por %p81, %p82
      %p84 = scmp.ne.s32.totalorder %s73, %s74
      %p85 = scmp.eq.s32.totalorder %s16, 0
      %p86 = por %p84, %p85
      %p87 = scmp.ne.s32.totalorder %s73, %s74
      %p88 = scmp.eq.s32.totalorder %s17, 1
      %p89 = por %p87, %p88
      %p91 = scmp.ne.s32.totalorder %s74, %s90
      %p92 = scmp.eq.s32.totalorder %s17, 0
      %p93 = por %p91, %p92
      %s94 = ssub.s32 %s18, %s37
      %s95 = ssub.s32 %s19, %s33
      %s96 = sor.u32 %s94, %s95
      %p97 = scmp.eq.s32.totalorder %s96, 0
      %s99 = sadd.s32 %s98, 1
      %s100 = scalar_select %p97, %s98, %s99
      %p103 = pneg %p97
      %p104 = scmp.eq.s32.totalorder %s11, 1
      %p105 = por %p103, %p104
      %p106 = scmp.ne.s32.totalorder %s98, %s101
      %p107 = scmp.eq.s32.totalorder %s11, 0
      %p108 = por %p106, %p107
      %p109 = scmp.ne.s32.totalorder %s98, %s101
      %p110 = scmp.eq.s32.totalorder %s16, 1
      %p111 = por %p109, %p110
      %p112 = scmp.ne.s32.totalorder %s101, %s102
      %p113 = scmp.eq.s32.totalorder %s16, 0
      %p114 = por %p112, %p113
      %p115 = scmp.ne.s32.totalorder %s101, %s102
      %p116 = scmp.eq.s32.totalorder %s17, 1
      %p117 = por %p115, %p116
      %p119 = scmp.ne.s32.totalorder %s102, %s118
      %p120 = scmp.eq.s32.totalorder %s17, 0
      %p121 = por %p119, %p120
      %p122 = scmp.le.s32.totalorder 1, %s11
      %p123 = scmp.lt.s32.totalorder %s11, 3
      %p124 = pnand %p122, %p123
      %p125 = pneg %p124
      // Predicated region
      $region9: #{a_call__.5} parent=5 // pred_check
        _
      $region10: #{a_call__.5} parent=5 // pred_check_branch
        %127 = sbr.rel (%p124) target = $region12
      $region11: #{a_call__.5} parent=5 // pred_region
        %s128 = ssub.s32 %s11, 1
        // Predicated region
        $region13: #{a_call__.5} parent=11 // pred_check
          %p129 = pneg %p86
        $region14: #{a_call__.5} parent=11 // pred_check_branch
          %131 = sbr.rel (%p129) target = $region16
        $region15: #{a_call__.5} parent=11 // pred_region
          %p132 = scmp.lt.s32.totalorder %s23, 0
          %s133 = scalar_select %p132, %s23, 0
          %p134 = scmp.lt.s32.totalorder %s22, 0
          %s135 = scalar_select %p134, %s22, 0
          %s136 = sadd.s32 %s135, %s133
          %s137 = smul.addr %s136, 4
          %s138 = scalar_lea.vmem %s1, %s137
        $region16: #{a_call__.5} parent=11 // pred_fallthru
          _
      $region12: #{a_call__.5} parent=5 // pred_fallthru
        _
      %p139 = scmp.lt.s32.totalorder %s11, 2
      // Predicated region
      $region17: #{a_call__.5} parent=5 // pred_check
        %p140 = pneg %p139
      $region18: #{a_call__.5} parent=5 // pred_check_branch
        %142 = sbr.rel (%p140) target = $region20
      $region19: #{a_call__.5} parent=5 // pred_region
        // Predicated region
        $region21: #{a_call__.5} parent=19 // pred_check
          %p143 = pneg %p52
        $region22: #{a_call__.5} parent=19 // pred_check_branch
          %145 = sbr.rel (%p143) target = $region24
        $region23: #{a_call__.5} parent=19 // pred_region
          %p146 = scmp.lt.s32.totalorder %s18, 1
          %s147 = scalar_select %p146, %s18, 1
          %p148 = scmp.lt.s32.totalorder %s20, 0
          %s149 = scalar_select %p148, %s20, 0
          %s150 = smul.addr %s147, 72
          %s151 = sadd.s32 %s149, %s150
          %s152 = smul.addr %s151, 4
          %s153 = scalar_lea.vmem %s0, %s152
        $region24: #{a_call__.5} parent=19 // pred_fallthru
          _
      $region20: #{a_call__.5} parent=5 // pred_fallthru
        _
      %p154 = scmp.le.s32.totalorder 1, %s11
      %p155 = scmp.lt.s32.totalorder %s11, 3
      %p156 = pnand %p154, %p155
      %p157 = pneg %p156
      // Predicated region
      $region25: #{a_call__.5} parent=5 // pred_check
        _
      $region26: #{a_call__.5} parent=5 // pred_check_branch
        %159 = sbr.rel (%p156) target = $region28
      $region27: #{a_call__.5} parent=5 // pred_region
        %s160 = ssub.s32 %s11, 1
        %p161 = scmp.lt.s32.totalorder %s21, 1
        %s162 = scalar_select %p161, %s21, 1
        %p163 = scmp.lt.s32.totalorder %s23, 0
        %s164 = scalar_select %p163, %s23, 0
        %s165 = smul.addr %s162, 72
        %s166 = sadd.s32 %s164, %s165
        %s167 = smul.addr %s166, 4
        %s168 = scalar_lea.vmem %s0, %s167
        %p169 = pneg %p58
        %p170 = pneg %p55
        %p171 = scmp.lt.s32.totalorder %s23, 0
        %s172 = scalar_select %p171, %s23, 0
        %p173 = scmp.lt.s32.totalorder %s22, 0
        %s174 = scalar_select %p173, %s22, 0
        %s175 = sadd.s32 %s174, %s172
        %s176 = smul.addr %s175, 4
        %s177 = scalar_lea.vmem %s1, %s176
        %p178 = pneg %p86
        %p179 = pneg %p83
        %p180 = pneg %p114
        %p181 = pneg %p111
        %s182 = sand.u32 %s101, 1
        %s183 = scalar_lea.sflag [#allocation4], %s182
        %s184 = sand.u32 %s101, 1
        %s185 = smul.addr %s184, 64
        %s186 = scalar_lea.vmem [#allocation3], %s185
        %p187 = scmp.lt.s32.totalorder %s21, 1
        %s188 = scalar_select %p187, %s21, 1
        %p189 = scmp.lt.s32.totalorder %s23, 0
        %s190 = scalar_select %p189, %s23, 0
        %s191 = smul.addr %s188, 72
        %s192 = sadd.s32 %s190, %s191
        %s193 = smul.addr %s192, 4
        %s194 = scalar_lea.vmem %s0, %s193
        %p195 = scmp.lt.s32.totalorder %s23, 0
        %s196 = scalar_select %p195, %s23, 0
        %p197 = scmp.lt.s32.totalorder %s22, 0
        %s198 = scalar_select %p197, %s22, 0
        %s199 = sadd.s32 %s198, %s196
        %s200 = smul.addr %s199, 4
        %s201 = scalar_lea.vmem %s1, %s200
        %p203 = scmp.eq.s32.totalorder %s23, 0
        // Predicated region
        $region29: #{a_call__.5} parent=27 // pred_check
          %p204 = pneg %p203
        $region30: #{a_call__.5} parent=27 // pred_check_branch
          %206 = sbr.rel (%p204) target = $region32
        $region31: #{a_call__.5} parent=27 // pred_region
          %vm207 = vcmask 130048
          %208 = vst.msk [vmem:[#allocation2] sm:$0xff] %vm207, 0.0
          %209 = vst.msk [vmem:[#allocation2 + $0x8] sm:$0xff] %vm207, 0.0
          %210 = vst.msk [vmem:[#allocation2 + $0x10] sm:$0xff] %vm207, 0.0
          %211 = vst.msk [vmem:[#allocation2 + $0x18] sm:$0xff] %vm207, 0.0
          %212 = vst.msk [vmem:[#allocation2 + $0x20] sm:$0xff] %vm207, 0.0
          %213 = vst.msk [vmem:[#allocation2 + $0x28] sm:$0xff] %vm207, 0.0
          %214 = vst.msk [vmem:[#allocation2 + $0x30] sm:$0xff] %vm207, 0.0
          %215 = vst.msk [vmem:[#allocation2 + $0x38] sm:$0xff] %vm207, 0.0
        $region32: #{a_call__.5} parent=27 // pred_fallthru
          _
        %v216 = vld [vmem:[#allocation2] sm:$0xff]
        %v217 = vld [vmem:[#allocation2 + $0x8] sm:$0xff]
        %v218 = vld [vmem:[#allocation2 + $0x10] sm:$0xff]
        %v219 = vld [vmem:[#allocation2 + $0x18] sm:$0xff]
        %v220 = vld [vmem:[#allocation2 + $0x20] sm:$0xff]
        %v221 = vld [vmem:[#allocation2 + $0x28] sm:$0xff]
        %v222 = vld [vmem:[#allocation2 + $0x30] sm:$0xff]
        %v223 = vld [vmem:[#allocation2 + $0x38] sm:$0xff]
        %v224 = vld [vmem:[%s194] sm:$0xf]
        %v225 = vld [vmem:[%s194 + $0x8] sm:$0xf]
        %v226 = vld [vmem:[%s194 + $0x10] sm:$0xf]
        %v227 = vld [vmem:[%s194 + $0x18] sm:$0xf]
        %v228 = vld [vmem:[%s194 + $0x20] sm:$0xf]
        %v229 = vld [vmem:[%s194 + $0x28] sm:$0xf]
        %v230 = vld [vmem:[%s194 + $0x30] sm:$0xf]
        %v231 = vld [vmem:[%s194 + $0x38] sm:$0xf]
        %v232 = vld [vmem:[%s201] sm:$0xf]
        %v241 = vunpack.c.l.b16 %v224
        %v242 = vunpack.c.l.b16 %v225
        %v243 = vunpack.c.l.b16 %v226
        %v244 = vunpack.c.l.b16 %v227
        %v245 = vunpack.c.l.b16 %v228
        %v246 = vunpack.c.l.b16 %v229
        %v247 = vunpack.c.l.b16 %v230
        %v248 = vunpack.c.l.b16 %v231
        %v249 = vpack.c.b16 %v242, %v241
        %v250 = vpack.c.b16 %v244, %v243
        %v251 = vpack.c.b16 %v246, %v245
        %v252 = vpack.c.b16 %v248, %v247
        %vm253 = vcmask 64512
        %v255 = vsel %vm253, %v249, 0
        %v258 = vsel %vm253, %v250, 0
        %v261 = vsel %vm253, %v251, 0
        %v264 = vsel %vm253, %v252, 0
        %vm266 = vcmask 1043456
        %v268 = vsel %vm266, %v232, 0
        %270 = vmatprep.subr.bf16.mxu0 0
        %271 = vmatpush1.bf16.msra.mxu0 %v268
        %272 = vmatprep.subr.bf16.mxu0 0
        %273 = vmatpush1.bf16.msra.mxu0 0
        %274 = vmatprep.subr.bf16.mxu0 0
        %275 = vmatpush1.bf16.msra.mxu0 0
        %276 = vmatprep.subr.bf16.mxu0 0
        %277 = vmatpush1.bf16.msra.mxu0 0
        %278 = vmatprep.subr.bf16.mxu0 0
        %279 = vmatpush1.bf16.msra.mxu0 0
        %280 = vmatprep.subr.bf16.mxu0 0
        %281 = vmatpush1.bf16.msra.mxu0 0
        %282 = vmatprep.subr.bf16.mxu0 0
        %283 = vmatpush1.bf16.msra.mxu0 0
        %284 = vmatprep.subr.bf16.mxu0 0
        %285 = vmatpush1.bf16.msra.mxu0 0
        %286 = vmatprep.subr.bf16.mxu0 0
        %287 = vmatpush1.bf16.msra.mxu0 0
        %288 = vmatprep.subr.bf16.mxu0 0
        %289 = vmatpush1.bf16.msra.mxu0 0
        %290 = vmatprep.subr.bf16.mxu0 0
        %291 = vmatpush1.bf16.msra.mxu0 0
        %292 = vmatprep.subr.bf16.mxu0 0
        %293 = vmatpush1.bf16.msra.mxu0 0
        %294 = vmatprep.subr.bf16.mxu0 0
        %295 = vmatpush1.bf16.msra.mxu0 0
        %296 = vmatprep.subr.bf16.mxu0 0
        %297 = vmatpush1.bf16.msra.mxu0 0
        %298 = vmatprep.subr.bf16.mxu0 0
        %299 = vmatpush1.bf16.msra.mxu0 0
        %300 = vmatprep.subr.bf16.mxu0 0
        %301 = vmatpush1.bf16.msra.mxu0 0
        %302 = vmatprep.mubr.bf16.mxu0 0
        %303 = vmatmul.mubr.bf16.gmra.mrb[0].mxu0 %v255
        %v304 = vpop.f32.mrb[0].mxu0
        %v305 = vadd.f32 0.0, %v304
        %v306 = vpop.f32.mrb[0].mxu0
        %v307 = vpop.f32.mrb[0].mxu0
        %v308 = vadd.f32 0.0, %v307
        %v309 = vpop.f32.mrb[0].mxu0
        %310 = vmatprep.mubr.bf16.mxu0 0
        %311 = vmatmul.mubr.bf16.gmra.mrb[0].mxu0 %v258
        %v312 = vpop.f32.mrb[0].mxu0
        %v313 = vadd.f32 0.0, %v312
        %v314 = vpop.f32.mrb[0].mxu0
        %v315 = vpop.f32.mrb[0].mxu0
        %v316 = vadd.f32 0.0, %v315
        %v317 = vpop.f32.mrb[0].mxu0
        %318 = vmatprep.mubr.bf16.mxu0 0
        %319 = vmatmul.mubr.bf16.gmra.mrb[0].mxu0 %v261
        %v320 = vpop.f32.mrb[0].mxu0
        %v321 = vadd.f32 0.0, %v320
        %v322 = vpop.f32.mrb[0].mxu0
        %v323 = vpop.f32.mrb[0].mxu0
        %v324 = vadd.f32 0.0, %v323
        %v325 = vpop.f32.mrb[0].mxu0
        %326 = vmatprep.mubr.bf16.mxu0 0
        %327 = vmatmul.mubr.bf16.gmra.mrb[0].mxu0 %v264
        %v328 = vpop.f32.mrb[0].mxu0
        %v329 = vadd.f32 0.0, %v328
        %v330 = vpop.f32.mrb[0].mxu0
        %v331 = vpop.f32.mrb[0].mxu0
        %v332 = vadd.f32 0.0, %v331
        %v333 = vpop.f32.mrb[0].mxu0
        %334 = vdwg.mxu0
        %v335 = vadd.f32 %v216, %v305
        %v336 = vadd.f32 %v217, %v308
        %v337 = vadd.f32 %v218, %v313
        %v338 = vadd.f32 %v219, %v316
        %v339 = vadd.f32 %v220, %v321
        %v340 = vadd.f32 %v221, %v324
        %v341 = vadd.f32 %v222, %v329
        %v342 = vadd.f32 %v223, %v332
        %s343 = scalar_lea.vmem %s194, 72
        %v344 = vld [vmem:[%s343] sm:$0xf]
        %v345 = vld [vmem:[%s343 + $0x8] sm:$0xf]
        %v346 = vld [vmem:[%s343 + $0x10] sm:$0xf]
        %v347 = vld [vmem:[%s343 + $0x18] sm:$0xf]
        %v348 = vld [vmem:[%s343 + $0x20] sm:$0xf]
        %v349 = vld [vmem:[%s343 + $0x28] sm:$0xf]
        %v350 = vld [vmem:[%s343 + $0x30] sm:$0xf]
        %v351 = vld [vmem:[%s343 + $0x38] sm:$0xf]
        %s352 = scalar_lea.vmem %s201, 4
        %v353 = vld [vmem:[%s352] sm:$0xf]
        %v362 = vunpack.c.l.b16 %v344
        %v363 = vunpack.c.l.b16 %v345
        %v364 = vunpack.c.l.b16 %v346
        %v365 = vunpack.c.l.b16 %v347
        %v366 = vunpack.c.l.b16 %v348
        %v367 = vunpack.c.l.b16 %v349
        %v368 = vunpack.c.l.b16 %v350
        %v369 = vunpack.c.l.b16 %v351
        %v370 = vpack.c.b16 %v363, %v362
        %v371 = vpack.c.b16 %v365, %v364
        %v372 = vpack.c.b16 %v367, %v366
        %v373 = vpack.c.b16 %v369, %v368
        %v375 = vsel %vm253, %v370, 0
        %v378 = vsel %vm253, %v371, 0
        %v381 = vsel %vm253, %v372, 0
        %v384 = vsel %vm253, %v373, 0
        %v387 = vsel %vm266, %v353, 0
        %389 = vmatprep.subr.bf16.mxu0 0
        %390 = vmatpush1.bf16.msra.mxu0 %v387
        %391 = vmatprep.subr.bf16.mxu0 0
        %392 = vmatpush1.bf16.msra.mxu0 0
        %393 = vmatprep.subr.bf16.mxu0 0
        %394 = vmatpush1.bf16.msra.mxu0 0
        %395 = vmatprep.subr.bf16.mxu0 0
        %396 = vmatpush1.bf16.msra.mxu0 0
        %397 = vmatprep.subr.bf16.mxu0 0
        %398 = vmatpush1.bf16.msra.mxu0 0
        %399 = vmatprep.subr.bf16.mxu0 0
        %400 = vmatpush1.bf16.msra.mxu0 0
        %401 = vmatprep.subr.bf16.mxu0 0
        %402 = vmatpush1.bf16.msra.mxu0 0
        %403 = vmatprep.subr.bf16.mxu0 0
        %404 = vmatpush1.bf16.msra.mxu0 0
        %405 = vmatprep.subr.bf16.mxu0 0
        %406 = vmatpush1.bf16.msra.mxu0 0
        %407 = vmatprep.subr.bf16.mxu0 0
        %408 = vmatpush1.bf16.msra.mxu0 0
        %409 = vmatprep.subr.bf16.mxu0 0
        %410 = vmatpush1.bf16.msra.mxu0 0
        %411 = vmatprep.subr.bf16.mxu0 0
        %412 = vmatpush1.bf16.msra.mxu0 0
        %413 = vmatprep.subr.bf16.mxu0 0
        %414 = vmatpush1.bf16.msra.mxu0 0
        %415 = vmatprep.subr.bf16.mxu0 0
        %416 = vmatpush1.bf16.msra.mxu0 0
        %417 = vmatprep.subr.bf16.mxu0 0
        %418 = vmatpush1.bf16.msra.mxu0 0
        %419 = vmatprep.subr.bf16.mxu0 0
        %420 = vmatpush1.bf16.msra.mxu0 0
        %421 = vmatprep.mubr.bf16.mxu0 0
        %422 = vmatmul.mubr.bf16.gmra.mrb[0].mxu0 %v375
        %v423 = vpop.f32.mrb[0].mxu0
        %v424 = vadd.f32 0.0, %v423
        %v425 = vpop.f32.mrb[0].mxu0
        %v426 = vpop.f32.mrb[0].mxu0
        %v427 = vadd.f32 0.0, %v426
        %v428 = vpop.f32.mrb[0].mxu0
        %429 = vmatprep.mubr.bf16.mxu0 0
        %430 = vmatmul.mubr.bf16.gmra.mrb[0].mxu0 %v378
        %v431 = vpop.f32.mrb[0].mxu0
        %v432 = vadd.f32 0.0, %v431
        %v433 = vpop.f32.mrb[0].mxu0
        %v434 = vpop.f32.mrb[0].mxu0
        %v435 = vadd.f32 0.0, %v434
        %v436 = vpop.f32.mrb[0].mxu0
        %437 = vmatprep.mubr.bf16.mxu0 0
        %438 = vmatmul.mubr.bf16.gmra.mrb[0].mxu0 %v381
        %v439 = vpop.f32.mrb[0].mxu0
        %v440 = vadd.f32 0.0, %v439
        %v441 = vpop.f32.mrb[0].mxu0
        %v442 = vpop.f32.mrb[0].mxu0
        %v443 = vadd.f32 0.0, %v442
        %v444 = vpop.f32.mrb[0].mxu0
        %445 = vmatprep.mubr.bf16.mxu0 0
        %446 = vmatmul.mubr.bf16.gmra.mrb[0].mxu0 %v384
        %v447 = vpop.f32.mrb[0].mxu0
        %v448 = vadd.f32 0.0, %v447
        %v449 = vpop.f32.mrb[0].mxu0
        %v450 = vpop.f32.mrb[0].mxu0
        %v451 = vadd.f32 0.0, %v450
        %v452 = vpop.f32.mrb[0].mxu0
        %453 = vdwg.mxu0
        %v454 = vadd.f32 %v335, %v424
        %v455 = vadd.f32 %v336, %v427
        %v456 = vadd.f32 %v337, %v432
        %v457 = vadd.f32 %v338, %v435
        %v458 = vadd.f32 %v339, %v440
        %v459 = vadd.f32 %v340, %v443
        %v460 = vadd.f32 %v341, %v448
        %v461 = vadd.f32 %v342, %v451
        %v462 = vld [vmem:[%s194] sm:$0xf]
        %v463 = vld [vmem:[%s194 + $0x4] sm:$0x1]
        %v464 = vld [vmem:[%s194 + $0x8] sm:$0xf]
        %v465 = vld [vmem:[%s194 + $0xc] sm:$0x1]
        %v466 = vld [vmem:[%s194 + $0x10] sm:$0xf]
        %v467 = vld [vmem:[%s194 + $0x14] sm:$0x1]
        %v468 = vld [vmem:[%s194 + $0x18] sm:$0xf]
        %v469 = vld [vmem:[%s194 + $0x1c] sm:$0x1]
        %v470 = vld [vmem:[%s194 + $0x20] sm:$0xf]
        %v471 = vld [vmem:[%s194 + $0x24] sm:$0x1]
        %v472 = vld [vmem:[%s194 + $0x28] sm:$0xf]
        %v473 = vld [vmem:[%s194 + $0x2c] sm:$0x1]
        %v474 = vld [vmem:[%s194 + $0x30] sm:$0xf]
        %v475 = vld [vmem:[%s194 + $0x34] sm:$0x1]
        %v476 = vld [vmem:[%s194 + $0x38] sm:$0xf]
        %v477 = vld [vmem:[%s194 + $0x3c] sm:$0x1]
        %vm478 = vsmask.f32 3328
        %vm479 = vsmask.f32 7440
        %vm480 = vmor %vm478, %vm479
        %v482 = vshrl.u32 %v462, 16
        %v484 = vrot.slane %v482, 4
        %v485 = vshll.u32 %v462, 16
        %v487 = vrot.slane %v485, 5
        %v488 = vor.u32 %v484, %v487
        %v489 = vrot.slane %v488, 4
        %v491 = vshll.u32 %v463, 16
        %v493 = vrot.slane %v491, 5
        %v494 = vsel %vm480, %v489, %v493
        %v496 = vshrl.u32 %v464, 16
        %v498 = vrot.slane %v496, 4
        %v499 = vshll.u32 %v464, 16
        %v501 = vrot.slane %v499, 5
        %v502 = vor.u32 %v498, %v501
        %v503 = vrot.slane %v502, 4
        %v505 = vshll.u32 %v465, 16
        %v507 = vrot.slane %v505, 5
        %v508 = vsel %vm480, %v503, %v507
        %v510 = vshrl.u32 %v466, 16
        %v512 = vrot.slane %v510, 4
        %v513 = vshll.u32 %v466, 16
        %v515 = vrot.slane %v513, 5
        %v516 = vor.u32 %v512, %v515
        %v517 = vrot.slane %v516, 4
        %v519 = vshll.u32 %v467, 16
        %v521 = vrot.slane %v519, 5
        %v522 = vsel %vm480, %v517, %v521
        %v524 = vshrl.u32 %v468, 16
        %v526 = vrot.slane %v524, 4
        %v527 = vshll.u32 %v468, 16
        %v529 = vrot.slane %v527, 5
        %v530 = vor.u32 %v526, %v529
        %v531 = vrot.slane %v530, 4
        %v533 = vshll.u32 %v469, 16
        %v535 = vrot.slane %v533, 5
        %v536 = vsel %vm480, %v531, %v535
        %v538 = vshrl.u32 %v470, 16
        %v540 = vrot.slane %v538, 4
        %v541 = vshll.u32 %v470, 16
        %v543 = vrot.slane %v541, 5
        %v544 = vor.u32 %v540, %v543
        %v545 = vrot.slane %v544, 4
        %v547 = vshll.u32 %v471, 16
        %v549 = vrot.slane %v547, 5
        %v550 = vsel %vm480, %v545, %v549
        %v552 = vshrl.u32 %v472, 16
        %v554 = vrot.slane %v552, 4
        %v555 = vshll.u32 %v472, 16
        %v557 = vrot.slane %v555, 5
        %v558 = vor.u32 %v554, %v557
        %v559 = vrot.slane %v558, 4
        %v561 = vshll.u32 %v473, 16
        %v563 = vrot.slane %v561, 5
        %v564 = vsel %vm480, %v559, %v563
        %v566 = vshrl.u32 %v474, 16
        %v568 = vrot.slane %v566, 4
        %v569 = vshll.u32 %v474, 16
        %v571 = vrot.slane %v569, 5
        %v572 = vor.u32 %v568, %v571
        %v573 = vrot.slane %v572, 4
        %v575 = vshll.u32 %v475, 16
        %v577 = vrot.slane %v575, 5
        %v578 = vsel %vm480, %v573, %v577
        %v580 = vshrl.u32 %v476, 16
        %v582 = vrot.slane %v580, 4
        %v583 = vshll.u32 %v476, 16
        %v585 = vrot.slane %v583, 5
        %v586 = vor.u32 %v582, %v585
        %v587 = vrot.slane %v586, 4
        %v589 = vshll.u32 %v477, 16
        %v591 = vrot.slane %v589, 5
        %v592 = vsel %vm480, %v587, %v591
        %s593 = scalar_lea.vmem %s201, 8
        %v594 = vld [vmem:[%s593] sm:$0xf]
        %v595 = vunpack.c.l.b16 %v494
        %v596 = vunpack.c.l.b16 %v508
        %v597 = vunpack.c.l.b16 %v522
        %v598 = vunpack.c.l.b16 %v536
        %v599 = vunpack.c.l.b16 %v550
        %v600 = vunpack.c.l.b16 %v564
        %v601 = vunpack.c.l.b16 %v578
        %v602 = vunpack.c.l.b16 %v592
        %v603 = vpack.c.b16 %v596, %v595
        %v604 = vpack.c.b16 %v598, %v597
        %v605 = vpack.c.b16 %v600, %v599
        %v606 = vpack.c.b16 %v602, %v601
        %v608 = vsel %vm253, %v603, 0
        %v611 = vsel %vm253, %v604, 0
        %v614 = vsel %vm253, %v605, 0
        %v617 = vsel %vm253, %v606, 0
        %v620 = vsel %vm266, %v594, 0
        %622 = vmatprep.subr.bf16.mxu0 0
        %623 = vmatpush1.bf16.msra.mxu0 %v620
        %624 = vmatprep.subr.bf16.mxu0 0
        %625 = vmatpush1.bf16.msra.mxu0 0
        %626 = vmatprep.subr.bf16.mxu0 0
        %627 = vmatpush1.bf16.msra.mxu0 0
        %628 = vmatprep.subr.bf16.mxu0 0
        %629 = vmatpush1.bf16.msra.mxu0 0
        %630 = vmatprep.subr.bf16.mxu0 0
        %631 = vmatpush1.bf16.msra.mxu0 0
        %632 = vmatprep.subr.bf16.mxu0 0
        %633 = vmatpush1.bf16.msra.mxu0 0
        %634 = vmatprep.subr.bf16.mxu0 0
        %635 = vmatpush1.bf16.msra.mxu0 0
        %636 = vmatprep.subr.bf16.mxu0 0
        %637 = vmatpush1.bf16.msra.mxu0 0
        %638 = vmatprep.subr.bf16.mxu0 0
        %639 = vmatpush1.bf16.msra.mxu0 0
        %640 = vmatprep.subr.bf16.mxu0 0
        %641 = vmatpush1.bf16.msra.mxu0 0
        %642 = vmatprep.subr.bf16.mxu0 0
        %643 = vmatpush1.bf16.msra.mxu0 0
        %644 = vmatprep.subr.bf16.mxu0 0
        %645 = vmatpush1.bf16.msra.mxu0 0
        %646 = vmatprep.subr.bf16.mxu0 0
        %647 = vmatpush1.bf16.msra.mxu0 0
        %648 = vmatprep.subr.bf16.mxu0 0
        %649 = vmatpush1.bf16.msra.mxu0 0
        %650 = vmatprep.subr.bf16.mxu0 0
        %651 = vmatpush1.bf16.msra.mxu0 0
        %652 = vmatprep.subr.bf16.mxu0 0
        %653 = vmatpush1.bf16.msra.mxu0 0
        %654 = vmatprep.mubr.bf16.mxu0 0
        %655 = vmatmul.mubr.bf16.gmra.mrb[0].mxu0 %v608
        %v656 = vpop.f32.mrb[0].mxu0
        %v657 = vadd.f32 0.0, %v656
        %v658 = vpop.f32.mrb[0].mxu0
        %v659 = vpop.f32.mrb[0].mxu0
        %v660 = vadd.f32 0.0, %v659
        %v661 = vpop.f32.mrb[0].mxu0
        %662 = vmatprep.mubr.bf16.mxu0 0
        %663 = vmatmul.mubr.bf16.gmra.mrb[0].mxu0 %v611
        %v664 = vpop.f32.mrb[0].mxu0
        %v665 = vadd.f32 0.0, %v664
        %v666 = vpop.f32.mrb[0].mxu0
        %v667 = vpop.f32.mrb[0].mxu0
        %v668 = vadd.f32 0.0, %v667
        %v669 = vpop.f32.mrb[0].mxu0
        %670 = vmatprep.mubr.bf16.mxu0 0
        %671 = vmatmul.mubr.bf16.gmra.mrb[0].mxu0 %v614
        %v672 = vpop.f32.mrb[0].mxu0
        %v673 = vadd.f32 0.0, %v672
        %v674 = vpop.f32.mrb[0].mxu0
        %v675 = vpop.f32.mrb[0].mxu0
        %v676 = vadd.f32 0.0, %v675
        %v677 = vpop.f32.mrb[0].mxu0
        %678 = vmatprep.mubr.bf16.mxu0 0
        %679 = vmatmul.mubr.bf16.gmra.mrb[0].mxu0 %v617
        %v680 = vpop.f32.mrb[0].mxu0
        %v681 = vadd.f32 0.0, %v680
        %v682 = vpop.f32.mrb[0].mxu0
        %v683 = vpop.f32.mrb[0].mxu0
        %v684 = vadd.f32 0.0, %v683
        %v685 = vpop.f32.mrb[0].mxu0
        %686 = vdwg.mxu0
        %v687 = vadd.f32 %v454, %v657
        %v688 = vadd.f32 %v455, %v660
        %v689 = vadd.f32 %v456, %v665
        %v690 = vadd.f32 %v457, %v668
        %v691 = vadd.f32 %v458, %v673
        %v692 = vadd.f32 %v459, %v676
        %v693 = vadd.f32 %v460, %v681
        %v694 = vadd.f32 %v461, %v684
        %s695 = scalar_lea.vmem %s194, 144
        %v696 = vld [vmem:[%s695] sm:$0xf]
        %v697 = vld [vmem:[%s695 + $0x8] sm:$0xf]
        %v698 = vld [vmem:[%s695 + $0x10] sm:$0xf]
        %v699 = vld [vmem:[%s695 + $0x18] sm:$0xf]
        %v700 = vld [vmem:[%s695 + $0x20] sm:$0xf]
        %v701 = vld [vmem:[%s695 + $0x28] sm:$0xf]
        %v702 = vld [vmem:[%s695 + $0x30] sm:$0xf]
        %v703 = vld [vmem:[%s695 + $0x38] sm:$0xf]
        %s704 = scalar_lea.vmem %s201, 12
        %v705 = vld [vmem:[%s704] sm:$0xf]
        %v714 = vunpack.c.l.b16 %v696
        %v715 = vunpack.c.l.b16 %v697
        %v716 = vunpack.c.l.b16 %v698
        %v717 = vunpack.c.l.b16 %v699
        %v718 = vunpack.c.l.b16 %v700
        %v719 = vunpack.c.l.b16 %v701
        %v720 = vunpack.c.l.b16 %v702
        %v721 = vunpack.c.l.b16 %v703
        %v722 = vpack.c.b16 %v715, %v714
        %v723 = vpack.c.b16 %v717, %v716
        %v724 = vpack.c.b16 %v719, %v718
        %v725 = vpack.c.b16 %v721, %v720
        %v727 = vsel %vm253, %v722, 0
        %v730 = vsel %vm253, %v723, 0
        %v733 = vsel %vm253, %v724, 0
        %v736 = vsel %vm253, %v725, 0
        %v739 = vsel %vm266, %v705, 0
        %741 = vmatprep.subr.bf16.mxu0 0
        %742 = vmatpush1.bf16.msra.mxu0 %v739
        %743 = vmatprep.subr.bf16.mxu0 0
        %744 = vmatpush1.bf16.msra.mxu0 0
        %745 = vmatprep.subr.bf16.mxu0 0
        %746 = vmatpush1.bf16.msra.mxu0 0
        %747 = vmatprep.subr.bf16.mxu0 0
        %748 = vmatpush1.bf16.msra.mxu0 0
        %749 = vmatprep.subr.bf16.mxu0 0
        %750 = vmatpush1.bf16.msra.mxu0 0
        %751 = vmatprep.subr.bf16.mxu0 0
        %752 = vmatpush1.bf16.msra.mxu0 0
        %753 = vmatprep.subr.bf16.mxu0 0
        %754 = vmatpush1.bf16.msra.mxu0 0
        %755 = vmatprep.subr.bf16.mxu0 0
        %756 = vmatpush1.bf16.msra.mxu0 0
        %757 = vmatprep.subr.bf16.mxu0 0
        %758 = vmatpush1.bf16.msra.mxu0 0
        %759 = vmatprep.subr.bf16.mxu0 0
        %760 = vmatpush1.bf16.msra.mxu0 0
        %761 = vmatprep.subr.bf16.mxu0 0
        %762 = vmatpush1.bf16.msra.mxu0 0
        %763 = vmatprep.subr.bf16.mxu0 0
        %764 = vmatpush1.bf16.msra.mxu0 0
        %765 = vmatprep.subr.bf16.mxu0 0
        %766 = vmatpush1.bf16.msra.mxu0 0
        %767 = vmatprep.subr.bf16.mxu0 0
        %768 = vmatpush1.bf16.msra.mxu0 0
        %769 = vmatprep.subr.bf16.mxu0 0
        %770 = vmatpush1.bf16.msra.mxu0 0
        %771 = vmatprep.subr.bf16.mxu0 0
        %772 = vmatpush1.bf16.msra.mxu0 0
        %773 = vmatprep.mubr.bf16.mxu0 0
        %774 = vmatmul.mubr.bf16.gmra.mrb[0].mxu0 %v727
        %v775 = vpop.f32.mrb[0].mxu0
        %v776 = vadd.f32 0.0, %v775
        %v777 = vpop.f32.mrb[0].mxu0
        %v778 = vpop.f32.mrb[0].mxu0
        %v779 = vadd.f32 0.0, %v778
        %v780 = vpop.f32.mrb[0].mxu0
        %781 = vmatprep.mubr.bf16.mxu0 0
        %782 = vmatmul.mubr.bf16.gmra.mrb[0].mxu0 %v730
        %v783 = vpop.f32.mrb[0].mxu0
        %v784 = vadd.f32 0.0, %v783
        %v785 = vpop.f32.mrb[0].mxu0
        %v786 = vpop.f32.mrb[0].mxu0
        %v787 = vadd.f32 0.0, %v786
        %v788 = vpop.f32.mrb[0].mxu0
        %789 = vmatprep.mubr.bf16.mxu0 0
        %790 = vmatmul.mubr.bf16.gmra.mrb[0].mxu0 %v733
        %v791 = vpop.f32.mrb[0].mxu0
        %v792 = vadd.f32 0.0, %v791
        %v793 = vpop.f32.mrb[0].mxu0
        %v794 = vpop.f32.mrb[0].mxu0
        %v795 = vadd.f32 0.0, %v794
        %v796 = vpop.f32.mrb[0].mxu0
        %797 = vmatprep.mubr.bf16.mxu0 0
        %798 = vmatmul.mubr.bf16.gmra.mrb[0].mxu0 %v736
        %v799 = vpop.f32.mrb[0].mxu0
        %v800 = vadd.f32 0.0, %v799
        %v801 = vpop.f32.mrb[0].mxu0
        %v802 = vpop.f32.mrb[0].mxu0
        %v803 = vadd.f32 0.0, %v802
        %v804 = vpop.f32.mrb[0].mxu0
        %805 = vdwg.mxu0
        %v806 = vadd.f32 %v687, %v776
        %v807 = vadd.f32 %v688, %v779
        %v808 = vadd.f32 %v689, %v784
        %v809 = vadd.f32 %v690, %v787
        %v810 = vadd.f32 %v691, %v792
        %v811 = vadd.f32 %v692, %v795
        %v812 = vadd.f32 %v693, %v800
        %v813 = vadd.f32 %v694, %v803
        %s814 = scalar_lea.vmem %s194, 216
        %v815 = vld [vmem:[%s814] sm:$0xf]
        %v816 = vld [vmem:[%s814 + $0x8] sm:$0xf]
        %v817 = vld [vmem:[%s814 + $0x10] sm:$0xf]
        %v818 = vld [vmem:[%s814 + $0x18] sm:$0xf]
        %v819 = vld [vmem:[%s814 + $0x20] sm:$0xf]
        %v820 = vld [vmem:[%s814 + $0x28] sm:$0xf]
        %v821 = vld [vmem:[%s814 + $0x30] sm:$0xf]
        %v822 = vld [vmem:[%s814 + $0x38] sm:$0xf]
        %s823 = scalar_lea.vmem %s201, 16
        %v824 = vld [vmem:[%s823] sm:$0xf]
        %v833 = vunpack.c.l.b16 %v815
        %v834 = vunpack.c.l.b16 %v816
        %v835 = vunpack.c.l.b16 %v817
        %v836 = vunpack.c.l.b16 %v818
        %v837 = vunpack.c.l.b16 %v819
        %v838 = vunpack.c.l.b16 %v820
        %v839 = vunpack.c.l.b16 %v821
        %v840 = vunpack.c.l.b16 %v822
        %v841 = vpack.c.b16 %v834, %v833
        %v842 = vpack.c.b16 %v836, %v835
        %v843 = vpack.c.b16 %v838, %v837
        %v844 = vpack.c.b16 %v840, %v839
        %v846 = vsel %vm253, %v841, 0
        %v849 = vsel %vm253, %v842, 0
        %v852 = vsel %vm253, %v843, 0
        %v855 = vsel %vm253, %v844, 0
        %v858 = vsel %vm266, %v824, 0
        %860 = vmatprep.subr.bf16.mxu0 0
        %861 = vmatpush1.bf16.msra.mxu0 %v858
        %862 = vmatprep.subr.bf16.mxu0 0
        %863 = vmatpush1.bf16.msra.mxu0 0
        %864 = vmatprep.subr.bf16.mxu0 0
        %865 = vmatpush1.bf16.msra.mxu0 0
        %866 = vmatprep.subr.bf16.mxu0 0
        %867 = vmatpush1.bf16.msra.mxu0 0
        %868 = vmatprep.subr.bf16.mxu0 0
        %869 = vmatpush1.bf16.msra.mxu0 0
        %870 = vmatprep.subr.bf16.mxu0 0
        %871 = vmatpush1.bf16.msra.mxu0 0
        %872 = vmatprep.subr.bf16.mxu0 0
        %873 = vmatpush1.bf16.msra.mxu0 0
        %874 = vmatprep.subr.bf16.mxu0 0
        %875 = vmatpush1.bf16.msra.mxu0 0
        %876 = vmatprep.subr.bf16.mxu0 0
        %877 = vmatpush1.bf16.msra.mxu0 0
        %878 = vmatprep.subr.bf16.mxu0 0
        %879 = vmatpush1.bf16.msra.mxu0 0
        %880 = vmatprep.subr.bf16.mxu0 0
        %881 = vmatpush1.bf16.msra.mxu0 0
        %882 = vmatprep.subr.bf16.mxu0 0
        %883 = vmatpush1.bf16.msra.mxu0 0
        %884 = vmatprep.subr.bf16.mxu0 0
        %885 = vmatpush1.bf16.msra.mxu0 0
        %886 = vmatprep.subr.bf16.mxu0 0
        %887 = vmatpush1.bf16.msra.mxu0 0
        %888 = vmatprep.subr.bf16.mxu0 0
        %889 = vmatpush1.bf16.msra.mxu0 0
        %890 = vmatprep.subr.bf16.mxu0 0
        %891 = vmatpush1.bf16.msra.mxu0 0
        %892 = vmatprep.mubr.bf16.mxu0 0
        %893 = vmatmul.mubr.bf16.gmra.mrb[0].mxu0 %v846
        %v894 = vpop.f32.mrb[0].mxu0
        %v895 = vadd.f32 0.0, %v894
        %v896 = vpop.f32.mrb[0].mxu0
        %v897 = vpop.f32.mrb[0].mxu0
        %v898 = vadd.f32 0.0, %v897
        %v899 = vpop.f32.mrb[0].mxu0
        %900 = vmatprep.mubr.bf16.mxu0 0
        %901 = vmatmul.mubr.bf16.gmra.mrb[0].mxu0 %v849
        %v902 = vpop.f32.mrb[0].mxu0
        %v903 = vadd.f32 0.0, %v902
        %v904 = vpop.f32.mrb[0].mxu0
        %v905 = vpop.f32.mrb[0].mxu0
        %v906 = vadd.f32 0.0, %v905
        %v907 = vpop.f32.mrb[0].mxu0
        %908 = vmatprep.mubr.bf16.mxu0 0
        %909 = vmatmul.mubr.bf16.gmra.mrb[0].mxu0 %v852
        %v910 = vpop.f32.mrb[0].mxu0
        %v911 = vadd.f32 0.0, %v910
        %v912 = vpop.f32.mrb[0].mxu0
        %v913 = vpop.f32.mrb[0].mxu0
        %v914 = vadd.f32 0.0, %v913
        %v915 = vpop.f32.mrb[0].mxu0
        %916 = vmatprep.mubr.bf16.mxu0 0
        %917 = vmatmul.mubr.bf16.gmra.mrb[0].mxu0 %v855
        %v918 = vpop.f32.mrb[0].mxu0
        %v919 = vadd.f32 0.0, %v918
        %v920 = vpop.f32.mrb[0].mxu0
        %v921 = vpop.f32.mrb[0].mxu0
        %v922 = vadd.f32 0.0, %v921
        %v923 = vpop.f32.mrb[0].mxu0
        %924 = vdwg.mxu0
        %v925 = vadd.f32 %v806, %v895
        %v926 = vadd.f32 %v807, %v898
        %v927 = vadd.f32 %v808, %v903
        %v928 = vadd.f32 %v809, %v906
        %v929 = vadd.f32 %v810, %v911
        %v930 = vadd.f32 %v811, %v914
        %v931 = vadd.f32 %v812, %v919
        %v932 = vadd.f32 %v813, %v922
        %v933 = vld [vmem:[%s695] sm:$0xf]
        %v934 = vld [vmem:[%s695 + $0x4] sm:$0x1]
        %v935 = vld [vmem:[%s695 + $0x8] sm:$0xf]
        %v936 = vld [vmem:[%s695 + $0xc] sm:$0x1]
        %v937 = vld [vmem:[%s695 + $0x10] sm:$0xf]
        %v938 = vld [vmem:[%s695 + $0x14] sm:$0x1]
        %v939 = vld [vmem:[%s695 + $0x18] sm:$0xf]
        %v940 = vld [vmem:[%s695 + $0x1c] sm:$0x1]
        %v941 = vld [vmem:[%s695 + $0x20] sm:$0xf]
        %v942 = vld [vmem:[%s695 + $0x24] sm:$0x1]
        %v943 = vld [vmem:[%s695 + $0x28] sm:$0xf]
        %v944 = vld [vmem:[%s695 + $0x2c] sm:$0x1]
        %v945 = vld [vmem:[%s695 + $0x30] sm:$0xf]
        %v946 = vld [vmem:[%s695 + $0x34] sm:$0x1]
        %v947 = vld [vmem:[%s695 + $0x38] sm:$0xf]
        %v948 = vld [vmem:[%s695 + $0x3c] sm:$0x1]
        %v950 = vshrl.u32 %v933, 16
        %v952 = vrot.slane %v950, 4
        %v953 = vshll.u32 %v933, 16
        %v955 = vrot.slane %v953, 5
        %v956 = vor.u32 %v952, %v955
        %v957 = vrot.slane %v956, 4
        %v959 = vshll.u32 %v934, 16
        %v961 = vrot.slane %v959, 5
        %v962 = vsel %vm480, %v957, %v961
        %v964 = vshrl.u32 %v935, 16
        %v966 = vrot.slane %v964, 4
        %v967 = vshll.u32 %v935, 16
        %v969 = vrot.slane %v967, 5
        %v970 = vor.u32 %v966, %v969
        %v971 = vrot.slane %v970, 4
        %v973 = vshll.u32 %v936, 16
        %v975 = vrot.slane %v973, 5
        %v976 = vsel %vm480, %v971, %v975
        %v978 = vshrl.u32 %v937, 16
        %v980 = vrot.slane %v978, 4
        %v981 = vshll.u32 %v937, 16
        %v983 = vrot.slane %v981, 5
        %v984 = vor.u32 %v980, %v983
        %v985 = vrot.slane %v984, 4
        %v987 = vshll.u32 %v938, 16
        %v989 = vrot.slane %v987, 5
        %v990 = vsel %vm480, %v985, %v989
        %v992 = vshrl.u32 %v939, 16
        %v994 = vrot.slane %v992, 4
        %v995 = vshll.u32 %v939, 16
        %v997 = vrot.slane %v995, 5
        %v998 = vor.u32 %v994, %v997
        %v999 = vrot.slane %v998, 4
        %v1001 = vshll.u32 %v940, 16
        %v1003 = vrot.slane %v1001, 5
        %v1004 = vsel %vm480, %v999, %v1003
        %v1006 = vshrl.u32 %v941, 16
        %v1008 = vrot.slane %v1006, 4
        %v1009 = vshll.u32 %v941, 16
        %v1011 = vrot.slane %v1009, 5
        %v1012 = vor.u32 %v1008, %v1011
        %v1013 = vrot.slane %v1012, 4
        %v1015 = vshll.u32 %v942, 16
        %v1017 = vrot.slane %v1015, 5
        %v1018 = vsel %vm480, %v1013, %v1017
        %v1020 = vshrl.u32 %v943, 16
        %v1022 = vrot.slane %v1020, 4
        %v1023 = vshll.u32 %v943, 16
        %v1025 = vrot.slane %v1023, 5
        %v1026 = vor.u32 %v1022, %v1025
        %v1027 = vrot.slane %v1026, 4
        %v1029 = vshll.u32 %v944, 16
        %v1031 = vrot.slane %v1029, 5
        %v1032 = vsel %vm480, %v1027, %v1031
        %v1034 = vshrl.u32 %v945, 16
        %v1036 = vrot.slane %v1034, 4
        %v1037 = vshll.u32 %v945, 16
        %v1039 = vrot.slane %v1037, 5
        %v1040 = vor.u32 %v1036, %v1039
        %v1041 = vrot.slane %v1040, 4
        %v1043 = vshll.u32 %v946, 16
        %v1045 = vrot.slane %v1043, 5
        %v1046 = vsel %vm480, %v1041, %v1045
        %v1048 = vshrl.u32 %v947, 16
        %v1050 = vrot.slane %v1048, 4
        %v1051 = vshll.u32 %v947, 16
        %v1053 = vrot.slane %v1051, 5
        %v1054 = vor.u32 %v1050, %v1053
        %v1055 = vrot.slane %v1054, 4
        %v1057 = vshll.u32 %v948, 16
        %v1059 = vrot.slane %v1057, 5
        %v1060 = vsel %vm480, %v1055, %v1059
        %s1061 = scalar_lea.vmem %s201, 20
        %v1062 = vld [vmem:[%s1061] sm:$0xf]
        %v1063 = vunpack.c.l.b16 %v962
        %v1064 = vunpack.c.l.b16 %v976
        %v1065 = vunpack.c.l.b16 %v990
        %v1066 = vunpack.c.l.b16 %v1004
        %v1067 = vunpack.c.l.b16 %v1018
        %v1068 = vunpack.c.l.b16 %v1032
        %v1069 = vunpack.c.l.b16 %v1046
        %v1070 = vunpack.c.l.b16 %v1060
        %v1071 = vpack.c.b16 %v1064, %v1063
        %v1072 = vpack.c.b16 %v1066, %v1065
        %v1073 = vpack.c.b16 %v1068, %v1067
        %v1074 = vpack.c.b16 %v1070, %v1069
        %v1076 = vsel %vm253, %v1071, 0
        %v1079 = vsel %vm253, %v1072, 0
        %v1082 = vsel %vm253, %v1073, 0
        %v1085 = vsel %vm253, %v1074, 0
        %v1088 = vsel %vm266, %v1062, 0
        %1090 = vmatprep.subr.bf16.mxu0 0
        %1091 = vmatpush1.bf16.msra.mxu0 %v1088
        %1092 = vmatprep.subr.bf16.mxu0 0
        %1093 = vmatpush1.bf16.msra.mxu0 0
        %1094 = vmatprep.subr.bf16.mxu0 0
        %1095 = vmatpush1.bf16.msra.mxu0 0
        %1096 = vmatprep.subr.bf16.mxu0 0
        %1097 = vmatpush1.bf16.msra.mxu0 0
        %1098 = vmatprep.subr.bf16.mxu0 0
        %1099 = vmatpush1.bf16.msra.mxu0 0
        %1100 = vmatprep.subr.bf16.mxu0 0
        %1101 = vmatpush1.bf16.msra.mxu0 0
        %1102 = vmatprep.subr.bf16.mxu0 0
        %1103 = vmatpush1.bf16.msra.mxu0 0
        %1104 = vmatprep.subr.bf16.mxu0 0
        %1105 = vmatpush1.bf16.msra.mxu0 0
        %1106 = vmatprep.subr.bf16.mxu0 0
        %1107 = vmatpush1.bf16.msra.mxu0 0
        %1108 = vmatprep.subr.bf16.mxu0 0
        %1109 = vmatpush1.bf16.msra.mxu0 0
        %1110 = vmatprep.subr.bf16.mxu0 0
        %1111 = vmatpush1.bf16.msra.mxu0 0
        %1112 = vmatprep.subr.bf16.mxu0 0
        %1113 = vmatpush1.bf16.msra.mxu0 0
        %1114 = vmatprep.subr.bf16.mxu0 0
        %1115 = vmatpush1.bf16.msra.mxu0 0
        %1116 = vmatprep.subr.bf16.mxu0 0
        %1117 = vmatpush1.bf16.msra.mxu0 0
        %1118 = vmatprep.subr.bf16.mxu0 0
        %1119 = vmatpush1.bf16.msra.mxu0 0
        %1120 = vmatprep.subr.bf16.mxu0 0
        %1121 = vmatpush1.bf16.msra.mxu0 0
        %1122 = vmatprep.mubr.bf16.mxu0 0
        %1123 = vmatmul.mubr.bf16.gmra.mrb[0].mxu0 %v1076
        %v1124 = vpop.f32.mrb[0].mxu0
        %v1125 = vadd.f32 0.0, %v1124
        %v1126 = vpop.f32.mrb[0].mxu0
        %v1127 = vpop.f32.mrb[0].mxu0
        %v1128 = vadd.f32 0.0, %v1127
        %v1129 = vpop.f32.mrb[0].mxu0
        %1130 = vmatprep.mubr.bf16.mxu0 0
        %1131 = vmatmul.mubr.bf16.gmra.mrb[0].mxu0 %v1079
        %v1132 = vpop.f32.mrb[0].mxu0
        %v1133 = vadd.f32 0.0, %v1132
        %v1134 = vpop.f32.mrb[0].mxu0
        %v1135 = vpop.f32.mrb[0].mxu0
        %v1136 = vadd.f32 0.0, %v1135
        %v1137 = vpop.f32.mrb[0].mxu0
        %1138 = vmatprep.mubr.bf16.mxu0 0
        %1139 = vmatmul.mubr.bf16.gmra.mrb[0].mxu0 %v1082
        %v1140 = vpop.f32.mrb[0].mxu0
        %v1141 = vadd.f32 0.0, %v1140
        %v1142 = vpop.f32.mrb[0].mxu0
        %v1143 = vpop.f32.mrb[0].mxu0
        %v1144 = vadd.f32 0.0, %v1143
        %v1145 = vpop.f32.mrb[0].mxu0
        %1146 = vmatprep.mubr.bf16.mxu0 0
        %1147 = vmatmul.mubr.bf16.gmra.mrb[0].mxu0 %v1085
        %v1148 = vpop.f32.mrb[0].mxu0
        %v1149 = vadd.f32 0.0, %v1148
        %v1150 = vpop.f32.mrb[0].mxu0
        %v1151 = vpop.f32.mrb[0].mxu0
        %v1152 = vadd.f32 0.0, %v1151
        %v1153 = vpop.f32.mrb[0].mxu0
        %1154 = vdwg.mxu0
        %v1155 = vadd.f32 %v925, %v1125
        %v1156 = vadd.f32 %v926, %v1128
        %v1157 = vadd.f32 %v927, %v1133
        %v1158 = vadd.f32 %v928, %v1136
        %v1159 = vadd.f32 %v929, %v1141
        %v1160 = vadd.f32 %v930, %v1144
        %v1161 = vadd.f32 %v931, %v1149
        %v1162 = vadd.f32 %v932, %v1152
        %s1163 = scalar_lea.vmem %s194, 8
        %v1164 = vld [vmem:[%s1163] sm:$0xf]
        %v1165 = vld [vmem:[%s1163 + $0x8] sm:$0xf]
        %v1166 = vld [vmem:[%s1163 + $0x10] sm:$0xf]
        %v1167 = vld [vmem:[%s1163 + $0x18] sm:$0xf]
        %v1168 = vld [vmem:[%s1163 + $0x20] sm:$0xf]
        %v1169 = vld [vmem:[%s1163 + $0x28] sm:$0xf]
        %v1170 = vld [vmem:[%s1163 + $0x30] sm:$0xf]
        %v1171 = vld [vmem:[%s1163 + $0x38] sm:$0xf]
        %s1172 = scalar_lea.vmem %s201, 24
        %v1173 = vld [vmem:[%s1172] sm:$0xf]
        %v1182 = vunpack.c.l.b16 %v1164
        %v1183 = vunpack.c.l.b16 %v1165
        %v1184 = vunpack.c.l.b16 %v1166
        %v1185 = vunpack.c.l.b16 %v1167
        %v1186 = vunpack.c.l.b16 %v1168
        %v1187 = vunpack.c.l.b16 %v1169
        %v1188 = vunpack.c.l.b16 %v1170
        %v1189 = vunpack.c.l.b16 %v1171
        %v1190 = vpack.c.b16 %v1183, %v1182
        %v1191 = vpack.c.b16 %v1185, %v1184
        %v1192 = vpack.c.b16 %v1187, %v1186
        %v1193 = vpack.c.b16 %v1189, %v1188
        %v1195 = vsel %vm253, %v1190, 0
        %v1198 = vsel %vm253, %v1191, 0
        %v1201 = vsel %vm253, %v1192, 0
        %v1204 = vsel %vm253, %v1193, 0
        %v1207 = vsel %vm266, %v1173, 0
        %1209 = vmatprep.subr.bf16.mxu0 0
        %1210 = vmatpush1.bf16.msra.mxu0 %v1207
        %1211 = vmatprep.subr.bf16.mxu0 0
        %1212 = vmatpush1.bf16.msra.mxu0 0
        %1213 = vmatprep.subr.bf16.mxu0 0
        %1214 = vmatpush1.bf16.msra.mxu0 0
        %1215 = vmatprep.subr.bf16.mxu0 0
        %1216 = vmatpush1.bf16.msra.mxu0 0
        %1217 = vmatprep.subr.bf16.mxu0 0
        %1218 = vmatpush1.bf16.msra.mxu0 0
        %1219 = vmatprep.subr.bf16.mxu0 0
        %1220 = vmatpush1.bf16.msra.mxu0 0
        %1221 = vmatprep.subr.bf16.mxu0 0
        %1222 = vmatpush1.bf16.msra.mxu0 0
        %1223 = vmatprep.subr.bf16.mxu0 0
        %1224 = vmatpush1.bf16.msra.mxu0 0
        %1225 = vmatprep.subr.bf16.mxu0 0
        %1226 = vmatpush1.bf16.msra.mxu0 0
        %1227 = vmatprep.subr.bf16.mxu0 0
        %1228 = vmatpush1.bf16.msra.mxu0 0
        %1229 = vmatprep.subr.bf16.mxu0 0
        %1230 = vmatpush1.bf16.msra.mxu0 0
        %1231 = vmatprep.subr.bf16.mxu0 0
        %1232 = vmatpush1.bf16.msra.mxu0 0
        %1233 = vmatprep.subr.bf16.mxu0 0
        %1234 = vmatpush1.bf16.msra.mxu0 0
        %1235 = vmatprep.subr.bf16.mxu0 0
        %1236 = vmatpush1.bf16.msra.mxu0 0
        %1237 = vmatprep.subr.bf16.mxu0 0
        %1238 = vmatpush1.bf16.msra.mxu0 0
        %1239 = vmatprep.subr.bf16.mxu0 0
        %1240 = vmatpush1.bf16.msra.mxu0 0
        %1241 = vmatprep.mubr.bf16.mxu0 0
        %1242 = vmatmul.mubr.bf16.gmra.mrb[0].mxu0 %v1195
        %v1243 = vpop.f32.mrb[0].mxu0
        %v1244 = vadd.f32 0.0, %v1243
        %v1245 = vpop.f32.mrb[0].mxu0
        %v1246 = vpop.f32.mrb[0].mxu0
        %v1247 = vadd.f32 0.0, %v1246
        %v1248 = vpop.f32.mrb[0].mxu0
        %1249 = vmatprep.mubr.bf16.mxu0 0
        %1250 = vmatmul.mubr.bf16.gmra.mrb[0].mxu0 %v1198
        %v1251 = vpop.f32.mrb[0].mxu0
        %v1252 = vadd.f32 0.0, %v1251
        %v1253 = vpop.f32.mrb[0].mxu0
        %v1254 = vpop.f32.mrb[0].mxu0
        %v1255 = vadd.f32 0.0, %v1254
        %v1256 = vpop.f32.mrb[0].mxu0
        %1257 = vmatprep.mubr.bf16.mxu0 0
        %1258 = vmatmul.mubr.bf16.gmra.mrb[0].mxu0 %v1201
        %v1259 = vpop.f32.mrb[0].mxu0
        %v1260 = vadd.f32 0.0, %v1259
        %v1261 = vpop.f32.mrb[0].mxu0
        %v1262 = vpop.f32.mrb[0].mxu0
        %v1263 = vadd.f32 0.0, %v1262
        %v1264 = vpop.f32.mrb[0].mxu0
        %1265 = vmatprep.mubr.bf16.mxu0 0
        %1266 = vmatmul.mubr.bf16.gmra.mrb[0].mxu0 %v1204
        %v1267 = vpop.f32.mrb[0].mxu0
        %v1268 = vadd.f32 0.0, %v1267
        %v1269 = vpop.f32.mrb[0].mxu0
        %v1270 = vpop.f32.mrb[0].mxu0
        %v1271 = vadd.f32 0.0, %v1270
        %v1272 = vpop.f32.mrb[0].mxu0
        %1273 = vdwg.mxu0
        %v1274 = vadd.f32 %v1155, %v1244
        %v1275 = vadd.f32 %v1156, %v1247
        %v1276 = vadd.f32 %v1157, %v1252
        %v1277 = vadd.f32 %v1158, %v1255
        %v1278 = vadd.f32 %v1159, %v1260
        %v1279 = vadd.f32 %v1160, %v1263
        %v1280 = vadd.f32 %v1161, %v1268
        %v1281 = vadd.f32 %v1162, %v1271
        %s1282 = scalar_lea.vmem %s194, 80
        %v1283 = vld [vmem:[%s1282] sm:$0xf]
        %v1284 = vld [vmem:[%s1282 + $0x8] sm:$0xf]
        %v1285 = vld [vmem:[%s1282 + $0x10] sm:$0xf]
        %v1286 = vld [vmem:[%s1282 + $0x18] sm:$0xf]
        %v1287 = vld [vmem:[%s1282 + $0x20] sm:$0xf]
        %v1288 = vld [vmem:[%s1282 + $0x28] sm:$0xf]
        %v1289 = vld [vmem:[%s1282 + $0x30] sm:$0xf]
        %v1290 = vld [vmem:[%s1282 + $0x38] sm:$0xf]
        %s1291 = scalar_lea.vmem %s201, 28
        %v1292 = vld [vmem:[%s1291] sm:$0xf]
        %v1301 = vunpack.c.l.b16 %v1283
        %v1302 = vunpack.c.l.b16 %v1284
        %v1303 = vunpack.c.l.b16 %v1285
        %v1304 = vunpack.c.l.b16 %v1286
        %v1305 = vunpack.c.l.b16 %v1287
        %v1306 = vunpack.c.l.b16 %v1288
        %v1307 = vunpack.c.l.b16 %v1289
        %v1308 = vunpack.c.l.b16 %v1290
        %v1309 = vpack.c.b16 %v1302, %v1301
        %v1310 = vpack.c.b16 %v1304, %v1303
        %v1311 = vpack.c.b16 %v1306, %v1305
        %v1312 = vpack.c.b16 %v1308, %v1307
        %v1314 = vsel %vm253, %v1309, 0
        %v1317 = vsel %vm253, %v1310, 0
        %v1320 = vsel %vm253, %v1311, 0
        %v1323 = vsel %vm253, %v1312, 0
        %v1326 = vsel %vm266, %v1292, 0
        %1328 = vmatprep.subr.bf16.mxu0 0
        %1329 = vmatpush1.bf16.msra.mxu0 %v1326
        %1330 = vmatprep.subr.bf16.mxu0 0
        %1331 = vmatpush1.bf16.msra.mxu0 0
        %1332 = vmatprep.subr.bf16.mxu0 0
        %1333 = vmatpush1.bf16.msra.mxu0 0
        %1334 = vmatprep.subr.bf16.mxu0 0
        %1335 = vmatpush1.bf16.msra.mxu0 0
        %1336 = vmatprep.subr.bf16.mxu0 0
        %1337 = vmatpush1.bf16.msra.mxu0 0
        %1338 = vmatprep.subr.bf16.mxu0 0
        %1339 = vmatpush1.bf16.msra.mxu0 0
        %1340 = vmatprep.subr.bf16.mxu0 0
        %1341 = vmatpush1.bf16.msra.mxu0 0
        %1342 = vmatprep.subr.bf16.mxu0 0
        %1343 = vmatpush1.bf16.msra.mxu0 0
        %1344 = vmatprep.subr.bf16.mxu0 0
        %1345 = vmatpush1.bf16.msra.mxu0 0
        %1346 = vmatprep.subr.bf16.mxu0 0
        %1347 = vmatpush1.bf16.msra.mxu0 0
        %1348 = vmatprep.subr.bf16.mxu0 0
        %1349 = vmatpush1.bf16.msra.mxu0 0
        %1350 = vmatprep.subr.bf16.mxu0 0
        %1351 = vmatpush1.bf16.msra.mxu0 0
        %1352 = vmatprep.subr.bf16.mxu0 0
        %1353 = vmatpush1.bf16.msra.mxu0 0
        %1354 = vmatprep.subr.bf16.mxu0 0
        %1355 = vmatpush1.bf16.msra.mxu0 0
        %1356 = vmatprep.subr.bf16.mxu0 0
        %1357 = vmatpush1.bf16.msra.mxu0 0
        %1358 = vmatprep.subr.bf16.mxu0 0
        %1359 = vmatpush1.bf16.msra.mxu0 0
        %1360 = vmatprep.mubr.bf16.mxu0 0
        %1361 = vmatmul.mubr.bf16.gmra.mrb[0].mxu0 %v1314
        %v1362 = vpop.f32.mrb[0].mxu0
        %v1363 = vadd.f32 0.0, %v1362
        %v1364 = vpop.f32.mrb[0].mxu0
        %v1365 = vpop.f32.mrb[0].mxu0
        %v1366 = vadd.f32 0.0, %v1365
        %v1367 = vpop.f32.mrb[0].mxu0
        %1368 = vmatprep.mubr.bf16.mxu0 0
        %1369 = vmatmul.mubr.bf16.gmra.mrb[0].mxu0 %v1317
        %v1370 = vpop.f32.mrb[0].mxu0
        %v1371 = vadd.f32 0.0, %v1370
        %v1372 = vpop.f32.mrb[0].mxu0
        %v1373 = vpop.f32.mrb[0].mxu0
        %v1374 = vadd.f32 0.0, %v1373
        %v1375 = vpop.f32.mrb[0].mxu0
        %1376 = vmatprep.mubr.bf16.mxu0 0
        %1377 = vmatmul.mubr.bf16.gmra.mrb[0].mxu0 %v1320
        %v1378 = vpop.f32.mrb[0].mxu0
        %v1379 = vadd.f32 0.0, %v1378
        %v1380 = vpop.f32.mrb[0].mxu0
        %v1381 = vpop.f32.mrb[0].mxu0
        %v1382 = vadd.f32 0.0, %v1381
        %v1383 = vpop.f32.mrb[0].mxu0
        %1384 = vmatprep.mubr.bf16.mxu0 0
        %1385 = vmatmul.mubr.bf16.gmra.mrb[0].mxu0 %v1323
        %v1386 = vpop.f32.mrb[0].mxu0
        %v1387 = vadd.f32 0.0, %v1386
        %v1388 = vpop.f32.mrb[0].mxu0
        %v1389 = vpop.f32.mrb[0].mxu0
        %v1390 = vadd.f32 0.0, %v1389
        %v1391 = vpop.f32.mrb[0].mxu0
        %1392 = vdwg.mxu0
        %v1393 = vadd.f32 %v1274, %v1363
        %v1394 = vadd.f32 %v1275, %v1366
        %v1395 = vadd.f32 %v1276, %v1371
        %v1396 = vadd.f32 %v1277, %v1374
        %v1397 = vadd.f32 %v1278, %v1379
        %v1398 = vadd.f32 %v1279, %v1382
        %v1399 = vadd.f32 %v1280, %v1387
        %v1400 = vadd.f32 %v1281, %v1390
        %v1401 = vld [vmem:[%s1163] sm:$0xf]
        %v1402 = vld [vmem:[%s1163 + $0x4] sm:$0x1]
        %v1403 = vld [vmem:[%s1163 + $0x8] sm:$0xf]
        %v1404 = vld [vmem:[%s1163 + $0xc] sm:$0x1]
        %v1405 = vld [vmem:[%s1163 + $0x10] sm:$0xf]
        %v1406 = vld [vmem:[%s1163 + $0x14] sm:$0x1]
        %v1407 = vld [vmem:[%s1163 + $0x18] sm:$0xf]
        %v1408 = vld [vmem:[%s1163 + $0x1c] sm:$0x1]
        %v1409 = vld [vmem:[%s1163 + $0x20] sm:$0xf]
        %v1410 = vld [vmem:[%s1163 + $0x24] sm:$0x1]
        %v1411 = vld [vmem:[%s1163 + $0x28] sm:$0xf]
        %v1412 = vld [vmem:[%s1163 + $0x2c] sm:$0x1]
        %v1413 = vld [vmem:[%s1163 + $0x30] sm:$0xf]
        %v1414 = vld [vmem:[%s1163 + $0x34] sm:$0x1]
        %v1415 = vld [vmem:[%s1163 + $0x38] sm:$0xf]
        %v1416 = vld [vmem:[%s1163 + $0x3c] sm:$0x1]
        %v1418 = vshrl.u32 %v1401, 16
        %v1420 = vrot.slane %v1418, 4
        %v1421 = vshll.u32 %v1401, 16
        %v1423 = vrot.slane %v1421, 5
        %v1424 = vor.u32 %v1420, %v1423
        %v1425 = vrot.slane %v1424, 4
        %v1427 = vshll.u32 %v1402, 16
        %v1429 = vrot.slane %v1427, 5
        %v1430 = vsel %vm480, %v1425, %v1429
        %v1432 = vshrl.u32 %v1403, 16
        %v1434 = vrot.slane %v1432, 4
        %v1435 = vshll.u32 %v1403, 16
        %v1437 = vrot.slane %v1435, 5
        %v1438 = vor.u32 %v1434, %v1437
        %v1439 = vrot.slane %v1438, 4
        %v1441 = vshll.u32 %v1404, 16
        %v1443 = vrot.slane %v1441, 5
        %v1444 = vsel %vm480, %v1439, %v1443
        %v1446 = vshrl.u32 %v1405, 16
        %v1448 = vrot.slane %v1446, 4
        %v1449 = vshll.u32 %v1405, 16
        %v1451 = vrot.slane %v1449, 5
        %v1452 = vor.u32 %v1448, %v1451
        %v1453 = vrot.slane %v1452, 4
        %v1455 = vshll.u32 %v1406, 16
        %v1457 = vrot.slane %v1455, 5
        %v1458 = vsel %vm480, %v1453, %v1457
        %v1460 = vshrl.u32 %v1407, 16
        %v1462 = vrot.slane %v1460, 4
        %v1463 = vshll.u32 %v1407, 16
        %v1465 = vrot.slane %v1463, 5
        %v1466 = vor.u32 %v1462, %v1465
        %v1467 = vrot.slane %v1466, 4
        %v1469 = vshll.u32 %v1408, 16
        %v1471 = vrot.slane %v1469, 5
        %v1472 = vsel %vm480, %v1467, %v1471
        %v1474 = vshrl.u32 %v1409, 16
        %v1476 = vrot.slane %v1474, 4
        %v1477 = vshll.u32 %v1409, 16
        %v1479 = vrot.slane %v1477, 5
        %v1480 = vor.u32 %v1476, %v1479
        %v1481 = vrot.slane %v1480, 4
        %v1483 = vshll.u32 %v1410, 16
        %v1485 = vrot.slane %v1483, 5
        %v1486 = vsel %vm480, %v1481, %v1485
        %v1488 = vshrl.u32 %v1411, 16
        %v1490 = vrot.slane %v1488, 4
        %v1491 = vshll.u32 %v1411, 16
        %v1493 = vrot.slane %v1491, 5
        %v1494 = vor.u32 %v1490, %v1493
        %v1495 = vrot.slane %v1494, 4
        %v1497 = vshll.u32 %v1412, 16
        %v1499 = vrot.slane %v1497, 5
        %v1500 = vsel %vm480, %v1495, %v1499
        %v1502 = vshrl.u32 %v1413, 16
        %v1504 = vrot.slane %v1502, 4
        %v1505 = vshll.u32 %v1413, 16
        %v1507 = vrot.slane %v1505, 5
        %v1508 = vor.u32 %v1504, %v1507
        %v1509 = vrot.slane %v1508, 4
        %v1511 = vshll.u32 %v1414, 16
        %v1513 = vrot.slane %v1511, 5
        %v1514 = vsel %vm480, %v1509, %v1513
        %v1516 = vshrl.u32 %v1415, 16
        %v1518 = vrot.slane %v1516, 4
        %v1519 = vshll.u32 %v1415, 16
        %v1521 = vrot.slane %v1519, 5
        %v1522 = vor.u32 %v1518, %v1521
        %v1523 = vrot.slane %v1522, 4
        %v1525 = vshll.u32 %v1416, 16
        %v1527 = vrot.slane %v1525, 5
        %v1528 = vsel %vm480, %v1523, %v1527
        %s1529 = scalar_lea.vmem %s201, 32
        %v1530 = vld [vmem:[%s1529] sm:$0xf]
        %v1531 = vunpack.c.l.b16 %v1430
        %v1532 = vunpack.c.l.b16 %v1444
        %v1533 = vunpack.c.l.b16 %v1458
        %v1534 = vunpack.c.l.b16 %v1472
        %v1535 = vunpack.c.l.b16 %v1486
        %v1536 = vunpack.c.l.b16 %v1500
        %v1537 = vunpack.c.l.b16 %v1514
        %v1538 = vunpack.c.l.b16 %v1528
        %v1539 = vpack.c.b16 %v1532, %v1531
        %v1540 = vpack.c.b16 %v1534, %v1533
        %v1541 = vpack.c.b16 %v1536, %v1535
        %v1542 = vpack.c.b16 %v1538, %v1537
        %v1544 = vsel %vm253, %v1539, 0
        %v1547 = vsel %vm253, %v1540, 0
        %v1550 = vsel %vm253, %v1541, 0
        %v1553 = vsel %vm253, %v1542, 0
        %v1556 = vsel %vm266, %v1530, 0
        %1558 = vmatprep.subr.bf16.mxu0 0
        %1559 = vmatpush1.bf16.msra.mxu0 %v1556
        %1560 = vmatprep.subr.bf16.mxu0 0
        %1561 = vmatpush1.bf16.msra.mxu0 0
        %1562 = vmatprep.subr.bf16.mxu0 0
        %1563 = vmatpush1.bf16.msra.mxu0 0
        %1564 = vmatprep.subr.bf16.mxu0 0
        %1565 = vmatpush1.bf16.msra.mxu0 0
        %1566 = vmatprep.subr.bf16.mxu0 0
        %1567 = vmatpush1.bf16.msra.mxu0 0
        %1568 = vmatprep.subr.bf16.mxu0 0
        %1569 = vmatpush1.bf16.msra.mxu0 0
        %1570 = vmatprep.subr.bf16.mxu0 0
        %1571 = vmatpush1.bf16.msra.mxu0 0
        %1572 = vmatprep.subr.bf16.mxu0 0
        %1573 = vmatpush1.bf16.msra.mxu0 0
        %1574 = vmatprep.subr.bf16.mxu0 0
        %1575 = vmatpush1.bf16.msra.mxu0 0
        %1576 = vmatprep.subr.bf16.mxu0 0
        %1577 = vmatpush1.bf16.msra.mxu0 0
        %1578 = vmatprep.subr.bf16.mxu0 0
        %1579 = vmatpush1.bf16.msra.mxu0 0
        %1580 = vmatprep.subr.bf16.mxu0 0
        %1581 = vmatpush1.bf16.msra.mxu0 0
        %1582 = vmatprep.subr.bf16.mxu0 0
        %1583 = vmatpush1.bf16.msra.mxu0 0
        %1584 = vmatprep.subr.bf16.mxu0 0
        %1585 = vmatpush1.bf16.msra.mxu0 0
        %1586 = vmatprep.subr.bf16.mxu0 0
        %1587 = vmatpush1.bf16.msra.mxu0 0
        %1588 = vmatprep.subr.bf16.mxu0 0
        %1589 = vmatpush1.bf16.msra.mxu0 0
        %1590 = vmatprep.mubr.bf16.mxu0 0
        %1591 = vmatmul.mubr.bf16.gmra.mrb[0].mxu0 %v1544
        %v1592 = vpop.f32.mrb[0].mxu0
        %v1593 = vadd.f32 0.0, %v1592
        %v1594 = vpop.f32.mrb[0].mxu0
        %v1595 = vpop.f32.mrb[0].mxu0
        %v1596 = vadd.f32 0.0, %v1595
        %v1597 = vpop.f32.mrb[0].mxu0
        %1598 = vmatprep.mubr.bf16.mxu0 0
        %1599 = vmatmul.mubr.bf16.gmra.mrb[0].mxu0 %v1547
        %v1600 = vpop.f32.mrb[0].mxu0
        %v1601 = vadd.f32 0.0, %v1600
        %v1602 = vpop.f32.mrb[0].mxu0
        %v1603 = vpop.f32.mrb[0].mxu0
        %v1604 = vadd.f32 0.0, %v1603
        %v1605 = vpop.f32.mrb[0].mxu0
        %1606 = vmatprep.mubr.bf16.mxu0 0
        %1607 = vmatmul.mubr.bf16.gmra.mrb[0].mxu0 %v1550
        %v1608 = vpop.f32.mrb[0].mxu0
        %v1609 = vadd.f32 0.0, %v1608
        %v1610 = vpop.f32.mrb[0].mxu0
        %v1611 = vpop.f32.mrb[0].mxu0
        %v1612 = vadd.f32 0.0, %v1611
        %v1613 = vpop.f32.mrb[0].mxu0
        %1614 = vmatprep.mubr.bf16.mxu0 0
        %1615 = vmatmul.mubr.bf16.gmra.mrb[0].mxu0 %v1553
        %v1616 = vpop.f32.mrb[0].mxu0
        %v1617 = vadd.f32 0.0, %v1616
        %v1618 = vpop.f32.mrb[0].mxu0
        %v1619 = vpop.f32.mrb[0].mxu0
        %v1620 = vadd.f32 0.0, %v1619
        %v1621 = vpop.f32.mrb[0].mxu0
        %1622 = vdwg.mxu0
        %v1623 = vadd.f32 %v1393, %v1593
        %v1624 = vadd.f32 %v1394, %v1596
        %v1625 = vadd.f32 %v1395, %v1601
        %v1626 = vadd.f32 %v1396, %v1604
        %v1627 = vadd.f32 %v1397, %v1609
        %v1628 = vadd.f32 %v1398, %v1612
        %v1629 = vadd.f32 %v1399, %v1617
        %v1630 = vadd.f32 %v1400, %v1620
        %vm1631 = vcmask 130048
        %1632 = vst.msk [vmem:[#allocation2] sm:$0xff] %vm1631, %v1623
        %1633 = vst.msk [vmem:[#allocation2 + $0x8] sm:$0xff] %vm1631, %v1624
        %1634 = vst.msk [vmem:[#allocation2 + $0x10] sm:$0xff] %vm1631, %v1625
        %1635 = vst.msk [vmem:[#allocation2 + $0x18] sm:$0xff] %vm1631, %v1626
        %1636 = vst.msk [vmem:[#allocation2 + $0x20] sm:$0xff] %vm1631, %v1627
        %1637 = vst.msk [vmem:[#allocation2 + $0x28] sm:$0xff] %vm1631, %v1628
        %1638 = vst.msk [vmem:[#allocation2 + $0x30] sm:$0xff] %vm1631, %v1629
        %1639 = vst.msk [vmem:[#allocation2 + $0x38] sm:$0xff] %vm1631, %v1630
        // Predicated region
        $region33: #{a_call__.5} parent=27 // pred_check
          %p1640 = pneg %p203
        $region34: #{a_call__.5} parent=27 // pred_check_branch
          %1642 = sbr.rel (%p1640) target = $region36
        $region35: #{a_call__.5} parent=27 // pred_region
          %1643 = vst.msk [vmem:[%s186] sm:$0xff] %vm1631, %v1623
          %1644 = vst.msk [vmem:[%s186 + $0x8] sm:$0xff] %vm1631, %v1624
          %1645 = vst.msk [vmem:[%s186 + $0x10] sm:$0xff] %vm1631, %v1625
          %1646 = vst.msk [vmem:[%s186 + $0x18] sm:$0xff] %vm1631, %v1626
          %1647 = vst.msk [vmem:[%s186 + $0x20] sm:$0xff] %vm1631, %v1627
          %1648 = vst.msk [vmem:[%s186 + $0x28] sm:$0xff] %vm1631, %v1628
          %1649 = vst.msk [vmem:[%s186 + $0x30] sm:$0xff] %vm1631, %v1629
          %1650 = vst.msk [vmem:[%s186 + $0x38] sm:$0xff] %vm1631, %v1630
        $region36: #{a_call__.5} parent=27 // pred_fallthru
          _
        %s1651 = sand.u32 %s101, 1
        %s1652 = scalar_lea.sflag [#allocation4], %s1651
        %s1653 = sand.u32 %s101, 1
        %s1654 = smul.addr %s1653, 64
        %s1655 = scalar_lea.vmem [#allocation3], %s1654
        // Predicated region
        $region37: #{a_call__.5} parent=27 // pred_check
          %p1656 = pneg %p111
        $region38: #{a_call__.5} parent=27 // pred_check_branch
          %1658 = sbr.rel (%p1656) target = $region40
        $region39: #{a_call__.5} parent=27 // pred_region
          %s1660 = ssub.s32 1024, 1024
          %1661 = vsyncadd %s1652, %s1660
          %s1662 = smul.addr %s21, 8
          %s1663 = sadd.s32 %s22, %s1662
          %s1664 = smul.addr %s1663, 128
          %s1665 = scalar_lea.hbm %s2, %s1664
          %s1666 = sshll.u32 %s1655, 4
          %s1667 = int_to_ptr.vmem [resolvable:$true] %s1666
          %1672 = dma.vmem_to_hbm [thread:$0]  %s1667, 1024, %s1665, %s1652, 128, 128, 8
        $region40: #{a_call__.5} parent=27 // pred_fallthru
          _
      $region28: #{a_call__.5} parent=5 // pred_fallthru
        _
      %p1673 = scmp.le.s32.totalorder 2, %s11
      // Predicated region
      $region41: #{a_call__.5} parent=5 // pred_check
        %p1674 = pneg %p1673
      $region42: #{a_call__.5} parent=5 // pred_check_branch
        %1676 = sbr.rel (%p1674) target = $region44
      $region43: #{a_call__.5} parent=5 // pred_region
        %s1677 = ssub.s32 %s11, 2
        // Predicated region
        $region45: #{a_call__.5} parent=43 // pred_check
          %p1678 = pneg %p117
        $region46: #{a_call__.5} parent=43 // pred_check_branch
          %1680 = sbr.rel (%p1678) target = $region48
        $region47: #{a_call__.5} parent=43 // pred_region
          %s1681 = sand.u32 %s102, 1
          %s1682 = scalar_lea.sflag [#allocation4], %s1681
          %s1683 = sand.u32 %s102, 1
          %s1684 = smul.addr %s1683, 64
          %s1685 = scalar_lea.vmem [#allocation3], %s1684
          %1686 = dma.done %s1682, 1024
        $region48: #{a_call__.5} parent=43 // pred_fallthru
          _
      $region44: #{a_call__.5} parent=5 // pred_fallthru
        _
    $region6: #{a_call__.5} parent=1 // loop_footer
      %s15 = sadd.s32 1, %s11
    $region7: #{a_call__.5} parent=1 // loop_footer_branch
      %10 = sbr.rel target = $region3
    $region8: #{a_call__.5} parent=1 // loop_exit
      _
    %1687 = vsyncpa [#allocation4], 1
    %s1688 = scalar_lea.sflag [#allocation4], 1
    %1689 = vsyncpa %s1688, 1

</llo_original>
